<compile_context>
chip_gen: v7x
topology: tpu7x:2x2x1
jax: 0.10.0
libtpu: 0.0.40
codegen_flags: <defaults>
</compile_context>

<pallas_src>
import jax
import jax.numpy as jnp
from jax import lax
from jax.experimental import pallas as pl
from jax.experimental.pallas import tpu as pltpu


def _decimation_matrices(n_in, n_out, dtype=jnp.float32):
    """0/1 selection matrices D_even/D_odd with D[u, v] = 1 iff u == 2v (+1).

    max(x @ D_even, x @ D_odd) is a 2-wide max-pool along the lane dim.
    Works unchanged when several images are tiled along lanes because
    n_in == 2 * n_out per image block, so block offsets scale consistently.
    """
    u = lax.broadcasted_iota(jnp.int32, (n_in, n_out), 0)
    v = lax.broadcasted_iota(jnp.int32, (n_in, n_out), 1)
    d_even = (u == 2 * v).astype(dtype)
    d_odd = (u == 2 * v + 1).astype(dtype)
    return d_even, d_odd


def _fused_cnn_kernel(x_ref, w1t_ref, b1_ref, w2t_ref, b2_ref,
                      fw1_ref, fb1_ref, fw2_ref, fb2_ref, fw3_ref, fb3_ref,
                      o_ref, h1_ref, h2_ref):
    """One batch block per grid step.

    Refs:
      x_ref:   (30, BB, 30)   spatially padded input, laid out (H, image, W)
      w1t_ref: (32, 9)        conv1 taps (BN scale folded in)
      b1_ref:  (32, 1)        conv1 bias + BN shift
      w2t_ref: (64, 288)      conv2 im2col weights (BN scale folded in)
      b2_ref:  (64, 1)
      fw1/2/3, fb1/2/3:       fc weights (in, out) / biases (1, out)
      o_ref:   (BB, 10)
      h1_ref:  (14, 32, BB*14)  VMEM scratch: pooled layer1 (row, cin, b*14+w)
      h2_ref:  (6, BB*6, 64)    VMEM scratch: pooled layer2 (row, b*6+w, cout)
    """
    f32 = jnp.float32
    BB = x_ref.shape[1]

    w1t = w1t_ref[...]
    b1 = b1_ref[...]
    w2t = w2t_ref[...]
    b2 = b2_ref[...]

    d1e, d1o = _decimation_matrices(28 * BB, 14 * BB)
    d2e, d2o = _decimation_matrices(12 * BB, 6 * BB)

    # ---- layer 1: conv3x3(pad=1, Cin=1) + BN + ReLU + maxpool2 ------------
    def conv1_row(h):                                   # h: conv output row
        x3 = x_ref[pl.ds(h, 3)]                         # (3, BB, 30)
        taps = []
        for ky in range(3):
            for kx in range(3):
                taps.append(jnp.concatenate(
                    [x3[ky, b:b + 1, kx:kx + 28] for b in range(BB)], axis=1))
        patches = jnp.concatenate(taps, axis=0)         # (9, BB*28)
        return jnp.dot(w1t, patches, preferred_element_type=f32)  # (32, BB*28)

    def l1_body(i, carry):
        r = jnp.maximum(conv1_row(2 * i), conv1_row(2 * i + 1))   # pool rows
        r = jnp.maximum(jnp.dot(r, d1e, preferred_element_type=f32),
                        jnp.dot(r, d1o, preferred_element_type=f32))  # pool cols
        h1_ref[i, :, :] = jnp.maximum(r + b1, 0.0)                # BN shift+ReLU
        return carry

    lax.fori_loop(0, 14, l1_body, 0)

    # ---- layer 2: conv3x3(valid, 32->64) + BN + ReLU + maxpool2 -----------
    def conv2_row(h):
        h3 = h1_ref[pl.ds(h, 3)]                        # (3, 32, BB*14)
        taps = []
        for ky in range(3):
            for kx in range(3):
                taps.append(jnp.concatenate(
                    [h3[ky, :, b * 14 + kx: b * 14 + kx + 12] for b in range(BB)],
                    axis=1))                            # (32, BB*12)
        patches = jnp.concatenate(taps, axis=0)         # (288, BB*12)
        return jnp.dot(w2t, patches, preferred_element_type=f32)  # (64, BB*12)

    def l2_body(i, carry):
        r = jnp.maximum(conv2_row(2 * i), conv2_row(2 * i + 1))
        r = jnp.maximum(jnp.dot(r, d2e, preferred_element_type=f32),
                        jnp.dot(r, d2o, preferred_element_type=f32))  # (64, BB*6)
        r = jnp.maximum(r + b2, 0.0)
        h2_ref[i, :, :] = r.T                           # (BB*6, 64)
        return carry

    lax.fori_loop(0, 6, l2_body, 0)

    # ---- flatten in (h, w, c) order (fc1 weights pre-permuted to match) ---
    feats = []
    for b in range(BB):
        pieces = []
        for h in range(6):
            a = h2_ref[h, b * 6:(b + 1) * 6, :]         # (6, 64) = (w, c)
            for w in range(6):
                pieces.append(a[w:w + 1, :])            # (1, 64)
        feats.append(jnp.concatenate(pieces, axis=1))   # (1, 2304)
    f = jnp.concatenate(feats, axis=0)                  # (BB, 2304)

    # ---- fc1 -> Dropout2d (identity at inference) -> fc2 -> fc3 -----------
    z = jnp.dot(f, fw1_ref[...], preferred_element_type=f32) + fb1_ref[...]
    z = jnp.dot(z, fw2_ref[...], preferred_element_type=f32) + fb2_ref[...]
    z = jnp.dot(z, fw3_ref[...], preferred_element_type=f32) + fb3_ref[...]
    o_ref[...] = z.astype(o_ref.dtype)


def forward_pallas(x_nchw, p, *, block_b=8, eps=1e-5):
    B, C, H, W = x_nchw.shape
    assert C == 1 and H == 28 and W == 28, (B, C, H, W)
    BB = min(block_b, B)
    nb = pl.cdiv(B, BB)
    b_pad = nb * BB

    # input: NCHW -> (padded H, image, padded W) so dynamic row access in the
    # kernel only touches a leading (untiled) dim.
    x = x_nchw[:, 0, :, :].astype(jnp.float32)
    x = jnp.pad(x, ((0, b_pad - B), (1, 1), (1, 1)))            # (b_pad, 30, 30)
    x = jnp.transpose(x, (1, 0, 2))                             # (30, b_pad, 30)

    # fold BatchNorm (inference) into conv weights / biases.
    scale1 = p["g1"] / jnp.sqrt(p["v1"] + eps)
    w1t = (p["w1"].reshape(32, 9) * scale1[:, None]).astype(jnp.float32)
    b1 = ((p["b1"] - p["m1"]) * scale1 + p["be1"]).reshape(32, 1).astype(jnp.float32)

    scale2 = p["g2"] / jnp.sqrt(p["v2"] + eps)
    w2t = (jnp.transpose(p["w2"], (0, 2, 3, 1)).reshape(64, 288)
           * scale2[:, None]).astype(jnp.float32)
    b2 = ((p["b2"] - p["m2"]) * scale2 + p["be2"]).reshape(64, 1).astype(jnp.float32)

    # fc1 rows: permute from torch's (c, h, w) flatten order to kernel (h, w, c).
    fw1 = (p["fw1"].reshape(64, 6, 6, 600).transpose(1, 2, 0, 3)
           .reshape(2304, 600).astype(jnp.float32))
    fb1 = p["fb1"].reshape(1, 600).astype(jnp.float32)
    fw2 = p["fw2"].astype(jnp.float32)
    fb2 = p["fb2"].reshape(1, 120).astype(jnp.float32)
    fw3 = p["fw3"].astype(jnp.float32)
    fb3 = p["fb3"].reshape(1, 10).astype(jnp.float32)

    const2 = lambda g: (0, 0)
    out = pl.pallas_call(
        _fused_cnn_kernel,
        out_shape=jax.ShapeDtypeStruct((b_pad, 10), jnp.float32),
        grid=(nb,),
        in_specs=[
            pl.BlockSpec((30, BB, 30), lambda g: (0, g, 0)),
            pl.BlockSpec((32, 9), const2),
            pl.BlockSpec((32, 1), const2),
            pl.BlockSpec((64, 288), const2),
            pl.BlockSpec((64, 1), const2),
            pl.BlockSpec((2304, 600), const2),
            pl.BlockSpec((1, 600), const2),
            pl.BlockSpec((600, 120), const2),
            pl.BlockSpec((1, 120), const2),
            pl.BlockSpec((120, 10), const2),
            pl.BlockSpec((1, 10), const2),
        ],
        out_specs=pl.BlockSpec((BB, 10), lambda g: (g, 0)),
        scratch_shapes=[
            pltpu.VMEM((14, 32, 14 * BB), jnp.float32),
            pltpu.VMEM((6, 6 * BB, 64), jnp.float32),
        ],
        compiler_params=pltpu.CompilerParams(
            dimension_semantics=("parallel",),
            vmem_limit_bytes=32 * 1024 * 1024),
    )(x, w1t, b1, w2t, b2, fw1, fb1, fw2, fb2, fw3, fb3)
    return out[:B]


# Pure-JAX reference (same inference semantics) for verification.
def forward_reference(x_nchw, p, eps=1e-5):
    def block(x, w, b, g, be, m, v, pad):
        y = lax.conv_general_dilated(
            x, w, window_strides=(1, 1), padding=[(pad, pad), (pad, pad)],
            dimension_numbers=("NCHW", "OIHW", "NCHW"))
        y = y + b[None, :, None, None]
        y = (y - m[None, :, None, None]) / jnp.sqrt(v[None, :, None, None] + eps)
        y = y * g[None, :, None, None] + be[None, :, None, None]
        y = jnp.maximum(y, 0.0)
        return lax.reduce_window(y, -jnp.inf, lax.max,
                                 (1, 1, 2, 2), (1, 1, 2, 2), "VALID")

    h = block(x_nchw, p["w1"], p["b1"], p["g1"], p["be1"], p["m1"], p["v1"], 1)
    h = block(h, p["w2"], p["b2"], p["g2"], p["be2"], p["m2"], p["v2"], 0)
    h = h.reshape(h.shape[0], -1)
    h = h @ p["fw1"] + p["fb1"]
    h = h @ p["fw2"] + p["fb2"]
    return h @ p["fw3"] + p["fb3"]


if __name__ == "__main__":
    key = jax.random.PRNGKey(0)
    ks = jax.random.split(key, 12)
    B = 2
    x = jax.random.normal(ks[0], (B, 1, 28, 28), jnp.float32)    # NCHW, like PyTorch

    params = dict(
        # conv weights in PyTorch OIHW layout
        w1=jax.random.normal(ks[1], (32, 1, 3, 3), jnp.float32) * 0.2,
        b1=jax.random.normal(ks[2], (32,), jnp.float32) * 0.1,
        g1=jnp.ones((32,), jnp.float32), be1=jnp.zeros((32,), jnp.float32),
        m1=jnp.zeros((32,), jnp.float32), v1=jnp.ones((32,), jnp.float32),
        w2=jax.random.normal(ks[3], (64, 32, 3, 3), jnp.float32) * (1.0 / (3.0 * 32.0 ** 0.5)),
        b2=jax.random.normal(ks[4], (64,), jnp.float32) * 0.1,
        g2=jnp.ones((64,), jnp.float32), be2=jnp.zeros((64,), jnp.float32),
        m2=jnp.zeros((64,), jnp.float32), v2=jnp.ones((64,), jnp.float32),
        # fc weights stored as (in, out)  ==  PyTorch weight.T
        fw1=jax.random.normal(ks[5], (64 * 6 * 6, 600), jnp.float32) / (2304.0 ** 0.5),
        fb1=jax.random.normal(ks[6], (600,), jnp.float32) * 0.05,
        fw2=jax.random.normal(ks[7], (600, 120), jnp.float32) / (600.0 ** 0.5),
        fb2=jax.random.normal(ks[8], (120,), jnp.float32) * 0.05,
        fw3=jax.random.normal(ks[9], (120, 10), jnp.float32) / (120.0 ** 0.5),
        fb3=jax.random.normal(ks[10], (10,), jnp.float32) * 0.05,
    )

    out = jax.jit(forward_pallas)(x, params)
    out = jax.block_until_ready(out)
    assert out.shape == (B, 10), out.shape
    assert bool(jnp.all(jnp.isfinite(out)))

    ref = forward_reference(x, params)
    assert bool(jnp.allclose(out, ref, rtol=2e-3, atol=2e-3)), (out, ref)

    print("KERNEL_OK")
</pallas_src>

<mosaic_0001>
module attributes {stable_mosaic.version = 11 : i64} {
  func.func @_fused_cnn_kernel(%arg0: i32, %arg1: memref<30x2x30xf32, #tpu.memory_space<vmem>>, %arg2: memref<32x9xf32, #tpu.memory_space<vmem>>, %arg3: memref<32x1xf32, #tpu.memory_space<vmem>>, %arg4: memref<64x288xf32, #tpu.memory_space<vmem>>, %arg5: memref<64x1xf32, #tpu.memory_space<vmem>>, %arg6: memref<2304x600xf32, #tpu.memory_space<vmem>>, %arg7: memref<1x600xf32, #tpu.memory_space<vmem>>, %arg8: memref<600x120xf32, #tpu.memory_space<vmem>>, %arg9: memref<1x120xf32, #tpu.memory_space<vmem>>, %arg10: memref<120x10xf32, #tpu.memory_space<vmem>>, %arg11: memref<1x10xf32, #tpu.memory_space<vmem>>, %arg12: memref<2x10xf32, #tpu.memory_space<vmem>>, %arg13: memref<14x32x28xf32, #tpu.memory_space<vmem>>, %arg14: memref<6x12x64xf32, #tpu.memory_space<vmem>>) attributes {dimension_semantics = [#tpu.dimension_semantics<parallel>], iteration_bounds = array<i64: 1>, scalar_prefetch = 0 : i64, scratch_operands = 2 : i64, tpu.core_type = #tpu.core_type<tc>, window_params = [{transform_indices = @transform_0, window_bounds = array<i64: 30, 2, 30>}, {pipeline_mode = #tpu.pipeline_mode<synchronous>, transform_indices = @transform_1, window_bounds = array<i64: 32, 9>}, {pipeline_mode = #tpu.pipeline_mode<synchronous>, transform_indices = @transform_2, window_bounds = array<i64: 32, 1>}, {pipeline_mode = #tpu.pipeline_mode<synchronous>, transform_indices = @transform_3, window_bounds = array<i64: 64, 288>}, {pipeline_mode = #tpu.pipeline_mode<synchronous>, transform_indices = @transform_4, window_bounds = array<i64: 64, 1>}, {pipeline_mode = #tpu.pipeline_mode<synchronous>, transform_indices = @transform_5, window_bounds = array<i64: 2304, 600>}, {pipeline_mode = #tpu.pipeline_mode<synchronous>, transform_indices = @transform_6, window_bounds = array<i64: 1, 600>}, {pipeline_mode = #tpu.pipeline_mode<synchronous>, transform_indices = @transform_7, window_bounds = array<i64: 600, 120>}, {pipeline_mode = #tpu.pipeline_mode<synchronous>, transform_indices = @transform_8, window_bounds = array<i64: 1, 120>}, {pipeline_mode = #tpu.pipeline_mode<synchronous>, transform_indices = @transform_9, window_bounds = array<i64: 120, 10>}, {pipeline_mode = #tpu.pipeline_mode<synchronous>, transform_indices = @transform_10, window_bounds = array<i64: 1, 10>}, {transform_indices = @transform_11, window_bounds = array<i64: 2, 10>}]} {
    %c0 = arith.constant 0 : index
    %c0_0 = arith.constant 0 : index
    %0 = vector.load %arg2[%c0, %c0_0] : memref<32x9xf32, #tpu.memory_space<vmem>>, vector<32x9xf32>
    %c0_1 = arith.constant 0 : index
    %c0_2 = arith.constant 0 : index
    %1 = vector.load %arg3[%c0_1, %c0_2] : memref<32x1xf32, #tpu.memory_space<vmem>>, vector<32x1xf32>
    %c0_3 = arith.constant 0 : index
    %c0_4 = arith.constant 0 : index
    %2 = vector.load %arg4[%c0_3, %c0_4] : memref<64x288xf32, #tpu.memory_space<vmem>>, vector<64x288xf32>
    %c0_5 = arith.constant 0 : index
    %c0_6 = arith.constant 0 : index
    %3 = vector.load %arg5[%c0_5, %c0_6] : memref<64x1xf32, #tpu.memory_space<vmem>>, vector<64x1xf32>
    %4 = tpu.iota {dimensions = array<i32: 0>} : vector<56x28xi32>
    %5 = tpu.iota {dimensions = array<i32: 1>} : vector<56x28xi32>
    %c2_i32 = arith.constant 2 : i32
    %6 = vector.broadcast %c2_i32 : i32 to vector<56x28xi32>
    %7 = arith.muli %6, %5 : vector<56x28xi32>
    %8 = arith.cmpi eq, %4, %7 : vector<56x28xi32>
    %9 = arith.extui %8 : vector<56x28xi1> to vector<56x28xi32>
    %10 = arith.sitofp %9 : vector<56x28xi32> to vector<56x28xf32>
    %c2_i32_7 = arith.constant 2 : i32
    %11 = vector.broadcast %c2_i32_7 : i32 to vector<56x28xi32>
    %12 = arith.muli %11, %5 : vector<56x28xi32>
    %c1_i32 = arith.constant 1 : i32
    %13 = vector.broadcast %c1_i32 : i32 to vector<56x28xi32>
    %14 = arith.addi %12, %13 : vector<56x28xi32>
    %15 = arith.cmpi eq, %4, %14 : vector<56x28xi32>
    %16 = arith.extui %15 : vector<56x28xi1> to vector<56x28xi32>
    %17 = arith.sitofp %16 : vector<56x28xi32> to vector<56x28xf32>
    %18 = tpu.iota {dimensions = array<i32: 0>} : vector<24x12xi32>
    %19 = tpu.iota {dimensions = array<i32: 1>} : vector<24x12xi32>
    %c2_i32_8 = arith.constant 2 : i32
    %20 = vector.broadcast %c2_i32_8 : i32 to vector<24x12xi32>
    %21 = arith.muli %20, %19 : vector<24x12xi32>
    %22 = arith.cmpi eq, %18, %21 : vector<24x12xi32>
    %23 = arith.extui %22 : vector<24x12xi1> to vector<24x12xi32>
    %24 = arith.sitofp %23 : vector<24x12xi32> to vector<24x12xf32>
    %c2_i32_9 = arith.constant 2 : i32
    %25 = vector.broadcast %c2_i32_9 : i32 to vector<24x12xi32>
    %26 = arith.muli %25, %19 : vector<24x12xi32>
    %c1_i32_10 = arith.constant 1 : i32
    %27 = vector.broadcast %c1_i32_10 : i32 to vector<24x12xi32>
    %28 = arith.addi %26, %27 : vector<24x12xi32>
    %29 = arith.cmpi eq, %18, %28 : vector<24x12xi32>
    %30 = arith.extui %29 : vector<24x12xi1> to vector<24x12xi32>
    %31 = arith.sitofp %30 : vector<24x12xi32> to vector<24x12xf32>
    %c0_i32 = arith.constant 0 : i32
    %c14_i32 = arith.constant 14 : i32
    %32 = arith.addi %c0_i32, %c14_i32 : i32
    %c1_i32_11 = arith.constant 1 : i32
    scf.for %arg15 = %c0_i32 to %32 step %c1_i32_11  : i32 {
      %c2_i32_62 = arith.constant 2 : i32
      %155 = arith.muli %c2_i32_62, %arg15 : i32
      %156 = arith.index_cast %155 : i32 to index
      %c0_63 = arith.constant 0 : index
      %c0_64 = arith.constant 0 : index
      %157 = vector.load %arg1[%156, %c0_63, %c0_64] : memref<30x2x30xf32, #tpu.memory_space<vmem>>, vector<3x2x30xf32>
      %158 = vector.extract_strided_slice %157 {offsets = [0, 0, 0], sizes = [1, 1, 28], strides = [1, 1, 1]} : vector<3x2x30xf32> to vector<1x1x28xf32>
      %159 = vector.shape_cast %158 : vector<1x1x28xf32> to vector<1x28xf32>
      %160 = vector.extract_strided_slice %157 {offsets = [0, 1, 0], sizes = [1, 1, 28], strides = [1, 1, 1]} : vector<3x2x30xf32> to vector<1x1x28xf32>
      %161 = vector.shape_cast %160 : vector<1x1x28xf32> to vector<1x28xf32>
      %162 = tpu.concatenate %159, %161 in 1 : vector<1x28xf32>, vector<1x28xf32> -> vector<1x56xf32>
      %163 = vector.extract_strided_slice %157 {offsets = [0, 0, 1], sizes = [1, 1, 28], strides = [1, 1, 1]} : vector<3x2x30xf32> to vector<1x1x28xf32>
      %164 = vector.shape_cast %163 : vector<1x1x28xf32> to vector<1x28xf32>
      %165 = vector.extract_strided_slice %157 {offsets = [0, 1, 1], sizes = [1, 1, 28], strides = [1, 1, 1]} : vector<3x2x30xf32> to vector<1x1x28xf32>
      %166 = vector.shape_cast %165 : vector<1x1x28xf32> to vector<1x28xf32>
      %167 = tpu.concatenate %164, %166 in 1 : vector<1x28xf32>, vector<1x28xf32> -> vector<1x56xf32>
      %168 = vector.extract_strided_slice %157 {offsets = [0, 0, 2], sizes = [1, 1, 28], strides = [1, 1, 1]} : vector<3x2x30xf32> to vector<1x1x28xf32>
      %169 = vector.shape_cast %168 : vector<1x1x28xf32> to vector<1x28xf32>
      %170 = vector.extract_strided_slice %157 {offsets = [0, 1, 2], sizes = [1, 1, 28], strides = [1, 1, 1]} : vector<3x2x30xf32> to vector<1x1x28xf32>
      %171 = vector.shape_cast %170 : vector<1x1x28xf32> to vector<1x28xf32>
      %172 = tpu.concatenate %169, %171 in 1 : vector<1x28xf32>, vector<1x28xf32> -> vector<1x56xf32>
      %173 = vector.extract_strided_slice %157 {offsets = [1, 0, 0], sizes = [1, 1, 28], strides = [1, 1, 1]} : vector<3x2x30xf32> to vector<1x1x28xf32>
      %174 = vector.shape_cast %173 : vector<1x1x28xf32> to vector<1x28xf32>
      %175 = vector.extract_strided_slice %157 {offsets = [1, 1, 0], sizes = [1, 1, 28], strides = [1, 1, 1]} : vector<3x2x30xf32> to vector<1x1x28xf32>
      %176 = vector.shape_cast %175 : vector<1x1x28xf32> to vector<1x28xf32>
      %177 = tpu.concatenate %174, %176 in 1 : vector<1x28xf32>, vector<1x28xf32> -> vector<1x56xf32>
      %178 = vector.extract_strided_slice %157 {offsets = [1, 0, 1], sizes = [1, 1, 28], strides = [1, 1, 1]} : vector<3x2x30xf32> to vector<1x1x28xf32>
      %179 = vector.shape_cast %178 : vector<1x1x28xf32> to vector<1x28xf32>
      %180 = vector.extract_strided_slice %157 {offsets = [1, 1, 1], sizes = [1, 1, 28], strides = [1, 1, 1]} : vector<3x2x30xf32> to vector<1x1x28xf32>
      %181 = vector.shape_cast %180 : vector<1x1x28xf32> to vector<1x28xf32>
      %182 = tpu.concatenate %179, %181 in 1 : vector<1x28xf32>, vector<1x28xf32> -> vector<1x56xf32>
      %183 = vector.extract_strided_slice %157 {offsets = [1, 0, 2], sizes = [1, 1, 28], strides = [1, 1, 1]} : vector<3x2x30xf32> to vector<1x1x28xf32>
      %184 = vector.shape_cast %183 : vector<1x1x28xf32> to vector<1x28xf32>
      %185 = vector.extract_strided_slice %157 {offsets = [1, 1, 2], sizes = [1, 1, 28], strides = [1, 1, 1]} : vector<3x2x30xf32> to vector<1x1x28xf32>
      %186 = vector.shape_cast %185 : vector<1x1x28xf32> to vector<1x28xf32>
      %187 = tpu.concatenate %184, %186 in 1 : vector<1x28xf32>, vector<1x28xf32> -> vector<1x56xf32>
      %188 = vector.extract_strided_slice %157 {offsets = [2, 0, 0], sizes = [1, 1, 28], strides = [1, 1, 1]} : vector<3x2x30xf32> to vector<1x1x28xf32>
      %189 = vector.shape_cast %188 : vector<1x1x28xf32> to vector<1x28xf32>
      %190 = vector.extract_strided_slice %157 {offsets = [2, 1, 0], sizes = [1, 1, 28], strides = [1, 1, 1]} : vector<3x2x30xf32> to vector<1x1x28xf32>
      %191 = vector.shape_cast %190 : vector<1x1x28xf32> to vector<1x28xf32>
      %192 = tpu.concatenate %189, %191 in 1 : vector<1x28xf32>, vector<1x28xf32> -> vector<1x56xf32>
      %193 = vector.extract_strided_slice %157 {offsets = [2, 0, 1], sizes = [1, 1, 28], strides = [1, 1, 1]} : vector<3x2x30xf32> to vector<1x1x28xf32>
      %194 = vector.shape_cast %193 : vector<1x1x28xf32> to vector<1x28xf32>
      %195 = vector.extract_strided_slice %157 {offsets = [2, 1, 1], sizes = [1, 1, 28], strides = [1, 1, 1]} : vector<3x2x30xf32> to vector<1x1x28xf32>
      %196 = vector.shape_cast %195 : vector<1x1x28xf32> to vector<1x28xf32>
      %197 = tpu.concatenate %194, %196 in 1 : vector<1x28xf32>, vector<1x28xf32> -> vector<1x56xf32>
      %198 = vector.extract_strided_slice %157 {offsets = [2, 0, 2], sizes = [1, 1, 28], strides = [1, 1, 1]} : vector<3x2x30xf32> to vector<1x1x28xf32>
      %199 = vector.shape_cast %198 : vector<1x1x28xf32> to vector<1x28xf32>
      %200 = vector.extract_strided_slice %157 {offsets = [2, 1, 2], sizes = [1, 1, 28], strides = [1, 1, 1]} : vector<3x2x30xf32> to vector<1x1x28xf32>
      %201 = vector.shape_cast %200 : vector<1x1x28xf32> to vector<1x28xf32>
      %202 = tpu.concatenate %199, %201 in 1 : vector<1x28xf32>, vector<1x28xf32> -> vector<1x56xf32>
      %203 = tpu.concatenate %162, %167, %172, %177, %182, %187, %192, %197, %202 in 0 : vector<1x56xf32>, vector<1x56xf32>, vector<1x56xf32>, vector<1x56xf32>, vector<1x56xf32>, vector<1x56xf32>, vector<1x56xf32>, vector<1x56xf32>, vector<1x56xf32> -> vector<9x56xf32>
      %cst_65 = arith.constant dense<0.000000e+00> : vector<32x56xf32>
      %204 = tpu.matmul %0, %203, %cst_65 {dimension_numbers = #tpu.dot_dimension_numbers<[1], [0], [0], [1], [0, 0, 1, 1], [], []>} : vector<32x9xf32>, vector<9x56xf32>, vector<32x56xf32> -> vector<32x56xf32>
      %c2_i32_66 = arith.constant 2 : i32
      %205 = arith.muli %c2_i32_66, %arg15 : i32
      %c1_i32_67 = arith.constant 1 : i32
      %206 = arith.addi %205, %c1_i32_67 : i32
      %207 = arith.index_cast %206 : i32 to index
      %c0_68 = arith.constant 0 : index
      %c0_69 = arith.constant 0 : index
      %208 = vector.load %arg1[%207, %c0_68, %c0_69] : memref<30x2x30xf32, #tpu.memory_space<vmem>>, vector<3x2x30xf32>
      %209 = vector.extract_strided_slice %208 {offsets = [0, 0, 0], sizes = [1, 1, 28], strides = [1, 1, 1]} : vector<3x2x30xf32> to vector<1x1x28xf32>
      %210 = vector.shape_cast %209 : vector<1x1x28xf32> to vector<1x28xf32>
      %211 = vector.extract_strided_slice %208 {offsets = [0, 1, 0], sizes = [1, 1, 28], strides = [1, 1, 1]} : vector<3x2x30xf32> to vector<1x1x28xf32>
      %212 = vector.shape_cast %211 : vector<1x1x28xf32> to vector<1x28xf32>
      %213 = tpu.concatenate %210, %212 in 1 : vector<1x28xf32>, vector<1x28xf32> -> vector<1x56xf32>
      %214 = vector.extract_strided_slice %208 {offsets = [0, 0, 1], sizes = [1, 1, 28], strides = [1, 1, 1]} : vector<3x2x30xf32> to vector<1x1x28xf32>
      %215 = vector.shape_cast %214 : vector<1x1x28xf32> to vector<1x28xf32>
      %216 = vector.extract_strided_slice %208 {offsets = [0, 1, 1], sizes = [1, 1, 28], strides = [1, 1, 1]} : vector<3x2x30xf32> to vector<1x1x28xf32>
      %217 = vector.shape_cast %216 : vector<1x1x28xf32> to vector<1x28xf32>
      %218 = tpu.concatenate %215, %217 in 1 : vector<1x28xf32>, vector<1x28xf32> -> vector<1x56xf32>
      %219 = vector.extract_strided_slice %208 {offsets = [0, 0, 2], sizes = [1, 1, 28], strides = [1, 1, 1]} : vector<3x2x30xf32> to vector<1x1x28xf32>
      %220 = vector.shape_cast %219 : vector<1x1x28xf32> to vector<1x28xf32>
      %221 = vector.extract_strided_slice %208 {offsets = [0, 1, 2], sizes = [1, 1, 28], strides = [1, 1, 1]} : vector<3x2x30xf32> to vector<1x1x28xf32>
      %222 = vector.shape_cast %221 : vector<1x1x28xf32> to vector<1x28xf32>
      %223 = tpu.concatenate %220, %222 in 1 : vector<1x28xf32>, vector<1x28xf32> -> vector<1x56xf32>
      %224 = vector.extract_strided_slice %208 {offsets = [1, 0, 0], sizes = [1, 1, 28], strides = [1, 1, 1]} : vector<3x2x30xf32> to vector<1x1x28xf32>
      %225 = vector.shape_cast %224 : vector<1x1x28xf32> to vector<1x28xf32>
      %226 = vector.extract_strided_slice %208 {offsets = [1, 1, 0], sizes = [1, 1, 28], strides = [1, 1, 1]} : vector<3x2x30xf32> to vector<1x1x28xf32>
      %227 = vector.shape_cast %226 : vector<1x1x28xf32> to vector<1x28xf32>
      %228 = tpu.concatenate %225, %227 in 1 : vector<1x28xf32>, vector<1x28xf32> -> vector<1x56xf32>
      %229 = vector.extract_strided_slice %208 {offsets = [1, 0, 1], sizes = [1, 1, 28], strides = [1, 1, 1]} : vector<3x2x30xf32> to vector<1x1x28xf32>
      %230 = vector.shape_cast %229 : vector<1x1x28xf32> to vector<1x28xf32>
      %231 = vector.extract_strided_slice %208 {offsets = [1, 1, 1], sizes = [1, 1, 28], strides = [1, 1, 1]} : vector<3x2x30xf32> to vector<1x1x28xf32>
      %232 = vector.shape_cast %231 : vector<1x1x28xf32> to vector<1x28xf32>
      %233 = tpu.concatenate %230, %232 in 1 : vector<1x28xf32>, vector<1x28xf32> -> vector<1x56xf32>
      %234 = vector.extract_strided_slice %208 {offsets = [1, 0, 2], sizes = [1, 1, 28], strides = [1, 1, 1]} : vector<3x2x30xf32> to vector<1x1x28xf32>
      %235 = vector.shape_cast %234 : vector<1x1x28xf32> to vector<1x28xf32>
      %236 = vector.extract_strided_slice %208 {offsets = [1, 1, 2], sizes = [1, 1, 28], strides = [1, 1, 1]} : vector<3x2x30xf32> to vector<1x1x28xf32>
      %237 = vector.shape_cast %236 : vector<1x1x28xf32> to vector<1x28xf32>
      %238 = tpu.concatenate %235, %237 in 1 : vector<1x28xf32>, vector<1x28xf32> -> vector<1x56xf32>
      %239 = vector.extract_strided_slice %208 {offsets = [2, 0, 0], sizes = [1, 1, 28], strides = [1, 1, 1]} : vector<3x2x30xf32> to vector<1x1x28xf32>
      %240 = vector.shape_cast %239 : vector<1x1x28xf32> to vector<1x28xf32>
      %241 = vector.extract_strided_slice %208 {offsets = [2, 1, 0], sizes = [1, 1, 28], strides = [1, 1, 1]} : vector<3x2x30xf32> to vector<1x1x28xf32>
      %242 = vector.shape_cast %241 : vector<1x1x28xf32> to vector<1x28xf32>
      %243 = tpu.concatenate %240, %242 in 1 : vector<1x28xf32>, vector<1x28xf32> -> vector<1x56xf32>
      %244 = vector.extract_strided_slice %208 {offsets = [2, 0, 1], sizes = [1, 1, 28], strides = [1, 1, 1]} : vector<3x2x30xf32> to vector<1x1x28xf32>
      %245 = vector.shape_cast %244 : vector<1x1x28xf32> to vector<1x28xf32>
      %246 = vector.extract_strided_slice %208 {offsets = [2, 1, 1], sizes = [1, 1, 28], strides = [1, 1, 1]} : vector<3x2x30xf32> to vector<1x1x28xf32>
      %247 = vector.shape_cast %246 : vector<1x1x28xf32> to vector<1x28xf32>
      %248 = tpu.concatenate %245, %247 in 1 : vector<1x28xf32>, vector<1x28xf32> -> vector<1x56xf32>
      %249 = vector.extract_strided_slice %208 {offsets = [2, 0, 2], sizes = [1, 1, 28], strides = [1, 1, 1]} : vector<3x2x30xf32> to vector<1x1x28xf32>
      %250 = vector.shape_cast %249 : vector<1x1x28xf32> to vector<1x28xf32>
      %251 = vector.extract_strided_slice %208 {offsets = [2, 1, 2], sizes = [1, 1, 28], strides = [1, 1, 1]} : vector<3x2x30xf32> to vector<1x1x28xf32>
      %252 = vector.shape_cast %251 : vector<1x1x28xf32> to vector<1x28xf32>
      %253 = tpu.concatenate %250, %252 in 1 : vector<1x28xf32>, vector<1x28xf32> -> vector<1x56xf32>
      %254 = tpu.concatenate %213, %218, %223, %228, %233, %238, %243, %248, %253 in 0 : vector<1x56xf32>, vector<1x56xf32>, vector<1x56xf32>, vector<1x56xf32>, vector<1x56xf32>, vector<1x56xf32>, vector<1x56xf32>, vector<1x56xf32>, vector<1x56xf32> -> vector<9x56xf32>
      %cst_70 = arith.constant dense<0.000000e+00> : vector<32x56xf32>
      %255 = tpu.matmul %0, %254, %cst_70 {dimension_numbers = #tpu.dot_dimension_numbers<[1], [0], [0], [1], [0, 0, 1, 1], [], []>} : vector<32x9xf32>, vector<9x56xf32>, vector<32x56xf32> -> vector<32x56xf32>
      %256 = arith.maximumf %204, %255 : vector<32x56xf32>
      %cst_71 = arith.constant dense<0.000000e+00> : vector<32x28xf32>
      %257 = tpu.matmul %256, %10, %cst_71 {dimension_numbers = #tpu.dot_dimension_numbers<[1], [0], [0], [1], [0, 0, 1, 1], [], []>} : vector<32x56xf32>, vector<56x28xf32>, vector<32x28xf32> -> vector<32x28xf32>
      %cst_72 = arith.constant dense<0.000000e+00> : vector<32x28xf32>
      %258 = tpu.matmul %256, %17, %cst_72 {dimension_numbers = #tpu.dot_dimension_numbers<[1], [0], [0], [1], [0, 0, 1, 1], [], []>} : vector<32x56xf32>, vector<56x28xf32>, vector<32x28xf32> -> vector<32x28xf32>
      %259 = arith.maximumf %257, %258 : vector<32x28xf32>
      %260 = vector.broadcast %1 : vector<32x1xf32> to vector<32x28xf32>
      %261 = arith.addf %259, %260 : vector<32x28xf32>
      %cst_73 = arith.constant 0.000000e+00 : f32
      %262 = vector.broadcast %cst_73 : f32 to vector<32x28xf32>
      %263 = arith.maximumf %261, %262 : vector<32x28xf32>
      %264 = arith.index_cast %arg15 : i32 to index
      %c0_74 = arith.constant 0 : index
      %c0_75 = arith.constant 0 : index
      %265 = vector.load %arg13[%264, %c0_74, %c0_75] : memref<14x32x28xf32, #tpu.memory_space<vmem>>, vector<1x32x28xf32>
      %266 = vector.shape_cast %265 : vector<1x32x28xf32> to vector<32x28xf32>
      %267 = vector.shape_cast %263 : vector<32x28xf32> to vector<1x32x28xf32>
      tpu.vector_store %arg13[%264, %c0_74, %c0_75], %267 {strides = array<i32>} : memref<14x32x28xf32, #tpu.memory_space<vmem>>, vector<1x32x28xf32>,
    }
    %c14_i32_12 = arith.constant 14 : i32
    %c0_i32_13 = arith.constant 0 : i32
    %c6_i32 = arith.constant 6 : i32
    %33 = arith.addi %c0_i32_13, %c6_i32 : i32
    %c1_i32_14 = arith.constant 1 : i32
    scf.for %arg15 = %c0_i32_13 to %33 step %c1_i32_14  : i32 {
      %c2_i32_62 = arith.constant 2 : i32
      %155 = arith.muli %c2_i32_62, %arg15 : i32
      %156 = arith.index_cast %155 : i32 to index
      %c0_63 = arith.constant 0 : index
      %c0_64 = arith.constant 0 : index
      %157 = vector.load %arg13[%156, %c0_63, %c0_64] : memref<14x32x28xf32, #tpu.memory_space<vmem>>, vector<3x32x28xf32>
      %158 = vector.extract_strided_slice %157 {offsets = [0, 0, 0], sizes = [1, 32, 12], strides = [1, 1, 1]} : vector<3x32x28xf32> to vector<1x32x12xf32>
      %159 = vector.shape_cast %158 : vector<1x32x12xf32> to vector<32x12xf32>
      %160 = vector.extract_strided_slice %157 {offsets = [0, 0, 14], sizes = [1, 32, 12], strides = [1, 1, 1]} : vector<3x32x28xf32> to vector<1x32x12xf32>
      %161 = vector.shape_cast %160 : vector<1x32x12xf32> to vector<32x12xf32>
      %162 = tpu.concatenate %159, %161 in 1 : vector<32x12xf32>, vector<32x12xf32> -> vector<32x24xf32>
      %163 = vector.extract_strided_slice %157 {offsets = [0, 0, 1], sizes = [1, 32, 12], strides = [1, 1, 1]} : vector<3x32x28xf32> to vector<1x32x12xf32>
      %164 = vector.shape_cast %163 : vector<1x32x12xf32> to vector<32x12xf32>
      %165 = vector.extract_strided_slice %157 {offsets = [0, 0, 15], sizes = [1, 32, 12], strides = [1, 1, 1]} : vector<3x32x28xf32> to vector<1x32x12xf32>
      %166 = vector.shape_cast %165 : vector<1x32x12xf32> to vector<32x12xf32>
      %167 = tpu.concatenate %164, %166 in 1 : vector<32x12xf32>, vector<32x12xf32> -> vector<32x24xf32>
      %168 = vector.extract_strided_slice %157 {offsets = [0, 0, 2], sizes = [1, 32, 12], strides = [1, 1, 1]} : vector<3x32x28xf32> to vector<1x32x12xf32>
      %169 = vector.shape_cast %168 : vector<1x32x12xf32> to vector<32x12xf32>
      %170 = vector.extract_strided_slice %157 {offsets = [0, 0, 16], sizes = [1, 32, 12], strides = [1, 1, 1]} : vector<3x32x28xf32> to vector<1x32x12xf32>
      %171 = vector.shape_cast %170 : vector<1x32x12xf32> to vector<32x12xf32>
      %172 = tpu.concatenate %169, %171 in 1 : vector<32x12xf32>, vector<32x12xf32> -> vector<32x24xf32>
      %173 = vector.extract_strided_slice %157 {offsets = [1, 0, 0], sizes = [1, 32, 12], strides = [1, 1, 1]} : vector<3x32x28xf32> to vector<1x32x12xf32>
      %174 = vector.shape_cast %173 : vector<1x32x12xf32> to vector<32x12xf32>
      %175 = vector.extract_strided_slice %157 {offsets = [1, 0, 14], sizes = [1, 32, 12], strides = [1, 1, 1]} : vector<3x32x28xf32> to vector<1x32x12xf32>
      %176 = vector.shape_cast %175 : vector<1x32x12xf32> to vector<32x12xf32>
      %177 = tpu.concatenate %174, %176 in 1 : vector<32x12xf32>, vector<32x12xf32> -> vector<32x24xf32>
      %178 = vector.extract_strided_slice %157 {offsets = [1, 0, 1], sizes = [1, 32, 12], strides = [1, 1, 1]} : vector<3x32x28xf32> to vector<1x32x12xf32>
      %179 = vector.shape_cast %178 : vector<1x32x12xf32> to vector<32x12xf32>
      %180 = vector.extract_strided_slice %157 {offsets = [1, 0, 15], sizes = [1, 32, 12], strides = [1, 1, 1]} : vector<3x32x28xf32> to vector<1x32x12xf32>
      %181 = vector.shape_cast %180 : vector<1x32x12xf32> to vector<32x12xf32>
      %182 = tpu.concatenate %179, %181 in 1 : vector<32x12xf32>, vector<32x12xf32> -> vector<32x24xf32>
      %183 = vector.extract_strided_slice %157 {offsets = [1, 0, 2], sizes = [1, 32, 12], strides = [1, 1, 1]} : vector<3x32x28xf32> to vector<1x32x12xf32>
      %184 = vector.shape_cast %183 : vector<1x32x12xf32> to vector<32x12xf32>
      %185 = vector.extract_strided_slice %157 {offsets = [1, 0, 16], sizes = [1, 32, 12], strides = [1, 1, 1]} : vector<3x32x28xf32> to vector<1x32x12xf32>
      %186 = vector.shape_cast %185 : vector<1x32x12xf32> to vector<32x12xf32>
      %187 = tpu.concatenate %184, %186 in 1 : vector<32x12xf32>, vector<32x12xf32> -> vector<32x24xf32>
      %188 = vector.extract_strided_slice %157 {offsets = [2, 0, 0], sizes = [1, 32, 12], strides = [1, 1, 1]} : vector<3x32x28xf32> to vector<1x32x12xf32>
      %189 = vector.shape_cast %188 : vector<1x32x12xf32> to vector<32x12xf32>
      %190 = vector.extract_strided_slice %157 {offsets = [2, 0, 14], sizes = [1, 32, 12], strides = [1, 1, 1]} : vector<3x32x28xf32> to vector<1x32x12xf32>
      %191 = vector.shape_cast %190 : vector<1x32x12xf32> to vector<32x12xf32>
      %192 = tpu.concatenate %189, %191 in 1 : vector<32x12xf32>, vector<32x12xf32> -> vector<32x24xf32>
      %193 = vector.extract_strided_slice %157 {offsets = [2, 0, 1], sizes = [1, 32, 12], strides = [1, 1, 1]} : vector<3x32x28xf32> to vector<1x32x12xf32>
      %194 = vector.shape_cast %193 : vector<1x32x12xf32> to vector<32x12xf32>
      %195 = vector.extract_strided_slice %157 {offsets = [2, 0, 15], sizes = [1, 32, 12], strides = [1, 1, 1]} : vector<3x32x28xf32> to vector<1x32x12xf32>
      %196 = vector.shape_cast %195 : vector<1x32x12xf32> to vector<32x12xf32>
      %197 = tpu.concatenate %194, %196 in 1 : vector<32x12xf32>, vector<32x12xf32> -> vector<32x24xf32>
      %198 = vector.extract_strided_slice %157 {offsets = [2, 0, 2], sizes = [1, 32, 12], strides = [1, 1, 1]} : vector<3x32x28xf32> to vector<1x32x12xf32>
      %199 = vector.shape_cast %198 : vector<1x32x12xf32> to vector<32x12xf32>
      %200 = vector.extract_strided_slice %157 {offsets = [2, 0, 16], sizes = [1, 32, 12], strides = [1, 1, 1]} : vector<3x32x28xf32> to vector<1x32x12xf32>
      %201 = vector.shape_cast %200 : vector<1x32x12xf32> to vector<32x12xf32>
      %202 = tpu.concatenate %199, %201 in 1 : vector<32x12xf32>, vector<32x12xf32> -> vector<32x24xf32>
      %203 = tpu.concatenate %162, %167, %172, %177, %182, %187, %192, %197, %202 in 0 : vector<32x24xf32>, vector<32x24xf32>, vector<32x24xf32>, vector<32x24xf32>, vector<32x24xf32>, vector<32x24xf32>, vector<32x24xf32>, vector<32x24xf32>, vector<32x24xf32> -> vector<288x24xf32>
      %cst_65 = arith.constant dense<0.000000e+00> : vector<64x24xf32>
      %204 = tpu.matmul %2, %203, %cst_65 {dimension_numbers = #tpu.dot_dimension_numbers<[1], [0], [0], [1], [0, 0, 1, 1], [], []>} : vector<64x288xf32>, vector<288x24xf32>, vector<64x24xf32> -> vector<64x24xf32>
      %c2_i32_66 = arith.constant 2 : i32
      %205 = arith.muli %c2_i32_66, %arg15 : i32
      %c1_i32_67 = arith.constant 1 : i32
      %206 = arith.addi %205, %c1_i32_67 : i32
      %207 = arith.index_cast %206 : i32 to index
      %c0_68 = arith.constant 0 : index
      %c0_69 = arith.constant 0 : index
      %208 = vector.load %arg13[%207, %c0_68, %c0_69] : memref<14x32x28xf32, #tpu.memory_space<vmem>>, vector<3x32x28xf32>
      %209 = vector.extract_strided_slice %208 {offsets = [0, 0, 0], sizes = [1, 32, 12], strides = [1, 1, 1]} : vector<3x32x28xf32> to vector<1x32x12xf32>
      %210 = vector.shape_cast %209 : vector<1x32x12xf32> to vector<32x12xf32>
      %211 = vector.extract_strided_slice %208 {offsets = [0, 0, 14], sizes = [1, 32, 12], strides = [1, 1, 1]} : vector<3x32x28xf32> to vector<1x32x12xf32>
      %212 = vector.shape_cast %211 : vector<1x32x12xf32> to vector<32x12xf32>
      %213 = tpu.concatenate %210, %212 in 1 : vector<32x12xf32>, vector<32x12xf32> -> vector<32x24xf32>
      %214 = vector.extract_strided_slice %208 {offsets = [0, 0, 1], sizes = [1, 32, 12], strides = [1, 1, 1]} : vector<3x32x28xf32> to vector<1x32x12xf32>
      %215 = vector.shape_cast %214 : vector<1x32x12xf32> to vector<32x12xf32>
      %216 = vector.extract_strided_slice %208 {offsets = [0, 0, 15], sizes = [1, 32, 12], strides = [1, 1, 1]} : vector<3x32x28xf32> to vector<1x32x12xf32>
      %217 = vector.shape_cast %216 : vector<1x32x12xf32> to vector<32x12xf32>
      %218 = tpu.concatenate %215, %217 in 1 : vector<32x12xf32>, vector<32x12xf32> -> vector<32x24xf32>
      %219 = vector.extract_strided_slice %208 {offsets = [0, 0, 2], sizes = [1, 32, 12], strides = [1, 1, 1]} : vector<3x32x28xf32> to vector<1x32x12xf32>
      %220 = vector.shape_cast %219 : vector<1x32x12xf32> to vector<32x12xf32>
      %221 = vector.extract_strided_slice %208 {offsets = [0, 0, 16], sizes = [1, 32, 12], strides = [1, 1, 1]} : vector<3x32x28xf32> to vector<1x32x12xf32>
      %222 = vector.shape_cast %221 : vector<1x32x12xf32> to vector<32x12xf32>
      %223 = tpu.concatenate %220, %222 in 1 : vector<32x12xf32>, vector<32x12xf32> -> vector<32x24xf32>
      %224 = vector.extract_strided_slice %208 {offsets = [1, 0, 0], sizes = [1, 32, 12], strides = [1, 1, 1]} : vector<3x32x28xf32> to vector<1x32x12xf32>
      %225 = vector.shape_cast %224 : vector<1x32x12xf32> to vector<32x12xf32>
      %226 = vector.extract_strided_slice %208 {offsets = [1, 0, 14], sizes = [1, 32, 12], strides = [1, 1, 1]} : vector<3x32x28xf32> to vector<1x32x12xf32>
      %227 = vector.shape_cast %226 : vector<1x32x12xf32> to vector<32x12xf32>
      %228 = tpu.concatenate %225, %227 in 1 : vector<32x12xf32>, vector<32x12xf32> -> vector<32x24xf32>
      %229 = vector.extract_strided_slice %208 {offsets = [1, 0, 1], sizes = [1, 32, 12], strides = [1, 1, 1]} : vector<3x32x28xf32> to vector<1x32x12xf32>
      %230 = vector.shape_cast %229 : vector<1x32x12xf32> to vector<32x12xf32>
      %231 = vector.extract_strided_slice %208 {offsets = [1, 0, 15], sizes = [1, 32, 12], strides = [1, 1, 1]} : vector<3x32x28xf32> to vector<1x32x12xf32>
      %232 = vector.shape_cast %231 : vector<1x32x12xf32> to vector<32x12xf32>
      %233 = tpu.concatenate %230, %232 in 1 : vector<32x12xf32>, vector<32x12xf32> -> vector<32x24xf32>
      %234 = vector.extract_strided_slice %208 {offsets = [1, 0, 2], sizes = [1, 32, 12], strides = [1, 1, 1]} : vector<3x32x28xf32> to vector<1x32x12xf32>
      %235 = vector.shape_cast %234 : vector<1x32x12xf32> to vector<32x12xf32>
      %236 = vector.extract_strided_slice %208 {offsets = [1, 0, 16], sizes = [1, 32, 12], strides = [1, 1, 1]} : vector<3x32x28xf32> to vector<1x32x12xf32>
      %237 = vector.shape_cast %236 : vector<1x32x12xf32> to vector<32x12xf32>
      %238 = tpu.concatenate %235, %237 in 1 : vector<32x12xf32>, vector<32x12xf32> -> vector<32x24xf32>
      %239 = vector.extract_strided_slice %208 {offsets = [2, 0, 0], sizes = [1, 32, 12], strides = [1, 1, 1]} : vector<3x32x28xf32> to vector<1x32x12xf32>
      %240 = vector.shape_cast %239 : vector<1x32x12xf32> to vector<32x12xf32>
      %241 = vector.extract_strided_slice %208 {offsets = [2, 0, 14], sizes = [1, 32, 12], strides = [1, 1, 1]} : vector<3x32x28xf32> to vector<1x32x12xf32>
      %242 = vector.shape_cast %241 : vector<1x32x12xf32> to vector<32x12xf32>
      %243 = tpu.concatenate %240, %242 in 1 : vector<32x12xf32>, vector<32x12xf32> -> vector<32x24xf32>
      %244 = vector.extract_strided_slice %208 {offsets = [2, 0, 1], sizes = [1, 32, 12], strides = [1, 1, 1]} : vector<3x32x28xf32> to vector<1x32x12xf32>
      %245 = vector.shape_cast %244 : vector<1x32x12xf32> to vector<32x12xf32>
      %246 = vector.extract_strided_slice %208 {offsets = [2, 0, 15], sizes = [1, 32, 12], strides = [1, 1, 1]} : vector<3x32x28xf32> to vector<1x32x12xf32>
      %247 = vector.shape_cast %246 : vector<1x32x12xf32> to vector<32x12xf32>
      %248 = tpu.concatenate %245, %247 in 1 : vector<32x12xf32>, vector<32x12xf32> -> vector<32x24xf32>
      %249 = vector.extract_strided_slice %208 {offsets = [2, 0, 2], sizes = [1, 32, 12], strides = [1, 1, 1]} : vector<3x32x28xf32> to vector<1x32x12xf32>
      %250 = vector.shape_cast %249 : vector<1x32x12xf32> to vector<32x12xf32>
      %251 = vector.extract_strided_slice %208 {offsets = [2, 0, 16], sizes = [1, 32, 12], strides = [1, 1, 1]} : vector<3x32x28xf32> to vector<1x32x12xf32>
      %252 = vector.shape_cast %251 : vector<1x32x12xf32> to vector<32x12xf32>
      %253 = tpu.concatenate %250, %252 in 1 : vector<32x12xf32>, vector<32x12xf32> -> vector<32x24xf32>
      %254 = tpu.concatenate %213, %218, %223, %228, %233, %238, %243, %248, %253 in 0 : vector<32x24xf32>, vector<32x24xf32>, vector<32x24xf32>, vector<32x24xf32>, vector<32x24xf32>, vector<32x24xf32>, vector<32x24xf32>, vector<32x24xf32>, vector<32x24xf32> -> vector<288x24xf32>
      %cst_70 = arith.constant dense<0.000000e+00> : vector<64x24xf32>
      %255 = tpu.matmul %2, %254, %cst_70 {dimension_numbers = #tpu.dot_dimension_numbers<[1], [0], [0], [1], [0, 0, 1, 1], [], []>} : vector<64x288xf32>, vector<288x24xf32>, vector<64x24xf32> -> vector<64x24xf32>
      %256 = arith.maximumf %204, %255 : vector<64x24xf32>
      %cst_71 = arith.constant dense<0.000000e+00> : vector<64x12xf32>
      %257 = tpu.matmul %256, %24, %cst_71 {dimension_numbers = #tpu.dot_dimension_numbers<[1], [0], [0], [1], [0, 0, 1, 1], [], []>} : vector<64x24xf32>, vector<24x12xf32>, vector<64x12xf32> -> vector<64x12xf32>
      %cst_72 = arith.constant dense<0.000000e+00> : vector<64x12xf32>
      %258 = tpu.matmul %256, %31, %cst_72 {dimension_numbers = #tpu.dot_dimension_numbers<[1], [0], [0], [1], [0, 0, 1, 1], [], []>} : vector<64x24xf32>, vector<24x12xf32>, vector<64x12xf32> -> vector<64x12xf32>
      %259 = arith.maximumf %257, %258 : vector<64x12xf32>
      %260 = vector.broadcast %3 : vector<64x1xf32> to vector<64x12xf32>
      %261 = arith.addf %259, %260 : vector<64x12xf32>
      %cst_73 = arith.constant 0.000000e+00 : f32
      %262 = vector.broadcast %cst_73 : f32 to vector<64x12xf32>
      %263 = arith.maximumf %261, %262 : vector<64x12xf32>
      %264 = tpu.transpose %263, [1, 0] : vector<64x12xf32> -> vector<12x64xf32>
      %265 = arith.index_cast %arg15 : i32 to index
      %c0_74 = arith.constant 0 : index
      %c0_75 = arith.constant 0 : index
      %266 = vector.load %arg14[%265, %c0_74, %c0_75] : memref<6x12x64xf32, #tpu.memory_space<vmem>>, vector<1x12x64xf32>
      %267 = vector.shape_cast %266 : vector<1x12x64xf32> to vector<12x64xf32>
      %268 = vector.shape_cast %264 : vector<12x64xf32> to vector<1x12x64xf32>
      tpu.vector_store %arg14[%265, %c0_74, %c0_75], %268 {strides = array<i32>} : memref<6x12x64xf32, #tpu.memory_space<vmem>>, vector<1x12x64xf32>,
    }
    %c6_i32_15 = arith.constant 6 : i32
    %c0_16 = arith.constant 0 : index
    %c0_17 = arith.constant 0 : index
    %c0_18 = arith.constant 0 : index
    %34 = vector.load %arg14[%c0_16, %c0_17, %c0_18] : memref<6x12x64xf32, #tpu.memory_space<vmem>>, vector<1x6x64xf32>
    %35 = vector.shape_cast %34 : vector<1x6x64xf32> to vector<6x64xf32>
    %36 = vector.extract_strided_slice %35 {offsets = [0, 0], sizes = [1, 64], strides = [1, 1]} : vector<6x64xf32> to vector<1x64xf32>
    %37 = vector.extract_strided_slice %35 {offsets = [1, 0], sizes = [1, 64], strides = [1, 1]} : vector<6x64xf32> to vector<1x64xf32>
    %38 = vector.extract_strided_slice %35 {offsets = [2, 0], sizes = [1, 64], strides = [1, 1]} : vector<6x64xf32> to vector<1x64xf32>
    %39 = vector.extract_strided_slice %35 {offsets = [3, 0], sizes = [1, 64], strides = [1, 1]} : vector<6x64xf32> to vector<1x64xf32>
    %40 = vector.extract_strided_slice %35 {offsets = [4, 0], sizes = [1, 64], strides = [1, 1]} : vector<6x64xf32> to vector<1x64xf32>
    %41 = vector.extract_strided_slice %35 {offsets = [5, 0], sizes = [1, 64], strides = [1, 1]} : vector<6x64xf32> to vector<1x64xf32>
    %c1 = arith.constant 1 : index
    %c0_19 = arith.constant 0 : index
    %c0_20 = arith.constant 0 : index
    %42 = vector.load %arg14[%c1, %c0_19, %c0_20] : memref<6x12x64xf32, #tpu.memory_space<vmem>>, vector<1x6x64xf32>
    %43 = vector.shape_cast %42 : vector<1x6x64xf32> to vector<6x64xf32>
    %44 = vector.extract_strided_slice %43 {offsets = [0, 0], sizes = [1, 64], strides = [1, 1]} : vector<6x64xf32> to vector<1x64xf32>
    %45 = vector.extract_strided_slice %43 {offsets = [1, 0], sizes = [1, 64], strides = [1, 1]} : vector<6x64xf32> to vector<1x64xf32>
    %46 = vector.extract_strided_slice %43 {offsets = [2, 0], sizes = [1, 64], strides = [1, 1]} : vector<6x64xf32> to vector<1x64xf32>
    %47 = vector.extract_strided_slice %43 {offsets = [3, 0], sizes = [1, 64], strides = [1, 1]} : vector<6x64xf32> to vector<1x64xf32>
    %48 = vector.extract_strided_slice %43 {offsets = [4, 0], sizes = [1, 64], strides = [1, 1]} : vector<6x64xf32> to vector<1x64xf32>
    %49 = vector.extract_strided_slice %43 {offsets = [5, 0], sizes = [1, 64], strides = [1, 1]} : vector<6x64xf32> to vector<1x64xf32>
    %c2 = arith.constant 2 : index
    %c0_21 = arith.constant 0 : index
    %c0_22 = arith.constant 0 : index
    %50 = vector.load %arg14[%c2, %c0_21, %c0_22] : memref<6x12x64xf32, #tpu.memory_space<vmem>>, vector<1x6x64xf32>
    %51 = vector.shape_cast %50 : vector<1x6x64xf32> to vector<6x64xf32>
    %52 = vector.extract_strided_slice %51 {offsets = [0, 0], sizes = [1, 64], strides = [1, 1]} : vector<6x64xf32> to vector<1x64xf32>
    %53 = vector.extract_strided_slice %51 {offsets = [1, 0], sizes = [1, 64], strides = [1, 1]} : vector<6x64xf32> to vector<1x64xf32>
    %54 = vector.extract_strided_slice %51 {offsets = [2, 0], sizes = [1, 64], strides = [1, 1]} : vector<6x64xf32> to vector<1x64xf32>
    %55 = vector.extract_strided_slice %51 {offsets = [3, 0], sizes = [1, 64], strides = [1, 1]} : vector<6x64xf32> to vector<1x64xf32>
    %56 = vector.extract_strided_slice %51 {offsets = [4, 0], sizes = [1, 64], strides = [1, 1]} : vector<6x64xf32> to vector<1x64xf32>
    %57 = vector.extract_strided_slice %51 {offsets = [5, 0], sizes = [1, 64], strides = [1, 1]} : vector<6x64xf32> to vector<1x64xf32>
    %c3 = arith.constant 3 : index
    %c0_23 = arith.constant 0 : index
    %c0_24 = arith.constant 0 : index
    %58 = vector.load %arg14[%c3, %c0_23, %c0_24] : memref<6x12x64xf32, #tpu.memory_space<vmem>>, vector<1x6x64xf32>
    %59 = vector.shape_cast %58 : vector<1x6x64xf32> to vector<6x64xf32>
    %60 = vector.extract_strided_slice %59 {offsets = [0, 0], sizes = [1, 64], strides = [1, 1]} : vector<6x64xf32> to vector<1x64xf32>
    %61 = vector.extract_strided_slice %59 {offsets = [1, 0], sizes = [1, 64], strides = [1, 1]} : vector<6x64xf32> to vector<1x64xf32>
    %62 = vector.extract_strided_slice %59 {offsets = [2, 0], sizes = [1, 64], strides = [1, 1]} : vector<6x64xf32> to vector<1x64xf32>
    %63 = vector.extract_strided_slice %59 {offsets = [3, 0], sizes = [1, 64], strides = [1, 1]} : vector<6x64xf32> to vector<1x64xf32>
    %64 = vector.extract_strided_slice %59 {offsets = [4, 0], sizes = [1, 64], strides = [1, 1]} : vector<6x64xf32> to vector<1x64xf32>
    %65 = vector.extract_strided_slice %59 {offsets = [5, 0], sizes = [1, 64], strides = [1, 1]} : vector<6x64xf32> to vector<1x64xf32>
    %c4 = arith.constant 4 : index
    %c0_25 = arith.constant 0 : index
    %c0_26 = arith.constant 0 : index
    %66 = vector.load %arg14[%c4, %c0_25, %c0_26] : memref<6x12x64xf32, #tpu.memory_space<vmem>>, vector<1x6x64xf32>
    %67 = vector.shape_cast %66 : vector<1x6x64xf32> to vector<6x64xf32>
    %68 = vector.extract_strided_slice %67 {offsets = [0, 0], sizes = [1, 64], strides = [1, 1]} : vector<6x64xf32> to vector<1x64xf32>
    %69 = vector.extract_strided_slice %67 {offsets = [1, 0], sizes = [1, 64], strides = [1, 1]} : vector<6x64xf32> to vector<1x64xf32>
    %70 = vector.extract_strided_slice %67 {offsets = [2, 0], sizes = [1, 64], strides = [1, 1]} : vector<6x64xf32> to vector<1x64xf32>
    %71 = vector.extract_strided_slice %67 {offsets = [3, 0], sizes = [1, 64], strides = [1, 1]} : vector<6x64xf32> to vector<1x64xf32>
    %72 = vector.extract_strided_slice %67 {offsets = [4, 0], sizes = [1, 64], strides = [1, 1]} : vector<6x64xf32> to vector<1x64xf32>
    %73 = vector.extract_strided_slice %67 {offsets = [5, 0], sizes = [1, 64], strides = [1, 1]} : vector<6x64xf32> to vector<1x64xf32>
    %c5 = arith.constant 5 : index
    %c0_27 = arith.constant 0 : index
    %c0_28 = arith.constant 0 : index
    %74 = vector.load %arg14[%c5, %c0_27, %c0_28] : memref<6x12x64xf32, #tpu.memory_space<vmem>>, vector<1x6x64xf32>
    %75 = vector.shape_cast %74 : vector<1x6x64xf32> to vector<6x64xf32>
    %76 = vector.extract_strided_slice %75 {offsets = [0, 0], sizes = [1, 64], strides = [1, 1]} : vector<6x64xf32> to vector<1x64xf32>
    %77 = vector.extract_strided_slice %75 {offsets = [1, 0], sizes = [1, 64], strides = [1, 1]} : vector<6x64xf32> to vector<1x64xf32>
    %78 = vector.extract_strided_slice %75 {offsets = [2, 0], sizes = [1, 64], strides = [1, 1]} : vector<6x64xf32> to vector<1x64xf32>
    %79 = vector.extract_strided_slice %75 {offsets = [3, 0], sizes = [1, 64], strides = [1, 1]} : vector<6x64xf32> to vector<1x64xf32>
    %80 = vector.extract_strided_slice %75 {offsets = [4, 0], sizes = [1, 64], strides = [1, 1]} : vector<6x64xf32> to vector<1x64xf32>
    %81 = vector.extract_strided_slice %75 {offsets = [5, 0], sizes = [1, 64], strides = [1, 1]} : vector<6x64xf32> to vector<1x64xf32>
    %82 = tpu.concatenate %36, %37, %38, %39, %40, %41, %44, %45, %46, %47, %48, %49, %52, %53, %54, %55 in 1 : vector<1x64xf32>, vector<1x64xf32>, vector<1x64xf32>, vector<1x64xf32>, vector<1x64xf32>, vector<1x64xf32>, vector<1x64xf32>, vector<1x64xf32>, vector<1x64xf32>, vector<1x64xf32>, vector<1x64xf32>, vector<1x64xf32>, vector<1x64xf32>, vector<1x64xf32>, vector<1x64xf32>, vector<1x64xf32> -> vector<1x1024xf32>
    %83 = tpu.concatenate %56, %57, %60, %61, %62, %63, %64, %65, %68, %69, %70, %71, %72, %73, %76, %77 in 1 : vector<1x64xf32>, vector<1x64xf32>, vector<1x64xf32>, vector<1x64xf32>, vector<1x64xf32>, vector<1x64xf32>, vector<1x64xf32>, vector<1x64xf32>, vector<1x64xf32>, vector<1x64xf32>, vector<1x64xf32>, vector<1x64xf32>, vector<1x64xf32>, vector<1x64xf32>, vector<1x64xf32>, vector<1x64xf32> -> vector<1x1024xf32>
    %84 = tpu.concatenate %78, %79, %80, %81 in 1 : vector<1x64xf32>, vector<1x64xf32>, vector<1x64xf32>, vector<1x64xf32> -> vector<1x256xf32>
    %85 = tpu.concatenate %82, %83, %84 in 1 : vector<1x1024xf32>, vector<1x1024xf32>, vector<1x256xf32> -> vector<1x2304xf32>
    %c0_29 = arith.constant 0 : index
    %c6 = arith.constant 6 : index
    %c0_30 = arith.constant 0 : index
    %86 = vector.load %arg14[%c0_29, %c6, %c0_30] : memref<6x12x64xf32, #tpu.memory_space<vmem>>, vector<1x6x64xf32>
    %87 = vector.shape_cast %86 : vector<1x6x64xf32> to vector<6x64xf32>
    %88 = vector.extract_strided_slice %87 {offsets = [0, 0], sizes = [1, 64], strides = [1, 1]} : vector<6x64xf32> to vector<1x64xf32>
    %89 = vector.extract_strided_slice %87 {offsets = [1, 0], sizes = [1, 64], strides = [1, 1]} : vector<6x64xf32> to vector<1x64xf32>
    %90 = vector.extract_strided_slice %87 {offsets = [2, 0], sizes = [1, 64], strides = [1, 1]} : vector<6x64xf32> to vector<1x64xf32>
    %91 = vector.extract_strided_slice %87 {offsets = [3, 0], sizes = [1, 64], strides = [1, 1]} : vector<6x64xf32> to vector<1x64xf32>
    %92 = vector.extract_strided_slice %87 {offsets = [4, 0], sizes = [1, 64], strides = [1, 1]} : vector<6x64xf32> to vector<1x64xf32>
    %93 = vector.extract_strided_slice %87 {offsets = [5, 0], sizes = [1, 64], strides = [1, 1]} : vector<6x64xf32> to vector<1x64xf32>
    %c1_31 = arith.constant 1 : index
    %c6_32 = arith.constant 6 : index
    %c0_33 = arith.constant 0 : index
    %94 = vector.load %arg14[%c1_31, %c6_32, %c0_33] : memref<6x12x64xf32, #tpu.memory_space<vmem>>, vector<1x6x64xf32>
    %95 = vector.shape_cast %94 : vector<1x6x64xf32> to vector<6x64xf32>
    %96 = vector.extract_strided_slice %95 {offsets = [0, 0], sizes = [1, 64], strides = [1, 1]} : vector<6x64xf32> to vector<1x64xf32>
    %97 = vector.extract_strided_slice %95 {offsets = [1, 0], sizes = [1, 64], strides = [1, 1]} : vector<6x64xf32> to vector<1x64xf32>
    %98 = vector.extract_strided_slice %95 {offsets = [2, 0], sizes = [1, 64], strides = [1, 1]} : vector<6x64xf32> to vector<1x64xf32>
    %99 = vector.extract_strided_slice %95 {offsets = [3, 0], sizes = [1, 64], strides = [1, 1]} : vector<6x64xf32> to vector<1x64xf32>
    %100 = vector.extract_strided_slice %95 {offsets = [4, 0], sizes = [1, 64], strides = [1, 1]} : vector<6x64xf32> to vector<1x64xf32>
    %101 = vector.extract_strided_slice %95 {offsets = [5, 0], sizes = [1, 64], strides = [1, 1]} : vector<6x64xf32> to vector<1x64xf32>
    %c2_34 = arith.constant 2 : index
    %c6_35 = arith.constant 6 : index
    %c0_36 = arith.constant 0 : index
    %102 = vector.load %arg14[%c2_34, %c6_35, %c0_36] : memref<6x12x64xf32, #tpu.memory_space<vmem>>, vector<1x6x64xf32>
    %103 = vector.shape_cast %102 : vector<1x6x64xf32> to vector<6x64xf32>
    %104 = vector.extract_strided_slice %103 {offsets = [0, 0], sizes = [1, 64], strides = [1, 1]} : vector<6x64xf32> to vector<1x64xf32>
    %105 = vector.extract_strided_slice %103 {offsets = [1, 0], sizes = [1, 64], strides = [1, 1]} : vector<6x64xf32> to vector<1x64xf32>
    %106 = vector.extract_strided_slice %103 {offsets = [2, 0], sizes = [1, 64], strides = [1, 1]} : vector<6x64xf32> to vector<1x64xf32>
    %107 = vector.extract_strided_slice %103 {offsets = [3, 0], sizes = [1, 64], strides = [1, 1]} : vector<6x64xf32> to vector<1x64xf32>
    %108 = vector.extract_strided_slice %103 {offsets = [4, 0], sizes = [1, 64], strides = [1, 1]} : vector<6x64xf32> to vector<1x64xf32>
    %109 = vector.extract_strided_slice %103 {offsets = [5, 0], sizes = [1, 64], strides = [1, 1]} : vector<6x64xf32> to vector<1x64xf32>
    %c3_37 = arith.constant 3 : index
    %c6_38 = arith.constant 6 : index
    %c0_39 = arith.constant 0 : index
    %110 = vector.load %arg14[%c3_37, %c6_38, %c0_39] : memref<6x12x64xf32, #tpu.memory_space<vmem>>, vector<1x6x64xf32>
    %111 = vector.shape_cast %110 : vector<1x6x64xf32> to vector<6x64xf32>
    %112 = vector.extract_strided_slice %111 {offsets = [0, 0], sizes = [1, 64], strides = [1, 1]} : vector<6x64xf32> to vector<1x64xf32>
    %113 = vector.extract_strided_slice %111 {offsets = [1, 0], sizes = [1, 64], strides = [1, 1]} : vector<6x64xf32> to vector<1x64xf32>
    %114 = vector.extract_strided_slice %111 {offsets = [2, 0], sizes = [1, 64], strides = [1, 1]} : vector<6x64xf32> to vector<1x64xf32>
    %115 = vector.extract_strided_slice %111 {offsets = [3, 0], sizes = [1, 64], strides = [1, 1]} : vector<6x64xf32> to vector<1x64xf32>
    %116 = vector.extract_strided_slice %111 {offsets = [4, 0], sizes = [1, 64], strides = [1, 1]} : vector<6x64xf32> to vector<1x64xf32>
    %117 = vector.extract_strided_slice %111 {offsets = [5, 0], sizes = [1, 64], strides = [1, 1]} : vector<6x64xf32> to vector<1x64xf32>
    %c4_40 = arith.constant 4 : index
    %c6_41 = arith.constant 6 : index
    %c0_42 = arith.constant 0 : index
    %118 = vector.load %arg14[%c4_40, %c6_41, %c0_42] : memref<6x12x64xf32, #tpu.memory_space<vmem>>, vector<1x6x64xf32>
    %119 = vector.shape_cast %118 : vector<1x6x64xf32> to vector<6x64xf32>
    %120 = vector.extract_strided_slice %119 {offsets = [0, 0], sizes = [1, 64], strides = [1, 1]} : vector<6x64xf32> to vector<1x64xf32>
    %121 = vector.extract_strided_slice %119 {offsets = [1, 0], sizes = [1, 64], strides = [1, 1]} : vector<6x64xf32> to vector<1x64xf32>
    %122 = vector.extract_strided_slice %119 {offsets = [2, 0], sizes = [1, 64], strides = [1, 1]} : vector<6x64xf32> to vector<1x64xf32>
    %123 = vector.extract_strided_slice %119 {offsets = [3, 0], sizes = [1, 64], strides = [1, 1]} : vector<6x64xf32> to vector<1x64xf32>
    %124 = vector.extract_strided_slice %119 {offsets = [4, 0], sizes = [1, 64], strides = [1, 1]} : vector<6x64xf32> to vector<1x64xf32>
    %125 = vector.extract_strided_slice %119 {offsets = [5, 0], sizes = [1, 64], strides = [1, 1]} : vector<6x64xf32> to vector<1x64xf32>
    %c5_43 = arith.constant 5 : index
    %c6_44 = arith.constant 6 : index
    %c0_45 = arith.constant 0 : index
    %126 = vector.load %arg14[%c5_43, %c6_44, %c0_45] : memref<6x12x64xf32, #tpu.memory_space<vmem>>, vector<1x6x64xf32>
    %127 = vector.shape_cast %126 : vector<1x6x64xf32> to vector<6x64xf32>
    %128 = vector.extract_strided_slice %127 {offsets = [0, 0], sizes = [1, 64], strides = [1, 1]} : vector<6x64xf32> to vector<1x64xf32>
    %129 = vector.extract_strided_slice %127 {offsets = [1, 0], sizes = [1, 64], strides = [1, 1]} : vector<6x64xf32> to vector<1x64xf32>
    %130 = vector.extract_strided_slice %127 {offsets = [2, 0], sizes = [1, 64], strides = [1, 1]} : vector<6x64xf32> to vector<1x64xf32>
    %131 = vector.extract_strided_slice %127 {offsets = [3, 0], sizes = [1, 64], strides = [1, 1]} : vector<6x64xf32> to vector<1x64xf32>
    %132 = vector.extract_strided_slice %127 {offsets = [4, 0], sizes = [1, 64], strides = [1, 1]} : vector<6x64xf32> to vector<1x64xf32>
    %133 = vector.extract_strided_slice %127 {offsets = [5, 0], sizes = [1, 64], strides = [1, 1]} : vector<6x64xf32> to vector<1x64xf32>
    %134 = tpu.concatenate %88, %89, %90, %91, %92, %93, %96, %97, %98, %99, %100, %101, %104, %105, %106, %107 in 1 : vector<1x64xf32>, vector<1x64xf32>, vector<1x64xf32>, vector<1x64xf32>, vector<1x64xf32>, vector<1x64xf32>, vector<1x64xf32>, vector<1x64xf32>, vector<1x64xf32>, vector<1x64xf32>, vector<1x64xf32>, vector<1x64xf32>, vector<1x64xf32>, vector<1x64xf32>, vector<1x64xf32>, vector<1x64xf32> -> vector<1x1024xf32>
    %135 = tpu.concatenate %108, %109, %112, %113, %114, %115, %116, %117, %120, %121, %122, %123, %124, %125, %128, %129 in 1 : vector<1x64xf32>, vector<1x64xf32>, vector<1x64xf32>, vector<1x64xf32>, vector<1x64xf32>, vector<1x64xf32>, vector<1x64xf32>, vector<1x64xf32>, vector<1x64xf32>, vector<1x64xf32>, vector<1x64xf32>, vector<1x64xf32>, vector<1x64xf32>, vector<1x64xf32>, vector<1x64xf32>, vector<1x64xf32> -> vector<1x1024xf32>
    %136 = tpu.concatenate %130, %131, %132, %133 in 1 : vector<1x64xf32>, vector<1x64xf32>, vector<1x64xf32>, vector<1x64xf32> -> vector<1x256xf32>
    %137 = tpu.concatenate %134, %135, %136 in 1 : vector<1x1024xf32>, vector<1x1024xf32>, vector<1x256xf32> -> vector<1x2304xf32>
    %138 = tpu.concatenate %85, %137 in 0 : vector<1x2304xf32>, vector<1x2304xf32> -> vector<2x2304xf32>
    %c0_46 = arith.constant 0 : index
    %c0_47 = arith.constant 0 : index
    %139 = vector.load %arg6[%c0_46, %c0_47] : memref<2304x600xf32, #tpu.memory_space<vmem>>, vector<2304x600xf32>
    %cst = arith.constant dense<0.000000e+00> : vector<2x600xf32>
    %140 = tpu.matmul %138, %139, %cst {dimension_numbers = #tpu.dot_dimension_numbers<[1], [0], [0], [1], [0, 0, 1, 1], [], []>} : vector<2x2304xf32>, vector<2304x600xf32>, vector<2x600xf32> -> vector<2x600xf32>
    %c0_48 = arith.constant 0 : index
    %c0_49 = arith.constant 0 : index
    %141 = vector.load %arg7[%c0_48, %c0_49] : memref<1x600xf32, #tpu.memory_space<vmem>>, vector<1x600xf32>
    %142 = vector.broadcast %141 : vector<1x600xf32> to vector<2x600xf32>
    %143 = arith.addf %140, %142 : vector<2x600xf32>
    %c0_50 = arith.constant 0 : index
    %c0_51 = arith.constant 0 : index
    %144 = vector.load %arg8[%c0_50, %c0_51] : memref<600x120xf32, #tpu.memory_space<vmem>>, vector<600x120xf32>
    %cst_52 = arith.constant dense<0.000000e+00> : vector<2x120xf32>
    %145 = tpu.matmul %143, %144, %cst_52 {dimension_numbers = #tpu.dot_dimension_numbers<[1], [0], [0], [1], [0, 0, 1, 1], [], []>} : vector<2x600xf32>, vector<600x120xf32>, vector<2x120xf32> -> vector<2x120xf32>
    %c0_53 = arith.constant 0 : index
    %c0_54 = arith.constant 0 : index
    %146 = vector.load %arg9[%c0_53, %c0_54] : memref<1x120xf32, #tpu.memory_space<vmem>>, vector<1x120xf32>
    %147 = vector.broadcast %146 : vector<1x120xf32> to vector<2x120xf32>
    %148 = arith.addf %145, %147 : vector<2x120xf32>
    %c0_55 = arith.constant 0 : index
    %c0_56 = arith.constant 0 : index
    %149 = vector.load %arg10[%c0_55, %c0_56] : memref<120x10xf32, #tpu.memory_space<vmem>>, vector<120x10xf32>
    %cst_57 = arith.constant dense<0.000000e+00> : vector<2x10xf32>
    %150 = tpu.matmul %148, %149, %cst_57 {dimension_numbers = #tpu.dot_dimension_numbers<[1], [0], [0], [1], [0, 0, 1, 1], [], []>} : vector<2x120xf32>, vector<120x10xf32>, vector<2x10xf32> -> vector<2x10xf32>
    %c0_58 = arith.constant 0 : index
    %c0_59 = arith.constant 0 : index
    %151 = vector.load %arg11[%c0_58, %c0_59] : memref<1x10xf32, #tpu.memory_space<vmem>>, vector<1x10xf32>
    %152 = vector.broadcast %151 : vector<1x10xf32> to vector<2x10xf32>
    %153 = arith.addf %150, %152 : vector<2x10xf32>
    %c0_60 = arith.constant 0 : index
    %c0_61 = arith.constant 0 : index
    %154 = vector.load %arg12[%c0_60, %c0_61] : memref<2x10xf32, #tpu.memory_space<vmem>>, vector<2x10xf32>
    tpu.vector_store %arg12[%c0_60, %c0_61], %153 {strides = array<i32>} : memref<2x10xf32, #tpu.memory_space<vmem>>, vector<2x10xf32>,
    return
  }
  func.func @transform_0(%arg0: i32) -> (i32, i32, i32) {
    %c0_i32 = arith.constant 0 : i32
    %c0_i32_0 = arith.constant 0 : i32
    %c0_i32_1 = arith.constant 0 : i32
    return %c0_i32, %arg0, %c0_i32_0 : i32, i32, i32
  }
  func.func @transform_1(%arg0: i32) -> (i32, i32) {
    %c0_i32 = arith.constant 0 : i32
    %c0_i32_0 = arith.constant 0 : i32
    %c0_i32_1 = arith.constant 0 : i32
    return %c0_i32, %c0_i32_0 : i32, i32
  }
  func.func @transform_2(%arg0: i32) -> (i32, i32) {
    %c0_i32 = arith.constant 0 : i32
    %c0_i32_0 = arith.constant 0 : i32
    %c0_i32_1 = arith.constant 0 : i32
    return %c0_i32, %c0_i32_0 : i32, i32
  }
  func.func @transform_3(%arg0: i32) -> (i32, i32) {
    %c0_i32 = arith.constant 0 : i32
    %c0_i32_0 = arith.constant 0 : i32
    %c0_i32_1 = arith.constant 0 : i32
    return %c0_i32, %c0_i32_0 : i32, i32
  }
  func.func @transform_4(%arg0: i32) -> (i32, i32) {
    %c0_i32 = arith.constant 0 : i32
    %c0_i32_0 = arith.constant 0 : i32
    %c0_i32_1 = arith.constant 0 : i32
    return %c0_i32, %c0_i32_0 : i32, i32
  }
  func.func @transform_5(%arg0: i32) -> (i32, i32) {
    %c0_i32 = arith.constant 0 : i32
    %c0_i32_0 = arith.constant 0 : i32
    %c0_i32_1 = arith.constant 0 : i32
    return %c0_i32, %c0_i32_0 : i32, i32
  }
  func.func @transform_6(%arg0: i32) -> (i32, i32) {
    %c0_i32 = arith.constant 0 : i32
    %c0_i32_0 = arith.constant 0 : i32
    %c0_i32_1 = arith.constant 0 : i32
    return %c0_i32, %c0_i32_0 : i32, i32
  }
  func.func @transform_7(%arg0: i32) -> (i32, i32) {
    %c0_i32 = arith.constant 0 : i32
    %c0_i32_0 = arith.constant 0 : i32
    %c0_i32_1 = arith.constant 0 : i32
    return %c0_i32, %c0_i32_0 : i32, i32
  }
  func.func @transform_8(%arg0: i32) -> (i32, i32) {
    %c0_i32 = arith.constant 0 : i32
    %c0_i32_0 = arith.constant 0 : i32
    %c0_i32_1 = arith.constant 0 : i32
    return %c0_i32, %c0_i32_0 : i32, i32
  }
  func.func @transform_9(%arg0: i32) -> (i32, i32) {
    %c0_i32 = arith.constant 0 : i32
    %c0_i32_0 = arith.constant 0 : i32
    %c0_i32_1 = arith.constant 0 : i32
    return %c0_i32, %c0_i32_0 : i32, i32
  }
  func.func @transform_10(%arg0: i32) -> (i32, i32) {
    %c0_i32 = arith.constant 0 : i32
    %c0_i32_0 = arith.constant 0 : i32
    %c0_i32_1 = arith.constant 0 : i32
    return %c0_i32, %c0_i32_0 : i32, i32
  }
  func.func @transform_11(%arg0: i32) -> (i32, i32) {
    %c0_i32 = arith.constant 0 : i32
    %c0_i32_0 = arith.constant 0 : i32
    return %arg0, %c0_i32 : i32, i32
  }
}

</mosaic_0001>

<llo_original>
// kernel: forward_pallas.1
$region0: #{forward_pallas.1}
  #allocation0 [shape = 'u32[]', space=smem, size = 0x4, offset = 0x4, fixed_abs, tag = 'smem constant byte address 0x4 - core index']
  #allocation1 [shape = 'u32[144,128]{1,0:T(1,128)}', space=vmem, size = 0x12000, scoped, tag = 'internal scratch']
  #allocation2 [shape = 'f32[14,32,28]{2,1,0:T(8,128)}', space=vmem, size = 0x38000, scoped, tag = 'scratch operand']
  #allocation3 [shape = 'f32[6,12,64]{2,1,0:T(8,128)}', space=vmem, size = 0xc000, scoped, tag = 'scratch operand']
  %s0 = inlined_call_operand.vmem [shape: f32[30,2,30], index: 0, kind: input, shape index: {}]
  %s1 = inlined_call_operand.vmem [shape: f32[32,9], index: 1, kind: input, shape index: {}]
  %s2 = inlined_call_operand.vmem [shape: f32[32,1], index: 2, kind: input, shape index: {}]
  %s3 = inlined_call_operand.vmem [shape: f32[64,288], index: 3, kind: input, shape index: {}]
  %s4 = inlined_call_operand.vmem [shape: f32[64,1], index: 4, kind: input, shape index: {}]
  %s5 = inlined_call_operand.vmem [shape: f32[2304,600], index: 5, kind: input, shape index: {}]
  %s6 = inlined_call_operand.vmem [shape: f32[1,600], index: 6, kind: input, shape index: {}]
  %s7 = inlined_call_operand.vmem [shape: f32[600,120], index: 7, kind: input, shape index: {}]
  %s8 = inlined_call_operand.vmem [shape: f32[1,120], index: 8, kind: input, shape index: {}]
  %s9 = inlined_call_operand.vmem [shape: f32[120,10], index: 9, kind: input, shape index: {}]
  %s10 = inlined_call_operand.vmem [shape: f32[1,10], index: 10, kind: input, shape index: {}]
  %s11 = inlined_call_operand.hbm [shape: f32[2,10], index: 11, kind: output, shape index: {}]
  %s12 = sld [smem:[#allocation0]]
  $region68: #{forward_pallas.1} parent=0
    _
  %s14 = ssub.s32 1, %s12
  %s15 = scalar_select 0, %s14, %s12
  $region1: #{forward_pallas.1} parent=0
    #allocation4 [shape = 'u8[1024]{0}', space=vmem, size = 0x400, scoped, tag = 'output window, operand 0, single buffered']
    #allocation5 [shape = 's32[1]{0}', space=sflag, size = 0x4, scoped, tag = 'scoped memory for forward_pallas.1']
    %16 = vsyncpa [#allocation5], 0
    // Predicated region
    $region2: #{forward_pallas.1} parent=1 // pred_check
      _
    $region3: #{forward_pallas.1} parent=1 // pred_check_branch
      %18 = sbr.rel (0) target = $region5
    $region4: #{forward_pallas.1} parent=1 // pred_region
      _
    $region5: #{forward_pallas.1} parent=1 // pred_fallthru
      _
    // Predicated region
    $region6: #{forward_pallas.1} parent=1 // pred_check
      _
    $region7: #{forward_pallas.1} parent=1 // pred_check_branch
      %20 = sbr.rel (0) target = $region9
    $region8: #{forward_pallas.1} parent=1 // pred_region
      _
    $region9: #{forward_pallas.1} parent=1 // pred_fallthru
      _
    // Predicated region
    $region10: #{forward_pallas.1} parent=1 // pred_check
      _
    $region11: #{forward_pallas.1} parent=1 // pred_check_branch
      %22 = sbr.rel (0) target = $region13
    $region12: #{forward_pallas.1} parent=1 // pred_region
      _
    $region13: #{forward_pallas.1} parent=1 // pred_fallthru
      _
    // Predicated region
    $region14: #{forward_pallas.1} parent=1 // pred_check
      _
    $region15: #{forward_pallas.1} parent=1 // pred_check_branch
      %24 = sbr.rel (0) target = $region17
    $region16: #{forward_pallas.1} parent=1 // pred_region
      _
    $region17: #{forward_pallas.1} parent=1 // pred_fallthru
      _
    // Predicated region
    $region18: #{forward_pallas.1} parent=1 // pred_check
      _
    $region19: #{forward_pallas.1} parent=1 // pred_check_branch
      %26 = sbr.rel (0) target = $region21
    $region20: #{forward_pallas.1} parent=1 // pred_region
      _
    $region21: #{forward_pallas.1} parent=1 // pred_fallthru
      _
    // Predicated region
    $region22: #{forward_pallas.1} parent=1 // pred_check
      _
    $region23: #{forward_pallas.1} parent=1 // pred_check_branch
      %28 = sbr.rel (0) target = $region25
    $region24: #{forward_pallas.1} parent=1 // pred_region
      _
    $region25: #{forward_pallas.1} parent=1 // pred_fallthru
      _
    // Predicated region
    $region26: #{forward_pallas.1} parent=1 // pred_check
      _
    $region27: #{forward_pallas.1} parent=1 // pred_check_branch
      %30 = sbr.rel (0) target = $region29
    $region28: #{forward_pallas.1} parent=1 // pred_region
      _
    $region29: #{forward_pallas.1} parent=1 // pred_fallthru
      _
    // Predicated region
    $region30: #{forward_pallas.1} parent=1 // pred_check
      _
    $region31: #{forward_pallas.1} parent=1 // pred_check_branch
      %32 = sbr.rel (0) target = $region33
    $region32: #{forward_pallas.1} parent=1 // pred_region
      _
    $region33: #{forward_pallas.1} parent=1 // pred_fallthru
      _
    // Predicated region
    $region34: #{forward_pallas.1} parent=1 // pred_check
      _
    $region35: #{forward_pallas.1} parent=1 // pred_check_branch
      %34 = sbr.rel (0) target = $region37
    $region36: #{forward_pallas.1} parent=1 // pred_region
      _
    $region37: #{forward_pallas.1} parent=1 // pred_fallthru
      _
    // Predicated region
    $region38: #{forward_pallas.1} parent=1 // pred_check
      _
    $region39: #{forward_pallas.1} parent=1 // pred_check_branch
      %36 = sbr.rel (0) target = $region41
    $region40: #{forward_pallas.1} parent=1 // pred_region
      _
    $region41: #{forward_pallas.1} parent=1 // pred_fallthru
      _
    // Predicated region
    $region42: #{forward_pallas.1} parent=1 // pred_check
      _
    $region43: #{forward_pallas.1} parent=1 // pred_check_branch
      %38 = sbr.rel (0) target = $region45
    $region44: #{forward_pallas.1} parent=1 // pred_region
      _
    $region45: #{forward_pallas.1} parent=1 // pred_fallthru
      _
    %v39 = vld [vmem:[%s1] sm:$0xff]
    %v40 = vld [vmem:[%s1 + $0x8] sm:$0xff]
    %v41 = vld [vmem:[%s1 + $0x10] sm:$0xff]
    %v42 = vld [vmem:[%s1 + $0x18] sm:$0xff]
    %v43 = vld [vmem:[%s2] sm:$0xff]
    %v44 = vld [vmem:[%s2 + $0x8] sm:$0xff]
    %v45 = vld [vmem:[%s2 + $0x10] sm:$0xff]
    %v46 = vld [vmem:[%s2 + $0x18] sm:$0xff]
    %v47 = vld [vmem:[%s3] sm:$0xff]
    %v48 = vld [vmem:[%s3 + $0x8] sm:$0xff]
    %v49 = vld [vmem:[%s3 + $0x10] sm:$0xff]
    %v50 = vld [vmem:[%s3 + $0x18] sm:$0xff]
    %v51 = vld [vmem:[%s3 + $0x20] sm:$0xff]
    %v52 = vld [vmem:[%s3 + $0x28] sm:$0xff]
    %v53 = vld [vmem:[%s3 + $0x30] sm:$0xff]
    %v54 = vld [vmem:[%s3 + $0x38] sm:$0xff]
    %v55 = vld [vmem:[%s3 + $0x40] sm:$0xff]
    %v56 = vld [vmem:[%s3 + $0x48] sm:$0xff]
    %v57 = vld [vmem:[%s3 + $0x50] sm:$0xff]
    %v58 = vld [vmem:[%s3 + $0x58] sm:$0xff]
    %v59 = vld [vmem:[%s3 + $0x60] sm:$0xff]
    %v60 = vld [vmem:[%s3 + $0x68] sm:$0xff]
    %v61 = vld [vmem:[%s3 + $0x70] sm:$0xff]
    %v62 = vld [vmem:[%s3 + $0x78] sm:$0xff]
    %v63 = vld [vmem:[%s3 + $0x80] sm:$0xff]
    %v64 = vld [vmem:[%s3 + $0x88] sm:$0xff]
    %v65 = vld [vmem:[%s3 + $0x90] sm:$0xff]
    %v66 = vld [vmem:[%s3 + $0x98] sm:$0xff]
    %v67 = vld [vmem:[%s3 + $0xa0] sm:$0xff]
    %v68 = vld [vmem:[%s3 + $0xa8] sm:$0xff]
    %v69 = vld [vmem:[%s3 + $0xb0] sm:$0xff]
    %v70 = vld [vmem:[%s3 + $0xb8] sm:$0xff]
    %v71 = vld [vmem:[%s4] sm:$0xff]
    %v72 = vld [vmem:[%s4 + $0x8] sm:$0xff]
    %v73 = vld [vmem:[%s4 + $0x10] sm:$0xff]
    %v74 = vld [vmem:[%s4 + $0x18] sm:$0xff]
    %v75 = vld [vmem:[%s4 + $0x20] sm:$0xff]
    %v76 = vld [vmem:[%s4 + $0x28] sm:$0xff]
    %v77 = vld [vmem:[%s4 + $0x30] sm:$0xff]
    %v78 = vld [vmem:[%s4 + $0x38] sm:$0xff]
    %v79 = vlaneseq
    %v80 = vshrl.u32 %v79, 7
    %v81 = vadd.s32 %v80, 8
    %v82 = vadd.s32 %v80, 16
    %v83 = vadd.s32 %v80, 24
    %v84 = vadd.s32 %v80, 32
    %v85 = vadd.s32 %v80, 40
    %v86 = vadd.s32 %v80, 48
    %v87 = vlaneseq
    %v88 = vand.u32 %v87, 127
    %v89 = vmul.u32 %v88, 2
    %vm90 = vcmp.eq.s32.totalorder %v80, %v89
    %vm91 = vcmp.eq.s32.totalorder %v81, %v89
    %vm92 = vcmp.eq.s32.totalorder %v82, %v89
    %vm93 = vcmp.eq.s32.totalorder %v83, %v89
    %vm94 = vcmp.eq.s32.totalorder %v84, %v89
    %vm95 = vcmp.eq.s32.totalorder %v85, %v89
    %vm96 = vcmp.eq.s32.totalorder %v86, %v89
    %v97 = vsel %vm90, 1, 0
    %v98 = vsel %vm91, 1, 0
    %v99 = vsel %vm92, 1, 0
    %v100 = vsel %vm93, 1, 0
    %v101 = vsel %vm94, 1, 0
    %v102 = vsel %vm95, 1, 0
    %v103 = vsel %vm96, 1, 0
    %v104 = vcvt.s32.f32 %v97
    %v105 = vcvt.s32.f32 %v98
    %v106 = vcvt.s32.f32 %v99
    %v107 = vcvt.s32.f32 %v100
    %v108 = vcvt.s32.f32 %v101
    %v109 = vcvt.s32.f32 %v102
    %v110 = vcvt.s32.f32 %v103
    %v111 = vadd.s32 %v89, 1
    %vm112 = vcmp.eq.s32.totalorder %v80, %v111
    %vm113 = vcmp.eq.s32.totalorder %v81, %v111
    %vm114 = vcmp.eq.s32.totalorder %v82, %v111
    %vm115 = vcmp.eq.s32.totalorder %v83, %v111
    %vm116 = vcmp.eq.s32.totalorder %v84, %v111
    %vm117 = vcmp.eq.s32.totalorder %v85, %v111
    %vm118 = vcmp.eq.s32.totalorder %v86, %v111
    %v119 = vsel %vm112, 1, 0
    %v120 = vsel %vm113, 1, 0
    %v121 = vsel %vm114, 1, 0
    %v122 = vsel %vm115, 1, 0
    %v123 = vsel %vm116, 1, 0
    %v124 = vsel %vm117, 1, 0
    %v125 = vsel %vm118, 1, 0
    %v126 = vcvt.s32.f32 %v119
    %v127 = vcvt.s32.f32 %v120
    %v128 = vcvt.s32.f32 %v121
    %v129 = vcvt.s32.f32 %v122
    %v130 = vcvt.s32.f32 %v123
    %v131 = vcvt.s32.f32 %v124
    %v132 = vcvt.s32.f32 %v125
    loop: start=0, step=1, limit=14
    $region46: #{forward_pallas.1} parent=1 // loop_pre_header
      _
    $region47: #{forward_pallas.1} parent=1 // loop_header
      %s134 = sphi 0, %s138
      %p135 = scmp.ge.s32.totalorder %s134, 14
    $region48: #{forward_pallas.1} parent=1 // loop_header_branch
      %137 = sbr.rel (%p135) target = $region52
    $region49: #{forward_pallas.1} parent=1 // loop_body
      %s139 = smul.u32 %s134, 2
      %s140 = smul.u32 %s139, 2
      %s141 = scalar_lea.vmem %s0, %s140
      %v142 = vld [vmem:[%s141] sm:$0x3]
      %v143 = vld [vmem:[%s141 + $0x2] sm:$0x3]
      %v144 = vld [vmem:[%s141 + $0x4] sm:$0x3]
      %v146 = vrot.slane %v142, 1
      %147 = vrot.lane.b32.xlu0 %v146, 28
      %v148 = vpop.permute.xlu0 %147
      %vm150 = vcmask 228352
      %v151 = vsel %vm150, %v142, %v148
      %152 = vrot.lane.b32.xlu0 %v142, 127
      %v153 = vpop.permute.xlu0 %152
      %155 = vrot.lane.b32.xlu0 %v146, 27
      %v156 = vpop.permute.xlu0 %155
      %v158 = vsel %vm150, %v153, %v156
      %159 = vrot.lane.b32.xlu0 %v142, 126
      %v160 = vpop.permute.xlu0 %159
      %162 = vrot.lane.b32.xlu0 %v146, 26
      %v163 = vpop.permute.xlu0 %162
      %v165 = vsel %vm150, %v160, %v163
      %v167 = vrot.slane %v143, 1
      %168 = vrot.lane.b32.xlu0 %v167, 28
      %v169 = vpop.permute.xlu0 %168
      %v171 = vsel %vm150, %v143, %v169
      %172 = vrot.lane.b32.xlu0 %v143, 127
      %v173 = vpop.permute.xlu0 %172
      %175 = vrot.lane.b32.xlu0 %v167, 27
      %v176 = vpop.permute.xlu0 %175
      %v178 = vsel %vm150, %v173, %v176
      %179 = vrot.lane.b32.xlu0 %v143, 126
      %v180 = vpop.permute.xlu0 %179
      %182 = vrot.lane.b32.xlu0 %v167, 26
      %v183 = vpop.permute.xlu0 %182
      %v185 = vsel %vm150, %v180, %v183
      %v187 = vrot.slane %v144, 1
      %188 = vrot.lane.b32.xlu0 %v187, 28
      %v189 = vpop.permute.xlu0 %188
      %v191 = vsel %vm150, %v144, %v189
      %192 = vrot.lane.b32.xlu0 %v144, 127
      %v193 = vpop.permute.xlu0 %192
      %195 = vrot.lane.b32.xlu0 %v187, 27
      %v196 = vpop.permute.xlu0 %195
      %v198 = vsel %vm150, %v193, %v196
      %199 = vrot.lane.b32.xlu0 %v144, 126
      %v200 = vpop.permute.xlu0 %199
      %202 = vrot.lane.b32.xlu0 %v187, 26
      %v203 = vpop.permute.xlu0 %202
      %v205 = vsel %vm150, %v200, %v203
      %v207 = vrot.slane %v158, 7
      %v210 = vrot.slane %v165, 6
      %v213 = vrot.slane %v171, 5
      %v216 = vrot.slane %v178, 4
      %v219 = vrot.slane %v185, 3
      %v222 = vrot.slane %v191, 2
      %v225 = vrot.slane %v198, 1
      %vm227 = vcmask 1040384
      %v228 = vsel %vm227, %v151, %v207
      %vm229 = vcmask 1041408
      %v230 = vsel %vm229, %v228, %v210
      %vm231 = vcmask 1042432
      %v232 = vsel %vm231, %v230, %v213
      %vm233 = vcmask 1043456
      %v234 = vsel %vm233, %v232, %v216
      %vm235 = vcmask 1044480
      %v236 = vsel %vm235, %v234, %v219
      %vm237 = vcmask 1045504
      %v238 = vsel %vm237, %v236, %v222
      %vm239 = vcmask 1046528
      %v240 = vsel %vm239, %v238, %v225
      %vm241 = vcmask 72704
      %v243 = vsel %vm241, %v39, 0
      %v246 = vsel %vm241, %v40, 0
      %v249 = vsel %vm241, %v41, 0
      %v252 = vsel %vm241, %v42, 0
      %v255 = vsel %vm227, %v205, 0
      %257 = vmatprep.subr.mxu0 0.0
      %258 = vmatpush1.msra.mxu0 %v240
      %259 = vmatprep.subr.mxu0 0.0
      %260 = vmatpush1.msra.mxu0 %v255
      %261 = vmatprep.subr.mxu0 0.0
      %262 = vmatpush1.msra.mxu0 0.0
      %263 = vmatprep.subr.mxu0 0.0
      %264 = vmatpush1.msra.mxu0 0.0
      %265 = vmatprep.subr.mxu0 0.0
      %266 = vmatpush1.msra.mxu0 0.0
      %267 = vmatprep.subr.mxu0 0.0
      %268 = vmatpush1.msra.mxu0 0.0
      %269 = vmatprep.subr.mxu0 0.0
      %270 = vmatpush1.msra.mxu0 0.0
      %271 = vmatprep.subr.mxu0 0.0
      %272 = vmatpush1.msra.mxu0 0.0
      %273 = vmatprep.subr.mxu0 0.0
      %274 = vmatpush1.msra.mxu0 0.0
      %275 = vmatprep.subr.mxu0 0.0
      %276 = vmatpush1.msra.mxu0 0.0
      %277 = vmatprep.subr.mxu0 0.0
      %278 = vmatpush1.msra.mxu0 0.0
      %279 = vmatprep.subr.mxu0 0.0
      %280 = vmatpush1.msra.mxu0 0.0
      %281 = vmatprep.subr.mxu0 0.0
      %282 = vmatpush1.msra.mxu0 0.0
      %283 = vmatprep.subr.mxu0 0.0
      %284 = vmatpush1.msra.mxu0 0.0
      %285 = vmatprep.subr.mxu0 0.0
      %286 = vmatpush1.msra.mxu0 0.0
      %287 = vmatprep.subr.mxu0 0.0
      %288 = vmatpush1.msra.mxu0 0.0
      %289 = vmatprep.subr.mxu0 0.0
      %290 = vmatpush1.msra.mxu0 0.0
      %291 = vmatprep.subr.mxu0 0.0
      %292 = vmatpush1.msra.mxu0 0.0
      %293 = vmatprep.subr.mxu0 0.0
      %294 = vmatpush1.msra.mxu0 0.0
      %295 = vmatprep.subr.mxu0 0.0
      %296 = vmatpush1.msra.mxu0 0.0
      %297 = vmatprep.subr.mxu0 0.0
      %298 = vmatpush1.msra.mxu0 0.0
      %299 = vmatprep.subr.mxu0 0.0
      %300 = vmatpush1.msra.mxu0 0.0
      %301 = vmatprep.subr.mxu0 0.0
      %302 = vmatpush1.msra.mxu0 0.0
      %303 = vmatprep.subr.mxu0 0.0
      %304 = vmatpush1.msra.mxu0 0.0
      %305 = vmatprep.subr.mxu0 0.0
      %306 = vmatpush1.msra.mxu0 0.0
      %307 = vmatprep.subr.mxu0 0.0
      %308 = vmatpush1.msra.mxu0 0.0
      %309 = vmatprep.subr.mxu0 0.0
      %310 = vmatpush1.msra.mxu0 0.0
      %311 = vmatprep.subr.mxu0 0.0
      %312 = vmatpush1.msra.mxu0 0.0
      %313 = vmatprep.subr.mxu0 0.0
      %314 = vmatpush1.msra.mxu0 0.0
      %315 = vmatprep.subr.mxu0 0.0
      %316 = vmatpush1.msra.mxu0 0.0
      %317 = vmatprep.subr.mxu0 0.0
      %318 = vmatpush1.msra.mxu0 0.0
      %319 = vmatprep.subr.mxu0 0.0
      %320 = vmatpush1.msra.mxu0 0.0
      %321 = vmatprep.mubr.f32.mxu0 0.0
      %322 = vmatmul.mubr.f32.gmra.mrb[0].mxu0 %v243
      %v323 = vpop.f32.mrb[0].mxu0
      %v324 = vadd.f32 0.0, %v323
      %v325 = vpop.f32.mrb[0].mxu0
      %326 = vmatprep.mubr.f32.mxu0 0.0
      %327 = vmatmul.mubr.f32.gmra.mrb[0].mxu0 %v246
      %v328 = vpop.f32.mrb[0].mxu0
      %v329 = vadd.f32 0.0, %v328
      %v330 = vpop.f32.mrb[0].mxu0
      %331 = vmatprep.mubr.f32.mxu0 0.0
      %332 = vmatmul.mubr.f32.gmra.mrb[0].mxu0 %v249
      %v333 = vpop.f32.mrb[0].mxu0
      %v334 = vadd.f32 0.0, %v333
      %v335 = vpop.f32.mrb[0].mxu0
      %336 = vmatprep.mubr.f32.mxu0 0.0
      %337 = vmatmul.mubr.f32.gmra.mrb[0].mxu0 %v252
      %v338 = vpop.f32.mrb[0].mxu0
      %v339 = vadd.f32 0.0, %v338
      %v340 = vpop.f32.mrb[0].mxu0
      %341 = vdwg.mxu0
      %s342 = sadd.s32 %s139, 1
      %s343 = smul.u32 %s342, 2
      %s344 = scalar_lea.vmem %s0, %s343
      %v345 = vld [vmem:[%s344] sm:$0x3]
      %v346 = vld [vmem:[%s344 + $0x2] sm:$0x3]
      %v347 = vld [vmem:[%s344 + $0x4] sm:$0x3]
      %v349 = vrot.slane %v345, 1
      %350 = vrot.lane.b32.xlu0 %v349, 28
      %v351 = vpop.permute.xlu0 %350
      %v353 = vsel %vm150, %v345, %v351
      %354 = vrot.lane.b32.xlu0 %v345, 127
      %v355 = vpop.permute.xlu0 %354
      %357 = vrot.lane.b32.xlu0 %v349, 27
      %v358 = vpop.permute.xlu0 %357
      %v360 = vsel %vm150, %v355, %v358
      %361 = vrot.lane.b32.xlu0 %v345, 126
      %v362 = vpop.permute.xlu0 %361
      %364 = vrot.lane.b32.xlu0 %v349, 26
      %v365 = vpop.permute.xlu0 %364
      %v367 = vsel %vm150, %v362, %v365
      %v369 = vrot.slane %v346, 1
      %370 = vrot.lane.b32.xlu0 %v369, 28
      %v371 = vpop.permute.xlu0 %370
      %v373 = vsel %vm150, %v346, %v371
      %374 = vrot.lane.b32.xlu0 %v346, 127
      %v375 = vpop.permute.xlu0 %374
      %377 = vrot.lane.b32.xlu0 %v369, 27
      %v378 = vpop.permute.xlu0 %377
      %v380 = vsel %vm150, %v375, %v378
      %381 = vrot.lane.b32.xlu0 %v346, 126
      %v382 = vpop.permute.xlu0 %381
      %384 = vrot.lane.b32.xlu0 %v369, 26
      %v385 = vpop.permute.xlu0 %384
      %v387 = vsel %vm150, %v382, %v385
      %v389 = vrot.slane %v347, 1
      %390 = vrot.lane.b32.xlu0 %v389, 28
      %v391 = vpop.permute.xlu0 %390
      %v393 = vsel %vm150, %v347, %v391
      %394 = vrot.lane.b32.xlu0 %v347, 127
      %v395 = vpop.permute.xlu0 %394
      %397 = vrot.lane.b32.xlu0 %v389, 27
      %v398 = vpop.permute.xlu0 %397
      %v400 = vsel %vm150, %v395, %v398
      %401 = vrot.lane.b32.xlu0 %v347, 126
      %v402 = vpop.permute.xlu0 %401
      %404 = vrot.lane.b32.xlu0 %v389, 26
      %v405 = vpop.permute.xlu0 %404
      %v407 = vsel %vm150, %v402, %v405
      %v409 = vrot.slane %v360, 7
      %v412 = vrot.slane %v367, 6
      %v415 = vrot.slane %v373, 5
      %v418 = vrot.slane %v380, 4
      %v421 = vrot.slane %v387, 3
      %v424 = vrot.slane %v393, 2
      %v427 = vrot.slane %v400, 1
      %v429 = vsel %vm227, %v353, %v409
      %v430 = vsel %vm229, %v429, %v412
      %v431 = vsel %vm231, %v430, %v415
      %v432 = vsel %vm233, %v431, %v418
      %v433 = vsel %vm235, %v432, %v421
      %v434 = vsel %vm237, %v433, %v424
      %v435 = vsel %vm239, %v434, %v427
      %v437 = vsel %vm227, %v407, 0
      %439 = vmatprep.subr.mxu0 0.0
      %440 = vmatpush1.msra.mxu0 %v435
      %441 = vmatprep.subr.mxu0 0.0
      %442 = vmatpush1.msra.mxu0 %v437
      %443 = vmatprep.subr.mxu0 0.0
      %444 = vmatpush1.msra.mxu0 0.0
      %445 = vmatprep.subr.mxu0 0.0
      %446 = vmatpush1.msra.mxu0 0.0
      %447 = vmatprep.subr.mxu0 0.0
      %448 = vmatpush1.msra.mxu0 0.0
      %449 = vmatprep.subr.mxu0 0.0
      %450 = vmatpush1.msra.mxu0 0.0
      %451 = vmatprep.subr.mxu0 0.0
      %452 = vmatpush1.msra.mxu0 0.0
      %453 = vmatprep.subr.mxu0 0.0
      %454 = vmatpush1.msra.mxu0 0.0
      %455 = vmatprep.subr.mxu0 0.0
      %456 = vmatpush1.msra.mxu0 0.0
      %457 = vmatprep.subr.mxu0 0.0
      %458 = vmatpush1.msra.mxu0 0.0
      %459 = vmatprep.subr.mxu0 0.0
      %460 = vmatpush1.msra.mxu0 0.0
      %461 = vmatprep.subr.mxu0 0.0
      %462 = vmatpush1.msra.mxu0 0.0
      %463 = vmatprep.subr.mxu0 0.0
      %464 = vmatpush1.msra.mxu0 0.0
      %465 = vmatprep.subr.mxu0 0.0
      %466 = vmatpush1.msra.mxu0 0.0
      %467 = vmatprep.subr.mxu0 0.0
      %468 = vmatpush1.msra.mxu0 0.0
      %469 = vmatprep.subr.mxu0 0.0
      %470 = vmatpush1.msra.mxu0 0.0
      %471 = vmatprep.subr.mxu0 0.0
      %472 = vmatpush1.msra.mxu0 0.0
      %473 = vmatprep.subr.mxu0 0.0
      %474 = vmatpush1.msra.mxu0 0.0
      %475 = vmatprep.subr.mxu0 0.0
      %476 = vmatpush1.msra.mxu0 0.0
      %477 = vmatprep.subr.mxu0 0.0
      %478 = vmatpush1.msra.mxu0 0.0
      %479 = vmatprep.subr.mxu0 0.0
      %480 = vmatpush1.msra.mxu0 0.0
      %481 = vmatprep.subr.mxu0 0.0
      %482 = vmatpush1.msra.mxu0 0.0
      %483 = vmatprep.subr.mxu0 0.0
      %484 = vmatpush1.msra.mxu0 0.0
      %485 = vmatprep.subr.mxu0 0.0
      %486 = vmatpush1.msra.mxu0 0.0
      %487 = vmatprep.subr.mxu0 0.0
      %488 = vmatpush1.msra.mxu0 0.0
      %489 = vmatprep.subr.mxu0 0.0
      %490 = vmatpush1.msra.mxu0 0.0
      %491 = vmatprep.subr.mxu0 0.0
      %492 = vmatpush1.msra.mxu0 0.0
      %493 = vmatprep.subr.mxu0 0.0
      %494 = vmatpush1.msra.mxu0 0.0
      %495 = vmatprep.subr.mxu0 0.0
      %496 = vmatpush1.msra.mxu0 0.0
      %497 = vmatprep.subr.mxu0 0.0
      %498 = vmatpush1.msra.mxu0 0.0
      %499 = vmatprep.subr.mxu0 0.0
      %500 = vmatpush1.msra.mxu0 0.0
      %501 = vmatprep.subr.mxu0 0.0
      %502 = vmatpush1.msra.mxu0 0.0
      %503 = vmatprep.mubr.f32.mxu0 0.0
      %504 = vmatmul.mubr.f32.gmra.mrb[0].mxu0 %v243
      %v505 = vpop.f32.mrb[0].mxu0
      %v506 = vadd.f32 0.0, %v505
      %v507 = vpop.f32.mrb[0].mxu0
      %508 = vmatprep.mubr.f32.mxu0 0.0
      %509 = vmatmul.mubr.f32.gmra.mrb[0].mxu0 %v246
      %v510 = vpop.f32.mrb[0].mxu0
      %v511 = vadd.f32 0.0, %v510
      %v512 = vpop.f32.mrb[0].mxu0
      %513 = vmatprep.mubr.f32.mxu0 0.0
      %514 = vmatmul.mubr.f32.gmra.mrb[0].mxu0 %v249
      %v515 = vpop.f32.mrb[0].mxu0
      %v516 = vadd.f32 0.0, %v515
      %v517 = vpop.f32.mrb[0].mxu0
      %518 = vmatprep.mubr.f32.mxu0 0.0
      %519 = vmatmul.mubr.f32.gmra.mrb[0].mxu0 %v252
      %v520 = vpop.f32.mrb[0].mxu0
      %v521 = vadd.f32 0.0, %v520
      %v522 = vpop.f32.mrb[0].mxu0
      %523 = vdwg.mxu0
      %v524 = vmax.f32 %v324, %v506
      %v525 = vmax.f32 %v329, %v511
      %v526 = vmax.f32 %v334, %v516
      %v527 = vmax.f32 %v339, %v521
      %vm528 = vcmask 457728
      %v530 = vsel %vm528, %v524, 0
      %v533 = vsel %vm528, %v525, 0
      %v536 = vsel %vm528, %v526, 0
      %v539 = vsel %vm528, %v527, 0
      %541 = vmatprep.subr.mxu0 0.0
      %542 = vmatpush1.msra.mxu0 %v104
      %543 = vmatprep.subr.mxu0 0.0
      %544 = vmatpush1.msra.mxu0 %v105
      %545 = vmatprep.subr.mxu0 0.0
      %546 = vmatpush1.msra.mxu0 %v106
      %547 = vmatprep.subr.mxu0 0.0
      %548 = vmatpush1.msra.mxu0 %v107
      %549 = vmatprep.subr.mxu0 0.0
      %550 = vmatpush1.msra.mxu0 %v108
      %551 = vmatprep.subr.mxu0 0.0
      %552 = vmatpush1.msra.mxu0 %v109
      %553 = vmatprep.subr.mxu0 0.0
      %554 = vmatpush1.msra.mxu0 %v110
      %555 = vmatprep.subr.mxu0 0.0
      %556 = vmatpush1.msra.mxu0 0.0
      %557 = vmatprep.subr.mxu0 0.0
      %558 = vmatpush1.msra.mxu0 0.0
      %559 = vmatprep.subr.mxu0 0.0
      %560 = vmatpush1.msra.mxu0 0.0
      %561 = vmatprep.subr.mxu0 0.0
      %562 = vmatpush1.msra.mxu0 0.0
      %563 = vmatprep.subr.mxu0 0.0
      %564 = vmatpush1.msra.mxu0 0.0
      %565 = vmatprep.subr.mxu0 0.0
      %566 = vmatpush1.msra.mxu0 0.0
      %567 = vmatprep.subr.mxu0 0.0
      %568 = vmatpush1.msra.mxu0 0.0
      %569 = vmatprep.subr.mxu0 0.0
      %570 = vmatpush1.msra.mxu0 0.0
      %571 = vmatprep.subr.mxu0 0.0
      %572 = vmatpush1.msra.mxu0 0.0
      %573 = vmatprep.subr.mxu0 0.0
      %574 = vmatpush1.msra.mxu0 0.0
      %575 = vmatprep.subr.mxu0 0.0
      %576 = vmatpush1.msra.mxu0 0.0
      %577 = vmatprep.subr.mxu0 0.0
      %578 = vmatpush1.msra.mxu0 0.0
      %579 = vmatprep.subr.mxu0 0.0
      %580 = vmatpush1.msra.mxu0 0.0
      %581 = vmatprep.subr.mxu0 0.0
      %582 = vmatpush1.msra.mxu0 0.0
      %583 = vmatprep.subr.mxu0 0.0
      %584 = vmatpush1.msra.mxu0 0.0
      %585 = vmatprep.subr.mxu0 0.0
      %586 = vmatpush1.msra.mxu0 0.0
      %587 = vmatprep.subr.mxu0 0.0
      %588 = vmatpush1.msra.mxu0 0.0
      %589 = vmatprep.subr.mxu0 0.0
      %590 = vmatpush1.msra.mxu0 0.0
      %591 = vmatprep.subr.mxu0 0.0
      %592 = vmatpush1.msra.mxu0 0.0
      %593 = vmatprep.subr.mxu0 0.0
      %594 = vmatpush1.msra.mxu0 0.0
      %595 = vmatprep.subr.mxu0 0.0
      %596 = vmatpush1.msra.mxu0 0.0
      %597 = vmatprep.subr.mxu0 0.0
      %598 = vmatpush1.msra.mxu0 0.0
      %599 = vmatprep.subr.mxu0 0.0
      %600 = vmatpush1.msra.mxu0 0.0
      %601 = vmatprep.subr.mxu0 0.0
      %602 = vmatpush1.msra.mxu0 0.0
      %603 = vmatprep.subr.mxu0 0.0
      %604 = vmatpush1.msra.mxu0 0.0
      %605 = vmatprep.mubr.f32.mxu0 0.0
      %606 = vmatmul.mubr.f32.gmra.mrb[0].mxu0 %v530
      %v607 = vpop.f32.mrb[0].mxu0
      %v608 = vadd.f32 0.0, %v607
      %v609 = vpop.f32.mrb[0].mxu0
      %610 = vmatprep.mubr.f32.mxu0 0.0
      %611 = vmatmul.mubr.f32.gmra.mrb[0].mxu0 %v533
      %v612 = vpop.f32.mrb[0].mxu0
      %v613 = vadd.f32 0.0, %v612
      %v614 = vpop.f32.mrb[0].mxu0
      %615 = vmatprep.mubr.f32.mxu0 0.0
      %616 = vmatmul.mubr.f32.gmra.mrb[0].mxu0 %v536
      %v617 = vpop.f32.mrb[0].mxu0
      %v618 = vadd.f32 0.0, %v617
      %v619 = vpop.f32.mrb[0].mxu0
      %620 = vmatprep.mubr.f32.mxu0 0.0
      %621 = vmatmul.mubr.f32.gmra.mrb[0].mxu0 %v539
      %v622 = vpop.f32.mrb[0].mxu0
      %v623 = vadd.f32 0.0, %v622
      %v624 = vpop.f32.mrb[0].mxu0
      %625 = vdwg.mxu0
      %626 = vmatprep.subr.mxu0 0.0
      %627 = vmatpush1.msra.mxu0 %v126
      %628 = vmatprep.subr.mxu0 0.0
      %629 = vmatpush1.msra.mxu0 %v127
      %630 = vmatprep.subr.mxu0 0.0
      %631 = vmatpush1.msra.mxu0 %v128
      %632 = vmatprep.subr.mxu0 0.0
      %633 = vmatpush1.msra.mxu0 %v129
      %634 = vmatprep.subr.mxu0 0.0
      %635 = vmatpush1.msra.mxu0 %v130
      %636 = vmatprep.subr.mxu0 0.0
      %637 = vmatpush1.msra.mxu0 %v131
      %638 = vmatprep.subr.mxu0 0.0
      %639 = vmatpush1.msra.mxu0 %v132
      %640 = vmatprep.subr.mxu0 0.0
      %641 = vmatpush1.msra.mxu0 0.0
      %642 = vmatprep.subr.mxu0 0.0
      %643 = vmatpush1.msra.mxu0 0.0
      %644 = vmatprep.subr.mxu0 0.0
      %645 = vmatpush1.msra.mxu0 0.0
      %646 = vmatprep.subr.mxu0 0.0
      %647 = vmatpush1.msra.mxu0 0.0
      %648 = vmatprep.subr.mxu0 0.0
      %649 = vmatpush1.msra.mxu0 0.0
      %650 = vmatprep.subr.mxu0 0.0
      %651 = vmatpush1.msra.mxu0 0.0
      %652 = vmatprep.subr.mxu0 0.0
      %653 = vmatpush1.msra.mxu0 0.0
      %654 = vmatprep.subr.mxu0 0.0
      %655 = vmatpush1.msra.mxu0 0.0
      %656 = vmatprep.subr.mxu0 0.0
      %657 = vmatpush1.msra.mxu0 0.0
      %658 = vmatprep.subr.mxu0 0.0
      %659 = vmatpush1.msra.mxu0 0.0
      %660 = vmatprep.subr.mxu0 0.0
      %661 = vmatpush1.msra.mxu0 0.0
      %662 = vmatprep.subr.mxu0 0.0
      %663 = vmatpush1.msra.mxu0 0.0
      %664 = vmatprep.subr.mxu0 0.0
      %665 = vmatpush1.msra.mxu0 0.0
      %666 = vmatprep.subr.mxu0 0.0
      %667 = vmatpush1.msra.mxu0 0.0
      %668 = vmatprep.subr.mxu0 0.0
      %669 = vmatpush1.msra.mxu0 0.0
      %670 = vmatprep.subr.mxu0 0.0
      %671 = vmatpush1.msra.mxu0 0.0
      %672 = vmatprep.subr.mxu0 0.0
      %673 = vmatpush1.msra.mxu0 0.0
      %674 = vmatprep.subr.mxu0 0.0
      %675 = vmatpush1.msra.mxu0 0.0
      %676 = vmatprep.subr.mxu0 0.0
      %677 = vmatpush1.msra.mxu0 0.0
      %678 = vmatprep.subr.mxu0 0.0
      %679 = vmatpush1.msra.mxu0 0.0
      %680 = vmatprep.subr.mxu0 0.0
      %681 = vmatpush1.msra.mxu0 0.0
      %682 = vmatprep.subr.mxu0 0.0
      %683 = vmatpush1.msra.mxu0 0.0
      %684 = vmatprep.subr.mxu0 0.0
      %685 = vmatpush1.msra.mxu0 0.0
      %686 = vmatprep.subr.mxu0 0.0
      %687 = vmatpush1.msra.mxu0 0.0
      %688 = vmatprep.subr.mxu0 0.0
      %689 = vmatpush1.msra.mxu0 0.0
      %690 = vmatprep.mubr.f32.mxu0 0.0
      %691 = vmatmul.mubr.f32.gmra.mrb[0].mxu0 %v530
      %v692 = vpop.f32.mrb[0].mxu0
      %v693 = vadd.f32 0.0, %v692
      %v694 = vpop.f32.mrb[0].mxu0
      %695 = vmatprep.mubr.f32.mxu0 0.0
      %696 = vmatmul.mubr.f32.gmra.mrb[0].mxu0 %v533
      %v697 = vpop.f32.mrb[0].mxu0
      %v698 = vadd.f32 0.0, %v697
      %v699 = vpop.f32.mrb[0].mxu0
      %700 = vmatprep.mubr.f32.mxu0 0.0
      %701 = vmatmul.mubr.f32.gmra.mrb[0].mxu0 %v536
      %v702 = vpop.f32.mrb[0].mxu0
      %v703 = vadd.f32 0.0, %v702
      %v704 = vpop.f32.mrb[0].mxu0
      %705 = vmatprep.mubr.f32.mxu0 0.0
      %706 = vmatmul.mubr.f32.gmra.mrb[0].mxu0 %v539
      %v707 = vpop.f32.mrb[0].mxu0
      %v708 = vadd.f32 0.0, %v707
      %v709 = vpop.f32.mrb[0].mxu0
      %710 = vdwg.mxu0
      %v711 = vmax.f32 %v608, %v693
      %v712 = vmax.f32 %v613, %v698
      %v713 = vmax.f32 %v618, %v703
      %v714 = vmax.f32 %v623, %v708
      %716 = vset.pattern.permute.xlu0 0
      %717 = vperm.xlu0 %716, %v43
      %v718 = vpop.permute.xlu0 %717
      %721 = vset.pattern.permute.xlu0 0
      %722 = vperm.xlu0 %721, %v44
      %v723 = vpop.permute.xlu0 %722
      %726 = vset.pattern.permute.xlu0 0
      %727 = vperm.xlu0 %726, %v45
      %v728 = vpop.permute.xlu0 %727
      %731 = vset.pattern.permute.xlu0 0
      %732 = vperm.xlu0 %731, %v46
      %v733 = vpop.permute.xlu0 %732
      %v735 = vadd.f32 %v711, %v718
      %v736 = vadd.f32 %v712, %v723
      %v737 = vadd.f32 %v713, %v728
      %v738 = vadd.f32 %v714, %v733
      %v739 = vmax.f32 %v735, 0.0
      %v740 = vmax.f32 %v736, 0.0
      %v741 = vmax.f32 %v737, 0.0
      %v742 = vmax.f32 %v738, 0.0
      %s743 = smul.u32 %s134, 32
      %s744 = scalar_lea.vmem [#allocation2], %s743
      %745 = vst.msk [vmem:[%s744] sm:$0xff] %vm150, %v739
      %746 = vst.msk [vmem:[%s744 + $0x8] sm:$0xff] %vm150, %v740
      %747 = vst.msk [vmem:[%s744 + $0x10] sm:$0xff] %vm150, %v741
      %748 = vst.msk [vmem:[%s744 + $0x18] sm:$0xff] %vm150, %v742
    $region50: #{forward_pallas.1} parent=1 // loop_footer
      %s138 = sadd.s32 1, %s134
    $region51: #{forward_pallas.1} parent=1 // loop_footer_branch
      %133 = sbr.rel target = $region47
    $region52: #{forward_pallas.1} parent=1 // loop_exit
      _
    loop: start=0, step=1, limit=6
    $region53: #{forward_pallas.1} parent=1 // loop_pre_header
      _
    $region54: #{forward_pallas.1} parent=1 // loop_header
      %s750 = sphi 0, %s754
      %p751 = scmp.ge.s32.totalorder %s750, 6
    $region55: #{forward_pallas.1} parent=1 // loop_header_branch
      %753 = sbr.rel (%p751) target = $region59
    $region56: #{forward_pallas.1} parent=1 // loop_body
      %s755 = smul.u32 %s750, 2
      %s756 = smul.u32 %s755, 32
      %s757 = scalar_lea.vmem [#allocation2], %s756
      %v758 = vld [vmem:[%s757] sm:$0xff]
      %v759 = vld [vmem:[%s757 + $0x8] sm:$0xff]
      %v760 = vld [vmem:[%s757 + $0x10] sm:$0xff]
      %v761 = vld [vmem:[%s757 + $0x18] sm:$0xff]
      %v762 = vld [vmem:[%s757 + $0x20] sm:$0xff]
      %v763 = vld [vmem:[%s757 + $0x28] sm:$0xff]
      %v764 = vld [vmem:[%s757 + $0x30] sm:$0xff]
      %v765 = vld [vmem:[%s757 + $0x38] sm:$0xff]
      %v766 = vld [vmem:[%s757 + $0x40] sm:$0xff]
      %v767 = vld [vmem:[%s757 + $0x48] sm:$0xff]
      %v768 = vld [vmem:[%s757 + $0x50] sm:$0xff]
      %v769 = vld [vmem:[%s757 + $0x58] sm:$0xff]
      %774 = vrot.lane.b32.xlu0 %v758, 126
      %v775 = vpop.permute.xlu0 %774
      %776 = vrot.lane.b32.xlu0 %v759, 126
      %v777 = vpop.permute.xlu0 %776
      %778 = vrot.lane.b32.xlu0 %v760, 126
      %v779 = vpop.permute.xlu0 %778
      %780 = vrot.lane.b32.xlu0 %v761, 126
      %v781 = vpop.permute.xlu0 %780
      %vm786 = vcmask 97280
      %v787 = vsel %vm786, %v758, %v775
      %v788 = vsel %vm786, %v759, %v777
      %v789 = vsel %vm786, %v760, %v779
      %v790 = vsel %vm786, %v761, %v781
      %791 = vrot.lane.b32.xlu0 %v758, 127
      %v792 = vpop.permute.xlu0 %791
      %793 = vrot.lane.b32.xlu0 %v759, 127
      %v794 = vpop.permute.xlu0 %793
      %795 = vrot.lane.b32.xlu0 %v760, 127
      %v796 = vpop.permute.xlu0 %795
      %797 = vrot.lane.b32.xlu0 %v761, 127
      %v798 = vpop.permute.xlu0 %797
      %803 = vrot.lane.b32.xlu0 %v758, 125
      %v804 = vpop.permute.xlu0 %803
      %805 = vrot.lane.b32.xlu0 %v759, 125
      %v806 = vpop.permute.xlu0 %805
      %807 = vrot.lane.b32.xlu0 %v760, 125
      %v808 = vpop.permute.xlu0 %807
      %809 = vrot.lane.b32.xlu0 %v761, 125
      %v810 = vpop.permute.xlu0 %809
      %v815 = vsel %vm786, %v792, %v804
      %v816 = vsel %vm786, %v794, %v806
      %v817 = vsel %vm786, %v796, %v808
      %v818 = vsel %vm786, %v798, %v810
      %819 = vrot.lane.b32.xlu0 %v758, 124
      %v820 = vpop.permute.xlu0 %819
      %821 = vrot.lane.b32.xlu0 %v759, 124
      %v822 = vpop.permute.xlu0 %821
      %823 = vrot.lane.b32.xlu0 %v760, 124
      %v824 = vpop.permute.xlu0 %823
      %825 = vrot.lane.b32.xlu0 %v761, 124
      %v826 = vpop.permute.xlu0 %825
      %v831 = vsel %vm786, %v775, %v820
      %v832 = vsel %vm786, %v777, %v822
      %v833 = vsel %vm786, %v779, %v824
      %v834 = vsel %vm786, %v781, %v826
      %839 = vrot.lane.b32.xlu0 %v762, 126
      %v840 = vpop.permute.xlu0 %839
      %841 = vrot.lane.b32.xlu0 %v763, 126
      %v842 = vpop.permute.xlu0 %841
      %843 = vrot.lane.b32.xlu0 %v764, 126
      %v844 = vpop.permute.xlu0 %843
      %845 = vrot.lane.b32.xlu0 %v765, 126
      %v846 = vpop.permute.xlu0 %845
      %v851 = vsel %vm786, %v762, %v840
      %v852 = vsel %vm786, %v763, %v842
      %v853 = vsel %vm786, %v764, %v844
      %v854 = vsel %vm786, %v765, %v846
      %855 = vrot.lane.b32.xlu0 %v762, 127
      %v856 = vpop.permute.xlu0 %855
      %857 = vrot.lane.b32.xlu0 %v763, 127
      %v858 = vpop.permute.xlu0 %857
      %859 = vrot.lane.b32.xlu0 %v764, 127
      %v860 = vpop.permute.xlu0 %859
      %861 = vrot.lane.b32.xlu0 %v765, 127
      %v862 = vpop.permute.xlu0 %861
      %867 = vrot.lane.b32.xlu0 %v762, 125
      %v868 = vpop.permute.xlu0 %867
      %869 = vrot.lane.b32.xlu0 %v763, 125
      %v870 = vpop.permute.xlu0 %869
      %871 = vrot.lane.b32.xlu0 %v764, 125
      %v872 = vpop.permute.xlu0 %871
      %873 = vrot.lane.b32.xlu0 %v765, 125
      %v874 = vpop.permute.xlu0 %873
      %v879 = vsel %vm786, %v856, %v868
      %v880 = vsel %vm786, %v858, %v870
      %v881 = vsel %vm786, %v860, %v872
      %v882 = vsel %vm786, %v862, %v874
      %883 = vrot.lane.b32.xlu0 %v762, 124
      %v884 = vpop.permute.xlu0 %883
      %885 = vrot.lane.b32.xlu0 %v763, 124
      %v886 = vpop.permute.xlu0 %885
      %887 = vrot.lane.b32.xlu0 %v764, 124
      %v888 = vpop.permute.xlu0 %887
      %889 = vrot.lane.b32.xlu0 %v765, 124
      %v890 = vpop.permute.xlu0 %889
      %v895 = vsel %vm786, %v840, %v884
      %v896 = vsel %vm786, %v842, %v886
      %v897 = vsel %vm786, %v844, %v888
      %v898 = vsel %vm786, %v846, %v890
      %903 = vrot.lane.b32.xlu0 %v766, 126
      %v904 = vpop.permute.xlu0 %903
      %905 = vrot.lane.b32.xlu0 %v767, 126
      %v906 = vpop.permute.xlu0 %905
      %907 = vrot.lane.b32.xlu0 %v768, 126
      %v908 = vpop.permute.xlu0 %907
      %909 = vrot.lane.b32.xlu0 %v769, 126
      %v910 = vpop.permute.xlu0 %909
      %v915 = vsel %vm786, %v766, %v904
      %v916 = vsel %vm786, %v767, %v906
      %v917 = vsel %vm786, %v768, %v908
      %v918 = vsel %vm786, %v769, %v910
      %919 = vrot.lane.b32.xlu0 %v766, 127
      %v920 = vpop.permute.xlu0 %919
      %921 = vrot.lane.b32.xlu0 %v767, 127
      %v922 = vpop.permute.xlu0 %921
      %923 = vrot.lane.b32.xlu0 %v768, 127
      %v924 = vpop.permute.xlu0 %923
      %925 = vrot.lane.b32.xlu0 %v769, 127
      %v926 = vpop.permute.xlu0 %925
      %931 = vrot.lane.b32.xlu0 %v766, 125
      %v932 = vpop.permute.xlu0 %931
      %933 = vrot.lane.b32.xlu0 %v767, 125
      %v934 = vpop.permute.xlu0 %933
      %935 = vrot.lane.b32.xlu0 %v768, 125
      %v936 = vpop.permute.xlu0 %935
      %937 = vrot.lane.b32.xlu0 %v769, 125
      %v938 = vpop.permute.xlu0 %937
      %v943 = vsel %vm786, %v920, %v932
      %v944 = vsel %vm786, %v922, %v934
      %v945 = vsel %vm786, %v924, %v936
      %v946 = vsel %vm786, %v926, %v938
      %947 = vrot.lane.b32.xlu0 %v766, 124
      %v948 = vpop.permute.xlu0 %947
      %949 = vrot.lane.b32.xlu0 %v767, 124
      %v950 = vpop.permute.xlu0 %949
      %951 = vrot.lane.b32.xlu0 %v768, 124
      %v952 = vpop.permute.xlu0 %951
      %953 = vrot.lane.b32.xlu0 %v769, 124
      %v954 = vpop.permute.xlu0 %953
      %v959 = vsel %vm786, %v904, %v948
      %v960 = vsel %vm786, %v906, %v950
      %v961 = vsel %vm786, %v908, %v952
      %v962 = vsel %vm786, %v910, %v954
      %vm963 = vcmask 261120
      %v965 = vsel %vm963, %v49, 0
      %v968 = vsel %vm963, %v52, 0
      %v971 = vsel %vm963, %v55, 0
      %v974 = vsel %vm963, %v58, 0
      %v977 = vsel %vm963, %v61, 0
      %v980 = vsel %vm963, %v64, 0
      %v983 = vsel %vm963, %v67, 0
      %v986 = vsel %vm963, %v70, 0
      %988 = vmatprep.subr.mxu0 0.0
      %989 = vmatpush1.msra.mxu0 %v787
      %990 = vmatprep.subr.mxu0 0.0
      %991 = vmatpush1.msra.mxu0 %v788
      %992 = vmatprep.subr.mxu0 0.0
      %993 = vmatpush1.msra.mxu0 %v789
      %994 = vmatprep.subr.mxu0 0.0
      %995 = vmatpush1.msra.mxu0 %v790
      %996 = vmatprep.subr.mxu0 0.0
      %997 = vmatpush1.msra.mxu0 %v815
      %998 = vmatprep.subr.mxu0 0.0
      %999 = vmatpush1.msra.mxu0 %v816
      %1000 = vmatprep.subr.mxu0 0.0
      %1001 = vmatpush1.msra.mxu0 %v817
      %1002 = vmatprep.subr.mxu0 0.0
      %1003 = vmatpush1.msra.mxu0 %v818
      %1004 = vmatprep.subr.mxu0 0.0
      %1005 = vmatpush1.msra.mxu0 %v831
      %1006 = vmatprep.subr.mxu0 0.0
      %1007 = vmatpush1.msra.mxu0 %v832
      %1008 = vmatprep.subr.mxu0 0.0
      %1009 = vmatpush1.msra.mxu0 %v833
      %1010 = vmatprep.subr.mxu0 0.0
      %1011 = vmatpush1.msra.mxu0 %v834
      %1012 = vmatprep.subr.mxu0 0.0
      %1013 = vmatpush1.msra.mxu0 %v851
      %1014 = vmatprep.subr.mxu0 0.0
      %1015 = vmatpush1.msra.mxu0 %v852
      %1016 = vmatprep.subr.mxu0 0.0
      %1017 = vmatpush1.msra.mxu0 %v853
      %1018 = vmatprep.subr.mxu0 0.0
      %1019 = vmatpush1.msra.mxu0 %v854
      %1020 = vmatprep.subr.mxu0 0.0
      %1021 = vmatpush1.msra.mxu0 %v879
      %1022 = vmatprep.subr.mxu0 0.0
      %1023 = vmatpush1.msra.mxu0 %v880
      %1024 = vmatprep.subr.mxu0 0.0
      %1025 = vmatpush1.msra.mxu0 %v881
      %1026 = vmatprep.subr.mxu0 0.0
      %1027 = vmatpush1.msra.mxu0 %v882
      %1028 = vmatprep.subr.mxu0 0.0
      %1029 = vmatpush1.msra.mxu0 %v895
      %1030 = vmatprep.subr.mxu0 0.0
      %1031 = vmatpush1.msra.mxu0 %v896
      %1032 = vmatprep.subr.mxu0 0.0
      %1033 = vmatpush1.msra.mxu0 %v897
      %1034 = vmatprep.subr.mxu0 0.0
      %1035 = vmatpush1.msra.mxu0 %v898
      %1036 = vmatprep.subr.mxu0 0.0
      %1037 = vmatpush1.msra.mxu0 %v915
      %1038 = vmatprep.subr.mxu0 0.0
      %1039 = vmatpush1.msra.mxu0 %v916
      %1040 = vmatprep.subr.mxu0 0.0
      %1041 = vmatpush1.msra.mxu0 %v917
      %1042 = vmatprep.subr.mxu0 0.0
      %1043 = vmatpush1.msra.mxu0 %v918
      %1044 = vmatprep.subr.mxu0 0.0
      %1045 = vmatpush1.msra.mxu0 %v943
      %1046 = vmatprep.subr.mxu0 0.0
      %1047 = vmatpush1.msra.mxu0 %v944
      %1048 = vmatprep.subr.mxu0 0.0
      %1049 = vmatpush1.msra.mxu0 %v945
      %1050 = vmatprep.subr.mxu0 0.0
      %1051 = vmatpush1.msra.mxu0 %v946
      %1052 = vmatprep.mubr.f32.mxu0 %v48
      %1053 = vmatmul.mubr.f32.gmra.mrb[0].mxu0 %v47
      %v1054 = vpop.f32.mrb[0].mxu0
      %v1055 = vadd.f32 0.0, %v1054
      %v1056 = vpop.f32.mrb[0].mxu0
      %1057 = vmatprep.mubr.f32.mxu0 %v51
      %1058 = vmatmul.mubr.f32.gmra.mrb[0].mxu0 %v50
      %v1059 = vpop.f32.mrb[0].mxu0
      %v1060 = vadd.f32 0.0, %v1059
      %v1061 = vpop.f32.mrb[0].mxu0
      %1062 = vmatprep.mubr.f32.mxu0 %v54
      %1063 = vmatmul.mubr.f32.gmra.mrb[0].mxu0 %v53
      %v1064 = vpop.f32.mrb[0].mxu0
      %v1065 = vadd.f32 0.0, %v1064
      %v1066 = vpop.f32.mrb[0].mxu0
      %1067 = vmatprep.mubr.f32.mxu0 %v57
      %1068 = vmatmul.mubr.f32.gmra.mrb[0].mxu0 %v56
      %v1069 = vpop.f32.mrb[0].mxu0
      %v1070 = vadd.f32 0.0, %v1069
      %v1071 = vpop.f32.mrb[0].mxu0
      %1072 = vmatprep.mubr.f32.mxu0 %v60
      %1073 = vmatmul.mubr.f32.gmra.mrb[0].mxu0 %v59
      %v1074 = vpop.f32.mrb[0].mxu0
      %v1075 = vadd.f32 0.0, %v1074
      %v1076 = vpop.f32.mrb[0].mxu0
      %1077 = vmatprep.mubr.f32.mxu0 %v63
      %1078 = vmatmul.mubr.f32.gmra.mrb[0].mxu0 %v62
      %v1079 = vpop.f32.mrb[0].mxu0
      %v1080 = vadd.f32 0.0, %v1079
      %v1081 = vpop.f32.mrb[0].mxu0
      %1082 = vmatprep.mubr.f32.mxu0 %v66
      %1083 = vmatmul.mubr.f32.gmra.mrb[0].mxu0 %v65
      %v1084 = vpop.f32.mrb[0].mxu0
      %v1085 = vadd.f32 0.0, %v1084
      %v1086 = vpop.f32.mrb[0].mxu0
      %1087 = vmatprep.mubr.f32.mxu0 %v69
      %1088 = vmatmul.mubr.f32.gmra.mrb[0].mxu0 %v68
      %v1089 = vpop.f32.mrb[0].mxu0
      %v1090 = vadd.f32 0.0, %v1089
      %v1091 = vpop.f32.mrb[0].mxu0
      %1092 = vdwg.mxu0
      %1093 = vmatprep.subr.mxu0 0.0
      %1094 = vmatpush1.msra.mxu0 %v959
      %1095 = vmatprep.subr.mxu0 0.0
      %1096 = vmatpush1.msra.mxu0 %v960
      %1097 = vmatprep.subr.mxu0 0.0
      %1098 = vmatpush1.msra.mxu0 %v961
      %1099 = vmatprep.subr.mxu0 0.0
      %1100 = vmatpush1.msra.mxu0 %v962
      %1101 = vmatprep.subr.mxu0 0.0
      %1102 = vmatpush1.msra.mxu0 0.0
      %1103 = vmatprep.subr.mxu0 0.0
      %1104 = vmatpush1.msra.mxu0 0.0
      %1105 = vmatprep.subr.mxu0 0.0
      %1106 = vmatpush1.msra.mxu0 0.0
      %1107 = vmatprep.subr.mxu0 0.0
      %1108 = vmatpush1.msra.mxu0 0.0
      %1109 = vmatprep.subr.mxu0 0.0
      %1110 = vmatpush1.msra.mxu0 0.0
      %1111 = vmatprep.subr.mxu0 0.0
      %1112 = vmatpush1.msra.mxu0 0.0
      %1113 = vmatprep.subr.mxu0 0.0
      %1114 = vmatpush1.msra.mxu0 0.0
      %1115 = vmatprep.subr.mxu0 0.0
      %1116 = vmatpush1.msra.mxu0 0.0
      %1117 = vmatprep.subr.mxu0 0.0
      %1118 = vmatpush1.msra.mxu0 0.0
      %1119 = vmatprep.subr.mxu0 0.0
      %1120 = vmatpush1.msra.mxu0 0.0
      %1121 = vmatprep.subr.mxu0 0.0
      %1122 = vmatpush1.msra.mxu0 0.0
      %1123 = vmatprep.subr.mxu0 0.0
      %1124 = vmatpush1.msra.mxu0 0.0
      %1125 = vmatprep.subr.mxu0 0.0
      %1126 = vmatpush1.msra.mxu0 0.0
      %1127 = vmatprep.subr.mxu0 0.0
      %1128 = vmatpush1.msra.mxu0 0.0
      %1129 = vmatprep.subr.mxu0 0.0
      %1130 = vmatpush1.msra.mxu0 0.0
      %1131 = vmatprep.subr.mxu0 0.0
      %1132 = vmatpush1.msra.mxu0 0.0
      %1133 = vmatprep.subr.mxu0 0.0
      %1134 = vmatpush1.msra.mxu0 0.0
      %1135 = vmatprep.subr.mxu0 0.0
      %1136 = vmatpush1.msra.mxu0 0.0
      %1137 = vmatprep.subr.mxu0 0.0
      %1138 = vmatpush1.msra.mxu0 0.0
      %1139 = vmatprep.subr.mxu0 0.0
      %1140 = vmatpush1.msra.mxu0 0.0
      %1141 = vmatprep.subr.mxu0 0.0
      %1142 = vmatpush1.msra.mxu0 0.0
      %1143 = vmatprep.subr.mxu0 0.0
      %1144 = vmatpush1.msra.mxu0 0.0
      %1145 = vmatprep.subr.mxu0 0.0
      %1146 = vmatpush1.msra.mxu0 0.0
      %1147 = vmatprep.subr.mxu0 0.0
      %1148 = vmatpush1.msra.mxu0 0.0
      %1149 = vmatprep.subr.mxu0 0.0
      %1150 = vmatpush1.msra.mxu0 0.0
      %1151 = vmatprep.subr.mxu0 0.0
      %1152 = vmatpush1.msra.mxu0 0.0
      %1153 = vmatprep.subr.mxu0 0.0
      %1154 = vmatpush1.msra.mxu0 0.0
      %1155 = vmatprep.subr.mxu0 0.0
      %1156 = vmatpush1.msra.mxu0 0.0
      %1157 = vmatprep.mubr.f32.mxu0 0.0
      %1158 = vmatmul.mubr.f32.gmra.mrb[0].mxu0 %v965
      %v1159 = vpop.f32.mrb[0].mxu0
      %v1160 = vadd.f32 %v1055, %v1159
      %v1161 = vpop.f32.mrb[0].mxu0
      %1162 = vmatprep.mubr.f32.mxu0 0.0
      %1163 = vmatmul.mubr.f32.gmra.mrb[0].mxu0 %v968
      %v1164 = vpop.f32.mrb[0].mxu0
      %v1165 = vadd.f32 %v1060, %v1164
      %v1166 = vpop.f32.mrb[0].mxu0
      %1167 = vmatprep.mubr.f32.mxu0 0.0
      %1168 = vmatmul.mubr.f32.gmra.mrb[0].mxu0 %v971
      %v1169 = vpop.f32.mrb[0].mxu0
      %v1170 = vadd.f32 %v1065, %v1169
      %v1171 = vpop.f32.mrb[0].mxu0
      %1172 = vmatprep.mubr.f32.mxu0 0.0
      %1173 = vmatmul.mubr.f32.gmra.mrb[0].mxu0 %v974
      %v1174 = vpop.f32.mrb[0].mxu0
      %v1175 = vadd.f32 %v1070, %v1174
      %v1176 = vpop.f32.mrb[0].mxu0
      %1177 = vmatprep.mubr.f32.mxu0 0.0
      %1178 = vmatmul.mubr.f32.gmra.mrb[0].mxu0 %v977
      %v1179 = vpop.f32.mrb[0].mxu0
      %v1180 = vadd.f32 %v1075, %v1179
      %v1181 = vpop.f32.mrb[0].mxu0
      %1182 = vmatprep.mubr.f32.mxu0 0.0
      %1183 = vmatmul.mubr.f32.gmra.mrb[0].mxu0 %v980
      %v1184 = vpop.f32.mrb[0].mxu0
      %v1185 = vadd.f32 %v1080, %v1184
      %v1186 = vpop.f32.mrb[0].mxu0
      %1187 = vmatprep.mubr.f32.mxu0 0.0
      %1188 = vmatmul.mubr.f32.gmra.mrb[0].mxu0 %v983
      %v1189 = vpop.f32.mrb[0].mxu0
      %v1190 = vadd.f32 %v1085, %v1189
      %v1191 = vpop.f32.mrb[0].mxu0
      %1192 = vmatprep.mubr.f32.mxu0 0.0
      %1193 = vmatmul.mubr.f32.gmra.mrb[0].mxu0 %v986
      %v1194 = vpop.f32.mrb[0].mxu0
      %v1195 = vadd.f32 %v1090, %v1194
      %v1196 = vpop.f32.mrb[0].mxu0
      %1197 = vdwg.mxu0
      %s1198 = sadd.s32 %s755, 1
      %s1199 = smul.u32 %s1198, 32
      %s1200 = scalar_lea.vmem [#allocation2], %s1199
      %v1201 = vld [vmem:[%s1200] sm:$0xff]
      %v1202 = vld [vmem:[%s1200 + $0x8] sm:$0xff]
      %v1203 = vld [vmem:[%s1200 + $0x10] sm:$0xff]
      %v1204 = vld [vmem:[%s1200 + $0x18] sm:$0xff]
      %v1205 = vld [vmem:[%s1200 + $0x20] sm:$0xff]
      %v1206 = vld [vmem:[%s1200 + $0x28] sm:$0xff]
      %v1207 = vld [vmem:[%s1200 + $0x30] sm:$0xff]
      %v1208 = vld [vmem:[%s1200 + $0x38] sm:$0xff]
      %v1209 = vld [vmem:[%s1200 + $0x40] sm:$0xff]
      %v1210 = vld [vmem:[%s1200 + $0x48] sm:$0xff]
      %v1211 = vld [vmem:[%s1200 + $0x50] sm:$0xff]
      %v1212 = vld [vmem:[%s1200 + $0x58] sm:$0xff]
      %1217 = vrot.lane.b32.xlu0 %v1201, 126
      %v1218 = vpop.permute.xlu0 %1217
      %1219 = vrot.lane.b32.xlu0 %v1202, 126
      %v1220 = vpop.permute.xlu0 %1219
      %1221 = vrot.lane.b32.xlu0 %v1203, 126
      %v1222 = vpop.permute.xlu0 %1221
      %1223 = vrot.lane.b32.xlu0 %v1204, 126
      %v1224 = vpop.permute.xlu0 %1223
      %v1229 = vsel %vm786, %v1201, %v1218
      %v1230 = vsel %vm786, %v1202, %v1220
      %v1231 = vsel %vm786, %v1203, %v1222
      %v1232 = vsel %vm786, %v1204, %v1224
      %1233 = vrot.lane.b32.xlu0 %v1201, 127
      %v1234 = vpop.permute.xlu0 %1233
      %1235 = vrot.lane.b32.xlu0 %v1202, 127
      %v1236 = vpop.permute.xlu0 %1235
      %1237 = vrot.lane.b32.xlu0 %v1203, 127
      %v1238 = vpop.permute.xlu0 %1237
      %1239 = vrot.lane.b32.xlu0 %v1204, 127
      %v1240 = vpop.permute.xlu0 %1239
      %1245 = vrot.lane.b32.xlu0 %v1201, 125
      %v1246 = vpop.permute.xlu0 %1245
      %1247 = vrot.lane.b32.xlu0 %v1202, 125
      %v1248 = vpop.permute.xlu0 %1247
      %1249 = vrot.lane.b32.xlu0 %v1203, 125
      %v1250 = vpop.permute.xlu0 %1249
      %1251 = vrot.lane.b32.xlu0 %v1204, 125
      %v1252 = vpop.permute.xlu0 %1251
      %v1257 = vsel %vm786, %v1234, %v1246
      %v1258 = vsel %vm786, %v1236, %v1248
      %v1259 = vsel %vm786, %v1238, %v1250
      %v1260 = vsel %vm786, %v1240, %v1252
      %1261 = vrot.lane.b32.xlu0 %v1201, 124
      %v1262 = vpop.permute.xlu0 %1261
      %1263 = vrot.lane.b32.xlu0 %v1202, 124
      %v1264 = vpop.permute.xlu0 %1263
      %1265 = vrot.lane.b32.xlu0 %v1203, 124
      %v1266 = vpop.permute.xlu0 %1265
      %1267 = vrot.lane.b32.xlu0 %v1204, 124
      %v1268 = vpop.permute.xlu0 %1267
      %v1273 = vsel %vm786, %v1218, %v1262
      %v1274 = vsel %vm786, %v1220, %v1264
      %v1275 = vsel %vm786, %v1222, %v1266
      %v1276 = vsel %vm786, %v1224, %v1268
      %1281 = vrot.lane.b32.xlu0 %v1205, 126
      %v1282 = vpop.permute.xlu0 %1281
      %1283 = vrot.lane.b32.xlu0 %v1206, 126
      %v1284 = vpop.permute.xlu0 %1283
      %1285 = vrot.lane.b32.xlu0 %v1207, 126
      %v1286 = vpop.permute.xlu0 %1285
      %1287 = vrot.lane.b32.xlu0 %v1208, 126
      %v1288 = vpop.permute.xlu0 %1287
      %v1293 = vsel %vm786, %v1205, %v1282
      %v1294 = vsel %vm786, %v1206, %v1284
      %v1295 = vsel %vm786, %v1207, %v1286
      %v1296 = vsel %vm786, %v1208, %v1288
      %1297 = vrot.lane.b32.xlu0 %v1205, 127
      %v1298 = vpop.permute.xlu0 %1297
      %1299 = vrot.lane.b32.xlu0 %v1206, 127
      %v1300 = vpop.permute.xlu0 %1299
      %1301 = vrot.lane.b32.xlu0 %v1207, 127
      %v1302 = vpop.permute.xlu0 %1301
      %1303 = vrot.lane.b32.xlu0 %v1208, 127
      %v1304 = vpop.permute.xlu0 %1303
      %1309 = vrot.lane.b32.xlu0 %v1205, 125
      %v1310 = vpop.permute.xlu0 %1309
      %1311 = vrot.lane.b32.xlu0 %v1206, 125
      %v1312 = vpop.permute.xlu0 %1311
      %1313 = vrot.lane.b32.xlu0 %v1207, 125
      %v1314 = vpop.permute.xlu0 %1313
      %1315 = vrot.lane.b32.xlu0 %v1208, 125
      %v1316 = vpop.permute.xlu0 %1315
      %v1321 = vsel %vm786, %v1298, %v1310
      %v1322 = vsel %vm786, %v1300, %v1312
      %v1323 = vsel %vm786, %v1302, %v1314
      %v1324 = vsel %vm786, %v1304, %v1316
      %1325 = vrot.lane.b32.xlu0 %v1205, 124
      %v1326 = vpop.permute.xlu0 %1325
      %1327 = vrot.lane.b32.xlu0 %v1206, 124
      %v1328 = vpop.permute.xlu0 %1327
      %1329 = vrot.lane.b32.xlu0 %v1207, 124
      %v1330 = vpop.permute.xlu0 %1329
      %1331 = vrot.lane.b32.xlu0 %v1208, 124
      %v1332 = vpop.permute.xlu0 %1331
      %v1337 = vsel %vm786, %v1282, %v1326
      %v1338 = vsel %vm786, %v1284, %v1328
      %v1339 = vsel %vm786, %v1286, %v1330
      %v1340 = vsel %vm786, %v1288, %v1332
      %1345 = vrot.lane.b32.xlu0 %v1209, 126
      %v1346 = vpop.permute.xlu0 %1345
      %1347 = vrot.lane.b32.xlu0 %v1210, 126
      %v1348 = vpop.permute.xlu0 %1347
      %1349 = vrot.lane.b32.xlu0 %v1211, 126
      %v1350 = vpop.permute.xlu0 %1349
      %1351 = vrot.lane.b32.xlu0 %v1212, 126
      %v1352 = vpop.permute.xlu0 %1351
      %v1357 = vsel %vm786, %v1209, %v1346
      %v1358 = vsel %vm786, %v1210, %v1348
      %v1359 = vsel %vm786, %v1211, %v1350
      %v1360 = vsel %vm786, %v1212, %v1352
      %1361 = vrot.lane.b32.xlu0 %v1209, 127
      %v1362 = vpop.permute.xlu0 %1361
      %1363 = vrot.lane.b32.xlu0 %v1210, 127
      %v1364 = vpop.permute.xlu0 %1363
      %1365 = vrot.lane.b32.xlu0 %v1211, 127
      %v1366 = vpop.permute.xlu0 %1365
      %1367 = vrot.lane.b32.xlu0 %v1212, 127
      %v1368 = vpop.permute.xlu0 %1367
      %1373 = vrot.lane.b32.xlu0 %v1209, 125
      %v1374 = vpop.permute.xlu0 %1373
      %1375 = vrot.lane.b32.xlu0 %v1210, 125
      %v1376 = vpop.permute.xlu0 %1375
      %1377 = vrot.lane.b32.xlu0 %v1211, 125
      %v1378 = vpop.permute.xlu0 %1377
      %1379 = vrot.lane.b32.xlu0 %v1212, 125
      %v1380 = vpop.permute.xlu0 %1379
      %v1385 = vsel %vm786, %v1362, %v1374
      %v1386 = vsel %vm786, %v1364, %v1376
      %v1387 = vsel %vm786, %v1366, %v1378
      %v1388 = vsel %vm786, %v1368, %v1380
      %1389 = vrot.lane.b32.xlu0 %v1209, 124
      %v1390 = vpop.permute.xlu0 %1389
      %1391 = vrot.lane.b32.xlu0 %v1210, 124
      %v1392 = vpop.permute.xlu0 %1391
      %1393 = vrot.lane.b32.xlu0 %v1211, 124
      %v1394 = vpop.permute.xlu0 %1393
      %1395 = vrot.lane.b32.xlu0 %v1212, 124
      %v1396 = vpop.permute.xlu0 %1395
      %v1401 = vsel %vm786, %v1346, %v1390
      %v1402 = vsel %vm786, %v1348, %v1392
      %v1403 = vsel %vm786, %v1350, %v1394
      %v1404 = vsel %vm786, %v1352, %v1396
      %1405 = vmatprep.subr.mxu0 0.0
      %1406 = vmatpush1.msra.mxu0 %v1229
      %1407 = vmatprep.subr.mxu0 0.0
      %1408 = vmatpush1.msra.mxu0 %v1230
      %1409 = vmatprep.subr.mxu0 0.0
      %1410 = vmatpush1.msra.mxu0 %v1231
      %1411 = vmatprep.subr.mxu0 0.0
      %1412 = vmatpush1.msra.mxu0 %v1232
      %1413 = vmatprep.subr.mxu0 0.0
      %1414 = vmatpush1.msra.mxu0 %v1257
      %1415 = vmatprep.subr.mxu0 0.0
      %1416 = vmatpush1.msra.mxu0 %v1258
      %1417 = vmatprep.subr.mxu0 0.0
      %1418 = vmatpush1.msra.mxu0 %v1259
      %1419 = vmatprep.subr.mxu0 0.0
      %1420 = vmatpush1.msra.mxu0 %v1260
      %1421 = vmatprep.subr.mxu0 0.0
      %1422 = vmatpush1.msra.mxu0 %v1273
      %1423 = vmatprep.subr.mxu0 0.0
      %1424 = vmatpush1.msra.mxu0 %v1274
      %1425 = vmatprep.subr.mxu0 0.0
      %1426 = vmatpush1.msra.mxu0 %v1275
      %1427 = vmatprep.subr.mxu0 0.0
      %1428 = vmatpush1.msra.mxu0 %v1276
      %1429 = vmatprep.subr.mxu0 0.0
      %1430 = vmatpush1.msra.mxu0 %v1293
      %1431 = vmatprep.subr.mxu0 0.0
      %1432 = vmatpush1.msra.mxu0 %v1294
      %1433 = vmatprep.subr.mxu0 0.0
      %1434 = vmatpush1.msra.mxu0 %v1295
      %1435 = vmatprep.subr.mxu0 0.0
      %1436 = vmatpush1.msra.mxu0 %v1296
      %1437 = vmatprep.subr.mxu0 0.0
      %1438 = vmatpush1.msra.mxu0 %v1321
      %1439 = vmatprep.subr.mxu0 0.0
      %1440 = vmatpush1.msra.mxu0 %v1322
      %1441 = vmatprep.subr.mxu0 0.0
      %1442 = vmatpush1.msra.mxu0 %v1323
      %1443 = vmatprep.subr.mxu0 0.0
      %1444 = vmatpush1.msra.mxu0 %v1324
      %1445 = vmatprep.subr.mxu0 0.0
      %1446 = vmatpush1.msra.mxu0 %v1337
      %1447 = vmatprep.subr.mxu0 0.0
      %1448 = vmatpush1.msra.mxu0 %v1338
      %1449 = vmatprep.subr.mxu0 0.0
      %1450 = vmatpush1.msra.mxu0 %v1339
      %1451 = vmatprep.subr.mxu0 0.0
      %1452 = vmatpush1.msra.mxu0 %v1340
      %1453 = vmatprep.subr.mxu0 0.0
      %1454 = vmatpush1.msra.mxu0 %v1357
      %1455 = vmatprep.subr.mxu0 0.0
      %1456 = vmatpush1.msra.mxu0 %v1358
      %1457 = vmatprep.subr.mxu0 0.0
      %1458 = vmatpush1.msra.mxu0 %v1359
      %1459 = vmatprep.subr.mxu0 0.0
      %1460 = vmatpush1.msra.mxu0 %v1360
      %1461 = vmatprep.subr.mxu0 0.0
      %1462 = vmatpush1.msra.mxu0 %v1385
      %1463 = vmatprep.subr.mxu0 0.0
      %1464 = vmatpush1.msra.mxu0 %v1386
      %1465 = vmatprep.subr.mxu0 0.0
      %1466 = vmatpush1.msra.mxu0 %v1387
      %1467 = vmatprep.subr.mxu0 0.0
      %1468 = vmatpush1.msra.mxu0 %v1388
      %1469 = vmatprep.mubr.f32.mxu0 %v48
      %1470 = vmatmul.mubr.f32.gmra.mrb[0].mxu0 %v47
      %v1471 = vpop.f32.mrb[0].mxu0
      %v1472 = vadd.f32 0.0, %v1471
      %v1473 = vpop.f32.mrb[0].mxu0
      %1474 = vmatprep.mubr.f32.mxu0 %v51
      %1475 = vmatmul.mubr.f32.gmra.mrb[0].mxu0 %v50
      %v1476 = vpop.f32.mrb[0].mxu0
      %v1477 = vadd.f32 0.0, %v1476
      %v1478 = vpop.f32.mrb[0].mxu0
      %1479 = vmatprep.mubr.f32.mxu0 %v54
      %1480 = vmatmul.mubr.f32.gmra.mrb[0].mxu0 %v53
      %v1481 = vpop.f32.mrb[0].mxu0
      %v1482 = vadd.f32 0.0, %v1481
      %v1483 = vpop.f32.mrb[0].mxu0
      %1484 = vmatprep.mubr.f32.mxu0 %v57
      %1485 = vmatmul.mubr.f32.gmra.mrb[0].mxu0 %v56
      %v1486 = vpop.f32.mrb[0].mxu0
      %v1487 = vadd.f32 0.0, %v1486
      %v1488 = vpop.f32.mrb[0].mxu0
      %1489 = vmatprep.mubr.f32.mxu0 %v60
      %1490 = vmatmul.mubr.f32.gmra.mrb[0].mxu0 %v59
      %v1491 = vpop.f32.mrb[0].mxu0
      %v1492 = vadd.f32 0.0, %v1491
      %v1493 = vpop.f32.mrb[0].mxu0
      %1494 = vmatprep.mubr.f32.mxu0 %v63
      %1495 = vmatmul.mubr.f32.gmra.mrb[0].mxu0 %v62
      %v1496 = vpop.f32.mrb[0].mxu0
      %v1497 = vadd.f32 0.0, %v1496
      %v1498 = vpop.f32.mrb[0].mxu0
      %1499 = vmatprep.mubr.f32.mxu0 %v66
      %1500 = vmatmul.mubr.f32.gmra.mrb[0].mxu0 %v65
      %v1501 = vpop.f32.mrb[0].mxu0
      %v1502 = vadd.f32 0.0, %v1501
      %v1503 = vpop.f32.mrb[0].mxu0
      %1504 = vmatprep.mubr.f32.mxu0 %v69
      %1505 = vmatmul.mubr.f32.gmra.mrb[0].mxu0 %v68
      %v1506 = vpop.f32.mrb[0].mxu0
      %v1507 = vadd.f32 0.0, %v1506
      %v1508 = vpop.f32.mrb[0].mxu0
      %1509 = vdwg.mxu0
      %1510 = vmatprep.subr.mxu0 0.0
      %1511 = vmatpush1.msra.mxu0 %v1401
      %1512 = vmatprep.subr.mxu0 0.0
      %1513 = vmatpush1.msra.mxu0 %v1402
      %1514 = vmatprep.subr.mxu0 0.0
      %1515 = vmatpush1.msra.mxu0 %v1403
      %1516 = vmatprep.subr.mxu0 0.0
      %1517 = vmatpush1.msra.mxu0 %v1404
      %1518 = vmatprep.subr.mxu0 0.0
      %1519 = vmatpush1.msra.mxu0 0.0
      %1520 = vmatprep.subr.mxu0 0.0
      %1521 = vmatpush1.msra.mxu0 0.0
      %1522 = vmatprep.subr.mxu0 0.0
      %1523 = vmatpush1.msra.mxu0 0.0
      %1524 = vmatprep.subr.mxu0 0.0
      %1525 = vmatpush1.msra.mxu0 0.0
      %1526 = vmatprep.subr.mxu0 0.0
      %1527 = vmatpush1.msra.mxu0 0.0
      %1528 = vmatprep.subr.mxu0 0.0
      %1529 = vmatpush1.msra.mxu0 0.0
      %1530 = vmatprep.subr.mxu0 0.0
      %1531 = vmatpush1.msra.mxu0 0.0
      %1532 = vmatprep.subr.mxu0 0.0
      %1533 = vmatpush1.msra.mxu0 0.0
      %1534 = vmatprep.subr.mxu0 0.0
      %1535 = vmatpush1.msra.mxu0 0.0
      %1536 = vmatprep.subr.mxu0 0.0
      %1537 = vmatpush1.msra.mxu0 0.0
      %1538 = vmatprep.subr.mxu0 0.0
      %1539 = vmatpush1.msra.mxu0 0.0
      %1540 = vmatprep.subr.mxu0 0.0
      %1541 = vmatpush1.msra.mxu0 0.0
      %1542 = vmatprep.subr.mxu0 0.0
      %1543 = vmatpush1.msra.mxu0 0.0
      %1544 = vmatprep.subr.mxu0 0.0
      %1545 = vmatpush1.msra.mxu0 0.0
      %1546 = vmatprep.subr.mxu0 0.0
      %1547 = vmatpush1.msra.mxu0 0.0
      %1548 = vmatprep.subr.mxu0 0.0
      %1549 = vmatpush1.msra.mxu0 0.0
      %1550 = vmatprep.subr.mxu0 0.0
      %1551 = vmatpush1.msra.mxu0 0.0
      %1552 = vmatprep.subr.mxu0 0.0
      %1553 = vmatpush1.msra.mxu0 0.0
      %1554 = vmatprep.subr.mxu0 0.0
      %1555 = vmatpush1.msra.mxu0 0.0
      %1556 = vmatprep.subr.mxu0 0.0
      %1557 = vmatpush1.msra.mxu0 0.0
      %1558 = vmatprep.subr.mxu0 0.0
      %1559 = vmatpush1.msra.mxu0 0.0
      %1560 = vmatprep.subr.mxu0 0.0
      %1561 = vmatpush1.msra.mxu0 0.0
      %1562 = vmatprep.subr.mxu0 0.0
      %1563 = vmatpush1.msra.mxu0 0.0
      %1564 = vmatprep.subr.mxu0 0.0
      %1565 = vmatpush1.msra.mxu0 0.0
      %1566 = vmatprep.subr.mxu0 0.0
      %1567 = vmatpush1.msra.mxu0 0.0
      %1568 = vmatprep.subr.mxu0 0.0
      %1569 = vmatpush1.msra.mxu0 0.0
      %1570 = vmatprep.subr.mxu0 0.0
      %1571 = vmatpush1.msra.mxu0 0.0
      %1572 = vmatprep.subr.mxu0 0.0
      %1573 = vmatpush1.msra.mxu0 0.0
      %1574 = vmatprep.mubr.f32.mxu0 0.0
      %1575 = vmatmul.mubr.f32.gmra.mrb[0].mxu0 %v965
      %v1576 = vpop.f32.mrb[0].mxu0
      %v1577 = vadd.f32 %v1472, %v1576
      %v1578 = vpop.f32.mrb[0].mxu0
      %1579 = vmatprep.mubr.f32.mxu0 0.0
      %1580 = vmatmul.mubr.f32.gmra.mrb[0].mxu0 %v968
      %v1581 = vpop.f32.mrb[0].mxu0
      %v1582 = vadd.f32 %v1477, %v1581
      %v1583 = vpop.f32.mrb[0].mxu0
      %1584 = vmatprep.mubr.f32.mxu0 0.0
      %1585 = vmatmul.mubr.f32.gmra.mrb[0].mxu0 %v971
      %v1586 = vpop.f32.mrb[0].mxu0
      %v1587 = vadd.f32 %v1482, %v1586
      %v1588 = vpop.f32.mrb[0].mxu0
      %1589 = vmatprep.mubr.f32.mxu0 0.0
      %1590 = vmatmul.mubr.f32.gmra.mrb[0].mxu0 %v974
      %v1591 = vpop.f32.mrb[0].mxu0
      %v1592 = vadd.f32 %v1487, %v1591
      %v1593 = vpop.f32.mrb[0].mxu0
      %1594 = vmatprep.mubr.f32.mxu0 0.0
      %1595 = vmatmul.mubr.f32.gmra.mrb[0].mxu0 %v977
      %v1596 = vpop.f32.mrb[0].mxu0
      %v1597 = vadd.f32 %v1492, %v1596
      %v1598 = vpop.f32.mrb[0].mxu0
      %1599 = vmatprep.mubr.f32.mxu0 0.0
      %1600 = vmatmul.mubr.f32.gmra.mrb[0].mxu0 %v980
      %v1601 = vpop.f32.mrb[0].mxu0
      %v1602 = vadd.f32 %v1497, %v1601
      %v1603 = vpop.f32.mrb[0].mxu0
      %1604 = vmatprep.mubr.f32.mxu0 0.0
      %1605 = vmatmul.mubr.f32.gmra.mrb[0].mxu0 %v983
      %v1606 = vpop.f32.mrb[0].mxu0
      %v1607 = vadd.f32 %v1502, %v1606
      %v1608 = vpop.f32.mrb[0].mxu0
      %1609 = vmatprep.mubr.f32.mxu0 0.0
      %1610 = vmatmul.mubr.f32.gmra.mrb[0].mxu0 %v986
      %v1611 = vpop.f32.mrb[0].mxu0
      %v1612 = vadd.f32 %v1507, %v1611
      %v1613 = vpop.f32.mrb[0].mxu0
      %1614 = vdwg.mxu0
      %v1615 = vmax.f32 %v1160, %v1577
      %v1616 = vmax.f32 %v1165, %v1582
      %v1617 = vmax.f32 %v1170, %v1587
      %v1618 = vmax.f32 %v1175, %v1592
      %v1619 = vmax.f32 %v1180, %v1597
      %v1620 = vmax.f32 %v1185, %v1602
      %v1621 = vmax.f32 %v1190, %v1607
      %v1622 = vmax.f32 %v1195, %v1612
      %vm1623 = vcmask 195584
      %v1625 = vsel %vm1623, %v1615, 0
      %v1628 = vsel %vm1623, %v1616, 0
      %v1631 = vsel %vm1623, %v1617, 0
      %v1634 = vsel %vm1623, %v1618, 0
      %v1637 = vsel %vm1623, %v1619, 0
      %v1640 = vsel %vm1623, %v1620, 0
      %v1643 = vsel %vm1623, %v1621, 0
      %v1646 = vsel %vm1623, %v1622, 0
      %1648 = vmatprep.subr.mxu0 0.0
      %1649 = vmatpush1.msra.mxu0 %v104
      %1650 = vmatprep.subr.mxu0 0.0
      %1651 = vmatpush1.msra.mxu0 %v105
      %1652 = vmatprep.subr.mxu0 0.0
      %1653 = vmatpush1.msra.mxu0 %v106
      %1654 = vmatprep.subr.mxu0 0.0
      %1655 = vmatpush1.msra.mxu0 0.0
      %1656 = vmatprep.subr.mxu0 0.0
      %1657 = vmatpush1.msra.mxu0 0.0
      %1658 = vmatprep.subr.mxu0 0.0
      %1659 = vmatpush1.msra.mxu0 0.0
      %1660 = vmatprep.subr.mxu0 0.0
      %1661 = vmatpush1.msra.mxu0 0.0
      %1662 = vmatprep.subr.mxu0 0.0
      %1663 = vmatpush1.msra.mxu0 0.0
      %1664 = vmatprep.subr.mxu0 0.0
      %1665 = vmatpush1.msra.mxu0 0.0
      %1666 = vmatprep.subr.mxu0 0.0
      %1667 = vmatpush1.msra.mxu0 0.0
      %1668 = vmatprep.subr.mxu0 0.0
      %1669 = vmatpush1.msra.mxu0 0.0
      %1670 = vmatprep.subr.mxu0 0.0
      %1671 = vmatpush1.msra.mxu0 0.0
      %1672 = vmatprep.subr.mxu0 0.0
      %1673 = vmatpush1.msra.mxu0 0.0
      %1674 = vmatprep.subr.mxu0 0.0
      %1675 = vmatpush1.msra.mxu0 0.0
      %1676 = vmatprep.subr.mxu0 0.0
      %1677 = vmatpush1.msra.mxu0 0.0
      %1678 = vmatprep.subr.mxu0 0.0
      %1679 = vmatpush1.msra.mxu0 0.0
      %1680 = vmatprep.subr.mxu0 0.0
      %1681 = vmatpush1.msra.mxu0 0.0
      %1682 = vmatprep.subr.mxu0 0.0
      %1683 = vmatpush1.msra.mxu0 0.0
      %1684 = vmatprep.subr.mxu0 0.0
      %1685 = vmatpush1.msra.mxu0 0.0
      %1686 = vmatprep.subr.mxu0 0.0
      %1687 = vmatpush1.msra.mxu0 0.0
      %1688 = vmatprep.subr.mxu0 0.0
      %1689 = vmatpush1.msra.mxu0 0.0
      %1690 = vmatprep.subr.mxu0 0.0
      %1691 = vmatpush1.msra.mxu0 0.0
      %1692 = vmatprep.subr.mxu0 0.0
      %1693 = vmatpush1.msra.mxu0 0.0
      %1694 = vmatprep.subr.mxu0 0.0
      %1695 = vmatpush1.msra.mxu0 0.0
      %1696 = vmatprep.subr.mxu0 0.0
      %1697 = vmatpush1.msra.mxu0 0.0
      %1698 = vmatprep.subr.mxu0 0.0
      %1699 = vmatpush1.msra.mxu0 0.0
      %1700 = vmatprep.subr.mxu0 0.0
      %1701 = vmatpush1.msra.mxu0 0.0
      %1702 = vmatprep.subr.mxu0 0.0
      %1703 = vmatpush1.msra.mxu0 0.0
      %1704 = vmatprep.subr.mxu0 0.0
      %1705 = vmatpush1.msra.mxu0 0.0
      %1706 = vmatprep.subr.mxu0 0.0
      %1707 = vmatpush1.msra.mxu0 0.0
      %1708 = vmatprep.subr.mxu0 0.0
      %1709 = vmatpush1.msra.mxu0 0.0
      %1710 = vmatprep.subr.mxu0 0.0
      %1711 = vmatpush1.msra.mxu0 0.0
      %1712 = vmatprep.mubr.f32.mxu0 0.0
      %1713 = vmatmul.mubr.f32.gmra.mrb[0].mxu0 %v1625
      %v1714 = vpop.f32.mrb[0].mxu0
      %v1715 = vadd.f32 0.0, %v1714
      %v1716 = vpop.f32.mrb[0].mxu0
      %1717 = vmatprep.mubr.f32.mxu0 0.0
      %1718 = vmatmul.mubr.f32.gmra.mrb[0].mxu0 %v1628
      %v1719 = vpop.f32.mrb[0].mxu0
      %v1720 = vadd.f32 0.0, %v1719
      %v1721 = vpop.f32.mrb[0].mxu0
      %1722 = vmatprep.mubr.f32.mxu0 0.0
      %1723 = vmatmul.mubr.f32.gmra.mrb[0].mxu0 %v1631
      %v1724 = vpop.f32.mrb[0].mxu0
      %v1725 = vadd.f32 0.0, %v1724
      %v1726 = vpop.f32.mrb[0].mxu0
      %1727 = vmatprep.mubr.f32.mxu0 0.0
      %1728 = vmatmul.mubr.f32.gmra.mrb[0].mxu0 %v1634
      %v1729 = vpop.f32.mrb[0].mxu0
      %v1730 = vadd.f32 0.0, %v1729
      %v1731 = vpop.f32.mrb[0].mxu0
      %1732 = vmatprep.mubr.f32.mxu0 0.0
      %1733 = vmatmul.mubr.f32.gmra.mrb[0].mxu0 %v1637
      %v1734 = vpop.f32.mrb[0].mxu0
      %v1735 = vadd.f32 0.0, %v1734
      %v1736 = vpop.f32.mrb[0].mxu0
      %1737 = vmatprep.mubr.f32.mxu0 0.0
      %1738 = vmatmul.mubr.f32.gmra.mrb[0].mxu0 %v1640
      %v1739 = vpop.f32.mrb[0].mxu0
      %v1740 = vadd.f32 0.0, %v1739
      %v1741 = vpop.f32.mrb[0].mxu0
      %1742 = vmatprep.mubr.f32.mxu0 0.0
      %1743 = vmatmul.mubr.f32.gmra.mrb[0].mxu0 %v1643
      %v1744 = vpop.f32.mrb[0].mxu0
      %v1745 = vadd.f32 0.0, %v1744
      %v1746 = vpop.f32.mrb[0].mxu0
      %1747 = vmatprep.mubr.f32.mxu0 0.0
      %1748 = vmatmul.mubr.f32.gmra.mrb[0].mxu0 %v1646
      %v1749 = vpop.f32.mrb[0].mxu0
      %v1750 = vadd.f32 0.0, %v1749
      %v1751 = vpop.f32.mrb[0].mxu0
      %1752 = vdwg.mxu0
      %1753 = vmatprep.subr.mxu0 0.0
      %1754 = vmatpush1.msra.mxu0 %v126
      %1755 = vmatprep.subr.mxu0 0.0
      %1756 = vmatpush1.msra.mxu0 %v127
      %1757 = vmatprep.subr.mxu0 0.0
      %1758 = vmatpush1.msra.mxu0 %v128
      %1759 = vmatprep.subr.mxu0 0.0
      %1760 = vmatpush1.msra.mxu0 0.0
      %1761 = vmatprep.subr.mxu0 0.0
      %1762 = vmatpush1.msra.mxu0 0.0
      %1763 = vmatprep.subr.mxu0 0.0
      %1764 = vmatpush1.msra.mxu0 0.0
      %1765 = vmatprep.subr.mxu0 0.0
      %1766 = vmatpush1.msra.mxu0 0.0
      %1767 = vmatprep.subr.mxu0 0.0
      %1768 = vmatpush1.msra.mxu0 0.0
      %1769 = vmatprep.subr.mxu0 0.0
      %1770 = vmatpush1.msra.mxu0 0.0
      %1771 = vmatprep.subr.mxu0 0.0
      %1772 = vmatpush1.msra.mxu0 0.0
      %1773 = vmatprep.subr.mxu0 0.0
      %1774 = vmatpush1.msra.mxu0 0.0
      %1775 = vmatprep.subr.mxu0 0.0
      %1776 = vmatpush1.msra.mxu0 0.0
      %1777 = vmatprep.subr.mxu0 0.0
      %1778 = vmatpush1.msra.mxu0 0.0
      %1779 = vmatprep.subr.mxu0 0.0
      %1780 = vmatpush1.msra.mxu0 0.0
      %1781 = vmatprep.subr.mxu0 0.0
      %1782 = vmatpush1.msra.mxu0 0.0
      %1783 = vmatprep.subr.mxu0 0.0
      %1784 = vmatpush1.msra.mxu0 0.0
      %1785 = vmatprep.subr.mxu0 0.0
      %1786 = vmatpush1.msra.mxu0 0.0
      %1787 = vmatprep.subr.mxu0 0.0
      %1788 = vmatpush1.msra.mxu0 0.0
      %1789 = vmatprep.subr.mxu0 0.0
      %1790 = vmatpush1.msra.mxu0 0.0
      %1791 = vmatprep.subr.mxu0 0.0
      %1792 = vmatpush1.msra.mxu0 0.0
      %1793 = vmatprep.subr.mxu0 0.0
      %1794 = vmatpush1.msra.mxu0 0.0
      %1795 = vmatprep.subr.mxu0 0.0
      %1796 = vmatpush1.msra.mxu0 0.0
      %1797 = vmatprep.subr.mxu0 0.0
      %1798 = vmatpush1.msra.mxu0 0.0
      %1799 = vmatprep.subr.mxu0 0.0
      %1800 = vmatpush1.msra.mxu0 0.0
      %1801 = vmatprep.subr.mxu0 0.0
      %1802 = vmatpush1.msra.mxu0 0.0
      %1803 = vmatprep.subr.mxu0 0.0
      %1804 = vmatpush1.msra.mxu0 0.0
      %1805 = vmatprep.subr.mxu0 0.0
      %1806 = vmatpush1.msra.mxu0 0.0
      %1807 = vmatprep.subr.mxu0 0.0
      %1808 = vmatpush1.msra.mxu0 0.0
      %1809 = vmatprep.subr.mxu0 0.0
      %1810 = vmatpush1.msra.mxu0 0.0
      %1811 = vmatprep.subr.mxu0 0.0
      %1812 = vmatpush1.msra.mxu0 0.0
      %1813 = vmatprep.subr.mxu0 0.0
      %1814 = vmatpush1.msra.mxu0 0.0
      %1815 = vmatprep.subr.mxu0 0.0
      %1816 = vmatpush1.msra.mxu0 0.0
      %1817 = vmatprep.mubr.f32.mxu0 0.0
      %1818 = vmatmul.mubr.f32.gmra.mrb[0].mxu0 %v1625
      %v1819 = vpop.f32.mrb[0].mxu0
      %v1820 = vadd.f32 0.0, %v1819
      %v1821 = vpop.f32.mrb[0].mxu0
      %1822 = vmatprep.mubr.f32.mxu0 0.0
      %1823 = vmatmul.mubr.f32.gmra.mrb[0].mxu0 %v1628
      %v1824 = vpop.f32.mrb[0].mxu0
      %v1825 = vadd.f32 0.0, %v1824
      %v1826 = vpop.f32.mrb[0].mxu0
      %1827 = vmatprep.mubr.f32.mxu0 0.0
      %1828 = vmatmul.mubr.f32.gmra.mrb[0].mxu0 %v1631
      %v1829 = vpop.f32.mrb[0].mxu0
      %v1830 = vadd.f32 0.0, %v1829
      %v1831 = vpop.f32.mrb[0].mxu0
      %1832 = vmatprep.mubr.f32.mxu0 0.0
      %1833 = vmatmul.mubr.f32.gmra.mrb[0].mxu0 %v1634
      %v1834 = vpop.f32.mrb[0].mxu0
      %v1835 = vadd.f32 0.0, %v1834
      %v1836 = vpop.f32.mrb[0].mxu0
      %1837 = vmatprep.mubr.f32.mxu0 0.0
      %1838 = vmatmul.mubr.f32.gmra.mrb[0].mxu0 %v1637
      %v1839 = vpop.f32.mrb[0].mxu0
      %v1840 = vadd.f32 0.0, %v1839
      %v1841 = vpop.f32.mrb[0].mxu0
      %1842 = vmatprep.mubr.f32.mxu0 0.0
      %1843 = vmatmul.mubr.f32.gmra.mrb[0].mxu0 %v1640
      %v1844 = vpop.f32.mrb[0].mxu0
      %v1845 = vadd.f32 0.0, %v1844
      %v1846 = vpop.f32.mrb[0].mxu0
      %1847 = vmatprep.mubr.f32.mxu0 0.0
      %1848 = vmatmul.mubr.f32.gmra.mrb[0].mxu0 %v1643
      %v1849 = vpop.f32.mrb[0].mxu0
      %v1850 = vadd.f32 0.0, %v1849
      %v1851 = vpop.f32.mrb[0].mxu0
      %1852 = vmatprep.mubr.f32.mxu0 0.0
      %1853 = vmatmul.mubr.f32.gmra.mrb[0].mxu0 %v1646
      %v1854 = vpop.f32.mrb[0].mxu0
      %v1855 = vadd.f32 0.0, %v1854
      %v1856 = vpop.f32.mrb[0].mxu0
      %1857 = vdwg.mxu0
      %v1858 = vmax.f32 %v1715, %v1820
      %v1859 = vmax.f32 %v1720, %v1825
      %v1860 = vmax.f32 %v1725, %v1830
      %v1861 = vmax.f32 %v1730, %v1835
      %v1862 = vmax.f32 %v1735, %v1840
      %v1863 = vmax.f32 %v1740, %v1845
      %v1864 = vmax.f32 %v1745, %v1850
      %v1865 = vmax.f32 %v1750, %v1855
      %1867 = vset.pattern.permute.xlu0 0
      %1868 = vperm.xlu0 %1867, %v71
      %v1869 = vpop.permute.xlu0 %1868
      %1872 = vset.pattern.permute.xlu0 0
      %1873 = vperm.xlu0 %1872, %v72
      %v1874 = vpop.permute.xlu0 %1873
      %1877 = vset.pattern.permute.xlu0 0
      %1878 = vperm.xlu0 %1877, %v73
      %v1879 = vpop.permute.xlu0 %1878
      %1882 = vset.pattern.permute.xlu0 0
      %1883 = vperm.xlu0 %1882, %v74
      %v1884 = vpop.permute.xlu0 %1883
      %1887 = vset.pattern.permute.xlu0 0
      %1888 = vperm.xlu0 %1887, %v75
      %v1889 = vpop.permute.xlu0 %1888
      %1892 = vset.pattern.permute.xlu0 0
      %1893 = vperm.xlu0 %1892, %v76
      %v1894 = vpop.permute.xlu0 %1893
      %1897 = vset.pattern.permute.xlu0 0
      %1898 = vperm.xlu0 %1897, %v77
      %v1899 = vpop.permute.xlu0 %1898
      %1902 = vset.pattern.permute.xlu0 0
      %1903 = vperm.xlu0 %1902, %v78
      %v1904 = vpop.permute.xlu0 %1903
      %v1906 = vadd.f32 %v1858, %v1869
      %v1907 = vadd.f32 %v1859, %v1874
      %v1908 = vadd.f32 %v1860, %v1879
      %v1909 = vadd.f32 %v1861, %v1884
      %v1910 = vadd.f32 %v1862, %v1889
      %v1911 = vadd.f32 %v1863, %v1894
      %v1912 = vadd.f32 %v1864, %v1899
      %v1913 = vadd.f32 %v1865, %v1904
      %v1914 = vmax.f32 %v1906, 0.0
      %v1915 = vmax.f32 %v1907, 0.0
      %v1916 = vmax.f32 %v1908, 0.0
      %v1917 = vmax.f32 %v1909, 0.0
      %v1918 = vmax.f32 %v1910, 0.0
      %v1919 = vmax.f32 %v1911, 0.0
      %v1920 = vmax.f32 %v1912, 0.0
      %v1921 = vmax.f32 %v1913, 0.0
      %1922 = vxpose.xlu0.b32.start [1/16] %v1914, 128
      %1923 = vxpose.xlu0.b32.cont [2/16] %v1915, 128
      %1924 = vxpose.xlu0.b32.cont [3/16] %v1916, 128
      %1925 = vxpose.xlu0.b32.cont [4/16] %v1917, 128
      %1926 = vxpose.xlu0.b32.cont [5/16] %v1918, 128
      %1927 = vxpose.xlu0.b32.cont [6/16] %v1919, 128
      %1928 = vxpose.xlu0.b32.cont [7/16] %v1920, 128
      %1929 = vxpose.xlu0.b32.cont [8/16] %v1921, 128
      %1930 = vxpose.xlu0.b32.cont [9/16] 0.0, 128
      %1931 = vxpose.xlu0.b32.cont [10/16] 0.0, 128
      %1932 = vxpose.xlu0.b32.cont [11/16] 0.0, 128
      %1933 = vxpose.xlu0.b32.cont [12/16] 0.0, 128
      %1934 = vxpose.xlu0.b32.cont [13/16] 0.0, 128
      %1935 = vxpose.xlu0.b32.cont [14/16] 0.0, 128
      %1936 = vxpose.xlu0.b32.cont [15/16] 0.0, 128
      %1937 = vxpose.xlu0.b32.end [16/16] 0.0, 128
      %v1938 = vpop.trf.xlu0
      %v1939 = vpop.trf.xlu0
      %v1940 = vpop.trf.xlu0
      %v1941 = vpop.trf.xlu0
      %v1942 = vpop.trf.xlu0
      %v1943 = vpop.trf.xlu0
      %v1944 = vpop.trf.xlu0
      %v1945 = vpop.trf.xlu0
      %v1946 = vpop.trf.xlu0
      %v1947 = vpop.trf.xlu0
      %v1948 = vpop.trf.xlu0
      %v1949 = vpop.trf.xlu0
      %v1950 = vpop.trf.xlu0
      %v1951 = vpop.trf.xlu0
      %v1952 = vpop.trf.xlu0
      %v1953 = vpop.trf.xlu0
      %s1954 = smul.u32 %s750, 16
      %s1955 = scalar_lea.vmem [#allocation3], %s1954
      %vm1956 = vcmask 523264
      %1957 = vst.msk [vmem:[%s1955] sm:$0xff] %vm1956, %v1938
      %vm1958 = vcmask 519168
      %1959 = vst.msk [vmem:[%s1955 + $0x8] sm:$0xf] %vm1958, %v1939
    $region57: #{forward_pallas.1} parent=1 // loop_footer
      %s754 = sadd.s32 1, %s750
    $region58: #{forward_pallas.1} parent=1 // loop_footer_branch
      %749 = sbr.rel target = $region54
    $region59: #{forward_pallas.1} parent=1 // loop_exit
      _
    %v1960 = vld [vmem:[#allocation3] sm:$0x3f]
    %s1961 = scalar_lea.vmem [#allocation3], 16
    %v1962 = vld [vmem:[%s1961] sm:$0x3f]
    %s1963 = scalar_lea.vmem [#allocation3], 32
    %v1964 = vld [vmem:[%s1963] sm:$0x3f]
    %s1965 = scalar_lea.vmem [#allocation3], 48
    %v1966 = vld [vmem:[%s1965] sm:$0x3f]
    %s1967 = scalar_lea.vmem [#allocation3], 64
    %v1968 = vld [vmem:[%s1967] sm:$0x3f]
    %s1969 = scalar_lea.vmem [#allocation3], 80
    %v1970 = vld [vmem:[%s1969] sm:$0x3f]
    %v1972 = vrot.slane %v1960, 1
    %1973 = vrot.lane.b32.xlu0 %v1972, 64
    %v1974 = vpop.permute.xlu0 %1973
    %v1976 = vrot.slane %v1960, 2
    %v1978 = vrot.slane %v1960, 3
    %1979 = vrot.lane.b32.xlu0 %v1978, 64
    %v1980 = vpop.permute.xlu0 %1979
    %v1982 = vrot.slane %v1960, 4
    %v1984 = vrot.slane %v1960, 5
    %1985 = vrot.lane.b32.xlu0 %v1984, 64
    %v1986 = vpop.permute.xlu0 %1985
    %v1989 = vrot.slane %v1962, 1
    %1990 = vrot.lane.b32.xlu0 %v1989, 64
    %v1991 = vpop.permute.xlu0 %1990
    %v1993 = vrot.slane %v1962, 2
    %v1995 = vrot.slane %v1962, 3
    %1996 = vrot.lane.b32.xlu0 %v1995, 64
    %v1997 = vpop.permute.xlu0 %1996
    %v1999 = vrot.slane %v1962, 4
    %v2001 = vrot.slane %v1962, 5
    %2002 = vrot.lane.b32.xlu0 %v2001, 64
    %v2003 = vpop.permute.xlu0 %2002
    %v2006 = vrot.slane %v1964, 1
    %2007 = vrot.lane.b32.xlu0 %v2006, 64
    %v2008 = vpop.permute.xlu0 %2007
    %v2010 = vrot.slane %v1964, 2
    %v2012 = vrot.slane %v1964, 3
    %2013 = vrot.lane.b32.xlu0 %v2012, 64
    %v2014 = vpop.permute.xlu0 %2013
    %vm2016 = vcmask 523264
    %v2017 = vsel %vm2016, %v1960, %v1974
    %v2018 = vsel %vm2016, %v1976, %v1980
    %v2019 = vsel %vm2016, %v1982, %v1986
    %v2020 = vsel %vm2016, %v1962, %v1991
    %v2021 = vsel %vm2016, %v1993, %v1997
    %v2022 = vsel %vm2016, %v1999, %v2003
    %v2023 = vsel %vm2016, %v1964, %v2008
    %v2024 = vsel %vm2016, %v2010, %v2014
    %v2026 = vrot.slane %v1966, 4
    %v2028 = vrot.slane %v1966, 5
    %2029 = vrot.lane.b32.xlu0 %v2028, 64
    %v2030 = vpop.permute.xlu0 %2029
    %v2032 = vrot.slane %v1966, 6
    %v2034 = vrot.slane %v1966, 7
    %2035 = vrot.lane.b32.xlu0 %v2034, 64
    %v2036 = vpop.permute.xlu0 %2035
    %v2038 = vrot.slane %v1966, 1
    %2039 = vrot.lane.b32.xlu0 %v2038, 64
    %v2040 = vpop.permute.xlu0 %2039
    %v2043 = vrot.slane %v1968, 4
    %v2045 = vrot.slane %v1968, 5
    %2046 = vrot.lane.b32.xlu0 %v2045, 64
    %v2047 = vpop.permute.xlu0 %2046
    %v2049 = vrot.slane %v1968, 6
    %v2051 = vrot.slane %v1968, 7
    %2052 = vrot.lane.b32.xlu0 %v2051, 64
    %v2053 = vpop.permute.xlu0 %2052
    %v2055 = vrot.slane %v1968, 1
    %2056 = vrot.lane.b32.xlu0 %v2055, 64
    %v2057 = vpop.permute.xlu0 %2056
    %v2060 = vrot.slane %v1970, 4
    %v2062 = vrot.slane %v1970, 5
    %2063 = vrot.lane.b32.xlu0 %v2062, 64
    %v2064 = vpop.permute.xlu0 %2063
    %v2066 = vsel %vm2016, %v2026, %v2030
    %v2067 = vsel %vm2016, %v2032, %v2036
    %v2068 = vsel %vm2016, %v1966, %v2040
    %v2069 = vsel %vm2016, %v2043, %v2047
    %v2070 = vsel %vm2016, %v2049, %v2053
    %v2071 = vsel %vm2016, %v1968, %v2057
    %v2072 = vsel %vm2016, %v2060, %v2064
    %v2073 = vrot.slane %v1970, 1
    %2074 = vrot.lane.b32.xlu0 %v2073, 64
    %v2075 = vpop.permute.xlu0 %2074
    %v2077 = vrot.slane %v1970, 2
    %v2079 = vrot.slane %v1970, 3
    %2080 = vrot.lane.b32.xlu0 %v2079, 64
    %v2081 = vpop.permute.xlu0 %2080
    %v2083 = vsel %vm2016, %v1970, %v2075
    %v2084 = vsel %vm2016, %v2077, %v2081
    %v2093 = vrot.slane %v2023, 4
    %v2094 = vrot.slane %v2066, 4
    %v2095 = vrot.slane %v2067, 4
    %v2096 = vrot.slane %v2068, 4
    %v2097 = vrot.slane %v2069, 4
    %v2098 = vrot.slane %v2070, 4
    %v2099 = vrot.slane %v2071, 4
    %v2100 = vrot.slane %v2072, 4
    %v2111 = vrot.slane %v2083, 2
    %v2112 = vrot.slane %v2084, 2
    %v2115 = vld [vmem:[#allocation3 + $0x6] sm:$0x3f]
    %v2116 = vld [vmem:[%s1961 + $0x6] sm:$0x3f]
    %v2117 = vld [vmem:[%s1963 + $0x6] sm:$0x3f]
    %v2118 = vld [vmem:[%s1965 + $0x6] sm:$0x3f]
    %v2119 = vld [vmem:[%s1967 + $0x6] sm:$0x3f]
    %v2120 = vld [vmem:[%s1969 + $0x6] sm:$0x3f]
    %v2122 = vrot.slane %v2115, 1
    %2123 = vrot.lane.b32.xlu0 %v2122, 64
    %v2124 = vpop.permute.xlu0 %2123
    %v2126 = vrot.slane %v2115, 2
    %v2128 = vrot.slane %v2115, 3
    %2129 = vrot.lane.b32.xlu0 %v2128, 64
    %v2130 = vpop.permute.xlu0 %2129
    %v2132 = vrot.slane %v2115, 4
    %v2134 = vrot.slane %v2115, 5
    %2135 = vrot.lane.b32.xlu0 %v2134, 64
    %v2136 = vpop.permute.xlu0 %2135
    %v2139 = vrot.slane %v2116, 1
    %2140 = vrot.lane.b32.xlu0 %v2139, 64
    %v2141 = vpop.permute.xlu0 %2140
    %v2143 = vrot.slane %v2116, 2
    %v2145 = vrot.slane %v2116, 3
    %2146 = vrot.lane.b32.xlu0 %v2145, 64
    %v2147 = vpop.permute.xlu0 %2146
    %v2149 = vrot.slane %v2116, 4
    %v2151 = vrot.slane %v2116, 5
    %2152 = vrot.lane.b32.xlu0 %v2151, 64
    %v2153 = vpop.permute.xlu0 %2152
    %v2156 = vrot.slane %v2117, 1
    %2157 = vrot.lane.b32.xlu0 %v2156, 64
    %v2158 = vpop.permute.xlu0 %2157
    %v2160 = vrot.slane %v2117, 2
    %v2162 = vrot.slane %v2117, 3
    %2163 = vrot.lane.b32.xlu0 %v2162, 64
    %v2164 = vpop.permute.xlu0 %2163
    %v2166 = vsel %vm2016, %v2115, %v2124
    %v2167 = vsel %vm2016, %v2126, %v2130
    %v2168 = vsel %vm2016, %v2132, %v2136
    %v2169 = vsel %vm2016, %v2116, %v2141
    %v2170 = vsel %vm2016, %v2143, %v2147
    %v2171 = vsel %vm2016, %v2149, %v2153
    %v2172 = vsel %vm2016, %v2117, %v2158
    %v2173 = vsel %vm2016, %v2160, %v2164
    %v2175 = vrot.slane %v2118, 4
    %v2177 = vrot.slane %v2118, 5
    %2178 = vrot.lane.b32.xlu0 %v2177, 64
    %v2179 = vpop.permute.xlu0 %2178
    %v2181 = vrot.slane %v2118, 6
    %v2183 = vrot.slane %v2118, 7
    %2184 = vrot.lane.b32.xlu0 %v2183, 64
    %v2185 = vpop.permute.xlu0 %2184
    %v2187 = vrot.slane %v2118, 1
    %2188 = vrot.lane.b32.xlu0 %v2187, 64
    %v2189 = vpop.permute.xlu0 %2188
    %v2192 = vrot.slane %v2119, 4
    %v2194 = vrot.slane %v2119, 5
    %2195 = vrot.lane.b32.xlu0 %v2194, 64
    %v2196 = vpop.permute.xlu0 %2195
    %v2198 = vrot.slane %v2119, 6
    %v2200 = vrot.slane %v2119, 7
    %2201 = vrot.lane.b32.xlu0 %v2200, 64
    %v2202 = vpop.permute.xlu0 %2201
    %v2204 = vrot.slane %v2119, 1
    %2205 = vrot.lane.b32.xlu0 %v2204, 64
    %v2206 = vpop.permute.xlu0 %2205
    %v2209 = vrot.slane %v2120, 4
    %v2211 = vrot.slane %v2120, 5
    %2212 = vrot.lane.b32.xlu0 %v2211, 64
    %v2213 = vpop.permute.xlu0 %2212
    %v2215 = vsel %vm2016, %v2175, %v2179
    %v2216 = vsel %vm2016, %v2181, %v2185
    %v2217 = vsel %vm2016, %v2118, %v2189
    %v2218 = vsel %vm2016, %v2192, %v2196
    %v2219 = vsel %vm2016, %v2198, %v2202
    %v2220 = vsel %vm2016, %v2119, %v2206
    %v2221 = vsel %vm2016, %v2209, %v2213
    %v2222 = vrot.slane %v2120, 1
    %2223 = vrot.lane.b32.xlu0 %v2222, 64
    %v2224 = vpop.permute.xlu0 %2223
    %v2226 = vrot.slane %v2120, 2
    %v2228 = vrot.slane %v2120, 3
    %2229 = vrot.lane.b32.xlu0 %v2228, 64
    %v2230 = vpop.permute.xlu0 %2229
    %v2232 = vsel %vm2016, %v2120, %v2224
    %v2233 = vsel %vm2016, %v2226, %v2230
    %v2242 = vrot.slane %v2172, 4
    %v2243 = vrot.slane %v2215, 4
    %v2244 = vrot.slane %v2216, 4
    %v2245 = vrot.slane %v2217, 4
    %v2246 = vrot.slane %v2218, 4
    %v2247 = vrot.slane %v2219, 4
    %v2248 = vrot.slane %v2220, 4
    %v2249 = vrot.slane %v2221, 4
    %v2252 = vrot.slane %v2232, 2
    %v2253 = vrot.slane %v2233, 2
    %v2261 = vrot.slane %v2166, 7
    %v2262 = vrot.slane %v2167, 7
    %v2263 = vrot.slane %v2168, 7
    %v2264 = vrot.slane %v2169, 7
    %v2265 = vrot.slane %v2170, 7
    %v2266 = vrot.slane %v2171, 7
    %v2267 = vrot.slane %v2172, 7
    %v2268 = vrot.slane %v2173, 7
    %v2269 = vrot.slane %v2242, 7
    %v2270 = vrot.slane %v2243, 7
    %v2271 = vrot.slane %v2244, 7
    %v2272 = vrot.slane %v2245, 7
    %v2273 = vrot.slane %v2246, 7
    %v2274 = vrot.slane %v2247, 7
    %v2275 = vrot.slane %v2248, 7
    %v2276 = vrot.slane %v2249, 7
    %v2277 = vrot.slane %v2252, 7
    %v2278 = vrot.slane %v2253, 7
    %vm2297 = vcmask 1040384
    %v2298 = vsel %vm2297, %v2017, %v2261
    %v2299 = vsel %vm2297, %v2018, %v2262
    %v2300 = vsel %vm2297, %v2019, %v2263
    %v2301 = vsel %vm2297, %v2020, %v2264
    %v2302 = vsel %vm2297, %v2021, %v2265
    %v2303 = vsel %vm2297, %v2022, %v2266
    %v2304 = vsel %vm2297, %v2023, %v2267
    %v2305 = vsel %vm2297, %v2024, %v2268
    %v2306 = vsel %vm2297, %v2093, %v2269
    %v2307 = vsel %vm2297, %v2094, %v2270
    %v2308 = vsel %vm2297, %v2095, %v2271
    %v2309 = vsel %vm2297, %v2096, %v2272
    %v2310 = vsel %vm2297, %v2097, %v2273
    %v2311 = vsel %vm2297, %v2098, %v2274
    %v2312 = vsel %vm2297, %v2099, %v2275
    %v2313 = vsel %vm2297, %v2100, %v2276
    %v2314 = vsel %vm2297, %v2111, %v2277
    %v2315 = vsel %vm2297, %v2112, %v2278
    %v2316 = vld [vmem:[%s5] sm:$0xff]
    %v2317 = vld [vmem:[%s5 + $0x8] sm:$0xff]
    %v2318 = vld [vmem:[%s5 + $0x10] sm:$0xff]
    %v2319 = vld [vmem:[%s5 + $0x18] sm:$0xff]
    %v2320 = vld [vmem:[%s5 + $0x20] sm:$0xff]
    %v2321 = vld [vmem:[%s5 + $0x28] sm:$0xff]
    %v2322 = vld [vmem:[%s5 + $0x30] sm:$0xff]
    %v2323 = vld [vmem:[%s5 + $0x38] sm:$0xff]
    %v2324 = vld [vmem:[%s5 + $0x40] sm:$0xff]
    %v2325 = vld [vmem:[%s5 + $0x48] sm:$0xff]
    %v2326 = vld [vmem:[%s5 + $0x50] sm:$0xff]
    %v2327 = vld [vmem:[%s5 + $0x58] sm:$0xff]
    %v2328 = vld [vmem:[%s5 + $0x60] sm:$0xff]
    %v2329 = vld [vmem:[%s5 + $0x68] sm:$0xff]
    %v2330 = vld [vmem:[%s5 + $0x70] sm:$0xff]
    %v2331 = vld [vmem:[%s5 + $0x78] sm:$0xff]
    %v2332 = vld [vmem:[%s5 + $0x80] sm:$0xff]
    %v2333 = vld [vmem:[%s5 + $0x88] sm:$0xff]
    %v2334 = vld [vmem:[%s5 + $0x90] sm:$0xff]
    %v2335 = vld [vmem:[%s5 + $0x98] sm:$0xff]
    %v2336 = vld [vmem:[%s5 + $0xa0] sm:$0xff]
    %v2337 = vld [vmem:[%s5 + $0xa8] sm:$0xff]
    %v2338 = vld [vmem:[%s5 + $0xb0] sm:$0xff]
    %v2339 = vld [vmem:[%s5 + $0xb8] sm:$0xff]
    %v2340 = vld [vmem:[%s5 + $0xc0] sm:$0xff]
    %v2341 = vld [vmem:[%s5 + $0xc8] sm:$0xff]
    %v2342 = vld [vmem:[%s5 + $0xd0] sm:$0xff]
    %v2343 = vld [vmem:[%s5 + $0xd8] sm:$0xff]
    %v2344 = vld [vmem:[%s5 + $0xe0] sm:$0xff]
    %v2345 = vld [vmem:[%s5 + $0xe8] sm:$0xff]
    %v2346 = vld [vmem:[%s5 + $0xf0] sm:$0xff]
    %v2347 = vld [vmem:[%s5 + $0xf8] sm:$0xff]
    %v2348 = vld [vmem:[%s5 + $0x100] sm:$0xff]
    %v2349 = vld [vmem:[%s5 + $0x108] sm:$0xff]
    %v2350 = vld [vmem:[%s5 + $0x110] sm:$0xff]
    %v2351 = vld [vmem:[%s5 + $0x118] sm:$0xff]
    %v2352 = vld [vmem:[%s5 + $0x120] sm:$0xff]
    %v2353 = vld [vmem:[%s5 + $0x128] sm:$0xff]
    %v2354 = vld [vmem:[%s5 + $0x130] sm:$0xff]
    %v2355 = vld [vmem:[%s5 + $0x138] sm:$0xff]
    %v2356 = vld [vmem:[%s5 + $0x140] sm:$0xff]
    %v2357 = vld [vmem:[%s5 + $0x148] sm:$0xff]
    %v2358 = vld [vmem:[%s5 + $0x150] sm:$0xff]
    %v2359 = vld [vmem:[%s5 + $0x158] sm:$0xff]
    %v2360 = vld [vmem:[%s5 + $0x160] sm:$0xff]
    %v2361 = vld [vmem:[%s5 + $0x168] sm:$0xff]
    %v2362 = vld [vmem:[%s5 + $0x170] sm:$0xff]
    %v2363 = vld [vmem:[%s5 + $0x178] sm:$0xff]
    %v2364 = vld [vmem:[%s5 + $0x180] sm:$0xff]
    %v2365 = vld [vmem:[%s5 + $0x188] sm:$0xff]
    %v2366 = vld [vmem:[%s5 + $0x190] sm:$0xff]
    %v2367 = vld [vmem:[%s5 + $0x198] sm:$0xff]
    %v2368 = vld [vmem:[%s5 + $0x1a0] sm:$0xff]
    %v2369 = vld [vmem:[%s5 + $0x1a8] sm:$0xff]
    %v2370 = vld [vmem:[%s5 + $0x1b0] sm:$0xff]
    %v2371 = vld [vmem:[%s5 + $0x1b8] sm:$0xff]
    %v2372 = vld [vmem:[%s5 + $0x1c0] sm:$0xff]
    %v2373 = vld [vmem:[%s5 + $0x1c8] sm:$0xff]
    %v2374 = vld [vmem:[%s5 + $0x1d0] sm:$0xff]
    %v2375 = vld [vmem:[%s5 + $0x1d8] sm:$0xff]
    %v2376 = vld [vmem:[%s5 + $0x1e0] sm:$0xff]
    %v2377 = vld [vmem:[%s5 + $0x1e8] sm:$0xff]
    %v2378 = vld [vmem:[%s5 + $0x1f0] sm:$0xff]
    %v2379 = vld [vmem:[%s5 + $0x1f8] sm:$0xff]
    %v2380 = vld [vmem:[%s5 + $0x200] sm:$0xff]
    %v2381 = vld [vmem:[%s5 + $0x208] sm:$0xff]
    %v2382 = vld [vmem:[%s5 + $0x210] sm:$0xff]
    %v2383 = vld [vmem:[%s5 + $0x218] sm:$0xff]
    %v2384 = vld [vmem:[%s5 + $0x220] sm:$0xff]
    %v2385 = vld [vmem:[%s5 + $0x228] sm:$0xff]
    %v2386 = vld [vmem:[%s5 + $0x230] sm:$0xff]
    %v2387 = vld [vmem:[%s5 + $0x238] sm:$0xff]
    %v2388 = vld [vmem:[%s5 + $0x240] sm:$0xff]
    %v2389 = vld [vmem:[%s5 + $0x248] sm:$0xff]
    %v2390 = vld [vmem:[%s5 + $0x250] sm:$0xff]
    %v2391 = vld [vmem:[%s5 + $0x258] sm:$0xff]
    %v2392 = vld [vmem:[%s5 + $0x260] sm:$0xff]
    %v2393 = vld [vmem:[%s5 + $0x268] sm:$0xff]
    %v2394 = vld [vmem:[%s5 + $0x270] sm:$0xff]
    %v2395 = vld [vmem:[%s5 + $0x278] sm:$0xff]
    %v2396 = vld [vmem:[%s5 + $0x280] sm:$0xff]
    %v2397 = vld [vmem:[%s5 + $0x288] sm:$0xff]
    %v2398 = vld [vmem:[%s5 + $0x290] sm:$0xff]
    %v2399 = vld [vmem:[%s5 + $0x298] sm:$0xff]
    %v2400 = vld [vmem:[%s5 + $0x2a0] sm:$0xff]
    %v2401 = vld [vmem:[%s5 + $0x2a8] sm:$0xff]
    %v2402 = vld [vmem:[%s5 + $0x2b0] sm:$0xff]
    %v2403 = vld [vmem:[%s5 + $0x2b8] sm:$0xff]
    %v2404 = vld [vmem:[%s5 + $0x2c0] sm:$0xff]
    %v2405 = vld [vmem:[%s5 + $0x2c8] sm:$0xff]
    %v2406 = vld [vmem:[%s5 + $0x2d0] sm:$0xff]
    %v2407 = vld [vmem:[%s5 + $0x2d8] sm:$0xff]
    %v2408 = vld [vmem:[%s5 + $0x2e0] sm:$0xff]
    %v2409 = vld [vmem:[%s5 + $0x2e8] sm:$0xff]
    %v2410 = vld [vmem:[%s5 + $0x2f0] sm:$0xff]
    %v2411 = vld [vmem:[%s5 + $0x2f8] sm:$0xff]
    %v2412 = vld [vmem:[%s5 + $0x300] sm:$0xff]
    %v2413 = vld [vmem:[%s5 + $0x308] sm:$0xff]
    %v2414 = vld [vmem:[%s5 + $0x310] sm:$0xff]
    %v2415 = vld [vmem:[%s5 + $0x318] sm:$0xff]
    %v2416 = vld [vmem:[%s5 + $0x320] sm:$0xff]
    %v2417 = vld [vmem:[%s5 + $0x328] sm:$0xff]
    %v2418 = vld [vmem:[%s5 + $0x330] sm:$0xff]
    %v2419 = vld [vmem:[%s5 + $0x338] sm:$0xff]
    %v2420 = vld [vmem:[%s5 + $0x340] sm:$0xff]
    %v2421 = vld [vmem:[%s5 + $0x348] sm:$0xff]
    %v2422 = vld [vmem:[%s5 + $0x350] sm:$0xff]
    %v2423 = vld [vmem:[%s5 + $0x358] sm:$0xff]
    %v2424 = vld [vmem:[%s5 + $0x360] sm:$0xff]
    %v2425 = vld [vmem:[%s5 + $0x368] sm:$0xff]
    %v2426 = vld [vmem:[%s5 + $0x370] sm:$0xff]
    %v2427 = vld [vmem:[%s5 + $0x378] sm:$0xff]
    %v2428 = vld [vmem:[%s5 + $0x380] sm:$0xff]
    %v2429 = vld [vmem:[%s5 + $0x388] sm:$0xff]
    %v2430 = vld [vmem:[%s5 + $0x390] sm:$0xff]
    %v2431 = vld [vmem:[%s5 + $0x398] sm:$0xff]
    %v2432 = vld [vmem:[%s5 + $0x3a0] sm:$0xff]
    %v2433 = vld [vmem:[%s5 + $0x3a8] sm:$0xff]
    %v2434 = vld [vmem:[%s5 + $0x3b0] sm:$0xff]
    %v2435 = vld [vmem:[%s5 + $0x3b8] sm:$0xff]
    %v2436 = vld [vmem:[%s5 + $0x3c0] sm:$0xff]
    %v2437 = vld [vmem:[%s5 + $0x3c8] sm:$0xff]
    %v2438 = vld [vmem:[%s5 + $0x3d0] sm:$0xff]
    %v2439 = vld [vmem:[%s5 + $0x3d8] sm:$0xff]
    %v2440 = vld [vmem:[%s5 + $0x3e0] sm:$0xff]
    %v2441 = vld [vmem:[%s5 + $0x3e8] sm:$0xff]
    %v2442 = vld [vmem:[%s5 + $0x3f0] sm:$0xff]
    %v2443 = vld [vmem:[%s5 + $0x3f8] sm:$0xff]
    %v2444 = vld [vmem:[%s5 + $0x400] sm:$0xff]
    %v2445 = vld [vmem:[%s5 + $0x408] sm:$0xff]
    %v2446 = vld [vmem:[%s5 + $0x410] sm:$0xff]
    %v2447 = vld [vmem:[%s5 + $0x418] sm:$0xff]
    %v2448 = vld [vmem:[%s5 + $0x420] sm:$0xff]
    %v2449 = vld [vmem:[%s5 + $0x428] sm:$0xff]
    %v2450 = vld [vmem:[%s5 + $0x430] sm:$0xff]
    %v2451 = vld [vmem:[%s5 + $0x438] sm:$0xff]
    %v2452 = vld [vmem:[%s5 + $0x440] sm:$0xff]
    %v2453 = vld [vmem:[%s5 + $0x448] sm:$0xff]
    %v2454 = vld [vmem:[%s5 + $0x450] sm:$0xff]
    %v2455 = vld [vmem:[%s5 + $0x458] sm:$0xff]
    %v2456 = vld [vmem:[%s5 + $0x460] sm:$0xff]
    %v2457 = vld [vmem:[%s5 + $0x468] sm:$0xff]
    %v2458 = vld [vmem:[%s5 + $0x470] sm:$0xff]
    %v2459 = vld [vmem:[%s5 + $0x478] sm:$0xff]
    %v2460 = vld [vmem:[%s5 + $0x480] sm:$0xff]
    %v2461 = vld [vmem:[%s5 + $0x488] sm:$0xff]
    %v2462 = vld [vmem:[%s5 + $0x490] sm:$0xff]
    %v2463 = vld [vmem:[%s5 + $0x498] sm:$0xff]
    %v2464 = vld [vmem:[%s5 + $0x4a0] sm:$0xff]
    %v2465 = vld [vmem:[%s5 + $0x4a8] sm:$0xff]
    %v2466 = vld [vmem:[%s5 + $0x4b0] sm:$0xff]
    %v2467 = vld [vmem:[%s5 + $0x4b8] sm:$0xff]
    %v2468 = vld [vmem:[%s5 + $0x4c0] sm:$0xff]
    %v2469 = vld [vmem:[%s5 + $0x4c8] sm:$0xff]
    %v2470 = vld [vmem:[%s5 + $0x4d0] sm:$0xff]
    %v2471 = vld [vmem:[%s5 + $0x4d8] sm:$0xff]
    %v2472 = vld [vmem:[%s5 + $0x4e0] sm:$0xff]
    %v2473 = vld [vmem:[%s5 + $0x4e8] sm:$0xff]
    %v2474 = vld [vmem:[%s5 + $0x4f0] sm:$0xff]
    %v2475 = vld [vmem:[%s5 + $0x4f8] sm:$0xff]
    %v2476 = vld [vmem:[%s5 + $0x500] sm:$0xff]
    %v2477 = vld [vmem:[%s5 + $0x508] sm:$0xff]
    %v2478 = vld [vmem:[%s5 + $0x510] sm:$0xff]
    %v2479 = vld [vmem:[%s5 + $0x518] sm:$0xff]
    %v2480 = vld [vmem:[%s5 + $0x520] sm:$0xff]
    %v2481 = vld [vmem:[%s5 + $0x528] sm:$0xff]
    %v2482 = vld [vmem:[%s5 + $0x530] sm:$0xff]
    %v2483 = vld [vmem:[%s5 + $0x538] sm:$0xff]
    %v2484 = vld [vmem:[%s5 + $0x540] sm:$0xff]
    %v2485 = vld [vmem:[%s5 + $0x548] sm:$0xff]
    %v2486 = vld [vmem:[%s5 + $0x550] sm:$0xff]
    %v2487 = vld [vmem:[%s5 + $0x558] sm:$0xff]
    %v2488 = vld [vmem:[%s5 + $0x560] sm:$0xff]
    %v2489 = vld [vmem:[%s5 + $0x568] sm:$0xff]
    %v2490 = vld [vmem:[%s5 + $0x570] sm:$0xff]
    %v2491 = vld [vmem:[%s5 + $0x578] sm:$0xff]
    %v2492 = vld [vmem:[%s5 + $0x580] sm:$0xff]
    %v2493 = vld [vmem:[%s5 + $0x588] sm:$0xff]
    %v2494 = vld [vmem:[%s5 + $0x590] sm:$0xff]
    %v2495 = vld [vmem:[%s5 + $0x598] sm:$0xff]
    %v2496 = vld [vmem:[%s5 + $0x5a0] sm:$0xff]
    %v2497 = vld [vmem:[%s5 + $0x5a8] sm:$0xff]
    %v2498 = vld [vmem:[%s5 + $0x5b0] sm:$0xff]
    %v2499 = vld [vmem:[%s5 + $0x5b8] sm:$0xff]
    %v2500 = vld [vmem:[%s5 + $0x5c0] sm:$0xff]
    %v2501 = vld [vmem:[%s5 + $0x5c8] sm:$0xff]
    %v2502 = vld [vmem:[%s5 + $0x5d0] sm:$0xff]
    %v2503 = vld [vmem:[%s5 + $0x5d8] sm:$0xff]
    %v2504 = vld [vmem:[%s5 + $0x5e0] sm:$0xff]
    %v2505 = vld [vmem:[%s5 + $0x5e8] sm:$0xff]
    %v2506 = vld [vmem:[%s5 + $0x5f0] sm:$0xff]
    %v2507 = vld [vmem:[%s5 + $0x5f8] sm:$0xff]
    %v2508 = vld [vmem:[%s5 + $0x600] sm:$0xff]
    %v2509 = vld [vmem:[%s5 + $0x608] sm:$0xff]
    %v2510 = vld [vmem:[%s5 + $0x610] sm:$0xff]
    %v2511 = vld [vmem:[%s5 + $0x618] sm:$0xff]
    %v2512 = vld [vmem:[%s5 + $0x620] sm:$0xff]
    %v2513 = vld [vmem:[%s5 + $0x628] sm:$0xff]
    %v2514 = vld [vmem:[%s5 + $0x630] sm:$0xff]
    %v2515 = vld [vmem:[%s5 + $0x638] sm:$0xff]
    %v2516 = vld [vmem:[%s5 + $0x640] sm:$0xff]
    %v2517 = vld [vmem:[%s5 + $0x648] sm:$0xff]
    %v2518 = vld [vmem:[%s5 + $0x650] sm:$0xff]
    %v2519 = vld [vmem:[%s5 + $0x658] sm:$0xff]
    %v2520 = vld [vmem:[%s5 + $0x660] sm:$0xff]
    %v2521 = vld [vmem:[%s5 + $0x668] sm:$0xff]
    %v2522 = vld [vmem:[%s5 + $0x670] sm:$0xff]
    %v2523 = vld [vmem:[%s5 + $0x678] sm:$0xff]
    %v2524 = vld [vmem:[%s5 + $0x680] sm:$0xff]
    %v2525 = vld [vmem:[%s5 + $0x688] sm:$0xff]
    %v2526 = vld [vmem:[%s5 + $0x690] sm:$0xff]
    %v2527 = vld [vmem:[%s5 + $0x698] sm:$0xff]
    %v2528 = vld [vmem:[%s5 + $0x6a0] sm:$0xff]
    %v2529 = vld [vmem:[%s5 + $0x6a8] sm:$0xff]
    %v2530 = vld [vmem:[%s5 + $0x6b0] sm:$0xff]
    %v2531 = vld [vmem:[%s5 + $0x6b8] sm:$0xff]
    %v2532 = vld [vmem:[%s5 + $0x6c0] sm:$0xff]
    %v2533 = vld [vmem:[%s5 + $0x6c8] sm:$0xff]
    %v2534 = vld [vmem:[%s5 + $0x6d0] sm:$0xff]
    %v2535 = vld [vmem:[%s5 + $0x6d8] sm:$0xff]
    %v2536 = vld [vmem:[%s5 + $0x6e0] sm:$0xff]
    %v2537 = vld [vmem:[%s5 + $0x6e8] sm:$0xff]
    %v2538 = vld [vmem:[%s5 + $0x6f0] sm:$0xff]
    %v2539 = vld [vmem:[%s5 + $0x6f8] sm:$0xff]
    %v2540 = vld [vmem:[%s5 + $0x700] sm:$0xff]
    %v2541 = vld [vmem:[%s5 + $0x708] sm:$0xff]
    %v2542 = vld [vmem:[%s5 + $0x710] sm:$0xff]
    %v2543 = vld [vmem:[%s5 + $0x718] sm:$0xff]
    %v2544 = vld [vmem:[%s5 + $0x720] sm:$0xff]
    %v2545 = vld [vmem:[%s5 + $0x728] sm:$0xff]
    %v2546 = vld [vmem:[%s5 + $0x730] sm:$0xff]
    %v2547 = vld [vmem:[%s5 + $0x738] sm:$0xff]
    %v2548 = vld [vmem:[%s5 + $0x740] sm:$0xff]
    %v2549 = vld [vmem:[%s5 + $0x748] sm:$0xff]
    %v2550 = vld [vmem:[%s5 + $0x750] sm:$0xff]
    %v2551 = vld [vmem:[%s5 + $0x758] sm:$0xff]
    %v2552 = vld [vmem:[%s5 + $0x760] sm:$0xff]
    %v2553 = vld [vmem:[%s5 + $0x768] sm:$0xff]
    %v2554 = vld [vmem:[%s5 + $0x770] sm:$0xff]
    %v2555 = vld [vmem:[%s5 + $0x778] sm:$0xff]
    %v2556 = vld [vmem:[%s5 + $0x780] sm:$0xff]
    %v2557 = vld [vmem:[%s5 + $0x788] sm:$0xff]
    %v2558 = vld [vmem:[%s5 + $0x790] sm:$0xff]
    %v2559 = vld [vmem:[%s5 + $0x798] sm:$0xff]
    %v2560 = vld [vmem:[%s5 + $0x7a0] sm:$0xff]
    %v2561 = vld [vmem:[%s5 + $0x7a8] sm:$0xff]
    %v2562 = vld [vmem:[%s5 + $0x7b0] sm:$0xff]
    %v2563 = vld [vmem:[%s5 + $0x7b8] sm:$0xff]
    %v2564 = vld [vmem:[%s5 + $0x7c0] sm:$0xff]
    %v2565 = vld [vmem:[%s5 + $0x7c8] sm:$0xff]
    %v2566 = vld [vmem:[%s5 + $0x7d0] sm:$0xff]
    %v2567 = vld [vmem:[%s5 + $0x7d8] sm:$0xff]
    %v2568 = vld [vmem:[%s5 + $0x7e0] sm:$0xff]
    %v2569 = vld [vmem:[%s5 + $0x7e8] sm:$0xff]
    %v2570 = vld [vmem:[%s5 + $0x7f0] sm:$0xff]
    %v2571 = vld [vmem:[%s5 + $0x7f8] sm:$0xff]
    %v2572 = vld [vmem:[%s5 + $0x800] sm:$0xff]
    %v2573 = vld [vmem:[%s5 + $0x808] sm:$0xff]
    %v2574 = vld [vmem:[%s5 + $0x810] sm:$0xff]
    %v2575 = vld [vmem:[%s5 + $0x818] sm:$0xff]
    %v2576 = vld [vmem:[%s5 + $0x820] sm:$0xff]
    %v2577 = vld [vmem:[%s5 + $0x828] sm:$0xff]
    %v2578 = vld [vmem:[%s5 + $0x830] sm:$0xff]
    %v2579 = vld [vmem:[%s5 + $0x838] sm:$0xff]
    %v2580 = vld [vmem:[%s5 + $0x840] sm:$0xff]
    %v2581 = vld [vmem:[%s5 + $0x848] sm:$0xff]
    %v2582 = vld [vmem:[%s5 + $0x850] sm:$0xff]
    %v2583 = vld [vmem:[%s5 + $0x858] sm:$0xff]
    %v2584 = vld [vmem:[%s5 + $0x860] sm:$0xff]
    %v2585 = vld [vmem:[%s5 + $0x868] sm:$0xff]
    %v2586 = vld [vmem:[%s5 + $0x870] sm:$0xff]
    %v2587 = vld [vmem:[%s5 + $0x878] sm:$0xff]
    %v2588 = vld [vmem:[%s5 + $0x880] sm:$0xff]
    %v2589 = vld [vmem:[%s5 + $0x888] sm:$0xff]
    %v2590 = vld [vmem:[%s5 + $0x890] sm:$0xff]
    %v2591 = vld [vmem:[%s5 + $0x898] sm:$0xff]
    %v2592 = vld [vmem:[%s5 + $0x8a0] sm:$0xff]
    %v2593 = vld [vmem:[%s5 + $0x8a8] sm:$0xff]
    %v2594 = vld [vmem:[%s5 + $0x8b0] sm:$0xff]
    %v2595 = vld [vmem:[%s5 + $0x8b8] sm:$0xff]
    %v2596 = vld [vmem:[%s5 + $0x8c0] sm:$0xff]
    %v2597 = vld [vmem:[%s5 + $0x8c8] sm:$0xff]
    %v2598 = vld [vmem:[%s5 + $0x8d0] sm:$0xff]
    %v2599 = vld [vmem:[%s5 + $0x8d8] sm:$0xff]
    %v2600 = vld [vmem:[%s5 + $0x8e0] sm:$0xff]
    %v2601 = vld [vmem:[%s5 + $0x8e8] sm:$0xff]
    %v2602 = vld [vmem:[%s5 + $0x8f0] sm:$0xff]
    %v2603 = vld [vmem:[%s5 + $0x8f8] sm:$0xff]
    %v2604 = vld [vmem:[%s5 + $0x900] sm:$0xff]
    %v2605 = vld [vmem:[%s5 + $0x908] sm:$0xff]
    %v2606 = vld [vmem:[%s5 + $0x910] sm:$0xff]
    %v2607 = vld [vmem:[%s5 + $0x918] sm:$0xff]
    %v2608 = vld [vmem:[%s5 + $0x920] sm:$0xff]
    %v2609 = vld [vmem:[%s5 + $0x928] sm:$0xff]
    %v2610 = vld [vmem:[%s5 + $0x930] sm:$0xff]
    %v2611 = vld [vmem:[%s5 + $0x938] sm:$0xff]
    %v2612 = vld [vmem:[%s5 + $0x940] sm:$0xff]
    %v2613 = vld [vmem:[%s5 + $0x948] sm:$0xff]
    %v2614 = vld [vmem:[%s5 + $0x950] sm:$0xff]
    %v2615 = vld [vmem:[%s5 + $0x958] sm:$0xff]
    %v2616 = vld [vmem:[%s5 + $0x960] sm:$0xff]
    %v2617 = vld [vmem:[%s5 + $0x968] sm:$0xff]
    %v2618 = vld [vmem:[%s5 + $0x970] sm:$0xff]
    %v2619 = vld [vmem:[%s5 + $0x978] sm:$0xff]
    %v2620 = vld [vmem:[%s5 + $0x980] sm:$0xff]
    %v2621 = vld [vmem:[%s5 + $0x988] sm:$0xff]
    %v2622 = vld [vmem:[%s5 + $0x990] sm:$0xff]
    %v2623 = vld [vmem:[%s5 + $0x998] sm:$0xff]
    %v2624 = vld [vmem:[%s5 + $0x9a0] sm:$0xff]
    %v2625 = vld [vmem:[%s5 + $0x9a8] sm:$0xff]
    %v2626 = vld [vmem:[%s5 + $0x9b0] sm:$0xff]
    %v2627 = vld [vmem:[%s5 + $0x9b8] sm:$0xff]
    %v2628 = vld [vmem:[%s5 + $0x9c0] sm:$0xff]
    %v2629 = vld [vmem:[%s5 + $0x9c8] sm:$0xff]
    %v2630 = vld [vmem:[%s5 + $0x9d0] sm:$0xff]
    %v2631 = vld [vmem:[%s5 + $0x9d8] sm:$0xff]
    %v2632 = vld [vmem:[%s5 + $0x9e0] sm:$0xff]
    %v2633 = vld [vmem:[%s5 + $0x9e8] sm:$0xff]
    %v2634 = vld [vmem:[%s5 + $0x9f0] sm:$0xff]
    %v2635 = vld [vmem:[%s5 + $0x9f8] sm:$0xff]
    %v2636 = vld [vmem:[%s5 + $0xa00] sm:$0xff]
    %v2637 = vld [vmem:[%s5 + $0xa08] sm:$0xff]
    %v2638 = vld [vmem:[%s5 + $0xa10] sm:$0xff]
    %v2639 = vld [vmem:[%s5 + $0xa18] sm:$0xff]
    %v2640 = vld [vmem:[%s5 + $0xa20] sm:$0xff]
    %v2641 = vld [vmem:[%s5 + $0xa28] sm:$0xff]
    %v2642 = vld [vmem:[%s5 + $0xa30] sm:$0xff]
    %v2643 = vld [vmem:[%s5 + $0xa38] sm:$0xff]
    %v2644 = vld [vmem:[%s5 + $0xa40] sm:$0xff]
    %v2645 = vld [vmem:[%s5 + $0xa48] sm:$0xff]
    %v2646 = vld [vmem:[%s5 + $0xa50] sm:$0xff]
    %v2647 = vld [vmem:[%s5 + $0xa58] sm:$0xff]
    %v2648 = vld [vmem:[%s5 + $0xa60] sm:$0xff]
    %v2649 = vld [vmem:[%s5 + $0xa68] sm:$0xff]
    %v2650 = vld [vmem:[%s5 + $0xa70] sm:$0xff]
    %v2651 = vld [vmem:[%s5 + $0xa78] sm:$0xff]
    %v2652 = vld [vmem:[%s5 + $0xa80] sm:$0xff]
    %v2653 = vld [vmem:[%s5 + $0xa88] sm:$0xff]
    %v2654 = vld [vmem:[%s5 + $0xa90] sm:$0xff]
    %v2655 = vld [vmem:[%s5 + $0xa98] sm:$0xff]
    %v2656 = vld [vmem:[%s5 + $0xaa0] sm:$0xff]
    %v2657 = vld [vmem:[%s5 + $0xaa8] sm:$0xff]
    %v2658 = vld [vmem:[%s5 + $0xab0] sm:$0xff]
    %v2659 = vld [vmem:[%s5 + $0xab8] sm:$0xff]
    %v2660 = vld [vmem:[%s5 + $0xac0] sm:$0xff]
    %v2661 = vld [vmem:[%s5 + $0xac8] sm:$0xff]
    %v2662 = vld [vmem:[%s5 + $0xad0] sm:$0xff]
    %v2663 = vld [vmem:[%s5 + $0xad8] sm:$0xff]
    %v2664 = vld [vmem:[%s5 + $0xae0] sm:$0xff]
    %v2665 = vld [vmem:[%s5 + $0xae8] sm:$0xff]
    %v2666 = vld [vmem:[%s5 + $0xaf0] sm:$0xff]
    %v2667 = vld [vmem:[%s5 + $0xaf8] sm:$0xff]
    %v2668 = vld [vmem:[%s5 + $0xb00] sm:$0xff]
    %v2669 = vld [vmem:[%s5 + $0xb08] sm:$0xff]
    %v2670 = vld [vmem:[%s5 + $0xb10] sm:$0xff]
    %v2671 = vld [vmem:[%s5 + $0xb18] sm:$0xff]
    %v2672 = vld [vmem:[%s5 + $0xb20] sm:$0xff]
    %v2673 = vld [vmem:[%s5 + $0xb28] sm:$0xff]
    %v2674 = vld [vmem:[%s5 + $0xb30] sm:$0xff]
    %v2675 = vld [vmem:[%s5 + $0xb38] sm:$0xff]
    %v2676 = vld [vmem:[%s5 + $0xb40] sm:$0xff]
    %v2677 = vld [vmem:[%s5 + $0xb48] sm:$0xff]
    %v2678 = vld [vmem:[%s5 + $0xb50] sm:$0xff]
    %v2679 = vld [vmem:[%s5 + $0xb58] sm:$0xff]
    %v2680 = vld [vmem:[%s5 + $0xb60] sm:$0xff]
    %v2681 = vld [vmem:[%s5 + $0xb68] sm:$0xff]
    %v2682 = vld [vmem:[%s5 + $0xb70] sm:$0xff]
    %v2683 = vld [vmem:[%s5 + $0xb78] sm:$0xff]
    %v2684 = vld [vmem:[%s5 + $0xb80] sm:$0xff]
    %v2685 = vld [vmem:[%s5 + $0xb88] sm:$0xff]
    %v2686 = vld [vmem:[%s5 + $0xb90] sm:$0xff]
    %v2687 = vld [vmem:[%s5 + $0xb98] sm:$0xff]
    %v2688 = vld [vmem:[%s5 + $0xba0] sm:$0xff]
    %v2689 = vld [vmem:[%s5 + $0xba8] sm:$0xff]
    %v2690 = vld [vmem:[%s5 + $0xbb0] sm:$0xff]
    %v2691 = vld [vmem:[%s5 + $0xbb8] sm:$0xff]
    %v2692 = vld [vmem:[%s5 + $0xbc0] sm:$0xff]
    %v2693 = vld [vmem:[%s5 + $0xbc8] sm:$0xff]
    %v2694 = vld [vmem:[%s5 + $0xbd0] sm:$0xff]
    %v2695 = vld [vmem:[%s5 + $0xbd8] sm:$0xff]
    %v2696 = vld [vmem:[%s5 + $0xbe0] sm:$0xff]
    %v2697 = vld [vmem:[%s5 + $0xbe8] sm:$0xff]
    %v2698 = vld [vmem:[%s5 + $0xbf0] sm:$0xff]
    %v2699 = vld [vmem:[%s5 + $0xbf8] sm:$0xff]
    %v2700 = vld [vmem:[%s5 + $0xc00] sm:$0xff]
    %v2701 = vld [vmem:[%s5 + $0xc08] sm:$0xff]
    %v2702 = vld [vmem:[%s5 + $0xc10] sm:$0xff]
    %v2703 = vld [vmem:[%s5 + $0xc18] sm:$0xff]
    %v2704 = vld [vmem:[%s5 + $0xc20] sm:$0xff]
    %v2705 = vld [vmem:[%s5 + $0xc28] sm:$0xff]
    %v2706 = vld [vmem:[%s5 + $0xc30] sm:$0xff]
    %v2707 = vld [vmem:[%s5 + $0xc38] sm:$0xff]
    %v2708 = vld [vmem:[%s5 + $0xc40] sm:$0xff]
    %v2709 = vld [vmem:[%s5 + $0xc48] sm:$0xff]
    %v2710 = vld [vmem:[%s5 + $0xc50] sm:$0xff]
    %v2711 = vld [vmem:[%s5 + $0xc58] sm:$0xff]
    %v2712 = vld [vmem:[%s5 + $0xc60] sm:$0xff]
    %v2713 = vld [vmem:[%s5 + $0xc68] sm:$0xff]
    %v2714 = vld [vmem:[%s5 + $0xc70] sm:$0xff]
    %v2715 = vld [vmem:[%s5 + $0xc78] sm:$0xff]
    %v2716 = vld [vmem:[%s5 + $0xc80] sm:$0xff]
    %v2717 = vld [vmem:[%s5 + $0xc88] sm:$0xff]
    %v2718 = vld [vmem:[%s5 + $0xc90] sm:$0xff]
    %v2719 = vld [vmem:[%s5 + $0xc98] sm:$0xff]
    %v2720 = vld [vmem:[%s5 + $0xca0] sm:$0xff]
    %v2721 = vld [vmem:[%s5 + $0xca8] sm:$0xff]
    %v2722 = vld [vmem:[%s5 + $0xcb0] sm:$0xff]
    %v2723 = vld [vmem:[%s5 + $0xcb8] sm:$0xff]
    %v2724 = vld [vmem:[%s5 + $0xcc0] sm:$0xff]
    %v2725 = vld [vmem:[%s5 + $0xcc8] sm:$0xff]
    %v2726 = vld [vmem:[%s5 + $0xcd0] sm:$0xff]
    %v2727 = vld [vmem:[%s5 + $0xcd8] sm:$0xff]
    %v2728 = vld [vmem:[%s5 + $0xce0] sm:$0xff]
    %v2729 = vld [vmem:[%s5 + $0xce8] sm:$0xff]
    %v2730 = vld [vmem:[%s5 + $0xcf0] sm:$0xff]
    %v2731 = vld [vmem:[%s5 + $0xcf8] sm:$0xff]
    %v2732 = vld [vmem:[%s5 + $0xd00] sm:$0xff]
    %v2733 = vld [vmem:[%s5 + $0xd08] sm:$0xff]
    %v2734 = vld [vmem:[%s5 + $0xd10] sm:$0xff]
    %v2735 = vld [vmem:[%s5 + $0xd18] sm:$0xff]
    %v2736 = vld [vmem:[%s5 + $0xd20] sm:$0xff]
    %v2737 = vld [vmem:[%s5 + $0xd28] sm:$0xff]
    %v2738 = vld [vmem:[%s5 + $0xd30] sm:$0xff]
    %v2739 = vld [vmem:[%s5 + $0xd38] sm:$0xff]
    %v2740 = vld [vmem:[%s5 + $0xd40] sm:$0xff]
    %v2741 = vld [vmem:[%s5 + $0xd48] sm:$0xff]
    %v2742 = vld [vmem:[%s5 + $0xd50] sm:$0xff]
    %v2743 = vld [vmem:[%s5 + $0xd58] sm:$0xff]
    %v2744 = vld [vmem:[%s5 + $0xd60] sm:$0xff]
    %v2745 = vld [vmem:[%s5 + $0xd68] sm:$0xff]
    %v2746 = vld [vmem:[%s5 + $0xd70] sm:$0xff]
    %v2747 = vld [vmem:[%s5 + $0xd78] sm:$0xff]
    %v2748 = vld [vmem:[%s5 + $0xd80] sm:$0xff]
    %v2749 = vld [vmem:[%s5 + $0xd88] sm:$0xff]
    %v2750 = vld [vmem:[%s5 + $0xd90] sm:$0xff]
    %v2751 = vld [vmem:[%s5 + $0xd98] sm:$0xff]
    %v2752 = vld [vmem:[%s5 + $0xda0] sm:$0xff]
    %v2753 = vld [vmem:[%s5 + $0xda8] sm:$0xff]
    %v2754 = vld [vmem:[%s5 + $0xdb0] sm:$0xff]
    %v2755 = vld [vmem:[%s5 + $0xdb8] sm:$0xff]
    %v2756 = vld [vmem:[%s5 + $0xdc0] sm:$0xff]
    %v2757 = vld [vmem:[%s5 + $0xdc8] sm:$0xff]
    %v2758 = vld [vmem:[%s5 + $0xdd0] sm:$0xff]
    %v2759 = vld [vmem:[%s5 + $0xdd8] sm:$0xff]
    %v2760 = vld [vmem:[%s5 + $0xde0] sm:$0xff]
    %v2761 = vld [vmem:[%s5 + $0xde8] sm:$0xff]
    %v2762 = vld [vmem:[%s5 + $0xdf0] sm:$0xff]
    %v2763 = vld [vmem:[%s5 + $0xdf8] sm:$0xff]
    %v2764 = vld [vmem:[%s5 + $0xe00] sm:$0xff]
    %v2765 = vld [vmem:[%s5 + $0xe08] sm:$0xff]
    %v2766 = vld [vmem:[%s5 + $0xe10] sm:$0xff]
    %v2767 = vld [vmem:[%s5 + $0xe18] sm:$0xff]
    %v2768 = vld [vmem:[%s5 + $0xe20] sm:$0xff]
    %v2769 = vld [vmem:[%s5 + $0xe28] sm:$0xff]
    %v2770 = vld [vmem:[%s5 + $0xe30] sm:$0xff]
    %v2771 = vld [vmem:[%s5 + $0xe38] sm:$0xff]
    %v2772 = vld [vmem:[%s5 + $0xe40] sm:$0xff]
    %v2773 = vld [vmem:[%s5 + $0xe48] sm:$0xff]
    %v2774 = vld [vmem:[%s5 + $0xe50] sm:$0xff]
    %v2775 = vld [vmem:[%s5 + $0xe58] sm:$0xff]
    %v2776 = vld [vmem:[%s5 + $0xe60] sm:$0xff]
    %v2777 = vld [vmem:[%s5 + $0xe68] sm:$0xff]
    %v2778 = vld [vmem:[%s5 + $0xe70] sm:$0xff]
    %v2779 = vld [vmem:[%s5 + $0xe78] sm:$0xff]
    %v2780 = vld [vmem:[%s5 + $0xe80] sm:$0xff]
    %v2781 = vld [vmem:[%s5 + $0xe88] sm:$0xff]
    %v2782 = vld [vmem:[%s5 + $0xe90] sm:$0xff]
    %v2783 = vld [vmem:[%s5 + $0xe98] sm:$0xff]
    %v2784 = vld [vmem:[%s5 + $0xea0] sm:$0xff]
    %v2785 = vld [vmem:[%s5 + $0xea8] sm:$0xff]
    %v2786 = vld [vmem:[%s5 + $0xeb0] sm:$0xff]
    %v2787 = vld [vmem:[%s5 + $0xeb8] sm:$0xff]
    %v2788 = vld [vmem:[%s5 + $0xec0] sm:$0xff]
    %v2789 = vld [vmem:[%s5 + $0xec8] sm:$0xff]
    %v2790 = vld [vmem:[%s5 + $0xed0] sm:$0xff]
    %v2791 = vld [vmem:[%s5 + $0xed8] sm:$0xff]
    %v2792 = vld [vmem:[%s5 + $0xee0] sm:$0xff]
    %v2793 = vld [vmem:[%s5 + $0xee8] sm:$0xff]
    %v2794 = vld [vmem:[%s5 + $0xef0] sm:$0xff]
    %v2795 = vld [vmem:[%s5 + $0xef8] sm:$0xff]
    %v2796 = vld [vmem:[%s5 + $0xf00] sm:$0xff]
    %v2797 = vld [vmem:[%s5 + $0xf08] sm:$0xff]
    %v2798 = vld [vmem:[%s5 + $0xf10] sm:$0xff]
    %v2799 = vld [vmem:[%s5 + $0xf18] sm:$0xff]
    %v2800 = vld [vmem:[%s5 + $0xf20] sm:$0xff]
    %v2801 = vld [vmem:[%s5 + $0xf28] sm:$0xff]
    %v2802 = vld [vmem:[%s5 + $0xf30] sm:$0xff]
    %v2803 = vld [vmem:[%s5 + $0xf38] sm:$0xff]
    %v2804 = vld [vmem:[%s5 + $0xf40] sm:$0xff]
    %v2805 = vld [vmem:[%s5 + $0xf48] sm:$0xff]
    %v2806 = vld [vmem:[%s5 + $0xf50] sm:$0xff]
    %v2807 = vld [vmem:[%s5 + $0xf58] sm:$0xff]
    %v2808 = vld [vmem:[%s5 + $0xf60] sm:$0xff]
    %v2809 = vld [vmem:[%s5 + $0xf68] sm:$0xff]
    %v2810 = vld [vmem:[%s5 + $0xf70] sm:$0xff]
    %v2811 = vld [vmem:[%s5 + $0xf78] sm:$0xff]
    %v2812 = vld [vmem:[%s5 + $0xf80] sm:$0xff]
    %v2813 = vld [vmem:[%s5 + $0xf88] sm:$0xff]
    %v2814 = vld [vmem:[%s5 + $0xf90] sm:$0xff]
    %v2815 = vld [vmem:[%s5 + $0xf98] sm:$0xff]
    %v2816 = vld [vmem:[%s5 + $0xfa0] sm:$0xff]
    %v2817 = vld [vmem:[%s5 + $0xfa8] sm:$0xff]
    %v2818 = vld [vmem:[%s5 + $0xfb0] sm:$0xff]
    %v2819 = vld [vmem:[%s5 + $0xfb8] sm:$0xff]
    %v2820 = vld [vmem:[%s5 + $0xfc0] sm:$0xff]
    %v2821 = vld [vmem:[%s5 + $0xfc8] sm:$0xff]
    %v2822 = vld [vmem:[%s5 + $0xfd0] sm:$0xff]
    %v2823 = vld [vmem:[%s5 + $0xfd8] sm:$0xff]
    %v2824 = vld [vmem:[%s5 + $0xfe0] sm:$0xff]
    %v2825 = vld [vmem:[%s5 + $0xfe8] sm:$0xff]
    %v2826 = vld [vmem:[%s5 + $0xff0] sm:$0xff]
    %v2827 = vld [vmem:[%s5 + $0xff8] sm:$0xff]
    %v2828 = vld [vmem:[%s5 + $0x1000] sm:$0xff]
    %v2829 = vld [vmem:[%s5 + $0x1008] sm:$0xff]
    %v2830 = vld [vmem:[%s5 + $0x1010] sm:$0xff]
    %v2831 = vld [vmem:[%s5 + $0x1018] sm:$0xff]
    %v2832 = vld [vmem:[%s5 + $0x1020] sm:$0xff]
    %v2833 = vld [vmem:[%s5 + $0x1028] sm:$0xff]
    %v2834 = vld [vmem:[%s5 + $0x1030] sm:$0xff]
    %v2835 = vld [vmem:[%s5 + $0x1038] sm:$0xff]
    %v2836 = vld [vmem:[%s5 + $0x1040] sm:$0xff]
    %v2837 = vld [vmem:[%s5 + $0x1048] sm:$0xff]
    %v2838 = vld [vmem:[%s5 + $0x1050] sm:$0xff]
    %v2839 = vld [vmem:[%s5 + $0x1058] sm:$0xff]
    %v2840 = vld [vmem:[%s5 + $0x1060] sm:$0xff]
    %v2841 = vld [vmem:[%s5 + $0x1068] sm:$0xff]
    %v2842 = vld [vmem:[%s5 + $0x1070] sm:$0xff]
    %v2843 = vld [vmem:[%s5 + $0x1078] sm:$0xff]
    %v2844 = vld [vmem:[%s5 + $0x1080] sm:$0xff]
    %v2845 = vld [vmem:[%s5 + $0x1088] sm:$0xff]
    %v2846 = vld [vmem:[%s5 + $0x1090] sm:$0xff]
    %v2847 = vld [vmem:[%s5 + $0x1098] sm:$0xff]
    %v2848 = vld [vmem:[%s5 + $0x10a0] sm:$0xff]
    %v2849 = vld [vmem:[%s5 + $0x10a8] sm:$0xff]
    %v2850 = vld [vmem:[%s5 + $0x10b0] sm:$0xff]
    %v2851 = vld [vmem:[%s5 + $0x10b8] sm:$0xff]
    %v2852 = vld [vmem:[%s5 + $0x10c0] sm:$0xff]
    %v2853 = vld [vmem:[%s5 + $0x10c8] sm:$0xff]
    %v2854 = vld [vmem:[%s5 + $0x10d0] sm:$0xff]
    %v2855 = vld [vmem:[%s5 + $0x10d8] sm:$0xff]
    %v2856 = vld [vmem:[%s5 + $0x10e0] sm:$0xff]
    %v2857 = vld [vmem:[%s5 + $0x10e8] sm:$0xff]
    %v2858 = vld [vmem:[%s5 + $0x10f0] sm:$0xff]
    %v2859 = vld [vmem:[%s5 + $0x10f8] sm:$0xff]
    %v2860 = vld [vmem:[%s5 + $0x1100] sm:$0xff]
    %v2861 = vld [vmem:[%s5 + $0x1108] sm:$0xff]
    %v2862 = vld [vmem:[%s5 + $0x1110] sm:$0xff]
    %v2863 = vld [vmem:[%s5 + $0x1118] sm:$0xff]
    %v2864 = vld [vmem:[%s5 + $0x1120] sm:$0xff]
    %v2865 = vld [vmem:[%s5 + $0x1128] sm:$0xff]
    %v2866 = vld [vmem:[%s5 + $0x1130] sm:$0xff]
    %v2867 = vld [vmem:[%s5 + $0x1138] sm:$0xff]
    %v2868 = vld [vmem:[%s5 + $0x1140] sm:$0xff]
    %v2869 = vld [vmem:[%s5 + $0x1148] sm:$0xff]
    %v2870 = vld [vmem:[%s5 + $0x1150] sm:$0xff]
    %v2871 = vld [vmem:[%s5 + $0x1158] sm:$0xff]
    %v2872 = vld [vmem:[%s5 + $0x1160] sm:$0xff]
    %v2873 = vld [vmem:[%s5 + $0x1168] sm:$0xff]
    %v2874 = vld [vmem:[%s5 + $0x1170] sm:$0xff]
    %v2875 = vld [vmem:[%s5 + $0x1178] sm:$0xff]
    %v2876 = vld [vmem:[%s5 + $0x1180] sm:$0xff]
    %v2877 = vld [vmem:[%s5 + $0x1188] sm:$0xff]
    %v2878 = vld [vmem:[%s5 + $0x1190] sm:$0xff]
    %v2879 = vld [vmem:[%s5 + $0x1198] sm:$0xff]
    %v2880 = vld [vmem:[%s5 + $0x11a0] sm:$0xff]
    %v2881 = vld [vmem:[%s5 + $0x11a8] sm:$0xff]
    %v2882 = vld [vmem:[%s5 + $0x11b0] sm:$0xff]
    %v2883 = vld [vmem:[%s5 + $0x11b8] sm:$0xff]
    %v2884 = vld [vmem:[%s5 + $0x11c0] sm:$0xff]
    %v2885 = vld [vmem:[%s5 + $0x11c8] sm:$0xff]
    %v2886 = vld [vmem:[%s5 + $0x11d0] sm:$0xff]
    %v2887 = vld [vmem:[%s5 + $0x11d8] sm:$0xff]
    %v2888 = vld [vmem:[%s5 + $0x11e0] sm:$0xff]
    %v2889 = vld [vmem:[%s5 + $0x11e8] sm:$0xff]
    %v2890 = vld [vmem:[%s5 + $0x11f0] sm:$0xff]
    %v2891 = vld [vmem:[%s5 + $0x11f8] sm:$0xff]
    %v2892 = vld [vmem:[%s5 + $0x1200] sm:$0xff]
    %v2893 = vld [vmem:[%s5 + $0x1208] sm:$0xff]
    %v2894 = vld [vmem:[%s5 + $0x1210] sm:$0xff]
    %v2895 = vld [vmem:[%s5 + $0x1218] sm:$0xff]
    %v2896 = vld [vmem:[%s5 + $0x1220] sm:$0xff]
    %v2897 = vld [vmem:[%s5 + $0x1228] sm:$0xff]
    %v2898 = vld [vmem:[%s5 + $0x1230] sm:$0xff]
    %v2899 = vld [vmem:[%s5 + $0x1238] sm:$0xff]
    %v2900 = vld [vmem:[%s5 + $0x1240] sm:$0xff]
    %v2901 = vld [vmem:[%s5 + $0x1248] sm:$0xff]
    %v2902 = vld [vmem:[%s5 + $0x1250] sm:$0xff]
    %v2903 = vld [vmem:[%s5 + $0x1258] sm:$0xff]
    %v2904 = vld [vmem:[%s5 + $0x1260] sm:$0xff]
    %v2905 = vld [vmem:[%s5 + $0x1268] sm:$0xff]
    %v2906 = vld [vmem:[%s5 + $0x1270] sm:$0xff]
    %v2907 = vld [vmem:[%s5 + $0x1278] sm:$0xff]
    %v2908 = vld [vmem:[%s5 + $0x1280] sm:$0xff]
    %v2909 = vld [vmem:[%s5 + $0x1288] sm:$0xff]
    %v2910 = vld [vmem:[%s5 + $0x1290] sm:$0xff]
    %v2911 = vld [vmem:[%s5 + $0x1298] sm:$0xff]
    %v2912 = vld [vmem:[%s5 + $0x12a0] sm:$0xff]
    %v2913 = vld [vmem:[%s5 + $0x12a8] sm:$0xff]
    %v2914 = vld [vmem:[%s5 + $0x12b0] sm:$0xff]
    %v2915 = vld [vmem:[%s5 + $0x12b8] sm:$0xff]
    %v2916 = vld [vmem:[%s5 + $0x12c0] sm:$0xff]
    %v2917 = vld [vmem:[%s5 + $0x12c8] sm:$0xff]
    %v2918 = vld [vmem:[%s5 + $0x12d0] sm:$0xff]
    %v2919 = vld [vmem:[%s5 + $0x12d8] sm:$0xff]
    %v2920 = vld [vmem:[%s5 + $0x12e0] sm:$0xff]
    %v2921 = vld [vmem:[%s5 + $0x12e8] sm:$0xff]
    %v2922 = vld [vmem:[%s5 + $0x12f0] sm:$0xff]
    %v2923 = vld [vmem:[%s5 + $0x12f8] sm:$0xff]
    %v2924 = vld [vmem:[%s5 + $0x1300] sm:$0xff]
    %v2925 = vld [vmem:[%s5 + $0x1308] sm:$0xff]
    %v2926 = vld [vmem:[%s5 + $0x1310] sm:$0xff]
    %v2927 = vld [vmem:[%s5 + $0x1318] sm:$0xff]
    %v2928 = vld [vmem:[%s5 + $0x1320] sm:$0xff]
    %v2929 = vld [vmem:[%s5 + $0x1328] sm:$0xff]
    %v2930 = vld [vmem:[%s5 + $0x1330] sm:$0xff]
    %v2931 = vld [vmem:[%s5 + $0x1338] sm:$0xff]
    %v2932 = vld [vmem:[%s5 + $0x1340] sm:$0xff]
    %v2933 = vld [vmem:[%s5 + $0x1348] sm:$0xff]
    %v2934 = vld [vmem:[%s5 + $0x1350] sm:$0xff]
    %v2935 = vld [vmem:[%s5 + $0x1358] sm:$0xff]
    %v2936 = vld [vmem:[%s5 + $0x1360] sm:$0xff]
    %v2937 = vld [vmem:[%s5 + $0x1368] sm:$0xff]
    %v2938 = vld [vmem:[%s5 + $0x1370] sm:$0xff]
    %v2939 = vld [vmem:[%s5 + $0x1378] sm:$0xff]
    %v2940 = vld [vmem:[%s5 + $0x1380] sm:$0xff]
    %v2941 = vld [vmem:[%s5 + $0x1388] sm:$0xff]
    %v2942 = vld [vmem:[%s5 + $0x1390] sm:$0xff]
    %v2943 = vld [vmem:[%s5 + $0x1398] sm:$0xff]
    %v2944 = vld [vmem:[%s5 + $0x13a0] sm:$0xff]
    %v2945 = vld [vmem:[%s5 + $0x13a8] sm:$0xff]
    %v2946 = vld [vmem:[%s5 + $0x13b0] sm:$0xff]
    %v2947 = vld [vmem:[%s5 + $0x13b8] sm:$0xff]
    %v2948 = vld [vmem:[%s5 + $0x13c0] sm:$0xff]
    %v2949 = vld [vmem:[%s5 + $0x13c8] sm:$0xff]
    %v2950 = vld [vmem:[%s5 + $0x13d0] sm:$0xff]
    %v2951 = vld [vmem:[%s5 + $0x13d8] sm:$0xff]
    %v2952 = vld [vmem:[%s5 + $0x13e0] sm:$0xff]
    %v2953 = vld [vmem:[%s5 + $0x13e8] sm:$0xff]
    %v2954 = vld [vmem:[%s5 + $0x13f0] sm:$0xff]
    %v2955 = vld [vmem:[%s5 + $0x13f8] sm:$0xff]
    %v2956 = vld [vmem:[%s5 + $0x1400] sm:$0xff]
    %v2957 = vld [vmem:[%s5 + $0x1408] sm:$0xff]
    %v2958 = vld [vmem:[%s5 + $0x1410] sm:$0xff]
    %v2959 = vld [vmem:[%s5 + $0x1418] sm:$0xff]
    %v2960 = vld [vmem:[%s5 + $0x1420] sm:$0xff]
    %v2961 = vld [vmem:[%s5 + $0x1428] sm:$0xff]
    %v2962 = vld [vmem:[%s5 + $0x1430] sm:$0xff]
    %v2963 = vld [vmem:[%s5 + $0x1438] sm:$0xff]
    %v2964 = vld [vmem:[%s5 + $0x1440] sm:$0xff]
    %v2965 = vld [vmem:[%s5 + $0x1448] sm:$0xff]
    %v2966 = vld [vmem:[%s5 + $0x1450] sm:$0xff]
    %v2967 = vld [vmem:[%s5 + $0x1458] sm:$0xff]
    %v2968 = vld [vmem:[%s5 + $0x1460] sm:$0xff]
    %v2969 = vld [vmem:[%s5 + $0x1468] sm:$0xff]
    %v2970 = vld [vmem:[%s5 + $0x1470] sm:$0xff]
    %v2971 = vld [vmem:[%s5 + $0x1478] sm:$0xff]
    %v2972 = vld [vmem:[%s5 + $0x1480] sm:$0xff]
    %v2973 = vld [vmem:[%s5 + $0x1488] sm:$0xff]
    %v2974 = vld [vmem:[%s5 + $0x1490] sm:$0xff]
    %v2975 = vld [vmem:[%s5 + $0x1498] sm:$0xff]
    %v2976 = vld [vmem:[%s5 + $0x14a0] sm:$0xff]
    %v2977 = vld [vmem:[%s5 + $0x14a8] sm:$0xff]
    %v2978 = vld [vmem:[%s5 + $0x14b0] sm:$0xff]
    %v2979 = vld [vmem:[%s5 + $0x14b8] sm:$0xff]
    %v2980 = vld [vmem:[%s5 + $0x14c0] sm:$0xff]
    %v2981 = vld [vmem:[%s5 + $0x14c8] sm:$0xff]
    %v2982 = vld [vmem:[%s5 + $0x14d0] sm:$0xff]
    %v2983 = vld [vmem:[%s5 + $0x14d8] sm:$0xff]
    %v2984 = vld [vmem:[%s5 + $0x14e0] sm:$0xff]
    %v2985 = vld [vmem:[%s5 + $0x14e8] sm:$0xff]
    %v2986 = vld [vmem:[%s5 + $0x14f0] sm:$0xff]
    %v2987 = vld [vmem:[%s5 + $0x14f8] sm:$0xff]
    %v2988 = vld [vmem:[%s5 + $0x1500] sm:$0xff]
    %v2989 = vld [vmem:[%s5 + $0x1508] sm:$0xff]
    %v2990 = vld [vmem:[%s5 + $0x1510] sm:$0xff]
    %v2991 = vld [vmem:[%s5 + $0x1518] sm:$0xff]
    %v2992 = vld [vmem:[%s5 + $0x1520] sm:$0xff]
    %v2993 = vld [vmem:[%s5 + $0x1528] sm:$0xff]
    %v2994 = vld [vmem:[%s5 + $0x1530] sm:$0xff]
    %v2995 = vld [vmem:[%s5 + $0x1538] sm:$0xff]
    %v2996 = vld [vmem:[%s5 + $0x1540] sm:$0xff]
    %v2997 = vld [vmem:[%s5 + $0x1548] sm:$0xff]
    %v2998 = vld [vmem:[%s5 + $0x1550] sm:$0xff]
    %v2999 = vld [vmem:[%s5 + $0x1558] sm:$0xff]
    %v3000 = vld [vmem:[%s5 + $0x1560] sm:$0xff]
    %v3001 = vld [vmem:[%s5 + $0x1568] sm:$0xff]
    %v3002 = vld [vmem:[%s5 + $0x1570] sm:$0xff]
    %v3003 = vld [vmem:[%s5 + $0x1578] sm:$0xff]
    %v3004 = vld [vmem:[%s5 + $0x1580] sm:$0xff]
    %v3005 = vld [vmem:[%s5 + $0x1588] sm:$0xff]
    %v3006 = vld [vmem:[%s5 + $0x1590] sm:$0xff]
    %v3007 = vld [vmem:[%s5 + $0x1598] sm:$0xff]
    %v3008 = vld [vmem:[%s5 + $0x15a0] sm:$0xff]
    %v3009 = vld [vmem:[%s5 + $0x15a8] sm:$0xff]
    %v3010 = vld [vmem:[%s5 + $0x15b0] sm:$0xff]
    %v3011 = vld [vmem:[%s5 + $0x15b8] sm:$0xff]
    %v3012 = vld [vmem:[%s5 + $0x15c0] sm:$0xff]
    %v3013 = vld [vmem:[%s5 + $0x15c8] sm:$0xff]
    %v3014 = vld [vmem:[%s5 + $0x15d0] sm:$0xff]
    %v3015 = vld [vmem:[%s5 + $0x15d8] sm:$0xff]
    %v3016 = vld [vmem:[%s5 + $0x15e0] sm:$0xff]
    %v3017 = vld [vmem:[%s5 + $0x15e8] sm:$0xff]
    %v3018 = vld [vmem:[%s5 + $0x15f0] sm:$0xff]
    %v3019 = vld [vmem:[%s5 + $0x15f8] sm:$0xff]
    %v3020 = vld [vmem:[%s5 + $0x1600] sm:$0xff]
    %v3021 = vld [vmem:[%s5 + $0x1608] sm:$0xff]
    %v3022 = vld [vmem:[%s5 + $0x1610] sm:$0xff]
    %v3023 = vld [vmem:[%s5 + $0x1618] sm:$0xff]
    %v3024 = vld [vmem:[%s5 + $0x1620] sm:$0xff]
    %v3025 = vld [vmem:[%s5 + $0x1628] sm:$0xff]
    %v3026 = vld [vmem:[%s5 + $0x1630] sm:$0xff]
    %v3027 = vld [vmem:[%s5 + $0x1638] sm:$0xff]
    %v3028 = vld [vmem:[%s5 + $0x1640] sm:$0xff]
    %v3029 = vld [vmem:[%s5 + $0x1648] sm:$0xff]
    %v3030 = vld [vmem:[%s5 + $0x1650] sm:$0xff]
    %v3031 = vld [vmem:[%s5 + $0x1658] sm:$0xff]
    %v3032 = vld [vmem:[%s5 + $0x1660] sm:$0xff]
    %v3033 = vld [vmem:[%s5 + $0x1668] sm:$0xff]
    %v3034 = vld [vmem:[%s5 + $0x1670] sm:$0xff]
    %v3035 = vld [vmem:[%s5 + $0x1678] sm:$0xff]
    %v3036 = vld [vmem:[%s5 + $0x1680] sm:$0xff]
    %v3037 = vld [vmem:[%s5 + $0x1688] sm:$0xff]
    %v3038 = vld [vmem:[%s5 + $0x1690] sm:$0xff]
    %v3039 = vld [vmem:[%s5 + $0x1698] sm:$0xff]
    %v3040 = vld [vmem:[%s5 + $0x16a0] sm:$0xff]
    %v3041 = vld [vmem:[%s5 + $0x16a8] sm:$0xff]
    %v3042 = vld [vmem:[%s5 + $0x16b0] sm:$0xff]
    %v3043 = vld [vmem:[%s5 + $0x16b8] sm:$0xff]
    %v3044 = vld [vmem:[%s5 + $0x16c0] sm:$0xff]
    %v3045 = vld [vmem:[%s5 + $0x16c8] sm:$0xff]
    %v3046 = vld [vmem:[%s5 + $0x16d0] sm:$0xff]
    %v3047 = vld [vmem:[%s5 + $0x16d8] sm:$0xff]
    %v3048 = vld [vmem:[%s5 + $0x16e0] sm:$0xff]
    %v3049 = vld [vmem:[%s5 + $0x16e8] sm:$0xff]
    %v3050 = vld [vmem:[%s5 + $0x16f0] sm:$0xff]
    %v3051 = vld [vmem:[%s5 + $0x16f8] sm:$0xff]
    %v3052 = vld [vmem:[%s5 + $0x1700] sm:$0xff]
    %v3053 = vld [vmem:[%s5 + $0x1708] sm:$0xff]
    %v3054 = vld [vmem:[%s5 + $0x1710] sm:$0xff]
    %v3055 = vld [vmem:[%s5 + $0x1718] sm:$0xff]
    %v3056 = vld [vmem:[%s5 + $0x1720] sm:$0xff]
    %v3057 = vld [vmem:[%s5 + $0x1728] sm:$0xff]
    %v3058 = vld [vmem:[%s5 + $0x1730] sm:$0xff]
    %v3059 = vld [vmem:[%s5 + $0x1738] sm:$0xff]
    %v3060 = vld [vmem:[%s5 + $0x1740] sm:$0xff]
    %v3061 = vld [vmem:[%s5 + $0x1748] sm:$0xff]
    %v3062 = vld [vmem:[%s5 + $0x1750] sm:$0xff]
    %v3063 = vld [vmem:[%s5 + $0x1758] sm:$0xff]
    %v3064 = vld [vmem:[%s5 + $0x1760] sm:$0xff]
    %v3065 = vld [vmem:[%s5 + $0x1768] sm:$0xff]
    %v3066 = vld [vmem:[%s5 + $0x1770] sm:$0xff]
    %v3067 = vld [vmem:[%s5 + $0x1778] sm:$0xff]
    %v3068 = vld [vmem:[%s5 + $0x1780] sm:$0xff]
    %v3069 = vld [vmem:[%s5 + $0x1788] sm:$0xff]
    %v3070 = vld [vmem:[%s5 + $0x1790] sm:$0xff]
    %v3071 = vld [vmem:[%s5 + $0x1798] sm:$0xff]
    %v3072 = vld [vmem:[%s5 + $0x17a0] sm:$0xff]
    %v3073 = vld [vmem:[%s5 + $0x17a8] sm:$0xff]
    %v3074 = vld [vmem:[%s5 + $0x17b0] sm:$0xff]
    %v3075 = vld [vmem:[%s5 + $0x17b8] sm:$0xff]
    %v3076 = vld [vmem:[%s5 + $0x17c0] sm:$0xff]
    %v3077 = vld [vmem:[%s5 + $0x17c8] sm:$0xff]
    %v3078 = vld [vmem:[%s5 + $0x17d0] sm:$0xff]
    %v3079 = vld [vmem:[%s5 + $0x17d8] sm:$0xff]
    %v3080 = vld [vmem:[%s5 + $0x17e0] sm:$0xff]
    %v3081 = vld [vmem:[%s5 + $0x17e8] sm:$0xff]
    %v3082 = vld [vmem:[%s5 + $0x17f0] sm:$0xff]
    %v3083 = vld [vmem:[%s5 + $0x17f8] sm:$0xff]
    %v3084 = vld [vmem:[%s5 + $0x1800] sm:$0xff]
    %v3085 = vld [vmem:[%s5 + $0x1808] sm:$0xff]
    %v3086 = vld [vmem:[%s5 + $0x1810] sm:$0xff]
    %v3087 = vld [vmem:[%s5 + $0x1818] sm:$0xff]
    %v3088 = vld [vmem:[%s5 + $0x1820] sm:$0xff]
    %v3089 = vld [vmem:[%s5 + $0x1828] sm:$0xff]
    %v3090 = vld [vmem:[%s5 + $0x1830] sm:$0xff]
    %v3091 = vld [vmem:[%s5 + $0x1838] sm:$0xff]
    %v3092 = vld [vmem:[%s5 + $0x1840] sm:$0xff]
    %v3093 = vld [vmem:[%s5 + $0x1848] sm:$0xff]
    %v3094 = vld [vmem:[%s5 + $0x1850] sm:$0xff]
    %v3095 = vld [vmem:[%s5 + $0x1858] sm:$0xff]
    %v3096 = vld [vmem:[%s5 + $0x1860] sm:$0xff]
    %v3097 = vld [vmem:[%s5 + $0x1868] sm:$0xff]
    %v3098 = vld [vmem:[%s5 + $0x1870] sm:$0xff]
    %v3099 = vld [vmem:[%s5 + $0x1878] sm:$0xff]
    %v3100 = vld [vmem:[%s5 + $0x1880] sm:$0xff]
    %v3101 = vld [vmem:[%s5 + $0x1888] sm:$0xff]
    %v3102 = vld [vmem:[%s5 + $0x1890] sm:$0xff]
    %v3103 = vld [vmem:[%s5 + $0x1898] sm:$0xff]
    %v3104 = vld [vmem:[%s5 + $0x18a0] sm:$0xff]
    %v3105 = vld [vmem:[%s5 + $0x18a8] sm:$0xff]
    %v3106 = vld [vmem:[%s5 + $0x18b0] sm:$0xff]
    %v3107 = vld [vmem:[%s5 + $0x18b8] sm:$0xff]
    %v3108 = vld [vmem:[%s5 + $0x18c0] sm:$0xff]
    %v3109 = vld [vmem:[%s5 + $0x18c8] sm:$0xff]
    %v3110 = vld [vmem:[%s5 + $0x18d0] sm:$0xff]
    %v3111 = vld [vmem:[%s5 + $0x18d8] sm:$0xff]
    %v3112 = vld [vmem:[%s5 + $0x18e0] sm:$0xff]
    %v3113 = vld [vmem:[%s5 + $0x18e8] sm:$0xff]
    %v3114 = vld [vmem:[%s5 + $0x18f0] sm:$0xff]
    %v3115 = vld [vmem:[%s5 + $0x18f8] sm:$0xff]
    %v3116 = vld [vmem:[%s5 + $0x1900] sm:$0xff]
    %v3117 = vld [vmem:[%s5 + $0x1908] sm:$0xff]
    %v3118 = vld [vmem:[%s5 + $0x1910] sm:$0xff]
    %v3119 = vld [vmem:[%s5 + $0x1918] sm:$0xff]
    %v3120 = vld [vmem:[%s5 + $0x1920] sm:$0xff]
    %v3121 = vld [vmem:[%s5 + $0x1928] sm:$0xff]
    %v3122 = vld [vmem:[%s5 + $0x1930] sm:$0xff]
    %v3123 = vld [vmem:[%s5 + $0x1938] sm:$0xff]
    %v3124 = vld [vmem:[%s5 + $0x1940] sm:$0xff]
    %v3125 = vld [vmem:[%s5 + $0x1948] sm:$0xff]
    %v3126 = vld [vmem:[%s5 + $0x1950] sm:$0xff]
    %v3127 = vld [vmem:[%s5 + $0x1958] sm:$0xff]
    %v3128 = vld [vmem:[%s5 + $0x1960] sm:$0xff]
    %v3129 = vld [vmem:[%s5 + $0x1968] sm:$0xff]
    %v3130 = vld [vmem:[%s5 + $0x1970] sm:$0xff]
    %v3131 = vld [vmem:[%s5 + $0x1978] sm:$0xff]
    %v3132 = vld [vmem:[%s5 + $0x1980] sm:$0xff]
    %v3133 = vld [vmem:[%s5 + $0x1988] sm:$0xff]
    %v3134 = vld [vmem:[%s5 + $0x1990] sm:$0xff]
    %v3135 = vld [vmem:[%s5 + $0x1998] sm:$0xff]
    %v3136 = vld [vmem:[%s5 + $0x19a0] sm:$0xff]
    %v3137 = vld [vmem:[%s5 + $0x19a8] sm:$0xff]
    %v3138 = vld [vmem:[%s5 + $0x19b0] sm:$0xff]
    %v3139 = vld [vmem:[%s5 + $0x19b8] sm:$0xff]
    %v3140 = vld [vmem:[%s5 + $0x19c0] sm:$0xff]
    %v3141 = vld [vmem:[%s5 + $0x19c8] sm:$0xff]
    %v3142 = vld [vmem:[%s5 + $0x19d0] sm:$0xff]
    %v3143 = vld [vmem:[%s5 + $0x19d8] sm:$0xff]
    %v3144 = vld [vmem:[%s5 + $0x19e0] sm:$0xff]
    %v3145 = vld [vmem:[%s5 + $0x19e8] sm:$0xff]
    %v3146 = vld [vmem:[%s5 + $0x19f0] sm:$0xff]
    %v3147 = vld [vmem:[%s5 + $0x19f8] sm:$0xff]
    %v3148 = vld [vmem:[%s5 + $0x1a00] sm:$0xff]
    %v3149 = vld [vmem:[%s5 + $0x1a08] sm:$0xff]
    %v3150 = vld [vmem:[%s5 + $0x1a10] sm:$0xff]
    %v3151 = vld [vmem:[%s5 + $0x1a18] sm:$0xff]
    %v3152 = vld [vmem:[%s5 + $0x1a20] sm:$0xff]
    %v3153 = vld [vmem:[%s5 + $0x1a28] sm:$0xff]
    %v3154 = vld [vmem:[%s5 + $0x1a30] sm:$0xff]
    %v3155 = vld [vmem:[%s5 + $0x1a38] sm:$0xff]
    %v3156 = vld [vmem:[%s5 + $0x1a40] sm:$0xff]
    %v3157 = vld [vmem:[%s5 + $0x1a48] sm:$0xff]
    %v3158 = vld [vmem:[%s5 + $0x1a50] sm:$0xff]
    %v3159 = vld [vmem:[%s5 + $0x1a58] sm:$0xff]
    %v3160 = vld [vmem:[%s5 + $0x1a60] sm:$0xff]
    %v3161 = vld [vmem:[%s5 + $0x1a68] sm:$0xff]
    %v3162 = vld [vmem:[%s5 + $0x1a70] sm:$0xff]
    %v3163 = vld [vmem:[%s5 + $0x1a78] sm:$0xff]
    %v3164 = vld [vmem:[%s5 + $0x1a80] sm:$0xff]
    %v3165 = vld [vmem:[%s5 + $0x1a88] sm:$0xff]
    %v3166 = vld [vmem:[%s5 + $0x1a90] sm:$0xff]
    %v3167 = vld [vmem:[%s5 + $0x1a98] sm:$0xff]
    %v3168 = vld [vmem:[%s5 + $0x1aa0] sm:$0xff]
    %v3169 = vld [vmem:[%s5 + $0x1aa8] sm:$0xff]
    %v3170 = vld [vmem:[%s5 + $0x1ab0] sm:$0xff]
    %v3171 = vld [vmem:[%s5 + $0x1ab8] sm:$0xff]
    %v3172 = vld [vmem:[%s5 + $0x1ac0] sm:$0xff]
    %v3173 = vld [vmem:[%s5 + $0x1ac8] sm:$0xff]
    %v3174 = vld [vmem:[%s5 + $0x1ad0] sm:$0xff]
    %v3175 = vld [vmem:[%s5 + $0x1ad8] sm:$0xff]
    %v3176 = vld [vmem:[%s5 + $0x1ae0] sm:$0xff]
    %v3177 = vld [vmem:[%s5 + $0x1ae8] sm:$0xff]
    %v3178 = vld [vmem:[%s5 + $0x1af0] sm:$0xff]
    %v3179 = vld [vmem:[%s5 + $0x1af8] sm:$0xff]
    %v3180 = vld [vmem:[%s5 + $0x1b00] sm:$0xff]
    %v3181 = vld [vmem:[%s5 + $0x1b08] sm:$0xff]
    %v3182 = vld [vmem:[%s5 + $0x1b10] sm:$0xff]
    %v3183 = vld [vmem:[%s5 + $0x1b18] sm:$0xff]
    %v3184 = vld [vmem:[%s5 + $0x1b20] sm:$0xff]
    %v3185 = vld [vmem:[%s5 + $0x1b28] sm:$0xff]
    %v3186 = vld [vmem:[%s5 + $0x1b30] sm:$0xff]
    %v3187 = vld [vmem:[%s5 + $0x1b38] sm:$0xff]
    %v3188 = vld [vmem:[%s5 + $0x1b40] sm:$0xff]
    %v3189 = vld [vmem:[%s5 + $0x1b48] sm:$0xff]
    %v3190 = vld [vmem:[%s5 + $0x1b50] sm:$0xff]
    %v3191 = vld [vmem:[%s5 + $0x1b58] sm:$0xff]
    %v3192 = vld [vmem:[%s5 + $0x1b60] sm:$0xff]
    %v3193 = vld [vmem:[%s5 + $0x1b68] sm:$0xff]
    %v3194 = vld [vmem:[%s5 + $0x1b70] sm:$0xff]
    %v3195 = vld [vmem:[%s5 + $0x1b78] sm:$0xff]
    %v3196 = vld [vmem:[%s5 + $0x1b80] sm:$0xff]
    %v3197 = vld [vmem:[%s5 + $0x1b88] sm:$0xff]
    %v3198 = vld [vmem:[%s5 + $0x1b90] sm:$0xff]
    %v3199 = vld [vmem:[%s5 + $0x1b98] sm:$0xff]
    %v3200 = vld [vmem:[%s5 + $0x1ba0] sm:$0xff]
    %v3201 = vld [vmem:[%s5 + $0x1ba8] sm:$0xff]
    %v3202 = vld [vmem:[%s5 + $0x1bb0] sm:$0xff]
    %v3203 = vld [vmem:[%s5 + $0x1bb8] sm:$0xff]
    %v3204 = vld [vmem:[%s5 + $0x1bc0] sm:$0xff]
    %v3205 = vld [vmem:[%s5 + $0x1bc8] sm:$0xff]
    %v3206 = vld [vmem:[%s5 + $0x1bd0] sm:$0xff]
    %v3207 = vld [vmem:[%s5 + $0x1bd8] sm:$0xff]
    %v3208 = vld [vmem:[%s5 + $0x1be0] sm:$0xff]
    %v3209 = vld [vmem:[%s5 + $0x1be8] sm:$0xff]
    %v3210 = vld [vmem:[%s5 + $0x1bf0] sm:$0xff]
    %v3211 = vld [vmem:[%s5 + $0x1bf8] sm:$0xff]
    %v3212 = vld [vmem:[%s5 + $0x1c00] sm:$0xff]
    %v3213 = vld [vmem:[%s5 + $0x1c08] sm:$0xff]
    %v3214 = vld [vmem:[%s5 + $0x1c10] sm:$0xff]
    %v3215 = vld [vmem:[%s5 + $0x1c18] sm:$0xff]
    %v3216 = vld [vmem:[%s5 + $0x1c20] sm:$0xff]
    %v3217 = vld [vmem:[%s5 + $0x1c28] sm:$0xff]
    %v3218 = vld [vmem:[%s5 + $0x1c30] sm:$0xff]
    %v3219 = vld [vmem:[%s5 + $0x1c38] sm:$0xff]
    %v3220 = vld [vmem:[%s5 + $0x1c40] sm:$0xff]
    %v3221 = vld [vmem:[%s5 + $0x1c48] sm:$0xff]
    %v3222 = vld [vmem:[%s5 + $0x1c50] sm:$0xff]
    %v3223 = vld [vmem:[%s5 + $0x1c58] sm:$0xff]
    %v3224 = vld [vmem:[%s5 + $0x1c60] sm:$0xff]
    %v3225 = vld [vmem:[%s5 + $0x1c68] sm:$0xff]
    %v3226 = vld [vmem:[%s5 + $0x1c70] sm:$0xff]
    %v3227 = vld [vmem:[%s5 + $0x1c78] sm:$0xff]
    %v3228 = vld [vmem:[%s5 + $0x1c80] sm:$0xff]
    %v3229 = vld [vmem:[%s5 + $0x1c88] sm:$0xff]
    %v3230 = vld [vmem:[%s5 + $0x1c90] sm:$0xff]
    %v3231 = vld [vmem:[%s5 + $0x1c98] sm:$0xff]
    %v3232 = vld [vmem:[%s5 + $0x1ca0] sm:$0xff]
    %v3233 = vld [vmem:[%s5 + $0x1ca8] sm:$0xff]
    %v3234 = vld [vmem:[%s5 + $0x1cb0] sm:$0xff]
    %v3235 = vld [vmem:[%s5 + $0x1cb8] sm:$0xff]
    %v3236 = vld [vmem:[%s5 + $0x1cc0] sm:$0xff]
    %v3237 = vld [vmem:[%s5 + $0x1cc8] sm:$0xff]
    %v3238 = vld [vmem:[%s5 + $0x1cd0] sm:$0xff]
    %v3239 = vld [vmem:[%s5 + $0x1cd8] sm:$0xff]
    %v3240 = vld [vmem:[%s5 + $0x1ce0] sm:$0xff]
    %v3241 = vld [vmem:[%s5 + $0x1ce8] sm:$0xff]
    %v3242 = vld [vmem:[%s5 + $0x1cf0] sm:$0xff]
    %v3243 = vld [vmem:[%s5 + $0x1cf8] sm:$0xff]
    %v3244 = vld [vmem:[%s5 + $0x1d00] sm:$0xff]
    %v3245 = vld [vmem:[%s5 + $0x1d08] sm:$0xff]
    %v3246 = vld [vmem:[%s5 + $0x1d10] sm:$0xff]
    %v3247 = vld [vmem:[%s5 + $0x1d18] sm:$0xff]
    %v3248 = vld [vmem:[%s5 + $0x1d20] sm:$0xff]
    %v3249 = vld [vmem:[%s5 + $0x1d28] sm:$0xff]
    %v3250 = vld [vmem:[%s5 + $0x1d30] sm:$0xff]
    %v3251 = vld [vmem:[%s5 + $0x1d38] sm:$0xff]
    %v3252 = vld [vmem:[%s5 + $0x1d40] sm:$0xff]
    %v3253 = vld [vmem:[%s5 + $0x1d48] sm:$0xff]
    %v3254 = vld [vmem:[%s5 + $0x1d50] sm:$0xff]
    %v3255 = vld [vmem:[%s5 + $0x1d58] sm:$0xff]
    %v3256 = vld [vmem:[%s5 + $0x1d60] sm:$0xff]
    %v3257 = vld [vmem:[%s5 + $0x1d68] sm:$0xff]
    %v3258 = vld [vmem:[%s5 + $0x1d70] sm:$0xff]
    %v3259 = vld [vmem:[%s5 + $0x1d78] sm:$0xff]
    %v3260 = vld [vmem:[%s5 + $0x1d80] sm:$0xff]
    %v3261 = vld [vmem:[%s5 + $0x1d88] sm:$0xff]
    %v3262 = vld [vmem:[%s5 + $0x1d90] sm:$0xff]
    %v3263 = vld [vmem:[%s5 + $0x1d98] sm:$0xff]
    %v3264 = vld [vmem:[%s5 + $0x1da0] sm:$0xff]
    %v3265 = vld [vmem:[%s5 + $0x1da8] sm:$0xff]
    %v3266 = vld [vmem:[%s5 + $0x1db0] sm:$0xff]
    %v3267 = vld [vmem:[%s5 + $0x1db8] sm:$0xff]
    %v3268 = vld [vmem:[%s5 + $0x1dc0] sm:$0xff]
    %v3269 = vld [vmem:[%s5 + $0x1dc8] sm:$0xff]
    %v3270 = vld [vmem:[%s5 + $0x1dd0] sm:$0xff]
    %v3271 = vld [vmem:[%s5 + $0x1dd8] sm:$0xff]
    %v3272 = vld [vmem:[%s5 + $0x1de0] sm:$0xff]
    %v3273 = vld [vmem:[%s5 + $0x1de8] sm:$0xff]
    %v3274 = vld [vmem:[%s5 + $0x1df0] sm:$0xff]
    %v3275 = vld [vmem:[%s5 + $0x1df8] sm:$0xff]
    %v3276 = vld [vmem:[%s5 + $0x1e00] sm:$0xff]
    %v3277 = vld [vmem:[%s5 + $0x1e08] sm:$0xff]
    %v3278 = vld [vmem:[%s5 + $0x1e10] sm:$0xff]
    %v3279 = vld [vmem:[%s5 + $0x1e18] sm:$0xff]
    %v3280 = vld [vmem:[%s5 + $0x1e20] sm:$0xff]
    %v3281 = vld [vmem:[%s5 + $0x1e28] sm:$0xff]
    %v3282 = vld [vmem:[%s5 + $0x1e30] sm:$0xff]
    %v3283 = vld [vmem:[%s5 + $0x1e38] sm:$0xff]
    %v3284 = vld [vmem:[%s5 + $0x1e40] sm:$0xff]
    %v3285 = vld [vmem:[%s5 + $0x1e48] sm:$0xff]
    %v3286 = vld [vmem:[%s5 + $0x1e50] sm:$0xff]
    %v3287 = vld [vmem:[%s5 + $0x1e58] sm:$0xff]
    %v3288 = vld [vmem:[%s5 + $0x1e60] sm:$0xff]
    %v3289 = vld [vmem:[%s5 + $0x1e68] sm:$0xff]
    %v3290 = vld [vmem:[%s5 + $0x1e70] sm:$0xff]
    %v3291 = vld [vmem:[%s5 + $0x1e78] sm:$0xff]
    %v3292 = vld [vmem:[%s5 + $0x1e80] sm:$0xff]
    %v3293 = vld [vmem:[%s5 + $0x1e88] sm:$0xff]
    %v3294 = vld [vmem:[%s5 + $0x1e90] sm:$0xff]
    %v3295 = vld [vmem:[%s5 + $0x1e98] sm:$0xff]
    %v3296 = vld [vmem:[%s5 + $0x1ea0] sm:$0xff]
    %v3297 = vld [vmem:[%s5 + $0x1ea8] sm:$0xff]
    %v3298 = vld [vmem:[%s5 + $0x1eb0] sm:$0xff]
    %v3299 = vld [vmem:[%s5 + $0x1eb8] sm:$0xff]
    %v3300 = vld [vmem:[%s5 + $0x1ec0] sm:$0xff]
    %v3301 = vld [vmem:[%s5 + $0x1ec8] sm:$0xff]
    %v3302 = vld [vmem:[%s5 + $0x1ed0] sm:$0xff]
    %v3303 = vld [vmem:[%s5 + $0x1ed8] sm:$0xff]
    %v3304 = vld [vmem:[%s5 + $0x1ee0] sm:$0xff]
    %v3305 = vld [vmem:[%s5 + $0x1ee8] sm:$0xff]
    %v3306 = vld [vmem:[%s5 + $0x1ef0] sm:$0xff]
    %v3307 = vld [vmem:[%s5 + $0x1ef8] sm:$0xff]
    %v3308 = vld [vmem:[%s5 + $0x1f00] sm:$0xff]
    %v3309 = vld [vmem:[%s5 + $0x1f08] sm:$0xff]
    %v3310 = vld [vmem:[%s5 + $0x1f10] sm:$0xff]
    %v3311 = vld [vmem:[%s5 + $0x1f18] sm:$0xff]
    %v3312 = vld [vmem:[%s5 + $0x1f20] sm:$0xff]
    %v3313 = vld [vmem:[%s5 + $0x1f28] sm:$0xff]
    %v3314 = vld [vmem:[%s5 + $0x1f30] sm:$0xff]
    %v3315 = vld [vmem:[%s5 + $0x1f38] sm:$0xff]
    %v3316 = vld [vmem:[%s5 + $0x1f40] sm:$0xff]
    %v3317 = vld [vmem:[%s5 + $0x1f48] sm:$0xff]
    %v3318 = vld [vmem:[%s5 + $0x1f50] sm:$0xff]
    %v3319 = vld [vmem:[%s5 + $0x1f58] sm:$0xff]
    %v3320 = vld [vmem:[%s5 + $0x1f60] sm:$0xff]
    %v3321 = vld [vmem:[%s5 + $0x1f68] sm:$0xff]
    %v3322 = vld [vmem:[%s5 + $0x1f70] sm:$0xff]
    %v3323 = vld [vmem:[%s5 + $0x1f78] sm:$0xff]
    %v3324 = vld [vmem:[%s5 + $0x1f80] sm:$0xff]
    %v3325 = vld [vmem:[%s5 + $0x1f88] sm:$0xff]
    %v3326 = vld [vmem:[%s5 + $0x1f90] sm:$0xff]
    %v3327 = vld [vmem:[%s5 + $0x1f98] sm:$0xff]
    %v3328 = vld [vmem:[%s5 + $0x1fa0] sm:$0xff]
    %v3329 = vld [vmem:[%s5 + $0x1fa8] sm:$0xff]
    %v3330 = vld [vmem:[%s5 + $0x1fb0] sm:$0xff]
    %v3331 = vld [vmem:[%s5 + $0x1fb8] sm:$0xff]
    %v3332 = vld [vmem:[%s5 + $0x1fc0] sm:$0xff]
    %v3333 = vld [vmem:[%s5 + $0x1fc8] sm:$0xff]
    %v3334 = vld [vmem:[%s5 + $0x1fd0] sm:$0xff]
    %v3335 = vld [vmem:[%s5 + $0x1fd8] sm:$0xff]
    %v3336 = vld [vmem:[%s5 + $0x1fe0] sm:$0xff]
    %v3337 = vld [vmem:[%s5 + $0x1fe8] sm:$0xff]
    %v3338 = vld [vmem:[%s5 + $0x1ff0] sm:$0xff]
    %v3339 = vld [vmem:[%s5 + $0x1ff8] sm:$0xff]
    %v3340 = vld [vmem:[%s5 + $0x2000] sm:$0xff]
    %v3341 = vld [vmem:[%s5 + $0x2008] sm:$0xff]
    %v3342 = vld [vmem:[%s5 + $0x2010] sm:$0xff]
    %v3343 = vld [vmem:[%s5 + $0x2018] sm:$0xff]
    %v3344 = vld [vmem:[%s5 + $0x2020] sm:$0xff]
    %v3345 = vld [vmem:[%s5 + $0x2028] sm:$0xff]
    %v3346 = vld [vmem:[%s5 + $0x2030] sm:$0xff]
    %v3347 = vld [vmem:[%s5 + $0x2038] sm:$0xff]
    %v3348 = vld [vmem:[%s5 + $0x2040] sm:$0xff]
    %v3349 = vld [vmem:[%s5 + $0x2048] sm:$0xff]
    %v3350 = vld [vmem:[%s5 + $0x2050] sm:$0xff]
    %v3351 = vld [vmem:[%s5 + $0x2058] sm:$0xff]
    %v3352 = vld [vmem:[%s5 + $0x2060] sm:$0xff]
    %v3353 = vld [vmem:[%s5 + $0x2068] sm:$0xff]
    %v3354 = vld [vmem:[%s5 + $0x2070] sm:$0xff]
    %v3355 = vld [vmem:[%s5 + $0x2078] sm:$0xff]
    %v3356 = vld [vmem:[%s5 + $0x2080] sm:$0xff]
    %v3357 = vld [vmem:[%s5 + $0x2088] sm:$0xff]
    %v3358 = vld [vmem:[%s5 + $0x2090] sm:$0xff]
    %v3359 = vld [vmem:[%s5 + $0x2098] sm:$0xff]
    %v3360 = vld [vmem:[%s5 + $0x20a0] sm:$0xff]
    %v3361 = vld [vmem:[%s5 + $0x20a8] sm:$0xff]
    %v3362 = vld [vmem:[%s5 + $0x20b0] sm:$0xff]
    %v3363 = vld [vmem:[%s5 + $0x20b8] sm:$0xff]
    %v3364 = vld [vmem:[%s5 + $0x20c0] sm:$0xff]
    %v3365 = vld [vmem:[%s5 + $0x20c8] sm:$0xff]
    %v3366 = vld [vmem:[%s5 + $0x20d0] sm:$0xff]
    %v3367 = vld [vmem:[%s5 + $0x20d8] sm:$0xff]
    %v3368 = vld [vmem:[%s5 + $0x20e0] sm:$0xff]
    %v3369 = vld [vmem:[%s5 + $0x20e8] sm:$0xff]
    %v3370 = vld [vmem:[%s5 + $0x20f0] sm:$0xff]
    %v3371 = vld [vmem:[%s5 + $0x20f8] sm:$0xff]
    %v3372 = vld [vmem:[%s5 + $0x2100] sm:$0xff]
    %v3373 = vld [vmem:[%s5 + $0x2108] sm:$0xff]
    %v3374 = vld [vmem:[%s5 + $0x2110] sm:$0xff]
    %v3375 = vld [vmem:[%s5 + $0x2118] sm:$0xff]
    %v3376 = vld [vmem:[%s5 + $0x2120] sm:$0xff]
    %v3377 = vld [vmem:[%s5 + $0x2128] sm:$0xff]
    %v3378 = vld [vmem:[%s5 + $0x2130] sm:$0xff]
    %v3379 = vld [vmem:[%s5 + $0x2138] sm:$0xff]
    %v3380 = vld [vmem:[%s5 + $0x2140] sm:$0xff]
    %v3381 = vld [vmem:[%s5 + $0x2148] sm:$0xff]
    %v3382 = vld [vmem:[%s5 + $0x2150] sm:$0xff]
    %v3383 = vld [vmem:[%s5 + $0x2158] sm:$0xff]
    %v3384 = vld [vmem:[%s5 + $0x2160] sm:$0xff]
    %v3385 = vld [vmem:[%s5 + $0x2168] sm:$0xff]
    %v3386 = vld [vmem:[%s5 + $0x2170] sm:$0xff]
    %v3387 = vld [vmem:[%s5 + $0x2178] sm:$0xff]
    %v3388 = vld [vmem:[%s5 + $0x2180] sm:$0xff]
    %v3389 = vld [vmem:[%s5 + $0x2188] sm:$0xff]
    %v3390 = vld [vmem:[%s5 + $0x2190] sm:$0xff]
    %v3391 = vld [vmem:[%s5 + $0x2198] sm:$0xff]
    %v3392 = vld [vmem:[%s5 + $0x21a0] sm:$0xff]
    %v3393 = vld [vmem:[%s5 + $0x21a8] sm:$0xff]
    %v3394 = vld [vmem:[%s5 + $0x21b0] sm:$0xff]
    %v3395 = vld [vmem:[%s5 + $0x21b8] sm:$0xff]
    %v3396 = vld [vmem:[%s5 + $0x21c0] sm:$0xff]
    %v3397 = vld [vmem:[%s5 + $0x21c8] sm:$0xff]
    %v3398 = vld [vmem:[%s5 + $0x21d0] sm:$0xff]
    %v3399 = vld [vmem:[%s5 + $0x21d8] sm:$0xff]
    %v3400 = vld [vmem:[%s5 + $0x21e0] sm:$0xff]
    %v3401 = vld [vmem:[%s5 + $0x21e8] sm:$0xff]
    %v3402 = vld [vmem:[%s5 + $0x21f0] sm:$0xff]
    %v3403 = vld [vmem:[%s5 + $0x21f8] sm:$0xff]
    %v3404 = vld [vmem:[%s5 + $0x2200] sm:$0xff]
    %v3405 = vld [vmem:[%s5 + $0x2208] sm:$0xff]
    %v3406 = vld [vmem:[%s5 + $0x2210] sm:$0xff]
    %v3407 = vld [vmem:[%s5 + $0x2218] sm:$0xff]
    %v3408 = vld [vmem:[%s5 + $0x2220] sm:$0xff]
    %v3409 = vld [vmem:[%s5 + $0x2228] sm:$0xff]
    %v3410 = vld [vmem:[%s5 + $0x2230] sm:$0xff]
    %v3411 = vld [vmem:[%s5 + $0x2238] sm:$0xff]
    %v3412 = vld [vmem:[%s5 + $0x2240] sm:$0xff]
    %v3413 = vld [vmem:[%s5 + $0x2248] sm:$0xff]
    %v3414 = vld [vmem:[%s5 + $0x2250] sm:$0xff]
    %v3415 = vld [vmem:[%s5 + $0x2258] sm:$0xff]
    %v3416 = vld [vmem:[%s5 + $0x2260] sm:$0xff]
    %v3417 = vld [vmem:[%s5 + $0x2268] sm:$0xff]
    %v3418 = vld [vmem:[%s5 + $0x2270] sm:$0xff]
    %v3419 = vld [vmem:[%s5 + $0x2278] sm:$0xff]
    %v3420 = vld [vmem:[%s5 + $0x2280] sm:$0xff]
    %v3421 = vld [vmem:[%s5 + $0x2288] sm:$0xff]
    %v3422 = vld [vmem:[%s5 + $0x2290] sm:$0xff]
    %v3423 = vld [vmem:[%s5 + $0x2298] sm:$0xff]
    %v3424 = vld [vmem:[%s5 + $0x22a0] sm:$0xff]
    %v3425 = vld [vmem:[%s5 + $0x22a8] sm:$0xff]
    %v3426 = vld [vmem:[%s5 + $0x22b0] sm:$0xff]
    %v3427 = vld [vmem:[%s5 + $0x22b8] sm:$0xff]
    %v3428 = vld [vmem:[%s5 + $0x22c0] sm:$0xff]
    %v3429 = vld [vmem:[%s5 + $0x22c8] sm:$0xff]
    %v3430 = vld [vmem:[%s5 + $0x22d0] sm:$0xff]
    %v3431 = vld [vmem:[%s5 + $0x22d8] sm:$0xff]
    %v3432 = vld [vmem:[%s5 + $0x22e0] sm:$0xff]
    %v3433 = vld [vmem:[%s5 + $0x22e8] sm:$0xff]
    %v3434 = vld [vmem:[%s5 + $0x22f0] sm:$0xff]
    %v3435 = vld [vmem:[%s5 + $0x22f8] sm:$0xff]
    %v3436 = vld [vmem:[%s5 + $0x2300] sm:$0xff]
    %v3437 = vld [vmem:[%s5 + $0x2308] sm:$0xff]
    %v3438 = vld [vmem:[%s5 + $0x2310] sm:$0xff]
    %v3439 = vld [vmem:[%s5 + $0x2318] sm:$0xff]
    %v3440 = vld [vmem:[%s5 + $0x2320] sm:$0xff]
    %v3441 = vld [vmem:[%s5 + $0x2328] sm:$0xff]
    %v3442 = vld [vmem:[%s5 + $0x2330] sm:$0xff]
    %v3443 = vld [vmem:[%s5 + $0x2338] sm:$0xff]
    %v3444 = vld [vmem:[%s5 + $0x2340] sm:$0xff]
    %v3445 = vld [vmem:[%s5 + $0x2348] sm:$0xff]
    %v3446 = vld [vmem:[%s5 + $0x2350] sm:$0xff]
    %v3447 = vld [vmem:[%s5 + $0x2358] sm:$0xff]
    %v3448 = vld [vmem:[%s5 + $0x2360] sm:$0xff]
    %v3449 = vld [vmem:[%s5 + $0x2368] sm:$0xff]
    %v3450 = vld [vmem:[%s5 + $0x2370] sm:$0xff]
    %v3451 = vld [vmem:[%s5 + $0x2378] sm:$0xff]
    %v3452 = vld [vmem:[%s5 + $0x2380] sm:$0xff]
    %v3453 = vld [vmem:[%s5 + $0x2388] sm:$0xff]
    %v3454 = vld [vmem:[%s5 + $0x2390] sm:$0xff]
    %v3455 = vld [vmem:[%s5 + $0x2398] sm:$0xff]
    %v3456 = vld [vmem:[%s5 + $0x23a0] sm:$0xff]
    %v3457 = vld [vmem:[%s5 + $0x23a8] sm:$0xff]
    %v3458 = vld [vmem:[%s5 + $0x23b0] sm:$0xff]
    %v3459 = vld [vmem:[%s5 + $0x23b8] sm:$0xff]
    %v3460 = vld [vmem:[%s5 + $0x23c0] sm:$0xff]
    %v3461 = vld [vmem:[%s5 + $0x23c8] sm:$0xff]
    %v3462 = vld [vmem:[%s5 + $0x23d0] sm:$0xff]
    %v3463 = vld [vmem:[%s5 + $0x23d8] sm:$0xff]
    %v3464 = vld [vmem:[%s5 + $0x23e0] sm:$0xff]
    %v3465 = vld [vmem:[%s5 + $0x23e8] sm:$0xff]
    %v3466 = vld [vmem:[%s5 + $0x23f0] sm:$0xff]
    %v3467 = vld [vmem:[%s5 + $0x23f8] sm:$0xff]
    %v3468 = vld [vmem:[%s5 + $0x2400] sm:$0xff]
    %v3469 = vld [vmem:[%s5 + $0x2408] sm:$0xff]
    %v3470 = vld [vmem:[%s5 + $0x2410] sm:$0xff]
    %v3471 = vld [vmem:[%s5 + $0x2418] sm:$0xff]
    %v3472 = vld [vmem:[%s5 + $0x2420] sm:$0xff]
    %v3473 = vld [vmem:[%s5 + $0x2428] sm:$0xff]
    %v3474 = vld [vmem:[%s5 + $0x2430] sm:$0xff]
    %v3475 = vld [vmem:[%s5 + $0x2438] sm:$0xff]
    %v3476 = vld [vmem:[%s5 + $0x2440] sm:$0xff]
    %v3477 = vld [vmem:[%s5 + $0x2448] sm:$0xff]
    %v3478 = vld [vmem:[%s5 + $0x2450] sm:$0xff]
    %v3479 = vld [vmem:[%s5 + $0x2458] sm:$0xff]
    %v3480 = vld [vmem:[%s5 + $0x2460] sm:$0xff]
    %v3481 = vld [vmem:[%s5 + $0x2468] sm:$0xff]
    %v3482 = vld [vmem:[%s5 + $0x2470] sm:$0xff]
    %v3483 = vld [vmem:[%s5 + $0x2478] sm:$0xff]
    %v3484 = vld [vmem:[%s5 + $0x2480] sm:$0xff]
    %v3485 = vld [vmem:[%s5 + $0x2488] sm:$0xff]
    %v3486 = vld [vmem:[%s5 + $0x2490] sm:$0xff]
    %v3487 = vld [vmem:[%s5 + $0x2498] sm:$0xff]
    %v3488 = vld [vmem:[%s5 + $0x24a0] sm:$0xff]
    %v3489 = vld [vmem:[%s5 + $0x24a8] sm:$0xff]
    %v3490 = vld [vmem:[%s5 + $0x24b0] sm:$0xff]
    %v3491 = vld [vmem:[%s5 + $0x24b8] sm:$0xff]
    %v3492 = vld [vmem:[%s5 + $0x24c0] sm:$0xff]
    %v3493 = vld [vmem:[%s5 + $0x24c8] sm:$0xff]
    %v3494 = vld [vmem:[%s5 + $0x24d0] sm:$0xff]
    %v3495 = vld [vmem:[%s5 + $0x24d8] sm:$0xff]
    %v3496 = vld [vmem:[%s5 + $0x24e0] sm:$0xff]
    %v3497 = vld [vmem:[%s5 + $0x24e8] sm:$0xff]
    %v3498 = vld [vmem:[%s5 + $0x24f0] sm:$0xff]
    %v3499 = vld [vmem:[%s5 + $0x24f8] sm:$0xff]
    %v3500 = vld [vmem:[%s5 + $0x2500] sm:$0xff]
    %v3501 = vld [vmem:[%s5 + $0x2508] sm:$0xff]
    %v3502 = vld [vmem:[%s5 + $0x2510] sm:$0xff]
    %v3503 = vld [vmem:[%s5 + $0x2518] sm:$0xff]
    %v3504 = vld [vmem:[%s5 + $0x2520] sm:$0xff]
    %v3505 = vld [vmem:[%s5 + $0x2528] sm:$0xff]
    %v3506 = vld [vmem:[%s5 + $0x2530] sm:$0xff]
    %v3507 = vld [vmem:[%s5 + $0x2538] sm:$0xff]
    %v3508 = vld [vmem:[%s5 + $0x2540] sm:$0xff]
    %v3509 = vld [vmem:[%s5 + $0x2548] sm:$0xff]
    %v3510 = vld [vmem:[%s5 + $0x2550] sm:$0xff]
    %v3511 = vld [vmem:[%s5 + $0x2558] sm:$0xff]
    %v3512 = vld [vmem:[%s5 + $0x2560] sm:$0xff]
    %v3513 = vld [vmem:[%s5 + $0x2568] sm:$0xff]
    %v3514 = vld [vmem:[%s5 + $0x2570] sm:$0xff]
    %v3515 = vld [vmem:[%s5 + $0x2578] sm:$0xff]
    %v3516 = vld [vmem:[%s5 + $0x2580] sm:$0xff]
    %v3517 = vld [vmem:[%s5 + $0x2588] sm:$0xff]
    %v3518 = vld [vmem:[%s5 + $0x2590] sm:$0xff]
    %v3519 = vld [vmem:[%s5 + $0x2598] sm:$0xff]
    %v3520 = vld [vmem:[%s5 + $0x25a0] sm:$0xff]
    %v3521 = vld [vmem:[%s5 + $0x25a8] sm:$0xff]
    %v3522 = vld [vmem:[%s5 + $0x25b0] sm:$0xff]
    %v3523 = vld [vmem:[%s5 + $0x25b8] sm:$0xff]
    %v3524 = vld [vmem:[%s5 + $0x25c0] sm:$0xff]
    %v3525 = vld [vmem:[%s5 + $0x25c8] sm:$0xff]
    %v3526 = vld [vmem:[%s5 + $0x25d0] sm:$0xff]
    %v3527 = vld [vmem:[%s5 + $0x25d8] sm:$0xff]
    %v3528 = vld [vmem:[%s5 + $0x25e0] sm:$0xff]
    %v3529 = vld [vmem:[%s5 + $0x25e8] sm:$0xff]
    %v3530 = vld [vmem:[%s5 + $0x25f0] sm:$0xff]
    %v3531 = vld [vmem:[%s5 + $0x25f8] sm:$0xff]
    %v3532 = vld [vmem:[%s5 + $0x2600] sm:$0xff]
    %v3533 = vld [vmem:[%s5 + $0x2608] sm:$0xff]
    %v3534 = vld [vmem:[%s5 + $0x2610] sm:$0xff]
    %v3535 = vld [vmem:[%s5 + $0x2618] sm:$0xff]
    %v3536 = vld [vmem:[%s5 + $0x2620] sm:$0xff]
    %v3537 = vld [vmem:[%s5 + $0x2628] sm:$0xff]
    %v3538 = vld [vmem:[%s5 + $0x2630] sm:$0xff]
    %v3539 = vld [vmem:[%s5 + $0x2638] sm:$0xff]
    %v3540 = vld [vmem:[%s5 + $0x2640] sm:$0xff]
    %v3541 = vld [vmem:[%s5 + $0x2648] sm:$0xff]
    %v3542 = vld [vmem:[%s5 + $0x2650] sm:$0xff]
    %v3543 = vld [vmem:[%s5 + $0x2658] sm:$0xff]
    %v3544 = vld [vmem:[%s5 + $0x2660] sm:$0xff]
    %v3545 = vld [vmem:[%s5 + $0x2668] sm:$0xff]
    %v3546 = vld [vmem:[%s5 + $0x2670] sm:$0xff]
    %v3547 = vld [vmem:[%s5 + $0x2678] sm:$0xff]
    %v3548 = vld [vmem:[%s5 + $0x2680] sm:$0xff]
    %v3549 = vld [vmem:[%s5 + $0x2688] sm:$0xff]
    %v3550 = vld [vmem:[%s5 + $0x2690] sm:$0xff]
    %v3551 = vld [vmem:[%s5 + $0x2698] sm:$0xff]
    %v3552 = vld [vmem:[%s5 + $0x26a0] sm:$0xff]
    %v3553 = vld [vmem:[%s5 + $0x26a8] sm:$0xff]
    %v3554 = vld [vmem:[%s5 + $0x26b0] sm:$0xff]
    %v3555 = vld [vmem:[%s5 + $0x26b8] sm:$0xff]
    %v3556 = vld [vmem:[%s5 + $0x26c0] sm:$0xff]
    %v3557 = vld [vmem:[%s5 + $0x26c8] sm:$0xff]
    %v3558 = vld [vmem:[%s5 + $0x26d0] sm:$0xff]
    %v3559 = vld [vmem:[%s5 + $0x26d8] sm:$0xff]
    %v3560 = vld [vmem:[%s5 + $0x26e0] sm:$0xff]
    %v3561 = vld [vmem:[%s5 + $0x26e8] sm:$0xff]
    %v3562 = vld [vmem:[%s5 + $0x26f0] sm:$0xff]
    %v3563 = vld [vmem:[%s5 + $0x26f8] sm:$0xff]
    %v3564 = vld [vmem:[%s5 + $0x2700] sm:$0xff]
    %v3565 = vld [vmem:[%s5 + $0x2708] sm:$0xff]
    %v3566 = vld [vmem:[%s5 + $0x2710] sm:$0xff]
    %v3567 = vld [vmem:[%s5 + $0x2718] sm:$0xff]
    %v3568 = vld [vmem:[%s5 + $0x2720] sm:$0xff]
    %v3569 = vld [vmem:[%s5 + $0x2728] sm:$0xff]
    %v3570 = vld [vmem:[%s5 + $0x2730] sm:$0xff]
    %v3571 = vld [vmem:[%s5 + $0x2738] sm:$0xff]
    %v3572 = vld [vmem:[%s5 + $0x2740] sm:$0xff]
    %v3573 = vld [vmem:[%s5 + $0x2748] sm:$0xff]
    %v3574 = vld [vmem:[%s5 + $0x2750] sm:$0xff]
    %v3575 = vld [vmem:[%s5 + $0x2758] sm:$0xff]
    %v3576 = vld [vmem:[%s5 + $0x2760] sm:$0xff]
    %v3577 = vld [vmem:[%s5 + $0x2768] sm:$0xff]
    %v3578 = vld [vmem:[%s5 + $0x2770] sm:$0xff]
    %v3579 = vld [vmem:[%s5 + $0x2778] sm:$0xff]
    %v3580 = vld [vmem:[%s5 + $0x2780] sm:$0xff]
    %v3581 = vld [vmem:[%s5 + $0x2788] sm:$0xff]
    %v3582 = vld [vmem:[%s5 + $0x2790] sm:$0xff]
    %v3583 = vld [vmem:[%s5 + $0x2798] sm:$0xff]
    %v3584 = vld [vmem:[%s5 + $0x27a0] sm:$0xff]
    %v3585 = vld [vmem:[%s5 + $0x27a8] sm:$0xff]
    %v3586 = vld [vmem:[%s5 + $0x27b0] sm:$0xff]
    %v3587 = vld [vmem:[%s5 + $0x27b8] sm:$0xff]
    %v3588 = vld [vmem:[%s5 + $0x27c0] sm:$0xff]
    %v3589 = vld [vmem:[%s5 + $0x27c8] sm:$0xff]
    %v3590 = vld [vmem:[%s5 + $0x27d0] sm:$0xff]
    %v3591 = vld [vmem:[%s5 + $0x27d8] sm:$0xff]
    %v3592 = vld [vmem:[%s5 + $0x27e0] sm:$0xff]
    %v3593 = vld [vmem:[%s5 + $0x27e8] sm:$0xff]
    %v3594 = vld [vmem:[%s5 + $0x27f0] sm:$0xff]
    %v3595 = vld [vmem:[%s5 + $0x27f8] sm:$0xff]
    %v3596 = vld [vmem:[%s5 + $0x2800] sm:$0xff]
    %v3597 = vld [vmem:[%s5 + $0x2808] sm:$0xff]
    %v3598 = vld [vmem:[%s5 + $0x2810] sm:$0xff]
    %v3599 = vld [vmem:[%s5 + $0x2818] sm:$0xff]
    %v3600 = vld [vmem:[%s5 + $0x2820] sm:$0xff]
    %v3601 = vld [vmem:[%s5 + $0x2828] sm:$0xff]
    %v3602 = vld [vmem:[%s5 + $0x2830] sm:$0xff]
    %v3603 = vld [vmem:[%s5 + $0x2838] sm:$0xff]
    %v3604 = vld [vmem:[%s5 + $0x2840] sm:$0xff]
    %v3605 = vld [vmem:[%s5 + $0x2848] sm:$0xff]
    %v3606 = vld [vmem:[%s5 + $0x2850] sm:$0xff]
    %v3607 = vld [vmem:[%s5 + $0x2858] sm:$0xff]
    %v3608 = vld [vmem:[%s5 + $0x2860] sm:$0xff]
    %v3609 = vld [vmem:[%s5 + $0x2868] sm:$0xff]
    %v3610 = vld [vmem:[%s5 + $0x2870] sm:$0xff]
    %v3611 = vld [vmem:[%s5 + $0x2878] sm:$0xff]
    %v3612 = vld [vmem:[%s5 + $0x2880] sm:$0xff]
    %v3613 = vld [vmem:[%s5 + $0x2888] sm:$0xff]
    %v3614 = vld [vmem:[%s5 + $0x2890] sm:$0xff]
    %v3615 = vld [vmem:[%s5 + $0x2898] sm:$0xff]
    %v3616 = vld [vmem:[%s5 + $0x28a0] sm:$0xff]
    %v3617 = vld [vmem:[%s5 + $0x28a8] sm:$0xff]
    %v3618 = vld [vmem:[%s5 + $0x28b0] sm:$0xff]
    %v3619 = vld [vmem:[%s5 + $0x28b8] sm:$0xff]
    %v3620 = vld [vmem:[%s5 + $0x28c0] sm:$0xff]
    %v3621 = vld [vmem:[%s5 + $0x28c8] sm:$0xff]
    %v3622 = vld [vmem:[%s5 + $0x28d0] sm:$0xff]
    %v3623 = vld [vmem:[%s5 + $0x28d8] sm:$0xff]
    %v3624 = vld [vmem:[%s5 + $0x28e0] sm:$0xff]
    %v3625 = vld [vmem:[%s5 + $0x28e8] sm:$0xff]
    %v3626 = vld [vmem:[%s5 + $0x28f0] sm:$0xff]
    %v3627 = vld [vmem:[%s5 + $0x28f8] sm:$0xff]
    %v3628 = vld [vmem:[%s5 + $0x2900] sm:$0xff]
    %v3629 = vld [vmem:[%s5 + $0x2908] sm:$0xff]
    %v3630 = vld [vmem:[%s5 + $0x2910] sm:$0xff]
    %v3631 = vld [vmem:[%s5 + $0x2918] sm:$0xff]
    %v3632 = vld [vmem:[%s5 + $0x2920] sm:$0xff]
    %v3633 = vld [vmem:[%s5 + $0x2928] sm:$0xff]
    %v3634 = vld [vmem:[%s5 + $0x2930] sm:$0xff]
    %v3635 = vld [vmem:[%s5 + $0x2938] sm:$0xff]
    %v3636 = vld [vmem:[%s5 + $0x2940] sm:$0xff]
    %v3637 = vld [vmem:[%s5 + $0x2948] sm:$0xff]
    %v3638 = vld [vmem:[%s5 + $0x2950] sm:$0xff]
    %v3639 = vld [vmem:[%s5 + $0x2958] sm:$0xff]
    %v3640 = vld [vmem:[%s5 + $0x2960] sm:$0xff]
    %v3641 = vld [vmem:[%s5 + $0x2968] sm:$0xff]
    %v3642 = vld [vmem:[%s5 + $0x2970] sm:$0xff]
    %v3643 = vld [vmem:[%s5 + $0x2978] sm:$0xff]
    %v3644 = vld [vmem:[%s5 + $0x2980] sm:$0xff]
    %v3645 = vld [vmem:[%s5 + $0x2988] sm:$0xff]
    %v3646 = vld [vmem:[%s5 + $0x2990] sm:$0xff]
    %v3647 = vld [vmem:[%s5 + $0x2998] sm:$0xff]
    %v3648 = vld [vmem:[%s5 + $0x29a0] sm:$0xff]
    %v3649 = vld [vmem:[%s5 + $0x29a8] sm:$0xff]
    %v3650 = vld [vmem:[%s5 + $0x29b0] sm:$0xff]
    %v3651 = vld [vmem:[%s5 + $0x29b8] sm:$0xff]
    %v3652 = vld [vmem:[%s5 + $0x29c0] sm:$0xff]
    %v3653 = vld [vmem:[%s5 + $0x29c8] sm:$0xff]
    %v3654 = vld [vmem:[%s5 + $0x29d0] sm:$0xff]
    %v3655 = vld [vmem:[%s5 + $0x29d8] sm:$0xff]
    %v3656 = vld [vmem:[%s5 + $0x29e0] sm:$0xff]
    %v3657 = vld [vmem:[%s5 + $0x29e8] sm:$0xff]
    %v3658 = vld [vmem:[%s5 + $0x29f0] sm:$0xff]
    %v3659 = vld [vmem:[%s5 + $0x29f8] sm:$0xff]
    %v3660 = vld [vmem:[%s5 + $0x2a00] sm:$0xff]
    %v3661 = vld [vmem:[%s5 + $0x2a08] sm:$0xff]
    %v3662 = vld [vmem:[%s5 + $0x2a10] sm:$0xff]
    %v3663 = vld [vmem:[%s5 + $0x2a18] sm:$0xff]
    %v3664 = vld [vmem:[%s5 + $0x2a20] sm:$0xff]
    %v3665 = vld [vmem:[%s5 + $0x2a28] sm:$0xff]
    %v3666 = vld [vmem:[%s5 + $0x2a30] sm:$0xff]
    %v3667 = vld [vmem:[%s5 + $0x2a38] sm:$0xff]
    %v3668 = vld [vmem:[%s5 + $0x2a40] sm:$0xff]
    %v3669 = vld [vmem:[%s5 + $0x2a48] sm:$0xff]
    %v3670 = vld [vmem:[%s5 + $0x2a50] sm:$0xff]
    %v3671 = vld [vmem:[%s5 + $0x2a58] sm:$0xff]
    %v3672 = vld [vmem:[%s5 + $0x2a60] sm:$0xff]
    %v3673 = vld [vmem:[%s5 + $0x2a68] sm:$0xff]
    %v3674 = vld [vmem:[%s5 + $0x2a70] sm:$0xff]
    %v3675 = vld [vmem:[%s5 + $0x2a78] sm:$0xff]
    %v3676 = vld [vmem:[%s5 + $0x2a80] sm:$0xff]
    %v3677 = vld [vmem:[%s5 + $0x2a88] sm:$0xff]
    %v3678 = vld [vmem:[%s5 + $0x2a90] sm:$0xff]
    %v3679 = vld [vmem:[%s5 + $0x2a98] sm:$0xff]
    %v3680 = vld [vmem:[%s5 + $0x2aa0] sm:$0xff]
    %v3681 = vld [vmem:[%s5 + $0x2aa8] sm:$0xff]
    %v3682 = vld [vmem:[%s5 + $0x2ab0] sm:$0xff]
    %v3683 = vld [vmem:[%s5 + $0x2ab8] sm:$0xff]
    %v3684 = vld [vmem:[%s5 + $0x2ac0] sm:$0xff]
    %v3685 = vld [vmem:[%s5 + $0x2ac8] sm:$0xff]
    %v3686 = vld [vmem:[%s5 + $0x2ad0] sm:$0xff]
    %v3687 = vld [vmem:[%s5 + $0x2ad8] sm:$0xff]
    %v3688 = vld [vmem:[%s5 + $0x2ae0] sm:$0xff]
    %v3689 = vld [vmem:[%s5 + $0x2ae8] sm:$0xff]
    %v3690 = vld [vmem:[%s5 + $0x2af0] sm:$0xff]
    %v3691 = vld [vmem:[%s5 + $0x2af8] sm:$0xff]
    %v3692 = vld [vmem:[%s5 + $0x2b00] sm:$0xff]
    %v3693 = vld [vmem:[%s5 + $0x2b08] sm:$0xff]
    %v3694 = vld [vmem:[%s5 + $0x2b10] sm:$0xff]
    %v3695 = vld [vmem:[%s5 + $0x2b18] sm:$0xff]
    %v3696 = vld [vmem:[%s5 + $0x2b20] sm:$0xff]
    %v3697 = vld [vmem:[%s5 + $0x2b28] sm:$0xff]
    %v3698 = vld [vmem:[%s5 + $0x2b30] sm:$0xff]
    %v3699 = vld [vmem:[%s5 + $0x2b38] sm:$0xff]
    %v3700 = vld [vmem:[%s5 + $0x2b40] sm:$0xff]
    %v3701 = vld [vmem:[%s5 + $0x2b48] sm:$0xff]
    %v3702 = vld [vmem:[%s5 + $0x2b50] sm:$0xff]
    %v3703 = vld [vmem:[%s5 + $0x2b58] sm:$0xff]
    %v3704 = vld [vmem:[%s5 + $0x2b60] sm:$0xff]
    %v3705 = vld [vmem:[%s5 + $0x2b68] sm:$0xff]
    %v3706 = vld [vmem:[%s5 + $0x2b70] sm:$0xff]
    %v3707 = vld [vmem:[%s5 + $0x2b78] sm:$0xff]
    %v3708 = vld [vmem:[%s5 + $0x2b80] sm:$0xff]
    %v3709 = vld [vmem:[%s5 + $0x2b88] sm:$0xff]
    %v3710 = vld [vmem:[%s5 + $0x2b90] sm:$0xff]
    %v3711 = vld [vmem:[%s5 + $0x2b98] sm:$0xff]
    %v3712 = vld [vmem:[%s5 + $0x2ba0] sm:$0xff]
    %v3713 = vld [vmem:[%s5 + $0x2ba8] sm:$0xff]
    %v3714 = vld [vmem:[%s5 + $0x2bb0] sm:$0xff]
    %v3715 = vld [vmem:[%s5 + $0x2bb8] sm:$0xff]
    %v3716 = vld [vmem:[%s5 + $0x2bc0] sm:$0xff]
    %v3717 = vld [vmem:[%s5 + $0x2bc8] sm:$0xff]
    %v3718 = vld [vmem:[%s5 + $0x2bd0] sm:$0xff]
    %v3719 = vld [vmem:[%s5 + $0x2bd8] sm:$0xff]
    %v3720 = vld [vmem:[%s5 + $0x2be0] sm:$0xff]
    %v3721 = vld [vmem:[%s5 + $0x2be8] sm:$0xff]
    %v3722 = vld [vmem:[%s5 + $0x2bf0] sm:$0xff]
    %v3723 = vld [vmem:[%s5 + $0x2bf8] sm:$0xff]
    %v3724 = vld [vmem:[%s5 + $0x2c00] sm:$0xff]
    %v3725 = vld [vmem:[%s5 + $0x2c08] sm:$0xff]
    %v3726 = vld [vmem:[%s5 + $0x2c10] sm:$0xff]
    %v3727 = vld [vmem:[%s5 + $0x2c18] sm:$0xff]
    %v3728 = vld [vmem:[%s5 + $0x2c20] sm:$0xff]
    %v3729 = vld [vmem:[%s5 + $0x2c28] sm:$0xff]
    %v3730 = vld [vmem:[%s5 + $0x2c30] sm:$0xff]
    %v3731 = vld [vmem:[%s5 + $0x2c38] sm:$0xff]
    %v3732 = vld [vmem:[%s5 + $0x2c40] sm:$0xff]
    %v3733 = vld [vmem:[%s5 + $0x2c48] sm:$0xff]
    %v3734 = vld [vmem:[%s5 + $0x2c50] sm:$0xff]
    %v3735 = vld [vmem:[%s5 + $0x2c58] sm:$0xff]
    %v3736 = vld [vmem:[%s5 + $0x2c60] sm:$0xff]
    %v3737 = vld [vmem:[%s5 + $0x2c68] sm:$0xff]
    %v3738 = vld [vmem:[%s5 + $0x2c70] sm:$0xff]
    %v3739 = vld [vmem:[%s5 + $0x2c78] sm:$0xff]
    %v3740 = vld [vmem:[%s5 + $0x2c80] sm:$0xff]
    %v3741 = vld [vmem:[%s5 + $0x2c88] sm:$0xff]
    %v3742 = vld [vmem:[%s5 + $0x2c90] sm:$0xff]
    %v3743 = vld [vmem:[%s5 + $0x2c98] sm:$0xff]
    %v3744 = vld [vmem:[%s5 + $0x2ca0] sm:$0xff]
    %v3745 = vld [vmem:[%s5 + $0x2ca8] sm:$0xff]
    %v3746 = vld [vmem:[%s5 + $0x2cb0] sm:$0xff]
    %v3747 = vld [vmem:[%s5 + $0x2cb8] sm:$0xff]
    %v3748 = vld [vmem:[%s5 + $0x2cc0] sm:$0xff]
    %v3749 = vld [vmem:[%s5 + $0x2cc8] sm:$0xff]
    %v3750 = vld [vmem:[%s5 + $0x2cd0] sm:$0xff]
    %v3751 = vld [vmem:[%s5 + $0x2cd8] sm:$0xff]
    %v3752 = vld [vmem:[%s5 + $0x2ce0] sm:$0xff]
    %v3753 = vld [vmem:[%s5 + $0x2ce8] sm:$0xff]
    %v3754 = vld [vmem:[%s5 + $0x2cf0] sm:$0xff]
    %v3755 = vld [vmem:[%s5 + $0x2cf8] sm:$0xff]
    %v3756 = vld [vmem:[%s6] sm:$0x1f]
    %v3758 = vlaneseq
    %v3759 = vshrl.u32 %v3758, 7
    %v3760 = vsub.s32 0, %v3759
    %v3761 = vrot.slane %v3756, %v3760
    %v3762 = vlaneseq
    %v3763 = vshrl.u32 %v3762, 7
    %v3764 = vsub.s32 1, %v3763
    %v3765 = vrot.slane %v3756, %v3764
    %v3766 = vlaneseq
    %v3767 = vshrl.u32 %v3766, 7
    %v3768 = vsub.s32 2, %v3767
    %v3769 = vrot.slane %v3756, %v3768
    %v3770 = vlaneseq
    %v3771 = vshrl.u32 %v3770, 7
    %v3772 = vsub.s32 3, %v3771
    %v3773 = vrot.slane %v3756, %v3772
    %v3774 = vlaneseq
    %v3775 = vshrl.u32 %v3774, 7
    %v3776 = vsub.s32 4, %v3775
    %v3777 = vrot.slane %v3756, %v3776
    %3783 = vmatprep.subr.mxu0 %v2317
    %3784 = vmatpush1.msra.mxu0 %v2316
    %3785 = vmatprep.subr.mxu0 %v2322
    %3786 = vmatpush1.msra.mxu0 %v2321
    %3787 = vmatprep.subr.mxu0 %v2327
    %3788 = vmatpush1.msra.mxu0 %v2326
    %3789 = vmatprep.subr.mxu0 %v2332
    %3790 = vmatpush1.msra.mxu0 %v2331
    %3791 = vmatprep.subr.mxu0 %v2337
    %3792 = vmatpush1.msra.mxu0 %v2336
    %3793 = vmatprep.subr.mxu0 %v2342
    %3794 = vmatpush1.msra.mxu0 %v2341
    %3795 = vmatprep.subr.mxu0 %v2347
    %3796 = vmatpush1.msra.mxu0 %v2346
    %3797 = vmatprep.subr.mxu0 %v2352
    %3798 = vmatpush1.msra.mxu0 %v2351
    %3799 = vmatprep.subr.mxu0 %v2357
    %3800 = vmatpush1.msra.mxu0 %v2356
    %3801 = vmatprep.subr.mxu0 %v2362
    %3802 = vmatpush1.msra.mxu0 %v2361
    %3803 = vmatprep.subr.mxu0 %v2367
    %3804 = vmatpush1.msra.mxu0 %v2366
    %3805 = vmatprep.subr.mxu0 %v2372
    %3806 = vmatpush1.msra.mxu0 %v2371
    %3807 = vmatprep.subr.mxu0 %v2377
    %3808 = vmatpush1.msra.mxu0 %v2376
    %3809 = vmatprep.subr.mxu0 %v2382
    %3810 = vmatpush1.msra.mxu0 %v2381
    %3811 = vmatprep.subr.mxu0 %v2387
    %3812 = vmatpush1.msra.mxu0 %v2386
    %3813 = vmatprep.subr.mxu0 %v2392
    %3814 = vmatpush1.msra.mxu0 %v2391
    %3815 = vmatprep.subr.mxu0 %v2397
    %3816 = vmatpush1.msra.mxu0 %v2396
    %3817 = vmatprep.subr.mxu0 %v2402
    %3818 = vmatpush1.msra.mxu0 %v2401
    %3819 = vmatprep.subr.mxu0 %v2407
    %3820 = vmatpush1.msra.mxu0 %v2406
    %3821 = vmatprep.subr.mxu0 %v2412
    %3822 = vmatpush1.msra.mxu0 %v2411
    %3823 = vmatprep.subr.mxu0 %v2417
    %3824 = vmatpush1.msra.mxu0 %v2416
    %3825 = vmatprep.subr.mxu0 %v2422
    %3826 = vmatpush1.msra.mxu0 %v2421
    %3827 = vmatprep.subr.mxu0 %v2427
    %3828 = vmatpush1.msra.mxu0 %v2426
    %3829 = vmatprep.subr.mxu0 %v2432
    %3830 = vmatpush1.msra.mxu0 %v2431
    %3831 = vmatprep.subr.mxu0 %v2437
    %3832 = vmatpush1.msra.mxu0 %v2436
    %3833 = vmatprep.subr.mxu0 %v2442
    %3834 = vmatpush1.msra.mxu0 %v2441
    %3835 = vmatprep.subr.mxu0 %v2447
    %3836 = vmatpush1.msra.mxu0 %v2446
    %3837 = vmatprep.subr.mxu0 %v2452
    %3838 = vmatpush1.msra.mxu0 %v2451
    %3839 = vmatprep.subr.mxu0 %v2457
    %3840 = vmatpush1.msra.mxu0 %v2456
    %3841 = vmatprep.subr.mxu0 %v2462
    %3842 = vmatpush1.msra.mxu0 %v2461
    %3843 = vmatprep.subr.mxu0 %v2467
    %3844 = vmatpush1.msra.mxu0 %v2466
    %3845 = vmatprep.subr.mxu0 %v2472
    %3846 = vmatpush1.msra.mxu0 %v2471
    %3847 = vmatprep.mubr.f32.mxu0 %v2299
    %3848 = vmatmul.mubr.f32.gmra.mrb[0].mxu0 %v2298
    %v3849 = vpop.f32.mrb[0].mxu0
    %v3850 = vadd.f32 %v3761, %v3849
    %v3851 = vpop.f32.mrb[0].mxu0
    %v3852 = vadd.f32 %v3765, %v3851
    %3853 = vdwg.mxu0
    %3854 = vmatprep.subr.mxu0 %v2477
    %3855 = vmatpush1.msra.mxu0 %v2476
    %3856 = vmatprep.subr.mxu0 %v2482
    %3857 = vmatpush1.msra.mxu0 %v2481
    %3858 = vmatprep.subr.mxu0 %v2487
    %3859 = vmatpush1.msra.mxu0 %v2486
    %3860 = vmatprep.subr.mxu0 %v2492
    %3861 = vmatpush1.msra.mxu0 %v2491
    %3862 = vmatprep.subr.mxu0 %v2497
    %3863 = vmatpush1.msra.mxu0 %v2496
    %3864 = vmatprep.subr.mxu0 %v2502
    %3865 = vmatpush1.msra.mxu0 %v2501
    %3866 = vmatprep.subr.mxu0 %v2507
    %3867 = vmatpush1.msra.mxu0 %v2506
    %3868 = vmatprep.subr.mxu0 %v2512
    %3869 = vmatpush1.msra.mxu0 %v2511
    %3870 = vmatprep.subr.mxu0 %v2517
    %3871 = vmatpush1.msra.mxu0 %v2516
    %3872 = vmatprep.subr.mxu0 %v2522
    %3873 = vmatpush1.msra.mxu0 %v2521
    %3874 = vmatprep.subr.mxu0 %v2527
    %3875 = vmatpush1.msra.mxu0 %v2526
    %3876 = vmatprep.subr.mxu0 %v2532
    %3877 = vmatpush1.msra.mxu0 %v2531
    %3878 = vmatprep.subr.mxu0 %v2537
    %3879 = vmatpush1.msra.mxu0 %v2536
    %3880 = vmatprep.subr.mxu0 %v2542
    %3881 = vmatpush1.msra.mxu0 %v2541
    %3882 = vmatprep.subr.mxu0 %v2547
    %3883 = vmatpush1.msra.mxu0 %v2546
    %3884 = vmatprep.subr.mxu0 %v2552
    %3885 = vmatpush1.msra.mxu0 %v2551
    %3886 = vmatprep.subr.mxu0 %v2557
    %3887 = vmatpush1.msra.mxu0 %v2556
    %3888 = vmatprep.subr.mxu0 %v2562
    %3889 = vmatpush1.msra.mxu0 %v2561
    %3890 = vmatprep.subr.mxu0 %v2567
    %3891 = vmatpush1.msra.mxu0 %v2566
    %3892 = vmatprep.subr.mxu0 %v2572
    %3893 = vmatpush1.msra.mxu0 %v2571
    %3894 = vmatprep.subr.mxu0 %v2577
    %3895 = vmatpush1.msra.mxu0 %v2576
    %3896 = vmatprep.subr.mxu0 %v2582
    %3897 = vmatpush1.msra.mxu0 %v2581
    %3898 = vmatprep.subr.mxu0 %v2587
    %3899 = vmatpush1.msra.mxu0 %v2586
    %3900 = vmatprep.subr.mxu0 %v2592
    %3901 = vmatpush1.msra.mxu0 %v2591
    %3902 = vmatprep.subr.mxu0 %v2597
    %3903 = vmatpush1.msra.mxu0 %v2596
    %3904 = vmatprep.subr.mxu0 %v2602
    %3905 = vmatpush1.msra.mxu0 %v2601
    %3906 = vmatprep.subr.mxu0 %v2607
    %3907 = vmatpush1.msra.mxu0 %v2606
    %3908 = vmatprep.subr.mxu0 %v2612
    %3909 = vmatpush1.msra.mxu0 %v2611
    %3910 = vmatprep.subr.mxu0 %v2617
    %3911 = vmatpush1.msra.mxu0 %v2616
    %3912 = vmatprep.subr.mxu0 %v2622
    %3913 = vmatpush1.msra.mxu0 %v2621
    %3914 = vmatprep.subr.mxu0 %v2627
    %3915 = vmatpush1.msra.mxu0 %v2626
    %3916 = vmatprep.subr.mxu0 %v2632
    %3917 = vmatpush1.msra.mxu0 %v2631
    %3918 = vmatprep.mubr.f32.mxu0 %v2301
    %3919 = vmatmul.mubr.f32.gmra.mrb[0].mxu0 %v2300
    %v3920 = vpop.f32.mrb[0].mxu0
    %v3921 = vadd.f32 %v3850, %v3920
    %v3922 = vpop.f32.mrb[0].mxu0
    %v3923 = vadd.f32 %v3852, %v3922
    %3924 = vdwg.mxu0
    %3925 = vmatprep.subr.mxu0 %v2637
    %3926 = vmatpush1.msra.mxu0 %v2636
    %3927 = vmatprep.subr.mxu0 %v2642
    %3928 = vmatpush1.msra.mxu0 %v2641
    %3929 = vmatprep.subr.mxu0 %v2647
    %3930 = vmatpush1.msra.mxu0 %v2646
    %3931 = vmatprep.subr.mxu0 %v2652
    %3932 = vmatpush1.msra.mxu0 %v2651
    %3933 = vmatprep.subr.mxu0 %v2657
    %3934 = vmatpush1.msra.mxu0 %v2656
    %3935 = vmatprep.subr.mxu0 %v2662
    %3936 = vmatpush1.msra.mxu0 %v2661
    %3937 = vmatprep.subr.mxu0 %v2667
    %3938 = vmatpush1.msra.mxu0 %v2666
    %3939 = vmatprep.subr.mxu0 %v2672
    %3940 = vmatpush1.msra.mxu0 %v2671
    %3941 = vmatprep.subr.mxu0 %v2677
    %3942 = vmatpush1.msra.mxu0 %v2676
    %3943 = vmatprep.subr.mxu0 %v2682
    %3944 = vmatpush1.msra.mxu0 %v2681
    %3945 = vmatprep.subr.mxu0 %v2687
    %3946 = vmatpush1.msra.mxu0 %v2686
    %3947 = vmatprep.subr.mxu0 %v2692
    %3948 = vmatpush1.msra.mxu0 %v2691
    %3949 = vmatprep.subr.mxu0 %v2697
    %3950 = vmatpush1.msra.mxu0 %v2696
    %3951 = vmatprep.subr.mxu0 %v2702
    %3952 = vmatpush1.msra.mxu0 %v2701
    %3953 = vmatprep.subr.mxu0 %v2707
    %3954 = vmatpush1.msra.mxu0 %v2706
    %3955 = vmatprep.subr.mxu0 %v2712
    %3956 = vmatpush1.msra.mxu0 %v2711
    %3957 = vmatprep.subr.mxu0 %v2717
    %3958 = vmatpush1.msra.mxu0 %v2716
    %3959 = vmatprep.subr.mxu0 %v2722
    %3960 = vmatpush1.msra.mxu0 %v2721
    %3961 = vmatprep.subr.mxu0 %v2727
    %3962 = vmatpush1.msra.mxu0 %v2726
    %3963 = vmatprep.subr.mxu0 %v2732
    %3964 = vmatpush1.msra.mxu0 %v2731
    %3965 = vmatprep.subr.mxu0 %v2737
    %3966 = vmatpush1.msra.mxu0 %v2736
    %3967 = vmatprep.subr.mxu0 %v2742
    %3968 = vmatpush1.msra.mxu0 %v2741
    %3969 = vmatprep.subr.mxu0 %v2747
    %3970 = vmatpush1.msra.mxu0 %v2746
    %3971 = vmatprep.subr.mxu0 %v2752
    %3972 = vmatpush1.msra.mxu0 %v2751
    %3973 = vmatprep.subr.mxu0 %v2757
    %3974 = vmatpush1.msra.mxu0 %v2756
    %3975 = vmatprep.subr.mxu0 %v2762
    %3976 = vmatpush1.msra.mxu0 %v2761
    %3977 = vmatprep.subr.mxu0 %v2767
    %3978 = vmatpush1.msra.mxu0 %v2766
    %3979 = vmatprep.subr.mxu0 %v2772
    %3980 = vmatpush1.msra.mxu0 %v2771
    %3981 = vmatprep.subr.mxu0 %v2777
    %3982 = vmatpush1.msra.mxu0 %v2776
    %3983 = vmatprep.subr.mxu0 %v2782
    %3984 = vmatpush1.msra.mxu0 %v2781
    %3985 = vmatprep.subr.mxu0 %v2787
    %3986 = vmatpush1.msra.mxu0 %v2786
    %3987 = vmatprep.subr.mxu0 %v2792
    %3988 = vmatpush1.msra.mxu0 %v2791
    %3989 = vmatprep.mubr.f32.mxu0 %v2303
    %3990 = vmatmul.mubr.f32.gmra.mrb[0].mxu0 %v2302
    %v3991 = vpop.f32.mrb[0].mxu0
    %v3992 = vadd.f32 %v3921, %v3991
    %v3993 = vpop.f32.mrb[0].mxu0
    %v3994 = vadd.f32 %v3923, %v3993
    %3995 = vdwg.mxu0
    %3996 = vmatprep.subr.mxu0 %v2797
    %3997 = vmatpush1.msra.mxu0 %v2796
    %3998 = vmatprep.subr.mxu0 %v2802
    %3999 = vmatpush1.msra.mxu0 %v2801
    %4000 = vmatprep.subr.mxu0 %v2807
    %4001 = vmatpush1.msra.mxu0 %v2806
    %4002 = vmatprep.subr.mxu0 %v2812
    %4003 = vmatpush1.msra.mxu0 %v2811
    %4004 = vmatprep.subr.mxu0 %v2817
    %4005 = vmatpush1.msra.mxu0 %v2816
    %4006 = vmatprep.subr.mxu0 %v2822
    %4007 = vmatpush1.msra.mxu0 %v2821
    %4008 = vmatprep.subr.mxu0 %v2827
    %4009 = vmatpush1.msra.mxu0 %v2826
    %4010 = vmatprep.subr.mxu0 %v2832
    %4011 = vmatpush1.msra.mxu0 %v2831
    %4012 = vmatprep.subr.mxu0 %v2837
    %4013 = vmatpush1.msra.mxu0 %v2836
    %4014 = vmatprep.subr.mxu0 %v2842
    %4015 = vmatpush1.msra.mxu0 %v2841
    %4016 = vmatprep.subr.mxu0 %v2847
    %4017 = vmatpush1.msra.mxu0 %v2846
    %4018 = vmatprep.subr.mxu0 %v2852
    %4019 = vmatpush1.msra.mxu0 %v2851
    %4020 = vmatprep.subr.mxu0 %v2857
    %4021 = vmatpush1.msra.mxu0 %v2856
    %4022 = vmatprep.subr.mxu0 %v2862
    %4023 = vmatpush1.msra.mxu0 %v2861
    %4024 = vmatprep.subr.mxu0 %v2867
    %4025 = vmatpush1.msra.mxu0 %v2866
    %4026 = vmatprep.subr.mxu0 %v2872
    %4027 = vmatpush1.msra.mxu0 %v2871
    %4028 = vmatprep.subr.mxu0 %v2877
    %4029 = vmatpush1.msra.mxu0 %v2876
    %4030 = vmatprep.subr.mxu0 %v2882
    %4031 = vmatpush1.msra.mxu0 %v2881
    %4032 = vmatprep.subr.mxu0 %v2887
    %4033 = vmatpush1.msra.mxu0 %v2886
    %4034 = vmatprep.subr.mxu0 %v2892
    %4035 = vmatpush1.msra.mxu0 %v2891
    %4036 = vmatprep.subr.mxu0 %v2897
    %4037 = vmatpush1.msra.mxu0 %v2896
    %4038 = vmatprep.subr.mxu0 %v2902
    %4039 = vmatpush1.msra.mxu0 %v2901
    %4040 = vmatprep.subr.mxu0 %v2907
    %4041 = vmatpush1.msra.mxu0 %v2906
    %4042 = vmatprep.subr.mxu0 %v2912
    %4043 = vmatpush1.msra.mxu0 %v2911
    %4044 = vmatprep.subr.mxu0 %v2917
    %4045 = vmatpush1.msra.mxu0 %v2916
    %4046 = vmatprep.subr.mxu0 %v2922
    %4047 = vmatpush1.msra.mxu0 %v2921
    %4048 = vmatprep.subr.mxu0 %v2927
    %4049 = vmatpush1.msra.mxu0 %v2926
    %4050 = vmatprep.subr.mxu0 %v2932
    %4051 = vmatpush1.msra.mxu0 %v2931
    %4052 = vmatprep.subr.mxu0 %v2937
    %4053 = vmatpush1.msra.mxu0 %v2936
    %4054 = vmatprep.subr.mxu0 %v2942
    %4055 = vmatpush1.msra.mxu0 %v2941
    %4056 = vmatprep.subr.mxu0 %v2947
    %4057 = vmatpush1.msra.mxu0 %v2946
    %4058 = vmatprep.subr.mxu0 %v2952
    %4059 = vmatpush1.msra.mxu0 %v2951
    %4060 = vmatprep.mubr.f32.mxu0 %v2305
    %4061 = vmatmul.mubr.f32.gmra.mrb[0].mxu0 %v2304
    %v4062 = vpop.f32.mrb[0].mxu0
    %v4063 = vadd.f32 %v3992, %v4062
    %v4064 = vpop.f32.mrb[0].mxu0
    %v4065 = vadd.f32 %v3994, %v4064
    %4066 = vdwg.mxu0
    %4067 = vmatprep.subr.mxu0 %v2957
    %4068 = vmatpush1.msra.mxu0 %v2956
    %4069 = vmatprep.subr.mxu0 %v2962
    %4070 = vmatpush1.msra.mxu0 %v2961
    %4071 = vmatprep.subr.mxu0 %v2967
    %4072 = vmatpush1.msra.mxu0 %v2966
    %4073 = vmatprep.subr.mxu0 %v2972
    %4074 = vmatpush1.msra.mxu0 %v2971
    %4075 = vmatprep.subr.mxu0 %v2977
    %4076 = vmatpush1.msra.mxu0 %v2976
    %4077 = vmatprep.subr.mxu0 %v2982
    %4078 = vmatpush1.msra.mxu0 %v2981
    %4079 = vmatprep.subr.mxu0 %v2987
    %4080 = vmatpush1.msra.mxu0 %v2986
    %4081 = vmatprep.subr.mxu0 %v2992
    %4082 = vmatpush1.msra.mxu0 %v2991
    %4083 = vmatprep.subr.mxu0 %v2997
    %4084 = vmatpush1.msra.mxu0 %v2996
    %4085 = vmatprep.subr.mxu0 %v3002
    %4086 = vmatpush1.msra.mxu0 %v3001
    %4087 = vmatprep.subr.mxu0 %v3007
    %4088 = vmatpush1.msra.mxu0 %v3006
    %4089 = vmatprep.subr.mxu0 %v3012
    %4090 = vmatpush1.msra.mxu0 %v3011
    %4091 = vmatprep.subr.mxu0 %v3017
    %4092 = vmatpush1.msra.mxu0 %v3016
    %4093 = vmatprep.subr.mxu0 %v3022
    %4094 = vmatpush1.msra.mxu0 %v3021
    %4095 = vmatprep.subr.mxu0 %v3027
    %4096 = vmatpush1.msra.mxu0 %v3026
    %4097 = vmatprep.subr.mxu0 %v3032
    %4098 = vmatpush1.msra.mxu0 %v3031
    %4099 = vmatprep.subr.mxu0 %v3037
    %4100 = vmatpush1.msra.mxu0 %v3036
    %4101 = vmatprep.subr.mxu0 %v3042
    %4102 = vmatpush1.msra.mxu0 %v3041
    %4103 = vmatprep.subr.mxu0 %v3047
    %4104 = vmatpush1.msra.mxu0 %v3046
    %4105 = vmatprep.subr.mxu0 %v3052
    %4106 = vmatpush1.msra.mxu0 %v3051
    %4107 = vmatprep.subr.mxu0 %v3057
    %4108 = vmatpush1.msra.mxu0 %v3056
    %4109 = vmatprep.subr.mxu0 %v3062
    %4110 = vmatpush1.msra.mxu0 %v3061
    %4111 = vmatprep.subr.mxu0 %v3067
    %4112 = vmatpush1.msra.mxu0 %v3066
    %4113 = vmatprep.subr.mxu0 %v3072
    %4114 = vmatpush1.msra.mxu0 %v3071
    %4115 = vmatprep.subr.mxu0 %v3077
    %4116 = vmatpush1.msra.mxu0 %v3076
    %4117 = vmatprep.subr.mxu0 %v3082
    %4118 = vmatpush1.msra.mxu0 %v3081
    %4119 = vmatprep.subr.mxu0 %v3087
    %4120 = vmatpush1.msra.mxu0 %v3086
    %4121 = vmatprep.subr.mxu0 %v3092
    %4122 = vmatpush1.msra.mxu0 %v3091
    %4123 = vmatprep.subr.mxu0 %v3097
    %4124 = vmatpush1.msra.mxu0 %v3096
    %4125 = vmatprep.subr.mxu0 %v3102
    %4126 = vmatpush1.msra.mxu0 %v3101
    %4127 = vmatprep.subr.mxu0 %v3107
    %4128 = vmatpush1.msra.mxu0 %v3106
    %4129 = vmatprep.subr.mxu0 %v3112
    %4130 = vmatpush1.msra.mxu0 %v3111
    %4131 = vmatprep.mubr.f32.mxu0 %v2307
    %4132 = vmatmul.mubr.f32.gmra.mrb[0].mxu0 %v2306
    %v4133 = vpop.f32.mrb[0].mxu0
    %v4134 = vadd.f32 %v4063, %v4133
    %v4135 = vpop.f32.mrb[0].mxu0
    %v4136 = vadd.f32 %v4065, %v4135
    %4137 = vdwg.mxu0
    %4138 = vmatprep.subr.mxu0 %v3117
    %4139 = vmatpush1.msra.mxu0 %v3116
    %4140 = vmatprep.subr.mxu0 %v3122
    %4141 = vmatpush1.msra.mxu0 %v3121
    %4142 = vmatprep.subr.mxu0 %v3127
    %4143 = vmatpush1.msra.mxu0 %v3126
    %4144 = vmatprep.subr.mxu0 %v3132
    %4145 = vmatpush1.msra.mxu0 %v3131
    %4146 = vmatprep.subr.mxu0 %v3137
    %4147 = vmatpush1.msra.mxu0 %v3136
    %4148 = vmatprep.subr.mxu0 %v3142
    %4149 = vmatpush1.msra.mxu0 %v3141
    %4150 = vmatprep.subr.mxu0 %v3147
    %4151 = vmatpush1.msra.mxu0 %v3146
    %4152 = vmatprep.subr.mxu0 %v3152
    %4153 = vmatpush1.msra.mxu0 %v3151
    %4154 = vmatprep.subr.mxu0 %v3157
    %4155 = vmatpush1.msra.mxu0 %v3156
    %4156 = vmatprep.subr.mxu0 %v3162
    %4157 = vmatpush1.msra.mxu0 %v3161
    %4158 = vmatprep.subr.mxu0 %v3167
    %4159 = vmatpush1.msra.mxu0 %v3166
    %4160 = vmatprep.subr.mxu0 %v3172
    %4161 = vmatpush1.msra.mxu0 %v3171
    %4162 = vmatprep.subr.mxu0 %v3177
    %4163 = vmatpush1.msra.mxu0 %v3176
    %4164 = vmatprep.subr.mxu0 %v3182
    %4165 = vmatpush1.msra.mxu0 %v3181
    %4166 = vmatprep.subr.mxu0 %v3187
    %4167 = vmatpush1.msra.mxu0 %v3186
    %4168 = vmatprep.subr.mxu0 %v3192
    %4169 = vmatpush1.msra.mxu0 %v3191
    %4170 = vmatprep.subr.mxu0 %v3197
    %4171 = vmatpush1.msra.mxu0 %v3196
    %4172 = vmatprep.subr.mxu0 %v3202
    %4173 = vmatpush1.msra.mxu0 %v3201
    %4174 = vmatprep.subr.mxu0 %v3207
    %4175 = vmatpush1.msra.mxu0 %v3206
    %4176 = vmatprep.subr.mxu0 %v3212
    %4177 = vmatpush1.msra.mxu0 %v3211
    %4178 = vmatprep.subr.mxu0 %v3217
    %4179 = vmatpush1.msra.mxu0 %v3216
    %4180 = vmatprep.subr.mxu0 %v3222
    %4181 = vmatpush1.msra.mxu0 %v3221
    %4182 = vmatprep.subr.mxu0 %v3227
    %4183 = vmatpush1.msra.mxu0 %v3226
    %4184 = vmatprep.subr.mxu0 %v3232
    %4185 = vmatpush1.msra.mxu0 %v3231
    %4186 = vmatprep.subr.mxu0 %v3237
    %4187 = vmatpush1.msra.mxu0 %v3236
    %4188 = vmatprep.subr.mxu0 %v3242
    %4189 = vmatpush1.msra.mxu0 %v3241
    %4190 = vmatprep.subr.mxu0 %v3247
    %4191 = vmatpush1.msra.mxu0 %v3246
    %4192 = vmatprep.subr.mxu0 %v3252
    %4193 = vmatpush1.msra.mxu0 %v3251
    %4194 = vmatprep.subr.mxu0 %v3257
    %4195 = vmatpush1.msra.mxu0 %v3256
    %4196 = vmatprep.subr.mxu0 %v3262
    %4197 = vmatpush1.msra.mxu0 %v3261
    %4198 = vmatprep.subr.mxu0 %v3267
    %4199 = vmatpush1.msra.mxu0 %v3266
    %4200 = vmatprep.subr.mxu0 %v3272
    %4201 = vmatpush1.msra.mxu0 %v3271
    %4202 = vmatprep.mubr.f32.mxu0 %v2309
    %4203 = vmatmul.mubr.f32.gmra.mrb[0].mxu0 %v2308
    %v4204 = vpop.f32.mrb[0].mxu0
    %v4205 = vadd.f32 %v4134, %v4204
    %v4206 = vpop.f32.mrb[0].mxu0
    %v4207 = vadd.f32 %v4136, %v4206
    %4208 = vdwg.mxu0
    %4209 = vmatprep.subr.mxu0 %v3277
    %4210 = vmatpush1.msra.mxu0 %v3276
    %4211 = vmatprep.subr.mxu0 %v3282
    %4212 = vmatpush1.msra.mxu0 %v3281
    %4213 = vmatprep.subr.mxu0 %v3287
    %4214 = vmatpush1.msra.mxu0 %v3286
    %4215 = vmatprep.subr.mxu0 %v3292
    %4216 = vmatpush1.msra.mxu0 %v3291
    %4217 = vmatprep.subr.mxu0 %v3297
    %4218 = vmatpush1.msra.mxu0 %v3296
    %4219 = vmatprep.subr.mxu0 %v3302
    %4220 = vmatpush1.msra.mxu0 %v3301
    %4221 = vmatprep.subr.mxu0 %v3307
    %4222 = vmatpush1.msra.mxu0 %v3306
    %4223 = vmatprep.subr.mxu0 %v3312
    %4224 = vmatpush1.msra.mxu0 %v3311
    %4225 = vmatprep.subr.mxu0 %v3317
    %4226 = vmatpush1.msra.mxu0 %v3316
    %4227 = vmatprep.subr.mxu0 %v3322
    %4228 = vmatpush1.msra.mxu0 %v3321
    %4229 = vmatprep.subr.mxu0 %v3327
    %4230 = vmatpush1.msra.mxu0 %v3326
    %4231 = vmatprep.subr.mxu0 %v3332
    %4232 = vmatpush1.msra.mxu0 %v3331
    %4233 = vmatprep.subr.mxu0 %v3337
    %4234 = vmatpush1.msra.mxu0 %v3336
    %4235 = vmatprep.subr.mxu0 %v3342
    %4236 = vmatpush1.msra.mxu0 %v3341
    %4237 = vmatprep.subr.mxu0 %v3347
    %4238 = vmatpush1.msra.mxu0 %v3346
    %4239 = vmatprep.subr.mxu0 %v3352
    %4240 = vmatpush1.msra.mxu0 %v3351
    %4241 = vmatprep.subr.mxu0 %v3357
    %4242 = vmatpush1.msra.mxu0 %v3356
    %4243 = vmatprep.subr.mxu0 %v3362
    %4244 = vmatpush1.msra.mxu0 %v3361
    %4245 = vmatprep.subr.mxu0 %v3367
    %4246 = vmatpush1.msra.mxu0 %v3366
    %4247 = vmatprep.subr.mxu0 %v3372
    %4248 = vmatpush1.msra.mxu0 %v3371
    %4249 = vmatprep.subr.mxu0 %v3377
    %4250 = vmatpush1.msra.mxu0 %v3376
    %4251 = vmatprep.subr.mxu0 %v3382
    %4252 = vmatpush1.msra.mxu0 %v3381
    %4253 = vmatprep.subr.mxu0 %v3387
    %4254 = vmatpush1.msra.mxu0 %v3386
    %4255 = vmatprep.subr.mxu0 %v3392
    %4256 = vmatpush1.msra.mxu0 %v3391
    %4257 = vmatprep.subr.mxu0 %v3397
    %4258 = vmatpush1.msra.mxu0 %v3396
    %4259 = vmatprep.subr.mxu0 %v3402
    %4260 = vmatpush1.msra.mxu0 %v3401
    %4261 = vmatprep.subr.mxu0 %v3407
    %4262 = vmatpush1.msra.mxu0 %v3406
    %4263 = vmatprep.subr.mxu0 %v3412
    %4264 = vmatpush1.msra.mxu0 %v3411
    %4265 = vmatprep.subr.mxu0 %v3417
    %4266 = vmatpush1.msra.mxu0 %v3416
    %4267 = vmatprep.subr.mxu0 %v3422
    %4268 = vmatpush1.msra.mxu0 %v3421
    %4269 = vmatprep.subr.mxu0 %v3427
    %4270 = vmatpush1.msra.mxu0 %v3426
    %4271 = vmatprep.subr.mxu0 %v3432
    %4272 = vmatpush1.msra.mxu0 %v3431
    %4273 = vmatprep.mubr.f32.mxu0 %v2311
    %4274 = vmatmul.mubr.f32.gmra.mrb[0].mxu0 %v2310
    %v4275 = vpop.f32.mrb[0].mxu0
    %v4276 = vadd.f32 %v4205, %v4275
    %v4277 = vpop.f32.mrb[0].mxu0
    %v4278 = vadd.f32 %v4207, %v4277
    %4279 = vdwg.mxu0
    %4280 = vmatprep.subr.mxu0 %v3437
    %4281 = vmatpush1.msra.mxu0 %v3436
    %4282 = vmatprep.subr.mxu0 %v3442
    %4283 = vmatpush1.msra.mxu0 %v3441
    %4284 = vmatprep.subr.mxu0 %v3447
    %4285 = vmatpush1.msra.mxu0 %v3446
    %4286 = vmatprep.subr.mxu0 %v3452
    %4287 = vmatpush1.msra.mxu0 %v3451
    %4288 = vmatprep.subr.mxu0 %v3457
    %4289 = vmatpush1.msra.mxu0 %v3456
    %4290 = vmatprep.subr.mxu0 %v3462
    %4291 = vmatpush1.msra.mxu0 %v3461
    %4292 = vmatprep.subr.mxu0 %v3467
    %4293 = vmatpush1.msra.mxu0 %v3466
    %4294 = vmatprep.subr.mxu0 %v3472
    %4295 = vmatpush1.msra.mxu0 %v3471
    %4296 = vmatprep.subr.mxu0 %v3477
    %4297 = vmatpush1.msra.mxu0 %v3476
    %4298 = vmatprep.subr.mxu0 %v3482
    %4299 = vmatpush1.msra.mxu0 %v3481
    %4300 = vmatprep.subr.mxu0 %v3487
    %4301 = vmatpush1.msra.mxu0 %v3486
    %4302 = vmatprep.subr.mxu0 %v3492
    %4303 = vmatpush1.msra.mxu0 %v3491
    %4304 = vmatprep.subr.mxu0 %v3497
    %4305 = vmatpush1.msra.mxu0 %v3496
    %4306 = vmatprep.subr.mxu0 %v3502
    %4307 = vmatpush1.msra.mxu0 %v3501
    %4308 = vmatprep.subr.mxu0 %v3507
    %4309 = vmatpush1.msra.mxu0 %v3506
    %4310 = vmatprep.subr.mxu0 %v3512
    %4311 = vmatpush1.msra.mxu0 %v3511
    %4312 = vmatprep.subr.mxu0 %v3517
    %4313 = vmatpush1.msra.mxu0 %v3516
    %4314 = vmatprep.subr.mxu0 %v3522
    %4315 = vmatpush1.msra.mxu0 %v3521
    %4316 = vmatprep.subr.mxu0 %v3527
    %4317 = vmatpush1.msra.mxu0 %v3526
    %4318 = vmatprep.subr.mxu0 %v3532
    %4319 = vmatpush1.msra.mxu0 %v3531
    %4320 = vmatprep.subr.mxu0 %v3537
    %4321 = vmatpush1.msra.mxu0 %v3536
    %4322 = vmatprep.subr.mxu0 %v3542
    %4323 = vmatpush1.msra.mxu0 %v3541
    %4324 = vmatprep.subr.mxu0 %v3547
    %4325 = vmatpush1.msra.mxu0 %v3546
    %4326 = vmatprep.subr.mxu0 %v3552
    %4327 = vmatpush1.msra.mxu0 %v3551
    %4328 = vmatprep.subr.mxu0 %v3557
    %4329 = vmatpush1.msra.mxu0 %v3556
    %4330 = vmatprep.subr.mxu0 %v3562
    %4331 = vmatpush1.msra.mxu0 %v3561
    %4332 = vmatprep.subr.mxu0 %v3567
    %4333 = vmatpush1.msra.mxu0 %v3566
    %4334 = vmatprep.subr.mxu0 %v3572
    %4335 = vmatpush1.msra.mxu0 %v3571
    %4336 = vmatprep.subr.mxu0 %v3577
    %4337 = vmatpush1.msra.mxu0 %v3576
    %4338 = vmatprep.subr.mxu0 %v3582
    %4339 = vmatpush1.msra.mxu0 %v3581
    %4340 = vmatprep.subr.mxu0 %v3587
    %4341 = vmatpush1.msra.mxu0 %v3586
    %4342 = vmatprep.subr.mxu0 %v3592
    %4343 = vmatpush1.msra.mxu0 %v3591
    %4344 = vmatprep.mubr.f32.mxu0 %v2313
    %4345 = vmatmul.mubr.f32.gmra.mrb[0].mxu0 %v2312
    %v4346 = vpop.f32.mrb[0].mxu0
    %v4347 = vadd.f32 %v4276, %v4346
    %v4348 = vpop.f32.mrb[0].mxu0
    %v4349 = vadd.f32 %v4278, %v4348
    %4350 = vdwg.mxu0
    %4351 = vmatprep.subr.mxu0 %v3597
    %4352 = vmatpush1.msra.mxu0 %v3596
    %4353 = vmatprep.subr.mxu0 %v3602
    %4354 = vmatpush1.msra.mxu0 %v3601
    %4355 = vmatprep.subr.mxu0 %v3607
    %4356 = vmatpush1.msra.mxu0 %v3606
    %4357 = vmatprep.subr.mxu0 %v3612
    %4358 = vmatpush1.msra.mxu0 %v3611
    %4359 = vmatprep.subr.mxu0 %v3617
    %4360 = vmatpush1.msra.mxu0 %v3616
    %4361 = vmatprep.subr.mxu0 %v3622
    %4362 = vmatpush1.msra.mxu0 %v3621
    %4363 = vmatprep.subr.mxu0 %v3627
    %4364 = vmatpush1.msra.mxu0 %v3626
    %4365 = vmatprep.subr.mxu0 %v3632
    %4366 = vmatpush1.msra.mxu0 %v3631
    %4367 = vmatprep.subr.mxu0 %v3637
    %4368 = vmatpush1.msra.mxu0 %v3636
    %4369 = vmatprep.subr.mxu0 %v3642
    %4370 = vmatpush1.msra.mxu0 %v3641
    %4371 = vmatprep.subr.mxu0 %v3647
    %4372 = vmatpush1.msra.mxu0 %v3646
    %4373 = vmatprep.subr.mxu0 %v3652
    %4374 = vmatpush1.msra.mxu0 %v3651
    %4375 = vmatprep.subr.mxu0 %v3657
    %4376 = vmatpush1.msra.mxu0 %v3656
    %4377 = vmatprep.subr.mxu0 %v3662
    %4378 = vmatpush1.msra.mxu0 %v3661
    %4379 = vmatprep.subr.mxu0 %v3667
    %4380 = vmatpush1.msra.mxu0 %v3666
    %4381 = vmatprep.subr.mxu0 %v3672
    %4382 = vmatpush1.msra.mxu0 %v3671
    %4383 = vmatprep.subr.mxu0 %v3677
    %4384 = vmatpush1.msra.mxu0 %v3676
    %4385 = vmatprep.subr.mxu0 %v3682
    %4386 = vmatpush1.msra.mxu0 %v3681
    %4387 = vmatprep.subr.mxu0 %v3687
    %4388 = vmatpush1.msra.mxu0 %v3686
    %4389 = vmatprep.subr.mxu0 %v3692
    %4390 = vmatpush1.msra.mxu0 %v3691
    %4391 = vmatprep.subr.mxu0 %v3697
    %4392 = vmatpush1.msra.mxu0 %v3696
    %4393 = vmatprep.subr.mxu0 %v3702
    %4394 = vmatpush1.msra.mxu0 %v3701
    %4395 = vmatprep.subr.mxu0 %v3707
    %4396 = vmatpush1.msra.mxu0 %v3706
    %4397 = vmatprep.subr.mxu0 %v3712
    %4398 = vmatpush1.msra.mxu0 %v3711
    %4399 = vmatprep.subr.mxu0 %v3717
    %4400 = vmatpush1.msra.mxu0 %v3716
    %4401 = vmatprep.subr.mxu0 %v3722
    %4402 = vmatpush1.msra.mxu0 %v3721
    %4403 = vmatprep.subr.mxu0 %v3727
    %4404 = vmatpush1.msra.mxu0 %v3726
    %4405 = vmatprep.subr.mxu0 %v3732
    %4406 = vmatpush1.msra.mxu0 %v3731
    %4407 = vmatprep.subr.mxu0 %v3737
    %4408 = vmatpush1.msra.mxu0 %v3736
    %4409 = vmatprep.subr.mxu0 %v3742
    %4410 = vmatpush1.msra.mxu0 %v3741
    %4411 = vmatprep.subr.mxu0 %v3747
    %4412 = vmatpush1.msra.mxu0 %v3746
    %4413 = vmatprep.subr.mxu0 %v3752
    %4414 = vmatpush1.msra.mxu0 %v3751
    %4415 = vmatprep.mubr.f32.mxu0 %v2315
    %4416 = vmatmul.mubr.f32.gmra.mrb[0].mxu0 %v2314
    %v4417 = vpop.f32.mrb[0].mxu0
    %v4418 = vadd.f32 %v4347, %v4417
    %v4419 = vpop.f32.mrb[0].mxu0
    %v4420 = vadd.f32 %v4349, %v4419
    %4421 = vdwg.mxu0
    %4422 = vmatprep.subr.mxu0 %v2319
    %4423 = vmatpush1.msra.mxu0 %v2318
    %4424 = vmatprep.subr.mxu0 %v2324
    %4425 = vmatpush1.msra.mxu0 %v2323
    %4426 = vmatprep.subr.mxu0 %v2329
    %4427 = vmatpush1.msra.mxu0 %v2328
    %4428 = vmatprep.subr.mxu0 %v2334
    %4429 = vmatpush1.msra.mxu0 %v2333
    %4430 = vmatprep.subr.mxu0 %v2339
    %4431 = vmatpush1.msra.mxu0 %v2338
    %4432 = vmatprep.subr.mxu0 %v2344
    %4433 = vmatpush1.msra.mxu0 %v2343
    %4434 = vmatprep.subr.mxu0 %v2349
    %4435 = vmatpush1.msra.mxu0 %v2348
    %4436 = vmatprep.subr.mxu0 %v2354
    %4437 = vmatpush1.msra.mxu0 %v2353
    %4438 = vmatprep.subr.mxu0 %v2359
    %4439 = vmatpush1.msra.mxu0 %v2358
    %4440 = vmatprep.subr.mxu0 %v2364
    %4441 = vmatpush1.msra.mxu0 %v2363
    %4442 = vmatprep.subr.mxu0 %v2369
    %4443 = vmatpush1.msra.mxu0 %v2368
    %4444 = vmatprep.subr.mxu0 %v2374
    %4445 = vmatpush1.msra.mxu0 %v2373
    %4446 = vmatprep.subr.mxu0 %v2379
    %4447 = vmatpush1.msra.mxu0 %v2378
    %4448 = vmatprep.subr.mxu0 %v2384
    %4449 = vmatpush1.msra.mxu0 %v2383
    %4450 = vmatprep.subr.mxu0 %v2389
    %4451 = vmatpush1.msra.mxu0 %v2388
    %4452 = vmatprep.subr.mxu0 %v2394
    %4453 = vmatpush1.msra.mxu0 %v2393
    %4454 = vmatprep.subr.mxu0 %v2399
    %4455 = vmatpush1.msra.mxu0 %v2398
    %4456 = vmatprep.subr.mxu0 %v2404
    %4457 = vmatpush1.msra.mxu0 %v2403
    %4458 = vmatprep.subr.mxu0 %v2409
    %4459 = vmatpush1.msra.mxu0 %v2408
    %4460 = vmatprep.subr.mxu0 %v2414
    %4461 = vmatpush1.msra.mxu0 %v2413
    %4462 = vmatprep.subr.mxu0 %v2419
    %4463 = vmatpush1.msra.mxu0 %v2418
    %4464 = vmatprep.subr.mxu0 %v2424
    %4465 = vmatpush1.msra.mxu0 %v2423
    %4466 = vmatprep.subr.mxu0 %v2429
    %4467 = vmatpush1.msra.mxu0 %v2428
    %4468 = vmatprep.subr.mxu0 %v2434
    %4469 = vmatpush1.msra.mxu0 %v2433
    %4470 = vmatprep.subr.mxu0 %v2439
    %4471 = vmatpush1.msra.mxu0 %v2438
    %4472 = vmatprep.subr.mxu0 %v2444
    %4473 = vmatpush1.msra.mxu0 %v2443
    %4474 = vmatprep.subr.mxu0 %v2449
    %4475 = vmatpush1.msra.mxu0 %v2448
    %4476 = vmatprep.subr.mxu0 %v2454
    %4477 = vmatpush1.msra.mxu0 %v2453
    %4478 = vmatprep.subr.mxu0 %v2459
    %4479 = vmatpush1.msra.mxu0 %v2458
    %4480 = vmatprep.subr.mxu0 %v2464
    %4481 = vmatpush1.msra.mxu0 %v2463
    %4482 = vmatprep.subr.mxu0 %v2469
    %4483 = vmatpush1.msra.mxu0 %v2468
    %4484 = vmatprep.subr.mxu0 %v2474
    %4485 = vmatpush1.msra.mxu0 %v2473
    %4486 = vmatprep.mubr.f32.mxu0 %v2299
    %4487 = vmatmul.mubr.f32.gmra.mrb[0].mxu0 %v2298
    %v4488 = vpop.f32.mrb[0].mxu0
    %v4489 = vadd.f32 %v3769, %v4488
    %v4490 = vpop.f32.mrb[0].mxu0
    %v4491 = vadd.f32 %v3773, %v4490
    %4492 = vdwg.mxu0
    %4493 = vmatprep.subr.mxu0 %v2479
    %4494 = vmatpush1.msra.mxu0 %v2478
    %4495 = vmatprep.subr.mxu0 %v2484
    %4496 = vmatpush1.msra.mxu0 %v2483
    %4497 = vmatprep.subr.mxu0 %v2489
    %4498 = vmatpush1.msra.mxu0 %v2488
    %4499 = vmatprep.subr.mxu0 %v2494
    %4500 = vmatpush1.msra.mxu0 %v2493
    %4501 = vmatprep.subr.mxu0 %v2499
    %4502 = vmatpush1.msra.mxu0 %v2498
    %4503 = vmatprep.subr.mxu0 %v2504
    %4504 = vmatpush1.msra.mxu0 %v2503
    %4505 = vmatprep.subr.mxu0 %v2509
    %4506 = vmatpush1.msra.mxu0 %v2508
    %4507 = vmatprep.subr.mxu0 %v2514
    %4508 = vmatpush1.msra.mxu0 %v2513
    %4509 = vmatprep.subr.mxu0 %v2519
    %4510 = vmatpush1.msra.mxu0 %v2518
    %4511 = vmatprep.subr.mxu0 %v2524
    %4512 = vmatpush1.msra.mxu0 %v2523
    %4513 = vmatprep.subr.mxu0 %v2529
    %4514 = vmatpush1.msra.mxu0 %v2528
    %4515 = vmatprep.subr.mxu0 %v2534
    %4516 = vmatpush1.msra.mxu0 %v2533
    %4517 = vmatprep.subr.mxu0 %v2539
    %4518 = vmatpush1.msra.mxu0 %v2538
    %4519 = vmatprep.subr.mxu0 %v2544
    %4520 = vmatpush1.msra.mxu0 %v2543
    %4521 = vmatprep.subr.mxu0 %v2549
    %4522 = vmatpush1.msra.mxu0 %v2548
    %4523 = vmatprep.subr.mxu0 %v2554
    %4524 = vmatpush1.msra.mxu0 %v2553
    %4525 = vmatprep.subr.mxu0 %v2559
    %4526 = vmatpush1.msra.mxu0 %v2558
    %4527 = vmatprep.subr.mxu0 %v2564
    %4528 = vmatpush1.msra.mxu0 %v2563
    %4529 = vmatprep.subr.mxu0 %v2569
    %4530 = vmatpush1.msra.mxu0 %v2568
    %4531 = vmatprep.subr.mxu0 %v2574
    %4532 = vmatpush1.msra.mxu0 %v2573
    %4533 = vmatprep.subr.mxu0 %v2579
    %4534 = vmatpush1.msra.mxu0 %v2578
    %4535 = vmatprep.subr.mxu0 %v2584
    %4536 = vmatpush1.msra.mxu0 %v2583
    %4537 = vmatprep.subr.mxu0 %v2589
    %4538 = vmatpush1.msra.mxu0 %v2588
    %4539 = vmatprep.subr.mxu0 %v2594
    %4540 = vmatpush1.msra.mxu0 %v2593
    %4541 = vmatprep.subr.mxu0 %v2599
    %4542 = vmatpush1.msra.mxu0 %v2598
    %4543 = vmatprep.subr.mxu0 %v2604
    %4544 = vmatpush1.msra.mxu0 %v2603
    %4545 = vmatprep.subr.mxu0 %v2609
    %4546 = vmatpush1.msra.mxu0 %v2608
    %4547 = vmatprep.subr.mxu0 %v2614
    %4548 = vmatpush1.msra.mxu0 %v2613
    %4549 = vmatprep.subr.mxu0 %v2619
    %4550 = vmatpush1.msra.mxu0 %v2618
    %4551 = vmatprep.subr.mxu0 %v2624
    %4552 = vmatpush1.msra.mxu0 %v2623
    %4553 = vmatprep.subr.mxu0 %v2629
    %4554 = vmatpush1.msra.mxu0 %v2628
    %4555 = vmatprep.subr.mxu0 %v2634
    %4556 = vmatpush1.msra.mxu0 %v2633
    %4557 = vmatprep.mubr.f32.mxu0 %v2301
    %4558 = vmatmul.mubr.f32.gmra.mrb[0].mxu0 %v2300
    %v4559 = vpop.f32.mrb[0].mxu0
    %v4560 = vadd.f32 %v4489, %v4559
    %v4561 = vpop.f32.mrb[0].mxu0
    %v4562 = vadd.f32 %v4491, %v4561
    %4563 = vdwg.mxu0
    %4564 = vmatprep.subr.mxu0 %v2639
    %4565 = vmatpush1.msra.mxu0 %v2638
    %4566 = vmatprep.subr.mxu0 %v2644
    %4567 = vmatpush1.msra.mxu0 %v2643
    %4568 = vmatprep.subr.mxu0 %v2649
    %4569 = vmatpush1.msra.mxu0 %v2648
    %4570 = vmatprep.subr.mxu0 %v2654
    %4571 = vmatpush1.msra.mxu0 %v2653
    %4572 = vmatprep.subr.mxu0 %v2659
    %4573 = vmatpush1.msra.mxu0 %v2658
    %4574 = vmatprep.subr.mxu0 %v2664
    %4575 = vmatpush1.msra.mxu0 %v2663
    %4576 = vmatprep.subr.mxu0 %v2669
    %4577 = vmatpush1.msra.mxu0 %v2668
    %4578 = vmatprep.subr.mxu0 %v2674
    %4579 = vmatpush1.msra.mxu0 %v2673
    %4580 = vmatprep.subr.mxu0 %v2679
    %4581 = vmatpush1.msra.mxu0 %v2678
    %4582 = vmatprep.subr.mxu0 %v2684
    %4583 = vmatpush1.msra.mxu0 %v2683
    %4584 = vmatprep.subr.mxu0 %v2689
    %4585 = vmatpush1.msra.mxu0 %v2688
    %4586 = vmatprep.subr.mxu0 %v2694
    %4587 = vmatpush1.msra.mxu0 %v2693
    %4588 = vmatprep.subr.mxu0 %v2699
    %4589 = vmatpush1.msra.mxu0 %v2698
    %4590 = vmatprep.subr.mxu0 %v2704
    %4591 = vmatpush1.msra.mxu0 %v2703
    %4592 = vmatprep.subr.mxu0 %v2709
    %4593 = vmatpush1.msra.mxu0 %v2708
    %4594 = vmatprep.subr.mxu0 %v2714
    %4595 = vmatpush1.msra.mxu0 %v2713
    %4596 = vmatprep.subr.mxu0 %v2719
    %4597 = vmatpush1.msra.mxu0 %v2718
    %4598 = vmatprep.subr.mxu0 %v2724
    %4599 = vmatpush1.msra.mxu0 %v2723
    %4600 = vmatprep.subr.mxu0 %v2729
    %4601 = vmatpush1.msra.mxu0 %v2728
    %4602 = vmatprep.subr.mxu0 %v2734
    %4603 = vmatpush1.msra.mxu0 %v2733
    %4604 = vmatprep.subr.mxu0 %v2739
    %4605 = vmatpush1.msra.mxu0 %v2738
    %4606 = vmatprep.subr.mxu0 %v2744
    %4607 = vmatpush1.msra.mxu0 %v2743
    %4608 = vmatprep.subr.mxu0 %v2749
    %4609 = vmatpush1.msra.mxu0 %v2748
    %4610 = vmatprep.subr.mxu0 %v2754
    %4611 = vmatpush1.msra.mxu0 %v2753
    %4612 = vmatprep.subr.mxu0 %v2759
    %4613 = vmatpush1.msra.mxu0 %v2758
    %4614 = vmatprep.subr.mxu0 %v2764
    %4615 = vmatpush1.msra.mxu0 %v2763
    %4616 = vmatprep.subr.mxu0 %v2769
    %4617 = vmatpush1.msra.mxu0 %v2768
    %4618 = vmatprep.subr.mxu0 %v2774
    %4619 = vmatpush1.msra.mxu0 %v2773
    %4620 = vmatprep.subr.mxu0 %v2779
    %4621 = vmatpush1.msra.mxu0 %v2778
    %4622 = vmatprep.subr.mxu0 %v2784
    %4623 = vmatpush1.msra.mxu0 %v2783
    %4624 = vmatprep.subr.mxu0 %v2789
    %4625 = vmatpush1.msra.mxu0 %v2788
    %4626 = vmatprep.subr.mxu0 %v2794
    %4627 = vmatpush1.msra.mxu0 %v2793
    %4628 = vmatprep.mubr.f32.mxu0 %v2303
    %4629 = vmatmul.mubr.f32.gmra.mrb[0].mxu0 %v2302
    %v4630 = vpop.f32.mrb[0].mxu0
    %v4631 = vadd.f32 %v4560, %v4630
    %v4632 = vpop.f32.mrb[0].mxu0
    %v4633 = vadd.f32 %v4562, %v4632
    %4634 = vdwg.mxu0
    %4635 = vmatprep.subr.mxu0 %v2799
    %4636 = vmatpush1.msra.mxu0 %v2798
    %4637 = vmatprep.subr.mxu0 %v2804
    %4638 = vmatpush1.msra.mxu0 %v2803
    %4639 = vmatprep.subr.mxu0 %v2809
    %4640 = vmatpush1.msra.mxu0 %v2808
    %4641 = vmatprep.subr.mxu0 %v2814
    %4642 = vmatpush1.msra.mxu0 %v2813
    %4643 = vmatprep.subr.mxu0 %v2819
    %4644 = vmatpush1.msra.mxu0 %v2818
    %4645 = vmatprep.subr.mxu0 %v2824
    %4646 = vmatpush1.msra.mxu0 %v2823
    %4647 = vmatprep.subr.mxu0 %v2829
    %4648 = vmatpush1.msra.mxu0 %v2828
    %4649 = vmatprep.subr.mxu0 %v2834
    %4650 = vmatpush1.msra.mxu0 %v2833
    %4651 = vmatprep.subr.mxu0 %v2839
    %4652 = vmatpush1.msra.mxu0 %v2838
    %4653 = vmatprep.subr.mxu0 %v2844
    %4654 = vmatpush1.msra.mxu0 %v2843
    %4655 = vmatprep.subr.mxu0 %v2849
    %4656 = vmatpush1.msra.mxu0 %v2848
    %4657 = vmatprep.subr.mxu0 %v2854
    %4658 = vmatpush1.msra.mxu0 %v2853
    %4659 = vmatprep.subr.mxu0 %v2859
    %4660 = vmatpush1.msra.mxu0 %v2858
    %4661 = vmatprep.subr.mxu0 %v2864
    %4662 = vmatpush1.msra.mxu0 %v2863
    %4663 = vmatprep.subr.mxu0 %v2869
    %4664 = vmatpush1.msra.mxu0 %v2868
    %4665 = vmatprep.subr.mxu0 %v2874
    %4666 = vmatpush1.msra.mxu0 %v2873
    %4667 = vmatprep.subr.mxu0 %v2879
    %4668 = vmatpush1.msra.mxu0 %v2878
    %4669 = vmatprep.subr.mxu0 %v2884
    %4670 = vmatpush1.msra.mxu0 %v2883
    %4671 = vmatprep.subr.mxu0 %v2889
    %4672 = vmatpush1.msra.mxu0 %v2888
    %4673 = vmatprep.subr.mxu0 %v2894
    %4674 = vmatpush1.msra.mxu0 %v2893
    %4675 = vmatprep.subr.mxu0 %v2899
    %4676 = vmatpush1.msra.mxu0 %v2898
    %4677 = vmatprep.subr.mxu0 %v2904
    %4678 = vmatpush1.msra.mxu0 %v2903
    %4679 = vmatprep.subr.mxu0 %v2909
    %4680 = vmatpush1.msra.mxu0 %v2908
    %4681 = vmatprep.subr.mxu0 %v2914
    %4682 = vmatpush1.msra.mxu0 %v2913
    %4683 = vmatprep.subr.mxu0 %v2919
    %4684 = vmatpush1.msra.mxu0 %v2918
    %4685 = vmatprep.subr.mxu0 %v2924
    %4686 = vmatpush1.msra.mxu0 %v2923
    %4687 = vmatprep.subr.mxu0 %v2929
    %4688 = vmatpush1.msra.mxu0 %v2928
    %4689 = vmatprep.subr.mxu0 %v2934
    %4690 = vmatpush1.msra.mxu0 %v2933
    %4691 = vmatprep.subr.mxu0 %v2939
    %4692 = vmatpush1.msra.mxu0 %v2938
    %4693 = vmatprep.subr.mxu0 %v2944
    %4694 = vmatpush1.msra.mxu0 %v2943
    %4695 = vmatprep.subr.mxu0 %v2949
    %4696 = vmatpush1.msra.mxu0 %v2948
    %4697 = vmatprep.subr.mxu0 %v2954
    %4698 = vmatpush1.msra.mxu0 %v2953
    %4699 = vmatprep.mubr.f32.mxu0 %v2305
    %4700 = vmatmul.mubr.f32.gmra.mrb[0].mxu0 %v2304
    %v4701 = vpop.f32.mrb[0].mxu0
    %v4702 = vadd.f32 %v4631, %v4701
    %v4703 = vpop.f32.mrb[0].mxu0
    %v4704 = vadd.f32 %v4633, %v4703
    %4705 = vdwg.mxu0
    %4706 = vmatprep.subr.mxu0 %v2959
    %4707 = vmatpush1.msra.mxu0 %v2958
    %4708 = vmatprep.subr.mxu0 %v2964
    %4709 = vmatpush1.msra.mxu0 %v2963
    %4710 = vmatprep.subr.mxu0 %v2969
    %4711 = vmatpush1.msra.mxu0 %v2968
    %4712 = vmatprep.subr.mxu0 %v2974
    %4713 = vmatpush1.msra.mxu0 %v2973
    %4714 = vmatprep.subr.mxu0 %v2979
    %4715 = vmatpush1.msra.mxu0 %v2978
    %4716 = vmatprep.subr.mxu0 %v2984
    %4717 = vmatpush1.msra.mxu0 %v2983
    %4718 = vmatprep.subr.mxu0 %v2989
    %4719 = vmatpush1.msra.mxu0 %v2988
    %4720 = vmatprep.subr.mxu0 %v2994
    %4721 = vmatpush1.msra.mxu0 %v2993
    %4722 = vmatprep.subr.mxu0 %v2999
    %4723 = vmatpush1.msra.mxu0 %v2998
    %4724 = vmatprep.subr.mxu0 %v3004
    %4725 = vmatpush1.msra.mxu0 %v3003
    %4726 = vmatprep.subr.mxu0 %v3009
    %4727 = vmatpush1.msra.mxu0 %v3008
    %4728 = vmatprep.subr.mxu0 %v3014
    %4729 = vmatpush1.msra.mxu0 %v3013
    %4730 = vmatprep.subr.mxu0 %v3019
    %4731 = vmatpush1.msra.mxu0 %v3018
    %4732 = vmatprep.subr.mxu0 %v3024
    %4733 = vmatpush1.msra.mxu0 %v3023
    %4734 = vmatprep.subr.mxu0 %v3029
    %4735 = vmatpush1.msra.mxu0 %v3028
    %4736 = vmatprep.subr.mxu0 %v3034
    %4737 = vmatpush1.msra.mxu0 %v3033
    %4738 = vmatprep.subr.mxu0 %v3039
    %4739 = vmatpush1.msra.mxu0 %v3038
    %4740 = vmatprep.subr.mxu0 %v3044
    %4741 = vmatpush1.msra.mxu0 %v3043
    %4742 = vmatprep.subr.mxu0 %v3049
    %4743 = vmatpush1.msra.mxu0 %v3048
    %4744 = vmatprep.subr.mxu0 %v3054
    %4745 = vmatpush1.msra.mxu0 %v3053
    %4746 = vmatprep.subr.mxu0 %v3059
    %4747 = vmatpush1.msra.mxu0 %v3058
    %4748 = vmatprep.subr.mxu0 %v3064
    %4749 = vmatpush1.msra.mxu0 %v3063
    %4750 = vmatprep.subr.mxu0 %v3069
    %4751 = vmatpush1.msra.mxu0 %v3068
    %4752 = vmatprep.subr.mxu0 %v3074
    %4753 = vmatpush1.msra.mxu0 %v3073
    %4754 = vmatprep.subr.mxu0 %v3079
    %4755 = vmatpush1.msra.mxu0 %v3078
    %4756 = vmatprep.subr.mxu0 %v3084
    %4757 = vmatpush1.msra.mxu0 %v3083
    %4758 = vmatprep.subr.mxu0 %v3089
    %4759 = vmatpush1.msra.mxu0 %v3088
    %4760 = vmatprep.subr.mxu0 %v3094
    %4761 = vmatpush1.msra.mxu0 %v3093
    %4762 = vmatprep.subr.mxu0 %v3099
    %4763 = vmatpush1.msra.mxu0 %v3098
    %4764 = vmatprep.subr.mxu0 %v3104
    %4765 = vmatpush1.msra.mxu0 %v3103
    %4766 = vmatprep.subr.mxu0 %v3109
    %4767 = vmatpush1.msra.mxu0 %v3108
    %4768 = vmatprep.subr.mxu0 %v3114
    %4769 = vmatpush1.msra.mxu0 %v3113
    %4770 = vmatprep.mubr.f32.mxu0 %v2307
    %4771 = vmatmul.mubr.f32.gmra.mrb[0].mxu0 %v2306
    %v4772 = vpop.f32.mrb[0].mxu0
    %v4773 = vadd.f32 %v4702, %v4772
    %v4774 = vpop.f32.mrb[0].mxu0
    %v4775 = vadd.f32 %v4704, %v4774
    %4776 = vdwg.mxu0
    %4777 = vmatprep.subr.mxu0 %v3119
    %4778 = vmatpush1.msra.mxu0 %v3118
    %4779 = vmatprep.subr.mxu0 %v3124
    %4780 = vmatpush1.msra.mxu0 %v3123
    %4781 = vmatprep.subr.mxu0 %v3129
    %4782 = vmatpush1.msra.mxu0 %v3128
    %4783 = vmatprep.subr.mxu0 %v3134
    %4784 = vmatpush1.msra.mxu0 %v3133
    %4785 = vmatprep.subr.mxu0 %v3139
    %4786 = vmatpush1.msra.mxu0 %v3138
    %4787 = vmatprep.subr.mxu0 %v3144
    %4788 = vmatpush1.msra.mxu0 %v3143
    %4789 = vmatprep.subr.mxu0 %v3149
    %4790 = vmatpush1.msra.mxu0 %v3148
    %4791 = vmatprep.subr.mxu0 %v3154
    %4792 = vmatpush1.msra.mxu0 %v3153
    %4793 = vmatprep.subr.mxu0 %v3159
    %4794 = vmatpush1.msra.mxu0 %v3158
    %4795 = vmatprep.subr.mxu0 %v3164
    %4796 = vmatpush1.msra.mxu0 %v3163
    %4797 = vmatprep.subr.mxu0 %v3169
    %4798 = vmatpush1.msra.mxu0 %v3168
    %4799 = vmatprep.subr.mxu0 %v3174
    %4800 = vmatpush1.msra.mxu0 %v3173
    %4801 = vmatprep.subr.mxu0 %v3179
    %4802 = vmatpush1.msra.mxu0 %v3178
    %4803 = vmatprep.subr.mxu0 %v3184
    %4804 = vmatpush1.msra.mxu0 %v3183
    %4805 = vmatprep.subr.mxu0 %v3189
    %4806 = vmatpush1.msra.mxu0 %v3188
    %4807 = vmatprep.subr.mxu0 %v3194
    %4808 = vmatpush1.msra.mxu0 %v3193
    %4809 = vmatprep.subr.mxu0 %v3199
    %4810 = vmatpush1.msra.mxu0 %v3198
    %4811 = vmatprep.subr.mxu0 %v3204
    %4812 = vmatpush1.msra.mxu0 %v3203
    %4813 = vmatprep.subr.mxu0 %v3209
    %4814 = vmatpush1.msra.mxu0 %v3208
    %4815 = vmatprep.subr.mxu0 %v3214
    %4816 = vmatpush1.msra.mxu0 %v3213
    %4817 = vmatprep.subr.mxu0 %v3219
    %4818 = vmatpush1.msra.mxu0 %v3218
    %4819 = vmatprep.subr.mxu0 %v3224
    %4820 = vmatpush1.msra.mxu0 %v3223
    %4821 = vmatprep.subr.mxu0 %v3229
    %4822 = vmatpush1.msra.mxu0 %v3228
    %4823 = vmatprep.subr.mxu0 %v3234
    %4824 = vmatpush1.msra.mxu0 %v3233
    %4825 = vmatprep.subr.mxu0 %v3239
    %4826 = vmatpush1.msra.mxu0 %v3238
    %4827 = vmatprep.subr.mxu0 %v3244
    %4828 = vmatpush1.msra.mxu0 %v3243
    %4829 = vmatprep.subr.mxu0 %v3249
    %4830 = vmatpush1.msra.mxu0 %v3248
    %4831 = vmatprep.subr.mxu0 %v3254
    %4832 = vmatpush1.msra.mxu0 %v3253
    %4833 = vmatprep.subr.mxu0 %v3259
    %4834 = vmatpush1.msra.mxu0 %v3258
    %4835 = vmatprep.subr.mxu0 %v3264
    %4836 = vmatpush1.msra.mxu0 %v3263
    %4837 = vmatprep.subr.mxu0 %v3269
    %4838 = vmatpush1.msra.mxu0 %v3268
    %4839 = vmatprep.subr.mxu0 %v3274
    %4840 = vmatpush1.msra.mxu0 %v3273
    %4841 = vmatprep.mubr.f32.mxu0 %v2309
    %4842 = vmatmul.mubr.f32.gmra.mrb[0].mxu0 %v2308
    %v4843 = vpop.f32.mrb[0].mxu0
    %v4844 = vadd.f32 %v4773, %v4843
    %v4845 = vpop.f32.mrb[0].mxu0
    %v4846 = vadd.f32 %v4775, %v4845
    %4847 = vdwg.mxu0
    %4848 = vmatprep.subr.mxu0 %v3279
    %4849 = vmatpush1.msra.mxu0 %v3278
    %4850 = vmatprep.subr.mxu0 %v3284
    %4851 = vmatpush1.msra.mxu0 %v3283
    %4852 = vmatprep.subr.mxu0 %v3289
    %4853 = vmatpush1.msra.mxu0 %v3288
    %4854 = vmatprep.subr.mxu0 %v3294
    %4855 = vmatpush1.msra.mxu0 %v3293
    %4856 = vmatprep.subr.mxu0 %v3299
    %4857 = vmatpush1.msra.mxu0 %v3298
    %4858 = vmatprep.subr.mxu0 %v3304
    %4859 = vmatpush1.msra.mxu0 %v3303
    %4860 = vmatprep.subr.mxu0 %v3309
    %4861 = vmatpush1.msra.mxu0 %v3308
    %4862 = vmatprep.subr.mxu0 %v3314
    %4863 = vmatpush1.msra.mxu0 %v3313
    %4864 = vmatprep.subr.mxu0 %v3319
    %4865 = vmatpush1.msra.mxu0 %v3318
    %4866 = vmatprep.subr.mxu0 %v3324
    %4867 = vmatpush1.msra.mxu0 %v3323
    %4868 = vmatprep.subr.mxu0 %v3329
    %4869 = vmatpush1.msra.mxu0 %v3328
    %4870 = vmatprep.subr.mxu0 %v3334
    %4871 = vmatpush1.msra.mxu0 %v3333
    %4872 = vmatprep.subr.mxu0 %v3339
    %4873 = vmatpush1.msra.mxu0 %v3338
    %4874 = vmatprep.subr.mxu0 %v3344
    %4875 = vmatpush1.msra.mxu0 %v3343
    %4876 = vmatprep.subr.mxu0 %v3349
    %4877 = vmatpush1.msra.mxu0 %v3348
    %4878 = vmatprep.subr.mxu0 %v3354
    %4879 = vmatpush1.msra.mxu0 %v3353
    %4880 = vmatprep.subr.mxu0 %v3359
    %4881 = vmatpush1.msra.mxu0 %v3358
    %4882 = vmatprep.subr.mxu0 %v3364
    %4883 = vmatpush1.msra.mxu0 %v3363
    %4884 = vmatprep.subr.mxu0 %v3369
    %4885 = vmatpush1.msra.mxu0 %v3368
    %4886 = vmatprep.subr.mxu0 %v3374
    %4887 = vmatpush1.msra.mxu0 %v3373
    %4888 = vmatprep.subr.mxu0 %v3379
    %4889 = vmatpush1.msra.mxu0 %v3378
    %4890 = vmatprep.subr.mxu0 %v3384
    %4891 = vmatpush1.msra.mxu0 %v3383
    %4892 = vmatprep.subr.mxu0 %v3389
    %4893 = vmatpush1.msra.mxu0 %v3388
    %4894 = vmatprep.subr.mxu0 %v3394
    %4895 = vmatpush1.msra.mxu0 %v3393
    %4896 = vmatprep.subr.mxu0 %v3399
    %4897 = vmatpush1.msra.mxu0 %v3398
    %4898 = vmatprep.subr.mxu0 %v3404
    %4899 = vmatpush1.msra.mxu0 %v3403
    %4900 = vmatprep.subr.mxu0 %v3409
    %4901 = vmatpush1.msra.mxu0 %v3408
    %4902 = vmatprep.subr.mxu0 %v3414
    %4903 = vmatpush1.msra.mxu0 %v3413
    %4904 = vmatprep.subr.mxu0 %v3419
    %4905 = vmatpush1.msra.mxu0 %v3418
    %4906 = vmatprep.subr.mxu0 %v3424
    %4907 = vmatpush1.msra.mxu0 %v3423
    %4908 = vmatprep.subr.mxu0 %v3429
    %4909 = vmatpush1.msra.mxu0 %v3428
    %4910 = vmatprep.subr.mxu0 %v3434
    %4911 = vmatpush1.msra.mxu0 %v3433
    %4912 = vmatprep.mubr.f32.mxu0 %v2311
    %4913 = vmatmul.mubr.f32.gmra.mrb[0].mxu0 %v2310
    %v4914 = vpop.f32.mrb[0].mxu0
    %v4915 = vadd.f32 %v4844, %v4914
    %v4916 = vpop.f32.mrb[0].mxu0
    %v4917 = vadd.f32 %v4846, %v4916
    %4918 = vdwg.mxu0
    %4919 = vmatprep.subr.mxu0 %v3439
    %4920 = vmatpush1.msra.mxu0 %v3438
    %4921 = vmatprep.subr.mxu0 %v3444
    %4922 = vmatpush1.msra.mxu0 %v3443
    %4923 = vmatprep.subr.mxu0 %v3449
    %4924 = vmatpush1.msra.mxu0 %v3448
    %4925 = vmatprep.subr.mxu0 %v3454
    %4926 = vmatpush1.msra.mxu0 %v3453
    %4927 = vmatprep.subr.mxu0 %v3459
    %4928 = vmatpush1.msra.mxu0 %v3458
    %4929 = vmatprep.subr.mxu0 %v3464
    %4930 = vmatpush1.msra.mxu0 %v3463
    %4931 = vmatprep.subr.mxu0 %v3469
    %4932 = vmatpush1.msra.mxu0 %v3468
    %4933 = vmatprep.subr.mxu0 %v3474
    %4934 = vmatpush1.msra.mxu0 %v3473
    %4935 = vmatprep.subr.mxu0 %v3479
    %4936 = vmatpush1.msra.mxu0 %v3478
    %4937 = vmatprep.subr.mxu0 %v3484
    %4938 = vmatpush1.msra.mxu0 %v3483
    %4939 = vmatprep.subr.mxu0 %v3489
    %4940 = vmatpush1.msra.mxu0 %v3488
    %4941 = vmatprep.subr.mxu0 %v3494
    %4942 = vmatpush1.msra.mxu0 %v3493
    %4943 = vmatprep.subr.mxu0 %v3499
    %4944 = vmatpush1.msra.mxu0 %v3498
    %4945 = vmatprep.subr.mxu0 %v3504
    %4946 = vmatpush1.msra.mxu0 %v3503
    %4947 = vmatprep.subr.mxu0 %v3509
    %4948 = vmatpush1.msra.mxu0 %v3508
    %4949 = vmatprep.subr.mxu0 %v3514
    %4950 = vmatpush1.msra.mxu0 %v3513
    %4951 = vmatprep.subr.mxu0 %v3519
    %4952 = vmatpush1.msra.mxu0 %v3518
    %4953 = vmatprep.subr.mxu0 %v3524
    %4954 = vmatpush1.msra.mxu0 %v3523
    %4955 = vmatprep.subr.mxu0 %v3529
    %4956 = vmatpush1.msra.mxu0 %v3528
    %4957 = vmatprep.subr.mxu0 %v3534
    %4958 = vmatpush1.msra.mxu0 %v3533
    %4959 = vmatprep.subr.mxu0 %v3539
    %4960 = vmatpush1.msra.mxu0 %v3538
    %4961 = vmatprep.subr.mxu0 %v3544
    %4962 = vmatpush1.msra.mxu0 %v3543
    %4963 = vmatprep.subr.mxu0 %v3549
    %4964 = vmatpush1.msra.mxu0 %v3548
    %4965 = vmatprep.subr.mxu0 %v3554
    %4966 = vmatpush1.msra.mxu0 %v3553
    %4967 = vmatprep.subr.mxu0 %v3559
    %4968 = vmatpush1.msra.mxu0 %v3558
    %4969 = vmatprep.subr.mxu0 %v3564
    %4970 = vmatpush1.msra.mxu0 %v3563
    %4971 = vmatprep.subr.mxu0 %v3569
    %4972 = vmatpush1.msra.mxu0 %v3568
    %4973 = vmatprep.subr.mxu0 %v3574
    %4974 = vmatpush1.msra.mxu0 %v3573
    %4975 = vmatprep.subr.mxu0 %v3579
    %4976 = vmatpush1.msra.mxu0 %v3578
    %4977 = vmatprep.subr.mxu0 %v3584
    %4978 = vmatpush1.msra.mxu0 %v3583
    %4979 = vmatprep.subr.mxu0 %v3589
    %4980 = vmatpush1.msra.mxu0 %v3588
    %4981 = vmatprep.subr.mxu0 %v3594
    %4982 = vmatpush1.msra.mxu0 %v3593
    %4983 = vmatprep.mubr.f32.mxu0 %v2313
    %4984 = vmatmul.mubr.f32.gmra.mrb[0].mxu0 %v2312
    %v4985 = vpop.f32.mrb[0].mxu0
    %v4986 = vadd.f32 %v4915, %v4985
    %v4987 = vpop.f32.mrb[0].mxu0
    %v4988 = vadd.f32 %v4917, %v4987
    %4989 = vdwg.mxu0
    %4990 = vmatprep.subr.mxu0 %v3599
    %4991 = vmatpush1.msra.mxu0 %v3598
    %4992 = vmatprep.subr.mxu0 %v3604
    %4993 = vmatpush1.msra.mxu0 %v3603
    %4994 = vmatprep.subr.mxu0 %v3609
    %4995 = vmatpush1.msra.mxu0 %v3608
    %4996 = vmatprep.subr.mxu0 %v3614
    %4997 = vmatpush1.msra.mxu0 %v3613
    %4998 = vmatprep.subr.mxu0 %v3619
    %4999 = vmatpush1.msra.mxu0 %v3618
    %5000 = vmatprep.subr.mxu0 %v3624
    %5001 = vmatpush1.msra.mxu0 %v3623
    %5002 = vmatprep.subr.mxu0 %v3629
    %5003 = vmatpush1.msra.mxu0 %v3628
    %5004 = vmatprep.subr.mxu0 %v3634
    %5005 = vmatpush1.msra.mxu0 %v3633
    %5006 = vmatprep.subr.mxu0 %v3639
    %5007 = vmatpush1.msra.mxu0 %v3638
    %5008 = vmatprep.subr.mxu0 %v3644
    %5009 = vmatpush1.msra.mxu0 %v3643
    %5010 = vmatprep.subr.mxu0 %v3649
    %5011 = vmatpush1.msra.mxu0 %v3648
    %5012 = vmatprep.subr.mxu0 %v3654
    %5013 = vmatpush1.msra.mxu0 %v3653
    %5014 = vmatprep.subr.mxu0 %v3659
    %5015 = vmatpush1.msra.mxu0 %v3658
    %5016 = vmatprep.subr.mxu0 %v3664
    %5017 = vmatpush1.msra.mxu0 %v3663
    %5018 = vmatprep.subr.mxu0 %v3669
    %5019 = vmatpush1.msra.mxu0 %v3668
    %5020 = vmatprep.subr.mxu0 %v3674
    %5021 = vmatpush1.msra.mxu0 %v3673
    %5022 = vmatprep.subr.mxu0 %v3679
    %5023 = vmatpush1.msra.mxu0 %v3678
    %5024 = vmatprep.subr.mxu0 %v3684
    %5025 = vmatpush1.msra.mxu0 %v3683
    %5026 = vmatprep.subr.mxu0 %v3689
    %5027 = vmatpush1.msra.mxu0 %v3688
    %5028 = vmatprep.subr.mxu0 %v3694
    %5029 = vmatpush1.msra.mxu0 %v3693
    %5030 = vmatprep.subr.mxu0 %v3699
    %5031 = vmatpush1.msra.mxu0 %v3698
    %5032 = vmatprep.subr.mxu0 %v3704
    %5033 = vmatpush1.msra.mxu0 %v3703
    %5034 = vmatprep.subr.mxu0 %v3709
    %5035 = vmatpush1.msra.mxu0 %v3708
    %5036 = vmatprep.subr.mxu0 %v3714
    %5037 = vmatpush1.msra.mxu0 %v3713
    %5038 = vmatprep.subr.mxu0 %v3719
    %5039 = vmatpush1.msra.mxu0 %v3718
    %5040 = vmatprep.subr.mxu0 %v3724
    %5041 = vmatpush1.msra.mxu0 %v3723
    %5042 = vmatprep.subr.mxu0 %v3729
    %5043 = vmatpush1.msra.mxu0 %v3728
    %5044 = vmatprep.subr.mxu0 %v3734
    %5045 = vmatpush1.msra.mxu0 %v3733
    %5046 = vmatprep.subr.mxu0 %v3739
    %5047 = vmatpush1.msra.mxu0 %v3738
    %5048 = vmatprep.subr.mxu0 %v3744
    %5049 = vmatpush1.msra.mxu0 %v3743
    %5050 = vmatprep.subr.mxu0 %v3749
    %5051 = vmatpush1.msra.mxu0 %v3748
    %5052 = vmatprep.subr.mxu0 %v3754
    %5053 = vmatpush1.msra.mxu0 %v3753
    %5054 = vmatprep.mubr.f32.mxu0 %v2315
    %5055 = vmatmul.mubr.f32.gmra.mrb[0].mxu0 %v2314
    %v5056 = vpop.f32.mrb[0].mxu0
    %v5057 = vadd.f32 %v4986, %v5056
    %v5058 = vpop.f32.mrb[0].mxu0
    %v5059 = vadd.f32 %v4988, %v5058
    %5060 = vdwg.mxu0
    %5061 = vmatprep.subr.mxu0 0.0
    %5062 = vmatpush1.msra.mxu0 %v2320
    %5063 = vmatprep.subr.mxu0 0.0
    %5064 = vmatpush1.msra.mxu0 %v2325
    %5065 = vmatprep.subr.mxu0 0.0
    %5066 = vmatpush1.msra.mxu0 %v2330
    %5067 = vmatprep.subr.mxu0 0.0
    %5068 = vmatpush1.msra.mxu0 %v2335
    %5069 = vmatprep.subr.mxu0 0.0
    %5070 = vmatpush1.msra.mxu0 %v2340
    %5071 = vmatprep.subr.mxu0 0.0
    %5072 = vmatpush1.msra.mxu0 %v2345
    %5073 = vmatprep.subr.mxu0 0.0
    %5074 = vmatpush1.msra.mxu0 %v2350
    %5075 = vmatprep.subr.mxu0 0.0
    %5076 = vmatpush1.msra.mxu0 %v2355
    %5077 = vmatprep.subr.mxu0 0.0
    %5078 = vmatpush1.msra.mxu0 %v2360
    %5079 = vmatprep.subr.mxu0 0.0
    %5080 = vmatpush1.msra.mxu0 %v2365
    %5081 = vmatprep.subr.mxu0 0.0
    %5082 = vmatpush1.msra.mxu0 %v2370
    %5083 = vmatprep.subr.mxu0 0.0
    %5084 = vmatpush1.msra.mxu0 %v2375
    %5085 = vmatprep.subr.mxu0 0.0
    %5086 = vmatpush1.msra.mxu0 %v2380
    %5087 = vmatprep.subr.mxu0 0.0
    %5088 = vmatpush1.msra.mxu0 %v2385
    %5089 = vmatprep.subr.mxu0 0.0
    %5090 = vmatpush1.msra.mxu0 %v2390
    %5091 = vmatprep.subr.mxu0 0.0
    %5092 = vmatpush1.msra.mxu0 %v2395
    %5093 = vmatprep.subr.mxu0 0.0
    %5094 = vmatpush1.msra.mxu0 %v2400
    %5095 = vmatprep.subr.mxu0 0.0
    %5096 = vmatpush1.msra.mxu0 %v2405
    %5097 = vmatprep.subr.mxu0 0.0
    %5098 = vmatpush1.msra.mxu0 %v2410
    %5099 = vmatprep.subr.mxu0 0.0
    %5100 = vmatpush1.msra.mxu0 %v2415
    %5101 = vmatprep.subr.mxu0 0.0
    %5102 = vmatpush1.msra.mxu0 %v2420
    %5103 = vmatprep.subr.mxu0 0.0
    %5104 = vmatpush1.msra.mxu0 %v2425
    %5105 = vmatprep.subr.mxu0 0.0
    %5106 = vmatpush1.msra.mxu0 %v2430
    %5107 = vmatprep.subr.mxu0 0.0
    %5108 = vmatpush1.msra.mxu0 %v2435
    %5109 = vmatprep.subr.mxu0 0.0
    %5110 = vmatpush1.msra.mxu0 %v2440
    %5111 = vmatprep.subr.mxu0 0.0
    %5112 = vmatpush1.msra.mxu0 %v2445
    %5113 = vmatprep.subr.mxu0 0.0
    %5114 = vmatpush1.msra.mxu0 %v2450
    %5115 = vmatprep.subr.mxu0 0.0
    %5116 = vmatpush1.msra.mxu0 %v2455
    %5117 = vmatprep.subr.mxu0 0.0
    %5118 = vmatpush1.msra.mxu0 %v2460
    %5119 = vmatprep.subr.mxu0 0.0
    %5120 = vmatpush1.msra.mxu0 %v2465
    %5121 = vmatprep.subr.mxu0 0.0
    %5122 = vmatpush1.msra.mxu0 %v2470
    %5123 = vmatprep.subr.mxu0 0.0
    %5124 = vmatpush1.msra.mxu0 %v2475
    %5125 = vmatprep.mubr.f32.mxu0 %v2299
    %5126 = vmatmul.mubr.f32.gmra.mrb[0].mxu0 %v2298
    %v5127 = vpop.f32.mrb[0].mxu0
    %v5128 = vadd.f32 %v3777, %v5127
    %v5129 = vpop.f32.mrb[0].mxu0
    %5130 = vdwg.mxu0
    %5131 = vmatprep.subr.mxu0 0.0
    %5132 = vmatpush1.msra.mxu0 %v2480
    %5133 = vmatprep.subr.mxu0 0.0
    %5134 = vmatpush1.msra.mxu0 %v2485
    %5135 = vmatprep.subr.mxu0 0.0
    %5136 = vmatpush1.msra.mxu0 %v2490
    %5137 = vmatprep.subr.mxu0 0.0
    %5138 = vmatpush1.msra.mxu0 %v2495
    %5139 = vmatprep.subr.mxu0 0.0
    %5140 = vmatpush1.msra.mxu0 %v2500
    %5141 = vmatprep.subr.mxu0 0.0
    %5142 = vmatpush1.msra.mxu0 %v2505
    %5143 = vmatprep.subr.mxu0 0.0
    %5144 = vmatpush1.msra.mxu0 %v2510
    %5145 = vmatprep.subr.mxu0 0.0
    %5146 = vmatpush1.msra.mxu0 %v2515
    %5147 = vmatprep.subr.mxu0 0.0
    %5148 = vmatpush1.msra.mxu0 %v2520
    %5149 = vmatprep.subr.mxu0 0.0
    %5150 = vmatpush1.msra.mxu0 %v2525
    %5151 = vmatprep.subr.mxu0 0.0
    %5152 = vmatpush1.msra.mxu0 %v2530
    %5153 = vmatprep.subr.mxu0 0.0
    %5154 = vmatpush1.msra.mxu0 %v2535
    %5155 = vmatprep.subr.mxu0 0.0
    %5156 = vmatpush1.msra.mxu0 %v2540
    %5157 = vmatprep.subr.mxu0 0.0
    %5158 = vmatpush1.msra.mxu0 %v2545
    %5159 = vmatprep.subr.mxu0 0.0
    %5160 = vmatpush1.msra.mxu0 %v2550
    %5161 = vmatprep.subr.mxu0 0.0
    %5162 = vmatpush1.msra.mxu0 %v2555
    %5163 = vmatprep.subr.mxu0 0.0
    %5164 = vmatpush1.msra.mxu0 %v2560
    %5165 = vmatprep.subr.mxu0 0.0
    %5166 = vmatpush1.msra.mxu0 %v2565
    %5167 = vmatprep.subr.mxu0 0.0
    %5168 = vmatpush1.msra.mxu0 %v2570
    %5169 = vmatprep.subr.mxu0 0.0
    %5170 = vmatpush1.msra.mxu0 %v2575
    %5171 = vmatprep.subr.mxu0 0.0
    %5172 = vmatpush1.msra.mxu0 %v2580
    %5173 = vmatprep.subr.mxu0 0.0
    %5174 = vmatpush1.msra.mxu0 %v2585
    %5175 = vmatprep.subr.mxu0 0.0
    %5176 = vmatpush1.msra.mxu0 %v2590
    %5177 = vmatprep.subr.mxu0 0.0
    %5178 = vmatpush1.msra.mxu0 %v2595
    %5179 = vmatprep.subr.mxu0 0.0
    %5180 = vmatpush1.msra.mxu0 %v2600
    %5181 = vmatprep.subr.mxu0 0.0
    %5182 = vmatpush1.msra.mxu0 %v2605
    %5183 = vmatprep.subr.mxu0 0.0
    %5184 = vmatpush1.msra.mxu0 %v2610
    %5185 = vmatprep.subr.mxu0 0.0
    %5186 = vmatpush1.msra.mxu0 %v2615
    %5187 = vmatprep.subr.mxu0 0.0
    %5188 = vmatpush1.msra.mxu0 %v2620
    %5189 = vmatprep.subr.mxu0 0.0
    %5190 = vmatpush1.msra.mxu0 %v2625
    %5191 = vmatprep.subr.mxu0 0.0
    %5192 = vmatpush1.msra.mxu0 %v2630
    %5193 = vmatprep.subr.mxu0 0.0
    %5194 = vmatpush1.msra.mxu0 %v2635
    %5195 = vmatprep.mubr.f32.mxu0 %v2301
    %5196 = vmatmul.mubr.f32.gmra.mrb[0].mxu0 %v2300
    %v5197 = vpop.f32.mrb[0].mxu0
    %v5198 = vadd.f32 %v5128, %v5197
    %v5199 = vpop.f32.mrb[0].mxu0
    %5200 = vdwg.mxu0
    %5201 = vmatprep.subr.mxu0 0.0
    %5202 = vmatpush1.msra.mxu0 %v2640
    %5203 = vmatprep.subr.mxu0 0.0
    %5204 = vmatpush1.msra.mxu0 %v2645
    %5205 = vmatprep.subr.mxu0 0.0
    %5206 = vmatpush1.msra.mxu0 %v2650
    %5207 = vmatprep.subr.mxu0 0.0
    %5208 = vmatpush1.msra.mxu0 %v2655
    %5209 = vmatprep.subr.mxu0 0.0
    %5210 = vmatpush1.msra.mxu0 %v2660
    %5211 = vmatprep.subr.mxu0 0.0
    %5212 = vmatpush1.msra.mxu0 %v2665
    %5213 = vmatprep.subr.mxu0 0.0
    %5214 = vmatpush1.msra.mxu0 %v2670
    %5215 = vmatprep.subr.mxu0 0.0
    %5216 = vmatpush1.msra.mxu0 %v2675
    %5217 = vmatprep.subr.mxu0 0.0
    %5218 = vmatpush1.msra.mxu0 %v2680
    %5219 = vmatprep.subr.mxu0 0.0
    %5220 = vmatpush1.msra.mxu0 %v2685
    %5221 = vmatprep.subr.mxu0 0.0
    %5222 = vmatpush1.msra.mxu0 %v2690
    %5223 = vmatprep.subr.mxu0 0.0
    %5224 = vmatpush1.msra.mxu0 %v2695
    %5225 = vmatprep.subr.mxu0 0.0
    %5226 = vmatpush1.msra.mxu0 %v2700
    %5227 = vmatprep.subr.mxu0 0.0
    %5228 = vmatpush1.msra.mxu0 %v2705
    %5229 = vmatprep.subr.mxu0 0.0
    %5230 = vmatpush1.msra.mxu0 %v2710
    %5231 = vmatprep.subr.mxu0 0.0
    %5232 = vmatpush1.msra.mxu0 %v2715
    %5233 = vmatprep.subr.mxu0 0.0
    %5234 = vmatpush1.msra.mxu0 %v2720
    %5235 = vmatprep.subr.mxu0 0.0
    %5236 = vmatpush1.msra.mxu0 %v2725
    %5237 = vmatprep.subr.mxu0 0.0
    %5238 = vmatpush1.msra.mxu0 %v2730
    %5239 = vmatprep.subr.mxu0 0.0
    %5240 = vmatpush1.msra.mxu0 %v2735
    %5241 = vmatprep.subr.mxu0 0.0
    %5242 = vmatpush1.msra.mxu0 %v2740
    %5243 = vmatprep.subr.mxu0 0.0
    %5244 = vmatpush1.msra.mxu0 %v2745
    %5245 = vmatprep.subr.mxu0 0.0
    %5246 = vmatpush1.msra.mxu0 %v2750
    %5247 = vmatprep.subr.mxu0 0.0
    %5248 = vmatpush1.msra.mxu0 %v2755
    %5249 = vmatprep.subr.mxu0 0.0
    %5250 = vmatpush1.msra.mxu0 %v2760
    %5251 = vmatprep.subr.mxu0 0.0
    %5252 = vmatpush1.msra.mxu0 %v2765
    %5253 = vmatprep.subr.mxu0 0.0
    %5254 = vmatpush1.msra.mxu0 %v2770
    %5255 = vmatprep.subr.mxu0 0.0
    %5256 = vmatpush1.msra.mxu0 %v2775
    %5257 = vmatprep.subr.mxu0 0.0
    %5258 = vmatpush1.msra.mxu0 %v2780
    %5259 = vmatprep.subr.mxu0 0.0
    %5260 = vmatpush1.msra.mxu0 %v2785
    %5261 = vmatprep.subr.mxu0 0.0
    %5262 = vmatpush1.msra.mxu0 %v2790
    %5263 = vmatprep.subr.mxu0 0.0
    %5264 = vmatpush1.msra.mxu0 %v2795
    %5265 = vmatprep.mubr.f32.mxu0 %v2303
    %5266 = vmatmul.mubr.f32.gmra.mrb[0].mxu0 %v2302
    %v5267 = vpop.f32.mrb[0].mxu0
    %v5268 = vadd.f32 %v5198, %v5267
    %v5269 = vpop.f32.mrb[0].mxu0
    %5270 = vdwg.mxu0
    %5271 = vmatprep.subr.mxu0 0.0
    %5272 = vmatpush1.msra.mxu0 %v2800
    %5273 = vmatprep.subr.mxu0 0.0
    %5274 = vmatpush1.msra.mxu0 %v2805
    %5275 = vmatprep.subr.mxu0 0.0
    %5276 = vmatpush1.msra.mxu0 %v2810
    %5277 = vmatprep.subr.mxu0 0.0
    %5278 = vmatpush1.msra.mxu0 %v2815
    %5279 = vmatprep.subr.mxu0 0.0
    %5280 = vmatpush1.msra.mxu0 %v2820
    %5281 = vmatprep.subr.mxu0 0.0
    %5282 = vmatpush1.msra.mxu0 %v2825
    %5283 = vmatprep.subr.mxu0 0.0
    %5284 = vmatpush1.msra.mxu0 %v2830
    %5285 = vmatprep.subr.mxu0 0.0
    %5286 = vmatpush1.msra.mxu0 %v2835
    %5287 = vmatprep.subr.mxu0 0.0
    %5288 = vmatpush1.msra.mxu0 %v2840
    %5289 = vmatprep.subr.mxu0 0.0
    %5290 = vmatpush1.msra.mxu0 %v2845
    %5291 = vmatprep.subr.mxu0 0.0
    %5292 = vmatpush1.msra.mxu0 %v2850
    %5293 = vmatprep.subr.mxu0 0.0
    %5294 = vmatpush1.msra.mxu0 %v2855
    %5295 = vmatprep.subr.mxu0 0.0
    %5296 = vmatpush1.msra.mxu0 %v2860
    %5297 = vmatprep.subr.mxu0 0.0
    %5298 = vmatpush1.msra.mxu0 %v2865
    %5299 = vmatprep.subr.mxu0 0.0
    %5300 = vmatpush1.msra.mxu0 %v2870
    %5301 = vmatprep.subr.mxu0 0.0
    %5302 = vmatpush1.msra.mxu0 %v2875
    %5303 = vmatprep.subr.mxu0 0.0
    %5304 = vmatpush1.msra.mxu0 %v2880
    %5305 = vmatprep.subr.mxu0 0.0
    %5306 = vmatpush1.msra.mxu0 %v2885
    %5307 = vmatprep.subr.mxu0 0.0
    %5308 = vmatpush1.msra.mxu0 %v2890
    %5309 = vmatprep.subr.mxu0 0.0
    %5310 = vmatpush1.msra.mxu0 %v2895
    %5311 = vmatprep.subr.mxu0 0.0
    %5312 = vmatpush1.msra.mxu0 %v2900
    %5313 = vmatprep.subr.mxu0 0.0
    %5314 = vmatpush1.msra.mxu0 %v2905
    %5315 = vmatprep.subr.mxu0 0.0
    %5316 = vmatpush1.msra.mxu0 %v2910
    %5317 = vmatprep.subr.mxu0 0.0
    %5318 = vmatpush1.msra.mxu0 %v2915
    %5319 = vmatprep.subr.mxu0 0.0
    %5320 = vmatpush1.msra.mxu0 %v2920
    %5321 = vmatprep.subr.mxu0 0.0
    %5322 = vmatpush1.msra.mxu0 %v2925
    %5323 = vmatprep.subr.mxu0 0.0
    %5324 = vmatpush1.msra.mxu0 %v2930
    %5325 = vmatprep.subr.mxu0 0.0
    %5326 = vmatpush1.msra.mxu0 %v2935
    %5327 = vmatprep.subr.mxu0 0.0
    %5328 = vmatpush1.msra.mxu0 %v2940
    %5329 = vmatprep.subr.mxu0 0.0
    %5330 = vmatpush1.msra.mxu0 %v2945
    %5331 = vmatprep.subr.mxu0 0.0
    %5332 = vmatpush1.msra.mxu0 %v2950
    %5333 = vmatprep.subr.mxu0 0.0
    %5334 = vmatpush1.msra.mxu0 %v2955
    %5335 = vmatprep.mubr.f32.mxu0 %v2305
    %5336 = vmatmul.mubr.f32.gmra.mrb[0].mxu0 %v2304
    %v5337 = vpop.f32.mrb[0].mxu0
    %v5338 = vadd.f32 %v5268, %v5337
    %v5339 = vpop.f32.mrb[0].mxu0
    %5340 = vdwg.mxu0
    %5341 = vmatprep.subr.mxu0 0.0
    %5342 = vmatpush1.msra.mxu0 %v2960
    %5343 = vmatprep.subr.mxu0 0.0
    %5344 = vmatpush1.msra.mxu0 %v2965
    %5345 = vmatprep.subr.mxu0 0.0
    %5346 = vmatpush1.msra.mxu0 %v2970
    %5347 = vmatprep.subr.mxu0 0.0
    %5348 = vmatpush1.msra.mxu0 %v2975
    %5349 = vmatprep.subr.mxu0 0.0
    %5350 = vmatpush1.msra.mxu0 %v2980
    %5351 = vmatprep.subr.mxu0 0.0
    %5352 = vmatpush1.msra.mxu0 %v2985
    %5353 = vmatprep.subr.mxu0 0.0
    %5354 = vmatpush1.msra.mxu0 %v2990
    %5355 = vmatprep.subr.mxu0 0.0
    %5356 = vmatpush1.msra.mxu0 %v2995
    %5357 = vmatprep.subr.mxu0 0.0
    %5358 = vmatpush1.msra.mxu0 %v3000
    %5359 = vmatprep.subr.mxu0 0.0
    %5360 = vmatpush1.msra.mxu0 %v3005
    %5361 = vmatprep.subr.mxu0 0.0
    %5362 = vmatpush1.msra.mxu0 %v3010
    %5363 = vmatprep.subr.mxu0 0.0
    %5364 = vmatpush1.msra.mxu0 %v3015
    %5365 = vmatprep.subr.mxu0 0.0
    %5366 = vmatpush1.msra.mxu0 %v3020
    %5367 = vmatprep.subr.mxu0 0.0
    %5368 = vmatpush1.msra.mxu0 %v3025
    %5369 = vmatprep.subr.mxu0 0.0
    %5370 = vmatpush1.msra.mxu0 %v3030
    %5371 = vmatprep.subr.mxu0 0.0
    %5372 = vmatpush1.msra.mxu0 %v3035
    %5373 = vmatprep.subr.mxu0 0.0
    %5374 = vmatpush1.msra.mxu0 %v3040
    %5375 = vmatprep.subr.mxu0 0.0
    %5376 = vmatpush1.msra.mxu0 %v3045
    %5377 = vmatprep.subr.mxu0 0.0
    %5378 = vmatpush1.msra.mxu0 %v3050
    %5379 = vmatprep.subr.mxu0 0.0
    %5380 = vmatpush1.msra.mxu0 %v3055
    %5381 = vmatprep.subr.mxu0 0.0
    %5382 = vmatpush1.msra.mxu0 %v3060
    %5383 = vmatprep.subr.mxu0 0.0
    %5384 = vmatpush1.msra.mxu0 %v3065
    %5385 = vmatprep.subr.mxu0 0.0
    %5386 = vmatpush1.msra.mxu0 %v3070
    %5387 = vmatprep.subr.mxu0 0.0
    %5388 = vmatpush1.msra.mxu0 %v3075
    %5389 = vmatprep.subr.mxu0 0.0
    %5390 = vmatpush1.msra.mxu0 %v3080
    %5391 = vmatprep.subr.mxu0 0.0
    %5392 = vmatpush1.msra.mxu0 %v3085
    %5393 = vmatprep.subr.mxu0 0.0
    %5394 = vmatpush1.msra.mxu0 %v3090
    %5395 = vmatprep.subr.mxu0 0.0
    %5396 = vmatpush1.msra.mxu0 %v3095
    %5397 = vmatprep.subr.mxu0 0.0
    %5398 = vmatpush1.msra.mxu0 %v3100
    %5399 = vmatprep.subr.mxu0 0.0
    %5400 = vmatpush1.msra.mxu0 %v3105
    %5401 = vmatprep.subr.mxu0 0.0
    %5402 = vmatpush1.msra.mxu0 %v3110
    %5403 = vmatprep.subr.mxu0 0.0
    %5404 = vmatpush1.msra.mxu0 %v3115
    %5405 = vmatprep.mubr.f32.mxu0 %v2307
    %5406 = vmatmul.mubr.f32.gmra.mrb[0].mxu0 %v2306
    %v5407 = vpop.f32.mrb[0].mxu0
    %v5408 = vadd.f32 %v5338, %v5407
    %v5409 = vpop.f32.mrb[0].mxu0
    %5410 = vdwg.mxu0
    %5411 = vmatprep.subr.mxu0 0.0
    %5412 = vmatpush1.msra.mxu0 %v3120
    %5413 = vmatprep.subr.mxu0 0.0
    %5414 = vmatpush1.msra.mxu0 %v3125
    %5415 = vmatprep.subr.mxu0 0.0
    %5416 = vmatpush1.msra.mxu0 %v3130
    %5417 = vmatprep.subr.mxu0 0.0
    %5418 = vmatpush1.msra.mxu0 %v3135
    %5419 = vmatprep.subr.mxu0 0.0
    %5420 = vmatpush1.msra.mxu0 %v3140
    %5421 = vmatprep.subr.mxu0 0.0
    %5422 = vmatpush1.msra.mxu0 %v3145
    %5423 = vmatprep.subr.mxu0 0.0
    %5424 = vmatpush1.msra.mxu0 %v3150
    %5425 = vmatprep.subr.mxu0 0.0
    %5426 = vmatpush1.msra.mxu0 %v3155
    %5427 = vmatprep.subr.mxu0 0.0
    %5428 = vmatpush1.msra.mxu0 %v3160
    %5429 = vmatprep.subr.mxu0 0.0
    %5430 = vmatpush1.msra.mxu0 %v3165
    %5431 = vmatprep.subr.mxu0 0.0
    %5432 = vmatpush1.msra.mxu0 %v3170
    %5433 = vmatprep.subr.mxu0 0.0
    %5434 = vmatpush1.msra.mxu0 %v3175
    %5435 = vmatprep.subr.mxu0 0.0
    %5436 = vmatpush1.msra.mxu0 %v3180
    %5437 = vmatprep.subr.mxu0 0.0
    %5438 = vmatpush1.msra.mxu0 %v3185
    %5439 = vmatprep.subr.mxu0 0.0
    %5440 = vmatpush1.msra.mxu0 %v3190
    %5441 = vmatprep.subr.mxu0 0.0
    %5442 = vmatpush1.msra.mxu0 %v3195
    %5443 = vmatprep.subr.mxu0 0.0
    %5444 = vmatpush1.msra.mxu0 %v3200
    %5445 = vmatprep.subr.mxu0 0.0
    %5446 = vmatpush1.msra.mxu0 %v3205
    %5447 = vmatprep.subr.mxu0 0.0
    %5448 = vmatpush1.msra.mxu0 %v3210
    %5449 = vmatprep.subr.mxu0 0.0
    %5450 = vmatpush1.msra.mxu0 %v3215
    %5451 = vmatprep.subr.mxu0 0.0
    %5452 = vmatpush1.msra.mxu0 %v3220
    %5453 = vmatprep.subr.mxu0 0.0
    %5454 = vmatpush1.msra.mxu0 %v3225
    %5455 = vmatprep.subr.mxu0 0.0
    %5456 = vmatpush1.msra.mxu0 %v3230
    %5457 = vmatprep.subr.mxu0 0.0
    %5458 = vmatpush1.msra.mxu0 %v3235
    %5459 = vmatprep.subr.mxu0 0.0
    %5460 = vmatpush1.msra.mxu0 %v3240
    %5461 = vmatprep.subr.mxu0 0.0
    %5462 = vmatpush1.msra.mxu0 %v3245
    %5463 = vmatprep.subr.mxu0 0.0
    %5464 = vmatpush1.msra.mxu0 %v3250
    %5465 = vmatprep.subr.mxu0 0.0
    %5466 = vmatpush1.msra.mxu0 %v3255
    %5467 = vmatprep.subr.mxu0 0.0
    %5468 = vmatpush1.msra.mxu0 %v3260
    %5469 = vmatprep.subr.mxu0 0.0
    %5470 = vmatpush1.msra.mxu0 %v3265
    %5471 = vmatprep.subr.mxu0 0.0
    %5472 = vmatpush1.msra.mxu0 %v3270
    %5473 = vmatprep.subr.mxu0 0.0
    %5474 = vmatpush1.msra.mxu0 %v3275
    %5475 = vmatprep.mubr.f32.mxu0 %v2309
    %5476 = vmatmul.mubr.f32.gmra.mrb[0].mxu0 %v2308
    %v5477 = vpop.f32.mrb[0].mxu0
    %v5478 = vadd.f32 %v5408, %v5477
    %v5479 = vpop.f32.mrb[0].mxu0
    %5480 = vdwg.mxu0
    %5481 = vmatprep.subr.mxu0 0.0
    %5482 = vmatpush1.msra.mxu0 %v3280
    %5483 = vmatprep.subr.mxu0 0.0
    %5484 = vmatpush1.msra.mxu0 %v3285
    %5485 = vmatprep.subr.mxu0 0.0
    %5486 = vmatpush1.msra.mxu0 %v3290
    %5487 = vmatprep.subr.mxu0 0.0
    %5488 = vmatpush1.msra.mxu0 %v3295
    %5489 = vmatprep.subr.mxu0 0.0
    %5490 = vmatpush1.msra.mxu0 %v3300
    %5491 = vmatprep.subr.mxu0 0.0
    %5492 = vmatpush1.msra.mxu0 %v3305
    %5493 = vmatprep.subr.mxu0 0.0
    %5494 = vmatpush1.msra.mxu0 %v3310
    %5495 = vmatprep.subr.mxu0 0.0
    %5496 = vmatpush1.msra.mxu0 %v3315
    %5497 = vmatprep.subr.mxu0 0.0
    %5498 = vmatpush1.msra.mxu0 %v3320
    %5499 = vmatprep.subr.mxu0 0.0
    %5500 = vmatpush1.msra.mxu0 %v3325
    %5501 = vmatprep.subr.mxu0 0.0
    %5502 = vmatpush1.msra.mxu0 %v3330
    %5503 = vmatprep.subr.mxu0 0.0
    %5504 = vmatpush1.msra.mxu0 %v3335
    %5505 = vmatprep.subr.mxu0 0.0
    %5506 = vmatpush1.msra.mxu0 %v3340
    %5507 = vmatprep.subr.mxu0 0.0
    %5508 = vmatpush1.msra.mxu0 %v3345
    %5509 = vmatprep.subr.mxu0 0.0
    %5510 = vmatpush1.msra.mxu0 %v3350
    %5511 = vmatprep.subr.mxu0 0.0
    %5512 = vmatpush1.msra.mxu0 %v3355
    %5513 = vmatprep.subr.mxu0 0.0
    %5514 = vmatpush1.msra.mxu0 %v3360
    %5515 = vmatprep.subr.mxu0 0.0
    %5516 = vmatpush1.msra.mxu0 %v3365
    %5517 = vmatprep.subr.mxu0 0.0
    %5518 = vmatpush1.msra.mxu0 %v3370
    %5519 = vmatprep.subr.mxu0 0.0
    %5520 = vmatpush1.msra.mxu0 %v3375
    %5521 = vmatprep.subr.mxu0 0.0
    %5522 = vmatpush1.msra.mxu0 %v3380
    %5523 = vmatprep.subr.mxu0 0.0
    %5524 = vmatpush1.msra.mxu0 %v3385
    %5525 = vmatprep.subr.mxu0 0.0
    %5526 = vmatpush1.msra.mxu0 %v3390
    %5527 = vmatprep.subr.mxu0 0.0
    %5528 = vmatpush1.msra.mxu0 %v3395
    %5529 = vmatprep.subr.mxu0 0.0
    %5530 = vmatpush1.msra.mxu0 %v3400
    %5531 = vmatprep.subr.mxu0 0.0
    %5532 = vmatpush1.msra.mxu0 %v3405
    %5533 = vmatprep.subr.mxu0 0.0
    %5534 = vmatpush1.msra.mxu0 %v3410
    %5535 = vmatprep.subr.mxu0 0.0
    %5536 = vmatpush1.msra.mxu0 %v3415
    %5537 = vmatprep.subr.mxu0 0.0
    %5538 = vmatpush1.msra.mxu0 %v3420
    %5539 = vmatprep.subr.mxu0 0.0
    %5540 = vmatpush1.msra.mxu0 %v3425
    %5541 = vmatprep.subr.mxu0 0.0
    %5542 = vmatpush1.msra.mxu0 %v3430
    %5543 = vmatprep.subr.mxu0 0.0
    %5544 = vmatpush1.msra.mxu0 %v3435
    %5545 = vmatprep.mubr.f32.mxu0 %v2311
    %5546 = vmatmul.mubr.f32.gmra.mrb[0].mxu0 %v2310
    %v5547 = vpop.f32.mrb[0].mxu0
    %v5548 = vadd.f32 %v5478, %v5547
    %v5549 = vpop.f32.mrb[0].mxu0
    %5550 = vdwg.mxu0
    %5551 = vmatprep.subr.mxu0 0.0
    %5552 = vmatpush1.msra.mxu0 %v3440
    %5553 = vmatprep.subr.mxu0 0.0
    %5554 = vmatpush1.msra.mxu0 %v3445
    %5555 = vmatprep.subr.mxu0 0.0
    %5556 = vmatpush1.msra.mxu0 %v3450
    %5557 = vmatprep.subr.mxu0 0.0
    %5558 = vmatpush1.msra.mxu0 %v3455
    %5559 = vmatprep.subr.mxu0 0.0
    %5560 = vmatpush1.msra.mxu0 %v3460
    %5561 = vmatprep.subr.mxu0 0.0
    %5562 = vmatpush1.msra.mxu0 %v3465
    %5563 = vmatprep.subr.mxu0 0.0
    %5564 = vmatpush1.msra.mxu0 %v3470
    %5565 = vmatprep.subr.mxu0 0.0
    %5566 = vmatpush1.msra.mxu0 %v3475
    %5567 = vmatprep.subr.mxu0 0.0
    %5568 = vmatpush1.msra.mxu0 %v3480
    %5569 = vmatprep.subr.mxu0 0.0
    %5570 = vmatpush1.msra.mxu0 %v3485
    %5571 = vmatprep.subr.mxu0 0.0
    %5572 = vmatpush1.msra.mxu0 %v3490
    %5573 = vmatprep.subr.mxu0 0.0
    %5574 = vmatpush1.msra.mxu0 %v3495
    %5575 = vmatprep.subr.mxu0 0.0
    %5576 = vmatpush1.msra.mxu0 %v3500
    %5577 = vmatprep.subr.mxu0 0.0
    %5578 = vmatpush1.msra.mxu0 %v3505
    %5579 = vmatprep.subr.mxu0 0.0
    %5580 = vmatpush1.msra.mxu0 %v3510
    %5581 = vmatprep.subr.mxu0 0.0
    %5582 = vmatpush1.msra.mxu0 %v3515
    %5583 = vmatprep.subr.mxu0 0.0
    %5584 = vmatpush1.msra.mxu0 %v3520
    %5585 = vmatprep.subr.mxu0 0.0
    %5586 = vmatpush1.msra.mxu0 %v3525
    %5587 = vmatprep.subr.mxu0 0.0
    %5588 = vmatpush1.msra.mxu0 %v3530
    %5589 = vmatprep.subr.mxu0 0.0
    %5590 = vmatpush1.msra.mxu0 %v3535
    %5591 = vmatprep.subr.mxu0 0.0
    %5592 = vmatpush1.msra.mxu0 %v3540
    %5593 = vmatprep.subr.mxu0 0.0
    %5594 = vmatpush1.msra.mxu0 %v3545
    %5595 = vmatprep.subr.mxu0 0.0
    %5596 = vmatpush1.msra.mxu0 %v3550
    %5597 = vmatprep.subr.mxu0 0.0
    %5598 = vmatpush1.msra.mxu0 %v3555
    %5599 = vmatprep.subr.mxu0 0.0
    %5600 = vmatpush1.msra.mxu0 %v3560
    %5601 = vmatprep.subr.mxu0 0.0
    %5602 = vmatpush1.msra.mxu0 %v3565
    %5603 = vmatprep.subr.mxu0 0.0
    %5604 = vmatpush1.msra.mxu0 %v3570
    %5605 = vmatprep.subr.mxu0 0.0
    %5606 = vmatpush1.msra.mxu0 %v3575
    %5607 = vmatprep.subr.mxu0 0.0
    %5608 = vmatpush1.msra.mxu0 %v3580
    %5609 = vmatprep.subr.mxu0 0.0
    %5610 = vmatpush1.msra.mxu0 %v3585
    %5611 = vmatprep.subr.mxu0 0.0
    %5612 = vmatpush1.msra.mxu0 %v3590
    %5613 = vmatprep.subr.mxu0 0.0
    %5614 = vmatpush1.msra.mxu0 %v3595
    %5615 = vmatprep.mubr.f32.mxu0 %v2313
    %5616 = vmatmul.mubr.f32.gmra.mrb[0].mxu0 %v2312
    %v5617 = vpop.f32.mrb[0].mxu0
    %v5618 = vadd.f32 %v5548, %v5617
    %v5619 = vpop.f32.mrb[0].mxu0
    %5620 = vdwg.mxu0
    %5621 = vmatprep.subr.mxu0 0.0
    %5622 = vmatpush1.msra.mxu0 %v3600
    %5623 = vmatprep.subr.mxu0 0.0
    %5624 = vmatpush1.msra.mxu0 %v3605
    %5625 = vmatprep.subr.mxu0 0.0
    %5626 = vmatpush1.msra.mxu0 %v3610
    %5627 = vmatprep.subr.mxu0 0.0
    %5628 = vmatpush1.msra.mxu0 %v3615
    %5629 = vmatprep.subr.mxu0 0.0
    %5630 = vmatpush1.msra.mxu0 %v3620
    %5631 = vmatprep.subr.mxu0 0.0
    %5632 = vmatpush1.msra.mxu0 %v3625
    %5633 = vmatprep.subr.mxu0 0.0
    %5634 = vmatpush1.msra.mxu0 %v3630
    %5635 = vmatprep.subr.mxu0 0.0
    %5636 = vmatpush1.msra.mxu0 %v3635
    %5637 = vmatprep.subr.mxu0 0.0
    %5638 = vmatpush1.msra.mxu0 %v3640
    %5639 = vmatprep.subr.mxu0 0.0
    %5640 = vmatpush1.msra.mxu0 %v3645
    %5641 = vmatprep.subr.mxu0 0.0
    %5642 = vmatpush1.msra.mxu0 %v3650
    %5643 = vmatprep.subr.mxu0 0.0
    %5644 = vmatpush1.msra.mxu0 %v3655
    %5645 = vmatprep.subr.mxu0 0.0
    %5646 = vmatpush1.msra.mxu0 %v3660
    %5647 = vmatprep.subr.mxu0 0.0
    %5648 = vmatpush1.msra.mxu0 %v3665
    %5649 = vmatprep.subr.mxu0 0.0
    %5650 = vmatpush1.msra.mxu0 %v3670
    %5651 = vmatprep.subr.mxu0 0.0
    %5652 = vmatpush1.msra.mxu0 %v3675
    %5653 = vmatprep.subr.mxu0 0.0
    %5654 = vmatpush1.msra.mxu0 %v3680
    %5655 = vmatprep.subr.mxu0 0.0
    %5656 = vmatpush1.msra.mxu0 %v3685
    %5657 = vmatprep.subr.mxu0 0.0
    %5658 = vmatpush1.msra.mxu0 %v3690
    %5659 = vmatprep.subr.mxu0 0.0
    %5660 = vmatpush1.msra.mxu0 %v3695
    %5661 = vmatprep.subr.mxu0 0.0
    %5662 = vmatpush1.msra.mxu0 %v3700
    %5663 = vmatprep.subr.mxu0 0.0
    %5664 = vmatpush1.msra.mxu0 %v3705
    %5665 = vmatprep.subr.mxu0 0.0
    %5666 = vmatpush1.msra.mxu0 %v3710
    %5667 = vmatprep.subr.mxu0 0.0
    %5668 = vmatpush1.msra.mxu0 %v3715
    %5669 = vmatprep.subr.mxu0 0.0
    %5670 = vmatpush1.msra.mxu0 %v3720
    %5671 = vmatprep.subr.mxu0 0.0
    %5672 = vmatpush1.msra.mxu0 %v3725
    %5673 = vmatprep.subr.mxu0 0.0
    %5674 = vmatpush1.msra.mxu0 %v3730
    %5675 = vmatprep.subr.mxu0 0.0
    %5676 = vmatpush1.msra.mxu0 %v3735
    %5677 = vmatprep.subr.mxu0 0.0
    %5678 = vmatpush1.msra.mxu0 %v3740
    %5679 = vmatprep.subr.mxu0 0.0
    %5680 = vmatpush1.msra.mxu0 %v3745
    %5681 = vmatprep.subr.mxu0 0.0
    %5682 = vmatpush1.msra.mxu0 %v3750
    %5683 = vmatprep.subr.mxu0 0.0
    %5684 = vmatpush1.msra.mxu0 %v3755
    %5685 = vmatprep.mubr.f32.mxu0 %v2315
    %5686 = vmatmul.mubr.f32.gmra.mrb[0].mxu0 %v2314
    %v5687 = vpop.f32.mrb[0].mxu0
    %v5688 = vadd.f32 %v5618, %v5687
    %v5689 = vpop.f32.mrb[0].mxu0
    %5690 = vdwg.mxu0
    %v5691 = vld [vmem:[%s7] sm:$0xff]
    %v5692 = vld [vmem:[%s7 + $0x8] sm:$0xff]
    %v5693 = vld [vmem:[%s7 + $0x10] sm:$0xff]
    %v5694 = vld [vmem:[%s7 + $0x18] sm:$0xff]
    %v5695 = vld [vmem:[%s7 + $0x20] sm:$0xff]
    %v5696 = vld [vmem:[%s7 + $0x28] sm:$0xff]
    %v5697 = vld [vmem:[%s7 + $0x30] sm:$0xff]
    %v5698 = vld [vmem:[%s7 + $0x38] sm:$0xff]
    %v5699 = vld [vmem:[%s7 + $0x40] sm:$0xff]
    %v5700 = vld [vmem:[%s7 + $0x48] sm:$0xff]
    %v5701 = vld [vmem:[%s7 + $0x50] sm:$0xff]
    %v5702 = vld [vmem:[%s7 + $0x58] sm:$0xff]
    %v5703 = vld [vmem:[%s7 + $0x60] sm:$0xff]
    %v5704 = vld [vmem:[%s7 + $0x68] sm:$0xff]
    %v5705 = vld [vmem:[%s7 + $0x70] sm:$0xff]
    %v5706 = vld [vmem:[%s7 + $0x78] sm:$0xff]
    %v5707 = vld [vmem:[%s7 + $0x80] sm:$0xff]
    %v5708 = vld [vmem:[%s7 + $0x88] sm:$0xff]
    %v5709 = vld [vmem:[%s7 + $0x90] sm:$0xff]
    %v5710 = vld [vmem:[%s7 + $0x98] sm:$0xff]
    %v5711 = vld [vmem:[%s7 + $0xa0] sm:$0xff]
    %v5712 = vld [vmem:[%s7 + $0xa8] sm:$0xff]
    %v5713 = vld [vmem:[%s7 + $0xb0] sm:$0xff]
    %v5714 = vld [vmem:[%s7 + $0xb8] sm:$0xff]
    %v5715 = vld [vmem:[%s7 + $0xc0] sm:$0xff]
    %v5716 = vld [vmem:[%s7 + $0xc8] sm:$0xff]
    %v5717 = vld [vmem:[%s7 + $0xd0] sm:$0xff]
    %v5718 = vld [vmem:[%s7 + $0xd8] sm:$0xff]
    %v5719 = vld [vmem:[%s7 + $0xe0] sm:$0xff]
    %v5720 = vld [vmem:[%s7 + $0xe8] sm:$0xff]
    %v5721 = vld [vmem:[%s7 + $0xf0] sm:$0xff]
    %v5722 = vld [vmem:[%s7 + $0xf8] sm:$0xff]
    %v5723 = vld [vmem:[%s7 + $0x100] sm:$0xff]
    %v5724 = vld [vmem:[%s7 + $0x108] sm:$0xff]
    %v5725 = vld [vmem:[%s7 + $0x110] sm:$0xff]
    %v5726 = vld [vmem:[%s7 + $0x118] sm:$0xff]
    %v5727 = vld [vmem:[%s7 + $0x120] sm:$0xff]
    %v5728 = vld [vmem:[%s7 + $0x128] sm:$0xff]
    %v5729 = vld [vmem:[%s7 + $0x130] sm:$0xff]
    %v5730 = vld [vmem:[%s7 + $0x138] sm:$0xff]
    %v5731 = vld [vmem:[%s7 + $0x140] sm:$0xff]
    %v5732 = vld [vmem:[%s7 + $0x148] sm:$0xff]
    %v5733 = vld [vmem:[%s7 + $0x150] sm:$0xff]
    %v5734 = vld [vmem:[%s7 + $0x158] sm:$0xff]
    %v5735 = vld [vmem:[%s7 + $0x160] sm:$0xff]
    %v5736 = vld [vmem:[%s7 + $0x168] sm:$0xff]
    %v5737 = vld [vmem:[%s7 + $0x170] sm:$0xff]
    %v5738 = vld [vmem:[%s7 + $0x178] sm:$0xff]
    %v5739 = vld [vmem:[%s7 + $0x180] sm:$0xff]
    %v5740 = vld [vmem:[%s7 + $0x188] sm:$0xff]
    %v5741 = vld [vmem:[%s7 + $0x190] sm:$0xff]
    %v5742 = vld [vmem:[%s7 + $0x198] sm:$0xff]
    %v5743 = vld [vmem:[%s7 + $0x1a0] sm:$0xff]
    %v5744 = vld [vmem:[%s7 + $0x1a8] sm:$0xff]
    %v5745 = vld [vmem:[%s7 + $0x1b0] sm:$0xff]
    %v5746 = vld [vmem:[%s7 + $0x1b8] sm:$0xff]
    %v5747 = vld [vmem:[%s7 + $0x1c0] sm:$0xff]
    %v5748 = vld [vmem:[%s7 + $0x1c8] sm:$0xff]
    %v5749 = vld [vmem:[%s7 + $0x1d0] sm:$0xff]
    %v5750 = vld [vmem:[%s7 + $0x1d8] sm:$0xff]
    %v5751 = vld [vmem:[%s7 + $0x1e0] sm:$0xff]
    %v5752 = vld [vmem:[%s7 + $0x1e8] sm:$0xff]
    %v5753 = vld [vmem:[%s7 + $0x1f0] sm:$0xff]
    %v5754 = vld [vmem:[%s7 + $0x1f8] sm:$0xff]
    %v5755 = vld [vmem:[%s7 + $0x200] sm:$0xff]
    %v5756 = vld [vmem:[%s7 + $0x208] sm:$0xff]
    %v5757 = vld [vmem:[%s7 + $0x210] sm:$0xff]
    %v5758 = vld [vmem:[%s7 + $0x218] sm:$0xff]
    %v5759 = vld [vmem:[%s7 + $0x220] sm:$0xff]
    %v5760 = vld [vmem:[%s7 + $0x228] sm:$0xff]
    %v5761 = vld [vmem:[%s7 + $0x230] sm:$0xff]
    %v5762 = vld [vmem:[%s7 + $0x238] sm:$0xff]
    %v5763 = vld [vmem:[%s7 + $0x240] sm:$0xff]
    %v5764 = vld [vmem:[%s7 + $0x248] sm:$0xff]
    %v5765 = vld [vmem:[%s7 + $0x250] sm:$0xff]
    %v5766 = vld [vmem:[%s8] sm:$0x1]
    %v5768 = vlaneseq
    %v5769 = vshrl.u32 %v5768, 7
    %v5770 = vsub.s32 0, %v5769
    %v5771 = vrot.slane %v5766, %v5770
    %vm5773 = vcmask 719872
    %v5775 = vsel %vm5773, %v5688, 0
    %5777 = vmatprep.subr.mxu0 0.0
    %5778 = vmatpush1.msra.mxu0 %v5691
    %5779 = vmatprep.subr.mxu0 0.0
    %5780 = vmatpush1.msra.mxu0 %v5692
    %5781 = vmatprep.subr.mxu0 0.0
    %5782 = vmatpush1.msra.mxu0 %v5693
    %5783 = vmatprep.subr.mxu0 0.0
    %5784 = vmatpush1.msra.mxu0 %v5694
    %5785 = vmatprep.subr.mxu0 0.0
    %5786 = vmatpush1.msra.mxu0 %v5695
    %5787 = vmatprep.subr.mxu0 0.0
    %5788 = vmatpush1.msra.mxu0 %v5696
    %5789 = vmatprep.subr.mxu0 0.0
    %5790 = vmatpush1.msra.mxu0 %v5697
    %5791 = vmatprep.subr.mxu0 0.0
    %5792 = vmatpush1.msra.mxu0 %v5698
    %5793 = vmatprep.subr.mxu0 0.0
    %5794 = vmatpush1.msra.mxu0 %v5699
    %5795 = vmatprep.subr.mxu0 0.0
    %5796 = vmatpush1.msra.mxu0 %v5700
    %5797 = vmatprep.subr.mxu0 0.0
    %5798 = vmatpush1.msra.mxu0 %v5701
    %5799 = vmatprep.subr.mxu0 0.0
    %5800 = vmatpush1.msra.mxu0 %v5702
    %5801 = vmatprep.subr.mxu0 0.0
    %5802 = vmatpush1.msra.mxu0 %v5703
    %5803 = vmatprep.subr.mxu0 0.0
    %5804 = vmatpush1.msra.mxu0 %v5704
    %5805 = vmatprep.subr.mxu0 0.0
    %5806 = vmatpush1.msra.mxu0 %v5705
    %5807 = vmatprep.subr.mxu0 0.0
    %5808 = vmatpush1.msra.mxu0 %v5706
    %5809 = vmatprep.subr.mxu0 0.0
    %5810 = vmatpush1.msra.mxu0 %v5707
    %5811 = vmatprep.subr.mxu0 0.0
    %5812 = vmatpush1.msra.mxu0 %v5708
    %5813 = vmatprep.subr.mxu0 0.0
    %5814 = vmatpush1.msra.mxu0 %v5709
    %5815 = vmatprep.subr.mxu0 0.0
    %5816 = vmatpush1.msra.mxu0 %v5710
    %5817 = vmatprep.subr.mxu0 0.0
    %5818 = vmatpush1.msra.mxu0 %v5711
    %5819 = vmatprep.subr.mxu0 0.0
    %5820 = vmatpush1.msra.mxu0 %v5712
    %5821 = vmatprep.subr.mxu0 0.0
    %5822 = vmatpush1.msra.mxu0 %v5713
    %5823 = vmatprep.subr.mxu0 0.0
    %5824 = vmatpush1.msra.mxu0 %v5714
    %5825 = vmatprep.subr.mxu0 0.0
    %5826 = vmatpush1.msra.mxu0 %v5715
    %5827 = vmatprep.subr.mxu0 0.0
    %5828 = vmatpush1.msra.mxu0 %v5716
    %5829 = vmatprep.subr.mxu0 0.0
    %5830 = vmatpush1.msra.mxu0 %v5717
    %5831 = vmatprep.subr.mxu0 0.0
    %5832 = vmatpush1.msra.mxu0 %v5718
    %5833 = vmatprep.subr.mxu0 0.0
    %5834 = vmatpush1.msra.mxu0 %v5719
    %5835 = vmatprep.subr.mxu0 0.0
    %5836 = vmatpush1.msra.mxu0 %v5720
    %5837 = vmatprep.subr.mxu0 0.0
    %5838 = vmatpush1.msra.mxu0 %v5721
    %5839 = vmatprep.subr.mxu0 0.0
    %5840 = vmatpush1.msra.mxu0 %v5722
    %5841 = vmatprep.mubr.f32.mxu0 %v4420
    %5842 = vmatmul.mubr.f32.gmra.mrb[0].mxu0 %v4418
    %v5843 = vpop.f32.mrb[0].mxu0
    %v5844 = vadd.f32 %v5771, %v5843
    %v5845 = vpop.f32.mrb[0].mxu0
    %5846 = vdwg.mxu0
    %5847 = vmatprep.subr.mxu0 0.0
    %5848 = vmatpush1.msra.mxu0 %v5723
    %5849 = vmatprep.subr.mxu0 0.0
    %5850 = vmatpush1.msra.mxu0 %v5724
    %5851 = vmatprep.subr.mxu0 0.0
    %5852 = vmatpush1.msra.mxu0 %v5725
    %5853 = vmatprep.subr.mxu0 0.0
    %5854 = vmatpush1.msra.mxu0 %v5726
    %5855 = vmatprep.subr.mxu0 0.0
    %5856 = vmatpush1.msra.mxu0 %v5727
    %5857 = vmatprep.subr.mxu0 0.0
    %5858 = vmatpush1.msra.mxu0 %v5728
    %5859 = vmatprep.subr.mxu0 0.0
    %5860 = vmatpush1.msra.mxu0 %v5729
    %5861 = vmatprep.subr.mxu0 0.0
    %5862 = vmatpush1.msra.mxu0 %v5730
    %5863 = vmatprep.subr.mxu0 0.0
    %5864 = vmatpush1.msra.mxu0 %v5731
    %5865 = vmatprep.subr.mxu0 0.0
    %5866 = vmatpush1.msra.mxu0 %v5732
    %5867 = vmatprep.subr.mxu0 0.0
    %5868 = vmatpush1.msra.mxu0 %v5733
    %5869 = vmatprep.subr.mxu0 0.0
    %5870 = vmatpush1.msra.mxu0 %v5734
    %5871 = vmatprep.subr.mxu0 0.0
    %5872 = vmatpush1.msra.mxu0 %v5735
    %5873 = vmatprep.subr.mxu0 0.0
    %5874 = vmatpush1.msra.mxu0 %v5736
    %5875 = vmatprep.subr.mxu0 0.0
    %5876 = vmatpush1.msra.mxu0 %v5737
    %5877 = vmatprep.subr.mxu0 0.0
    %5878 = vmatpush1.msra.mxu0 %v5738
    %5879 = vmatprep.subr.mxu0 0.0
    %5880 = vmatpush1.msra.mxu0 %v5739
    %5881 = vmatprep.subr.mxu0 0.0
    %5882 = vmatpush1.msra.mxu0 %v5740
    %5883 = vmatprep.subr.mxu0 0.0
    %5884 = vmatpush1.msra.mxu0 %v5741
    %5885 = vmatprep.subr.mxu0 0.0
    %5886 = vmatpush1.msra.mxu0 %v5742
    %5887 = vmatprep.subr.mxu0 0.0
    %5888 = vmatpush1.msra.mxu0 %v5743
    %5889 = vmatprep.subr.mxu0 0.0
    %5890 = vmatpush1.msra.mxu0 %v5744
    %5891 = vmatprep.subr.mxu0 0.0
    %5892 = vmatpush1.msra.mxu0 %v5745
    %5893 = vmatprep.subr.mxu0 0.0
    %5894 = vmatpush1.msra.mxu0 %v5746
    %5895 = vmatprep.subr.mxu0 0.0
    %5896 = vmatpush1.msra.mxu0 %v5747
    %5897 = vmatprep.subr.mxu0 0.0
    %5898 = vmatpush1.msra.mxu0 %v5748
    %5899 = vmatprep.subr.mxu0 0.0
    %5900 = vmatpush1.msra.mxu0 %v5749
    %5901 = vmatprep.subr.mxu0 0.0
    %5902 = vmatpush1.msra.mxu0 %v5750
    %5903 = vmatprep.subr.mxu0 0.0
    %5904 = vmatpush1.msra.mxu0 %v5751
    %5905 = vmatprep.subr.mxu0 0.0
    %5906 = vmatpush1.msra.mxu0 %v5752
    %5907 = vmatprep.subr.mxu0 0.0
    %5908 = vmatpush1.msra.mxu0 %v5753
    %5909 = vmatprep.subr.mxu0 0.0
    %5910 = vmatpush1.msra.mxu0 %v5754
    %5911 = vmatprep.mubr.f32.mxu0 %v5059
    %5912 = vmatmul.mubr.f32.gmra.mrb[0].mxu0 %v5057
    %v5913 = vpop.f32.mrb[0].mxu0
    %v5914 = vadd.f32 %v5844, %v5913
    %v5915 = vpop.f32.mrb[0].mxu0
    %5916 = vdwg.mxu0
    %5917 = vmatprep.subr.mxu0 0.0
    %5918 = vmatpush1.msra.mxu0 %v5755
    %5919 = vmatprep.subr.mxu0 0.0
    %5920 = vmatpush1.msra.mxu0 %v5756
    %5921 = vmatprep.subr.mxu0 0.0
    %5922 = vmatpush1.msra.mxu0 %v5757
    %5923 = vmatprep.subr.mxu0 0.0
    %5924 = vmatpush1.msra.mxu0 %v5758
    %5925 = vmatprep.subr.mxu0 0.0
    %5926 = vmatpush1.msra.mxu0 %v5759
    %5927 = vmatprep.subr.mxu0 0.0
    %5928 = vmatpush1.msra.mxu0 %v5760
    %5929 = vmatprep.subr.mxu0 0.0
    %5930 = vmatpush1.msra.mxu0 %v5761
    %5931 = vmatprep.subr.mxu0 0.0
    %5932 = vmatpush1.msra.mxu0 %v5762
    %5933 = vmatprep.subr.mxu0 0.0
    %5934 = vmatpush1.msra.mxu0 %v5763
    %5935 = vmatprep.subr.mxu0 0.0
    %5936 = vmatpush1.msra.mxu0 %v5764
    %5937 = vmatprep.subr.mxu0 0.0
    %5938 = vmatpush1.msra.mxu0 %v5765
    %5939 = vmatprep.subr.mxu0 0.0
    %5940 = vmatpush1.msra.mxu0 0.0
    %5941 = vmatprep.subr.mxu0 0.0
    %5942 = vmatpush1.msra.mxu0 0.0
    %5943 = vmatprep.subr.mxu0 0.0
    %5944 = vmatpush1.msra.mxu0 0.0
    %5945 = vmatprep.subr.mxu0 0.0
    %5946 = vmatpush1.msra.mxu0 0.0
    %5947 = vmatprep.subr.mxu0 0.0
    %5948 = vmatpush1.msra.mxu0 0.0
    %5949 = vmatprep.subr.mxu0 0.0
    %5950 = vmatpush1.msra.mxu0 0.0
    %5951 = vmatprep.subr.mxu0 0.0
    %5952 = vmatpush1.msra.mxu0 0.0
    %5953 = vmatprep.subr.mxu0 0.0
    %5954 = vmatpush1.msra.mxu0 0.0
    %5955 = vmatprep.subr.mxu0 0.0
    %5956 = vmatpush1.msra.mxu0 0.0
    %5957 = vmatprep.subr.mxu0 0.0
    %5958 = vmatpush1.msra.mxu0 0.0
    %5959 = vmatprep.subr.mxu0 0.0
    %5960 = vmatpush1.msra.mxu0 0.0
    %5961 = vmatprep.subr.mxu0 0.0
    %5962 = vmatpush1.msra.mxu0 0.0
    %5963 = vmatprep.subr.mxu0 0.0
    %5964 = vmatpush1.msra.mxu0 0.0
    %5965 = vmatprep.subr.mxu0 0.0
    %5966 = vmatpush1.msra.mxu0 0.0
    %5967 = vmatprep.subr.mxu0 0.0
    %5968 = vmatpush1.msra.mxu0 0.0
    %5969 = vmatprep.subr.mxu0 0.0
    %5970 = vmatpush1.msra.mxu0 0.0
    %5971 = vmatprep.subr.mxu0 0.0
    %5972 = vmatpush1.msra.mxu0 0.0
    %5973 = vmatprep.subr.mxu0 0.0
    %5974 = vmatpush1.msra.mxu0 0.0
    %5975 = vmatprep.subr.mxu0 0.0
    %5976 = vmatpush1.msra.mxu0 0.0
    %5977 = vmatprep.subr.mxu0 0.0
    %5978 = vmatpush1.msra.mxu0 0.0
    %5979 = vmatprep.subr.mxu0 0.0
    %5980 = vmatpush1.msra.mxu0 0.0
    %5981 = vmatprep.mubr.f32.mxu0 0.0
    %5982 = vmatmul.mubr.f32.gmra.mrb[0].mxu0 %v5775
    %v5983 = vpop.f32.mrb[0].mxu0
    %v5984 = vadd.f32 %v5914, %v5983
    %v5985 = vpop.f32.mrb[0].mxu0
    %5986 = vdwg.mxu0
    %v5987 = vld [vmem:[%s9] sm:$0xff]
    %v5988 = vld [vmem:[%s9 + $0x8] sm:$0xff]
    %v5989 = vld [vmem:[%s9 + $0x10] sm:$0xff]
    %v5990 = vld [vmem:[%s9 + $0x18] sm:$0xff]
    %v5991 = vld [vmem:[%s9 + $0x20] sm:$0xff]
    %v5992 = vld [vmem:[%s9 + $0x28] sm:$0xff]
    %v5993 = vld [vmem:[%s9 + $0x30] sm:$0xff]
    %v5994 = vld [vmem:[%s9 + $0x38] sm:$0xff]
    %v5995 = vld [vmem:[%s9 + $0x40] sm:$0xff]
    %v5996 = vld [vmem:[%s9 + $0x48] sm:$0xff]
    %v5997 = vld [vmem:[%s9 + $0x50] sm:$0xff]
    %v5998 = vld [vmem:[%s9 + $0x58] sm:$0xff]
    %v5999 = vld [vmem:[%s9 + $0x60] sm:$0xff]
    %v6000 = vld [vmem:[%s9 + $0x68] sm:$0xff]
    %v6001 = vld [vmem:[%s9 + $0x70] sm:$0xff]
    %v6002 = vld [vmem:[%s10] sm:$0x1]
    %v6004 = vlaneseq
    %v6005 = vshrl.u32 %v6004, 7
    %v6006 = vsub.s32 0, %v6005
    %v6007 = vrot.slane %v6002, %v6006
    %vm6009 = vcmask 982016
    %v6011 = vsel %vm6009, %v5984, 0
    %6013 = vmatprep.subr.mxu0 0.0
    %6014 = vmatpush1.msra.mxu0 %v5987
    %6015 = vmatprep.subr.mxu0 0.0
    %6016 = vmatpush1.msra.mxu0 %v5988
    %6017 = vmatprep.subr.mxu0 0.0
    %6018 = vmatpush1.msra.mxu0 %v5989
    %6019 = vmatprep.subr.mxu0 0.0
    %6020 = vmatpush1.msra.mxu0 %v5990
    %6021 = vmatprep.subr.mxu0 0.0
    %6022 = vmatpush1.msra.mxu0 %v5991
    %6023 = vmatprep.subr.mxu0 0.0
    %6024 = vmatpush1.msra.mxu0 %v5992
    %6025 = vmatprep.subr.mxu0 0.0
    %6026 = vmatpush1.msra.mxu0 %v5993
    %6027 = vmatprep.subr.mxu0 0.0
    %6028 = vmatpush1.msra.mxu0 %v5994
    %6029 = vmatprep.subr.mxu0 0.0
    %6030 = vmatpush1.msra.mxu0 %v5995
    %6031 = vmatprep.subr.mxu0 0.0
    %6032 = vmatpush1.msra.mxu0 %v5996
    %6033 = vmatprep.subr.mxu0 0.0
    %6034 = vmatpush1.msra.mxu0 %v5997
    %6035 = vmatprep.subr.mxu0 0.0
    %6036 = vmatpush1.msra.mxu0 %v5998
    %6037 = vmatprep.subr.mxu0 0.0
    %6038 = vmatpush1.msra.mxu0 %v5999
    %6039 = vmatprep.subr.mxu0 0.0
    %6040 = vmatpush1.msra.mxu0 %v6000
    %6041 = vmatprep.subr.mxu0 0.0
    %6042 = vmatpush1.msra.mxu0 %v6001
    %6043 = vmatprep.subr.mxu0 0.0
    %6044 = vmatpush1.msra.mxu0 0.0
    %6045 = vmatprep.subr.mxu0 0.0
    %6046 = vmatpush1.msra.mxu0 0.0
    %6047 = vmatprep.subr.mxu0 0.0
    %6048 = vmatpush1.msra.mxu0 0.0
    %6049 = vmatprep.subr.mxu0 0.0
    %6050 = vmatpush1.msra.mxu0 0.0
    %6051 = vmatprep.subr.mxu0 0.0
    %6052 = vmatpush1.msra.mxu0 0.0
    %6053 = vmatprep.subr.mxu0 0.0
    %6054 = vmatpush1.msra.mxu0 0.0
    %6055 = vmatprep.subr.mxu0 0.0
    %6056 = vmatpush1.msra.mxu0 0.0
    %6057 = vmatprep.subr.mxu0 0.0
    %6058 = vmatpush1.msra.mxu0 0.0
    %6059 = vmatprep.subr.mxu0 0.0
    %6060 = vmatpush1.msra.mxu0 0.0
    %6061 = vmatprep.subr.mxu0 0.0
    %6062 = vmatpush1.msra.mxu0 0.0
    %6063 = vmatprep.subr.mxu0 0.0
    %6064 = vmatpush1.msra.mxu0 0.0
    %6065 = vmatprep.subr.mxu0 0.0
    %6066 = vmatpush1.msra.mxu0 0.0
    %6067 = vmatprep.subr.mxu0 0.0
    %6068 = vmatpush1.msra.mxu0 0.0
    %6069 = vmatprep.subr.mxu0 0.0
    %6070 = vmatpush1.msra.mxu0 0.0
    %6071 = vmatprep.subr.mxu0 0.0
    %6072 = vmatpush1.msra.mxu0 0.0
    %6073 = vmatprep.subr.mxu0 0.0
    %6074 = vmatpush1.msra.mxu0 0.0
    %6075 = vmatprep.subr.mxu0 0.0
    %6076 = vmatpush1.msra.mxu0 0.0
    %6077 = vmatprep.mubr.f32.mxu0 0.0
    %6078 = vmatmul.mubr.f32.gmra.mrb[0].mxu0 %v6011
    %v6079 = vpop.f32.mrb[0].mxu0
    %v6080 = vadd.f32 %v6007, %v6079
    %v6081 = vpop.f32.mrb[0].mxu0
    %6082 = vdwg.mxu0
    %vm6083 = vcmask 74752
    %6084 = vst.msk [vmem:[#allocation4] sm:$0x3] %vm6083, %v6080
    // Predicated region
    $region60: #{forward_pallas.1} parent=1 // pred_check
      _
    $region61: #{forward_pallas.1} parent=1 // pred_check_branch
      %6086 = sbr.rel (0) target = $region63
    $region62: #{forward_pallas.1} parent=1 // pred_region
      %s6088 = ssub.s32 32, 32
      %6089 = vsyncadd [#allocation5], %s6088
      %s6091 = sshll.u32 [#allocation4], 4
      %s6092 = int_to_ptr.vmem [resolvable:$true] %s6091
      %6094 = dma.vmem_to_hbm [thread:$0]  %s6092, 32, %s11, [#allocation5]
    $region63: #{forward_pallas.1} parent=1 // pred_fallthru
      _
    // Predicated region
    $region64: #{forward_pallas.1} parent=1 // pred_check
      _
    $region65: #{forward_pallas.1} parent=1 // pred_check_branch
      %6096 = sbr.rel (0) target = $region67
    $region66: #{forward_pallas.1} parent=1 // pred_region
      %6097 = dma.done [#allocation5], 32
    $region67: #{forward_pallas.1} parent=1 // pred_fallthru
      _
    %6098 = vsyncpa [#allocation5], 1

</llo_original>
